<compile_context>
chip_gen: v6e
topology: v6e:2x2x1
jax: 0.10.0
libtpu: 0.0.40
codegen_flags: <defaults>
</compile_context>

<pallas_src>
import jax
import jax.numpy as jnp
from jax.experimental import pallas as pl
from jax.experimental.pallas import tpu as pltpu

BN_EPS = 1e-5


def _encoder_block_kernel(x_ref, w1_ref, g1_ref, be1_ref,
                          w2_ref, g2_ref, be2_ref, ws_ref, bs_ref,
                          x_out_ref, p_out_ref,
                          pad1, pad2, col1, col2):
    """Fused conv3x3->BN->ReLU->conv3x3->BN->ReLU->(+1x1 skip)->maxpool2x2 (NHWC)."""
    N, H, W, Cin = x_ref.shape
    Cout = x_out_ref.shape[-1]
    M = N * H * W
    inv_m = 1.0 / M

    x = x_ref[...]                                         # (N, H, W, Cin)

    # ---- zero-pad input inside the kernel: border-only fill -----------------
    pad1[:, 1:H + 1, 1:W + 1, :] = x
    pad1[:, 0:1, :, :] = jnp.zeros((N, 1, W + 2, Cin), jnp.float32)
    pad1[:, H + 1:H + 2, :, :] = jnp.zeros((N, 1, W + 2, Cin), jnp.float32)
    pad1[:, :, 0:1, :] = jnp.zeros((N, H + 2, 1, Cin), jnp.float32)
    pad1[:, :, W + 1:W + 2, :] = jnp.zeros((N, H + 2, 1, Cin), jnp.float32)

    # ---- conv1: im2col -> one (M, 9*Cin) x (9*Cin, Cout) MXU matmul ---------
    # (conv bias omitted: exactly cancelled by training-mode BN mean subtraction)
    t = 0
    for dh in range(3):
        for dw in range(3):
            col1[:, t * Cin:(t + 1) * Cin] = (
                pad1[:, dh:dh + H, dw:dw + W, :].reshape(M, Cin))
            t += 1
    acc1 = jnp.dot(col1[...], w1_ref[...], preferred_element_type=jnp.float32)

    # ---- bn1 (one-pass batch stats over N*H*W) + ReLU ------------------------
    s1 = jnp.sum(acc1, axis=0, keepdims=True)
    ss1 = jnp.sum(acc1 * acc1, axis=0, keepdims=True)
    mean1 = s1 * inv_m
    var1 = ss1 * inv_m - mean1 * mean1
    scale1 = g1_ref[...] * jax.lax.rsqrt(var1 + BN_EPS)
    shift1 = be1_ref[...] - mean1 * scale1
    h1 = jnp.maximum(acc1 * scale1 + shift1, 0.0)          # (M, Cout)

    # ---- conv2: pad h1 (border-only fill), im2col, one matmul ---------------
    pad2[:, 1:H + 1, 1:W + 1, :] = h1.reshape(N, H, W, Cout)
    pad2[:, 0:1, :, :] = jnp.zeros((N, 1, W + 2, Cout), jnp.float32)
    pad2[:, H + 1:H + 2, :, :] = jnp.zeros((N, 1, W + 2, Cout), jnp.float32)
    pad2[:, :, 0:1, :] = jnp.zeros((N, H + 2, 1, Cout), jnp.float32)
    pad2[:, :, W + 1:W + 2, :] = jnp.zeros((N, H + 2, 1, Cout), jnp.float32)

    t = 0
    for dh in range(3):
        for dw in range(3):
            col2[:, t * Cout:(t + 1) * Cout] = (
                pad2[:, dh:dh + H, dw:dw + W, :].reshape(M, Cout))
            t += 1
    acc2 = jnp.dot(col2[...], w2_ref[...], preferred_element_type=jnp.float32)

    # ---- bn2 + ReLU ----------------------------------------------------------
    s2 = jnp.sum(acc2, axis=0, keepdims=True)
    ss2 = jnp.sum(acc2 * acc2, axis=0, keepdims=True)
    mean2 = s2 * inv_m
    var2 = ss2 * inv_m - mean2 * mean2
    scale2 = g2_ref[...] * jax.lax.rsqrt(var2 + BN_EPS)
    shift2 = be2_ref[...] - mean2 * scale2
    h2 = jnp.maximum(acc2 * scale2 + shift2, 0.0)          # (M, Cout)

    # ---- 1x1 skip: center tap of conv1 == the unpadded input itself ---------
    skp = jnp.dot(x.reshape(M, Cin), ws_ref[...],
                  preferred_element_type=jnp.float32) + bs_ref[...]

    y = (h2 + skp).reshape(N, H, W, Cout)
    x_out_ref[...] = y

    # ---- fused 2x2 maxpool: 4 strided reads of the just-written output ------
    H2, W2 = H // 2, W // 2
    ev_h, od_h = pl.ds(0, H2, stride=2), pl.ds(1, H2, stride=2)
    ev_w, od_w = pl.ds(0, W2, stride=2), pl.ds(1, W2, stride=2)
    p_out_ref[...] = jnp.maximum(
        jnp.maximum(x_out_ref[:, ev_h, ev_w, :], x_out_ref[:, ev_h, od_w, :]),
        jnp.maximum(x_out_ref[:, od_h, ev_w, :], x_out_ref[:, od_h, od_w, :]))


def encoder_block_nhwc(x_nhwc, params):
    """res_block + fused 2x2 maxpool. NHWC in / NHWC out (chainable without transposes)."""
    x_nhwc = x_nhwc.astype(jnp.float32)
    N, H, W, Cin = x_nhwc.shape
    Cout = params["w1"].shape[-1]
    assert H % 2 == 0 and W % 2 == 0, "MaxPool2d(2) path assumes even H and W"
    M = N * H * W

    # one-time weight repack: HWIO (3,3,Ci,Co) -> im2col layout (9*Ci, Co)
    w1c = params["w1"].reshape(9 * Cin, Cout)
    w2c = params["w2"].reshape(9 * Cout, Cout)

    vmem = pl.BlockSpec(memory_space=pltpu.MemorySpace.VMEM)
    x_out, p_out = pl.pallas_call(
        _encoder_block_kernel,
        out_shape=(jax.ShapeDtypeStruct((N, H, W, Cout), jnp.float32),
                   jax.ShapeDtypeStruct((N, H // 2, W // 2, Cout), jnp.float32)),
        in_specs=[vmem] * 9,
        out_specs=(vmem, vmem),
        scratch_shapes=[
            pltpu.VMEM((N, H + 2, W + 2, Cin), jnp.float32),    # padded input
            pltpu.VMEM((N, H + 2, W + 2, Cout), jnp.float32),   # padded h1
            pltpu.VMEM((M, 9 * Cin), jnp.float32),              # im2col for conv1
            pltpu.VMEM((M, 9 * Cout), jnp.float32),             # im2col for conv2
        ],
    )(x_nhwc, w1c, params["g1"], params["be1"],
      w2c, params["g2"], params["be2"], params["ws"], params["bs"])
    return x_out, p_out


@jax.jit
def encoder_block_forward(x_nchw, params):
    """PyTorch-facing NCHW adapter: transposes only at model entry/exit."""
    x = jnp.transpose(x_nchw.astype(jnp.float32), (0, 2, 3, 1))  # NCHW -> NHWC
    x_out, p_out = encoder_block_nhwc(x, params)
    return (jnp.transpose(x_out, (0, 3, 1, 2)),
            jnp.transpose(p_out, (0, 3, 1, 2)))


def init_params(key, in_channels, out_channels):
    ks = jax.random.split(key, 8)
    f32 = jnp.float32
    return {
        # conv1: 3x3, Cin -> Cout (HWIO). b1/b2 kept for the reference only; the kernel
        # drops them because training-mode BN cancels a pre-BN per-channel constant.
        "w1": 0.1 * jax.random.normal(ks[0], (3, 3, in_channels, out_channels), f32),
        "b1": 0.05 * jax.random.normal(ks[1], (1, out_channels), f32),
        "g1": 1.0 + 0.1 * jax.random.normal(ks[2], (1, out_channels), f32),
        "be1": 0.1 * jax.random.normal(ks[3], (1, out_channels), f32),
        # conv2: 3x3, Cout -> Cout
        "w2": 0.1 * jax.random.normal(ks[4], (3, 3, out_channels, out_channels), f32),
        "b2": 0.05 * jax.random.normal(ks[5], (1, out_channels), f32),
        "g2": 1.0 + 0.1 * jax.random.normal(ks[6], (1, out_channels), f32),
        "be2": 0.1 * jax.random.normal(ks[7], (1, out_channels), f32),
        # skip: 1x1 conv, Cin -> Cout (bias NOT cancelled — no BN after the skip)
        "ws": 0.1 * jax.random.normal(jax.random.fold_in(key, 100),
                                      (in_channels, out_channels), f32),
        "bs": 0.05 * jax.random.normal(jax.random.fold_in(key, 101),
                                       (1, out_channels), f32),
    }


def _reference_nhwc(x, params):
    """Pure-JAX reference of the PyTorch encoder_block forward (training-mode BN)."""
    hi = jax.lax.Precision.HIGHEST
    x = x.astype(jnp.float32)

    def conv3x3(v, w, b):
        y = jax.lax.conv_general_dilated(
            v, w, window_strides=(1, 1), padding="SAME",
            dimension_numbers=("NHWC", "HWIO", "NHWC"), precision=hi)
        return y + b.reshape(1, 1, 1, -1)

    def bn_relu(v, g, be):
        m = jnp.mean(v, axis=(0, 1, 2), keepdims=True)
        var = jnp.mean((v - m) ** 2, axis=(0, 1, 2), keepdims=True)
        return jax.nn.relu((v - m) * jax.lax.rsqrt(var + BN_EPS)
                           * g.reshape(1, 1, 1, -1) + be.reshape(1, 1, 1, -1))

    h = bn_relu(conv3x3(x, params["w1"], params["b1"]), params["g1"], params["be1"])
    h = bn_relu(conv3x3(h, params["w2"], params["b2"]), params["g2"], params["be2"])
    s = jnp.einsum("nhwc,cd->nhwd", x, params["ws"], precision=hi) \
        + params["bs"].reshape(1, 1, 1, -1)
    xo = h + s
    N, H, W, C = xo.shape
    p = jnp.max(xo.reshape(N, H // 2, 2, W // 2, 2, C), axis=(2, 4))
    return xo, p


if __name__ == "__main__":
    key = jax.random.PRNGKey(0)
    k_x, k_p = jax.random.split(key)

    N, Cin, H, W = 2, 4, 16, 16
    Cout = 8

    x_nchw = jax.random.normal(k_x, (N, Cin, H, W), jnp.float32)
    params = init_params(k_p, Cin, Cout)

    x_full, pooled = encoder_block_forward(x_nchw, params)
    jax.block_until_ready((x_full, pooled))

    assert x_full.shape == (N, Cout, H, W)
    assert pooled.shape == (N, Cout, H // 2, W // 2)

    # numerical check vs pure-JAX reference (reference includes the conv biases, which
    # training-mode BatchNorm cancels — validates dropping them in the kernel)
    x_nhwc = jnp.transpose(x_nchw, (0, 2, 3, 1))
    x_ref, p_ref = _reference_nhwc(x_nhwc, params)
    err_x = float(jnp.max(jnp.abs(jnp.transpose(x_full, (0, 2, 3, 1)) - x_ref)))
    err_p = float(jnp.max(jnp.abs(jnp.transpose(pooled, (0, 2, 3, 1)) - p_ref)))
    assert err_x < 5e-2 and err_p < 5e-2, (err_x, err_p)

    print("KERNEL_OK")
</pallas_src>

<mosaic_0001>
module attributes {stable_mosaic.version = 11 : i64} {
  func.func @_encoder_block_kernel(%arg0: memref<2x16x16x4xf32, #tpu.memory_space<vmem>>, %arg1: memref<36x8xf32, #tpu.memory_space<vmem>>, %arg2: memref<1x8xf32, #tpu.memory_space<vmem>>, %arg3: memref<1x8xf32, #tpu.memory_space<vmem>>, %arg4: memref<72x8xf32, #tpu.memory_space<vmem>>, %arg5: memref<1x8xf32, #tpu.memory_space<vmem>>, %arg6: memref<1x8xf32, #tpu.memory_space<vmem>>, %arg7: memref<4x8xf32, #tpu.memory_space<vmem>>, %arg8: memref<1x8xf32, #tpu.memory_space<vmem>>, %arg9: memref<2x16x16x8xf32, #tpu.memory_space<vmem>>, %arg10: memref<2x8x8x8xf32, #tpu.memory_space<vmem>>, %arg11: memref<2x18x18x4xf32, #tpu.memory_space<vmem>>, %arg12: memref<2x18x18x8xf32, #tpu.memory_space<vmem>>, %arg13: memref<512x36xf32, #tpu.memory_space<vmem>>, %arg14: memref<512x72xf32, #tpu.memory_space<vmem>>) attributes {dimension_semantics = [], scalar_prefetch = 0 : i64, scratch_operands = 4 : i64, tpu.core_type = #tpu.core_type<tc>} {
    %c0 = arith.constant 0 : index
    %c0_0 = arith.constant 0 : index
    %c0_1 = arith.constant 0 : index
    %c0_2 = arith.constant 0 : index
    %0 = vector.load %arg0[%c0, %c0_0, %c0_1, %c0_2] : memref<2x16x16x4xf32, #tpu.memory_space<vmem>>, vector<2x16x16x4xf32>
    %c0_3 = arith.constant 0 : index
    %c1 = arith.constant 1 : index
    %c1_4 = arith.constant 1 : index
    %c0_5 = arith.constant 0 : index
    %1 = vector.load %arg11[%c0_3, %c1, %c1_4, %c0_5] : memref<2x18x18x4xf32, #tpu.memory_space<vmem>>, vector<2x16x16x4xf32>
    tpu.vector_store %arg11[%c0_3, %c1, %c1_4, %c0_5], %0 {strides = array<i32>} : memref<2x18x18x4xf32, #tpu.memory_space<vmem>>, vector<2x16x16x4xf32>,
    %cst = arith.constant 0.000000e+00 : f32
    %2 = vector.broadcast %cst : f32 to vector<2x1x18x4xf32>
    %c0_6 = arith.constant 0 : index
    %c0_7 = arith.constant 0 : index
    %c0_8 = arith.constant 0 : index
    %c0_9 = arith.constant 0 : index
    %3 = vector.load %arg11[%c0_6, %c0_7, %c0_8, %c0_9] : memref<2x18x18x4xf32, #tpu.memory_space<vmem>>, vector<2x1x18x4xf32>
    tpu.vector_store %arg11[%c0_6, %c0_7, %c0_8, %c0_9], %2 {strides = array<i32>} : memref<2x18x18x4xf32, #tpu.memory_space<vmem>>, vector<2x1x18x4xf32>,
    %cst_10 = arith.constant 0.000000e+00 : f32
    %4 = vector.broadcast %cst_10 : f32 to vector<2x1x18x4xf32>
    %c0_11 = arith.constant 0 : index
    %c17 = arith.constant 17 : index
    %c0_12 = arith.constant 0 : index
    %c0_13 = arith.constant 0 : index
    %5 = vector.load %arg11[%c0_11, %c17, %c0_12, %c0_13] : memref<2x18x18x4xf32, #tpu.memory_space<vmem>>, vector<2x1x18x4xf32>
    tpu.vector_store %arg11[%c0_11, %c17, %c0_12, %c0_13], %4 {strides = array<i32>} : memref<2x18x18x4xf32, #tpu.memory_space<vmem>>, vector<2x1x18x4xf32>,
    %cst_14 = arith.constant 0.000000e+00 : f32
    %6 = vector.broadcast %cst_14 : f32 to vector<2x18x1x4xf32>
    %c0_15 = arith.constant 0 : index
    %c0_16 = arith.constant 0 : index
    %c0_17 = arith.constant 0 : index
    %c0_18 = arith.constant 0 : index
    %7 = vector.load %arg11[%c0_15, %c0_16, %c0_17, %c0_18] : memref<2x18x18x4xf32, #tpu.memory_space<vmem>>, vector<2x18x1x4xf32>
    tpu.vector_store %arg11[%c0_15, %c0_16, %c0_17, %c0_18], %6 {strides = array<i32>} : memref<2x18x18x4xf32, #tpu.memory_space<vmem>>, vector<2x18x1x4xf32>,
    %cst_19 = arith.constant 0.000000e+00 : f32
    %8 = vector.broadcast %cst_19 : f32 to vector<2x18x1x4xf32>
    %c0_20 = arith.constant 0 : index
    %c0_21 = arith.constant 0 : index
    %c17_22 = arith.constant 17 : index
    %c0_23 = arith.constant 0 : index
    %9 = vector.load %arg11[%c0_20, %c0_21, %c17_22, %c0_23] : memref<2x18x18x4xf32, #tpu.memory_space<vmem>>, vector<2x18x1x4xf32>
    tpu.vector_store %arg11[%c0_20, %c0_21, %c17_22, %c0_23], %8 {strides = array<i32>} : memref<2x18x18x4xf32, #tpu.memory_space<vmem>>, vector<2x18x1x4xf32>,
    %c0_24 = arith.constant 0 : index
    %c0_25 = arith.constant 0 : index
    %c0_26 = arith.constant 0 : index
    %c0_27 = arith.constant 0 : index
    %10 = vector.load %arg11[%c0_24, %c0_25, %c0_26, %c0_27] : memref<2x18x18x4xf32, #tpu.memory_space<vmem>>, vector<2x16x16x4xf32>
    %11 = vector.shape_cast %10 : vector<2x16x16x4xf32> to vector<512x4xf32>
    %c0_28 = arith.constant 0 : index
    %c0_29 = arith.constant 0 : index
    %12 = vector.load %arg13[%c0_28, %c0_29] : memref<512x36xf32, #tpu.memory_space<vmem>>, vector<512x4xf32>
    tpu.vector_store %arg13[%c0_28, %c0_29], %11 {strides = array<i32>} : memref<512x36xf32, #tpu.memory_space<vmem>>, vector<512x4xf32>,
    %c0_30 = arith.constant 0 : index
    %c0_31 = arith.constant 0 : index
    %c1_32 = arith.constant 1 : index
    %c0_33 = arith.constant 0 : index
    %13 = vector.load %arg11[%c0_30, %c0_31, %c1_32, %c0_33] : memref<2x18x18x4xf32, #tpu.memory_space<vmem>>, vector<2x16x16x4xf32>
    %14 = vector.shape_cast %13 : vector<2x16x16x4xf32> to vector<512x4xf32>
    %c0_34 = arith.constant 0 : index
    %c4 = arith.constant 4 : index
    %15 = vector.load %arg13[%c0_34, %c4] : memref<512x36xf32, #tpu.memory_space<vmem>>, vector<512x4xf32>
    tpu.vector_store %arg13[%c0_34, %c4], %14 {strides = array<i32>} : memref<512x36xf32, #tpu.memory_space<vmem>>, vector<512x4xf32>,
    %c0_35 = arith.constant 0 : index
    %c0_36 = arith.constant 0 : index
    %c2 = arith.constant 2 : index
    %c0_37 = arith.constant 0 : index
    %16 = vector.load %arg11[%c0_35, %c0_36, %c2, %c0_37] : memref<2x18x18x4xf32, #tpu.memory_space<vmem>>, vector<2x16x16x4xf32>
    %17 = vector.shape_cast %16 : vector<2x16x16x4xf32> to vector<512x4xf32>
    %c0_38 = arith.constant 0 : index
    %c8 = arith.constant 8 : index
    %18 = vector.load %arg13[%c0_38, %c8] : memref<512x36xf32, #tpu.memory_space<vmem>>, vector<512x4xf32>
    tpu.vector_store %arg13[%c0_38, %c8], %17 {strides = array<i32>} : memref<512x36xf32, #tpu.memory_space<vmem>>, vector<512x4xf32>,
    %c0_39 = arith.constant 0 : index
    %c1_40 = arith.constant 1 : index
    %c0_41 = arith.constant 0 : index
    %c0_42 = arith.constant 0 : index
    %19 = vector.load %arg11[%c0_39, %c1_40, %c0_41, %c0_42] : memref<2x18x18x4xf32, #tpu.memory_space<vmem>>, vector<2x16x16x4xf32>
    %20 = vector.shape_cast %19 : vector<2x16x16x4xf32> to vector<512x4xf32>
    %c0_43 = arith.constant 0 : index
    %c12 = arith.constant 12 : index
    %21 = vector.load %arg13[%c0_43, %c12] : memref<512x36xf32, #tpu.memory_space<vmem>>, vector<512x4xf32>
    tpu.vector_store %arg13[%c0_43, %c12], %20 {strides = array<i32>} : memref<512x36xf32, #tpu.memory_space<vmem>>, vector<512x4xf32>,
    %c0_44 = arith.constant 0 : index
    %c1_45 = arith.constant 1 : index
    %c1_46 = arith.constant 1 : index
    %c0_47 = arith.constant 0 : index
    %22 = vector.load %arg11[%c0_44, %c1_45, %c1_46, %c0_47] : memref<2x18x18x4xf32, #tpu.memory_space<vmem>>, vector<2x16x16x4xf32>
    %23 = vector.shape_cast %22 : vector<2x16x16x4xf32> to vector<512x4xf32>
    %c0_48 = arith.constant 0 : index
    %c16 = arith.constant 16 : index
    %24 = vector.load %arg13[%c0_48, %c16] : memref<512x36xf32, #tpu.memory_space<vmem>>, vector<512x4xf32>
    tpu.vector_store %arg13[%c0_48, %c16], %23 {strides = array<i32>} : memref<512x36xf32, #tpu.memory_space<vmem>>, vector<512x4xf32>,
    %c0_49 = arith.constant 0 : index
    %c1_50 = arith.constant 1 : index
    %c2_51 = arith.constant 2 : index
    %c0_52 = arith.constant 0 : index
    %25 = vector.load %arg11[%c0_49, %c1_50, %c2_51, %c0_52] : memref<2x18x18x4xf32, #tpu.memory_space<vmem>>, vector<2x16x16x4xf32>
    %26 = vector.shape_cast %25 : vector<2x16x16x4xf32> to vector<512x4xf32>
    %c0_53 = arith.constant 0 : index
    %c20 = arith.constant 20 : index
    %27 = vector.load %arg13[%c0_53, %c20] : memref<512x36xf32, #tpu.memory_space<vmem>>, vector<512x4xf32>
    tpu.vector_store %arg13[%c0_53, %c20], %26 {strides = array<i32>} : memref<512x36xf32, #tpu.memory_space<vmem>>, vector<512x4xf32>,
    %c0_54 = arith.constant 0 : index
    %c2_55 = arith.constant 2 : index
    %c0_56 = arith.constant 0 : index
    %c0_57 = arith.constant 0 : index
    %28 = vector.load %arg11[%c0_54, %c2_55, %c0_56, %c0_57] : memref<2x18x18x4xf32, #tpu.memory_space<vmem>>, vector<2x16x16x4xf32>
    %29 = vector.shape_cast %28 : vector<2x16x16x4xf32> to vector<512x4xf32>
    %c0_58 = arith.constant 0 : index
    %c24 = arith.constant 24 : index
    %30 = vector.load %arg13[%c0_58, %c24] : memref<512x36xf32, #tpu.memory_space<vmem>>, vector<512x4xf32>
    tpu.vector_store %arg13[%c0_58, %c24], %29 {strides = array<i32>} : memref<512x36xf32, #tpu.memory_space<vmem>>, vector<512x4xf32>,
    %c0_59 = arith.constant 0 : index
    %c2_60 = arith.constant 2 : index
    %c1_61 = arith.constant 1 : index
    %c0_62 = arith.constant 0 : index
    %31 = vector.load %arg11[%c0_59, %c2_60, %c1_61, %c0_62] : memref<2x18x18x4xf32, #tpu.memory_space<vmem>>, vector<2x16x16x4xf32>
    %32 = vector.shape_cast %31 : vector<2x16x16x4xf32> to vector<512x4xf32>
    %c0_63 = arith.constant 0 : index
    %c28 = arith.constant 28 : index
    %33 = vector.load %arg13[%c0_63, %c28] : memref<512x36xf32, #tpu.memory_space<vmem>>, vector<512x4xf32>
    tpu.vector_store %arg13[%c0_63, %c28], %32 {strides = array<i32>} : memref<512x36xf32, #tpu.memory_space<vmem>>, vector<512x4xf32>,
    %c0_64 = arith.constant 0 : index
    %c2_65 = arith.constant 2 : index
    %c2_66 = arith.constant 2 : index
    %c0_67 = arith.constant 0 : index
    %34 = vector.load %arg11[%c0_64, %c2_65, %c2_66, %c0_67] : memref<2x18x18x4xf32, #tpu.memory_space<vmem>>, vector<2x16x16x4xf32>
    %35 = vector.shape_cast %34 : vector<2x16x16x4xf32> to vector<512x4xf32>
    %c0_68 = arith.constant 0 : index
    %c32 = arith.constant 32 : index
    %36 = vector.load %arg13[%c0_68, %c32] : memref<512x36xf32, #tpu.memory_space<vmem>>, vector<512x4xf32>
    tpu.vector_store %arg13[%c0_68, %c32], %35 {strides = array<i32>} : memref<512x36xf32, #tpu.memory_space<vmem>>, vector<512x4xf32>,
    %c0_69 = arith.constant 0 : index
    %c0_70 = arith.constant 0 : index
    %37 = vector.load %arg13[%c0_69, %c0_70] : memref<512x36xf32, #tpu.memory_space<vmem>>, vector<512x36xf32>
    %c0_71 = arith.constant 0 : index
    %c0_72 = arith.constant 0 : index
    %38 = vector.load %arg1[%c0_71, %c0_72] : memref<36x8xf32, #tpu.memory_space<vmem>>, vector<36x8xf32>
    %cst_73 = arith.constant dense<0.000000e+00> : vector<512x8xf32>
    %39 = tpu.matmul %37, %38, %cst_73 {dimension_numbers = #tpu.dot_dimension_numbers<[1], [0], [0], [1], [0, 0, 1, 1], [], []>} : vector<512x36xf32>, vector<36x8xf32>, vector<512x8xf32> -> vector<512x8xf32>
    %cst_74 = arith.constant dense<0.000000e+00> : vector<8xf32>
    %40 = vector.multi_reduction <add>, %39, %cst_74 [0] : vector<512x8xf32> to vector<8xf32>
    %41 = vector.shape_cast %40 : vector<8xf32> to vector<1x8xf32>
    %42 = arith.mulf %39, %39 : vector<512x8xf32>
    %cst_75 = arith.constant dense<0.000000e+00> : vector<8xf32>
    %43 = vector.multi_reduction <add>, %42, %cst_75 [0] : vector<512x8xf32> to vector<8xf32>
    %44 = vector.shape_cast %43 : vector<8xf32> to vector<1x8xf32>
    %cst_76 = arith.constant 0.001953125 : f32
    %45 = vector.broadcast %cst_76 : f32 to vector<1x8xf32>
    %46 = arith.mulf %41, %45 : vector<1x8xf32>
    %cst_77 = arith.constant 0.001953125 : f32
    %47 = vector.broadcast %cst_77 : f32 to vector<1x8xf32>
    %48 = arith.mulf %44, %47 : vector<1x8xf32>
    %49 = arith.mulf %46, %46 : vector<1x8xf32>
    %50 = arith.subf %48, %49 : vector<1x8xf32>
    %c0_78 = arith.constant 0 : index
    %c0_79 = arith.constant 0 : index
    %51 = vector.load %arg2[%c0_78, %c0_79] : memref<1x8xf32, #tpu.memory_space<vmem>>, vector<1x8xf32>
    %cst_80 = arith.constant 9.99999974E-6 : f32
    %52 = vector.broadcast %cst_80 : f32 to vector<1x8xf32>
    %53 = arith.addf %50, %52 : vector<1x8xf32>
    %54 = math.rsqrt %53 : vector<1x8xf32>
    %55 = arith.mulf %51, %54 : vector<1x8xf32>
    %c0_81 = arith.constant 0 : index
    %c0_82 = arith.constant 0 : index
    %56 = vector.load %arg3[%c0_81, %c0_82] : memref<1x8xf32, #tpu.memory_space<vmem>>, vector<1x8xf32>
    %57 = arith.mulf %46, %55 : vector<1x8xf32>
    %58 = arith.subf %56, %57 : vector<1x8xf32>
    %59 = vector.broadcast %55 : vector<1x8xf32> to vector<512x8xf32>
    %60 = arith.mulf %39, %59 : vector<512x8xf32>
    %61 = vector.broadcast %58 : vector<1x8xf32> to vector<512x8xf32>
    %62 = arith.addf %60, %61 : vector<512x8xf32>
    %cst_83 = arith.constant 0.000000e+00 : f32
    %63 = vector.broadcast %cst_83 : f32 to vector<512x8xf32>
    %64 = arith.maximumf %62, %63 : vector<512x8xf32>
    %65 = vector.shape_cast %64 : vector<512x8xf32> to vector<2x16x16x8xf32>
    %c0_84 = arith.constant 0 : index
    %c1_85 = arith.constant 1 : index
    %c1_86 = arith.constant 1 : index
    %c0_87 = arith.constant 0 : index
    %66 = vector.load %arg12[%c0_84, %c1_85, %c1_86, %c0_87] : memref<2x18x18x8xf32, #tpu.memory_space<vmem>>, vector<2x16x16x8xf32>
    tpu.vector_store %arg12[%c0_84, %c1_85, %c1_86, %c0_87], %65 {strides = array<i32>} : memref<2x18x18x8xf32, #tpu.memory_space<vmem>>, vector<2x16x16x8xf32>,
    %cst_88 = arith.constant 0.000000e+00 : f32
    %67 = vector.broadcast %cst_88 : f32 to vector<2x1x18x8xf32>
    %c0_89 = arith.constant 0 : index
    %c0_90 = arith.constant 0 : index
    %c0_91 = arith.constant 0 : index
    %c0_92 = arith.constant 0 : index
    %68 = vector.load %arg12[%c0_89, %c0_90, %c0_91, %c0_92] : memref<2x18x18x8xf32, #tpu.memory_space<vmem>>, vector<2x1x18x8xf32>
    tpu.vector_store %arg12[%c0_89, %c0_90, %c0_91, %c0_92], %67 {strides = array<i32>} : memref<2x18x18x8xf32, #tpu.memory_space<vmem>>, vector<2x1x18x8xf32>,
    %cst_93 = arith.constant 0.000000e+00 : f32
    %69 = vector.broadcast %cst_93 : f32 to vector<2x1x18x8xf32>
    %c0_94 = arith.constant 0 : index
    %c17_95 = arith.constant 17 : index
    %c0_96 = arith.constant 0 : index
    %c0_97 = arith.constant 0 : index
    %70 = vector.load %arg12[%c0_94, %c17_95, %c0_96, %c0_97] : memref<2x18x18x8xf32, #tpu.memory_space<vmem>>, vector<2x1x18x8xf32>
    tpu.vector_store %arg12[%c0_94, %c17_95, %c0_96, %c0_97], %69 {strides = array<i32>} : memref<2x18x18x8xf32, #tpu.memory_space<vmem>>, vector<2x1x18x8xf32>,
    %cst_98 = arith.constant 0.000000e+00 : f32
    %71 = vector.broadcast %cst_98 : f32 to vector<2x18x1x8xf32>
    %c0_99 = arith.constant 0 : index
    %c0_100 = arith.constant 0 : index
    %c0_101 = arith.constant 0 : index
    %c0_102 = arith.constant 0 : index
    %72 = vector.load %arg12[%c0_99, %c0_100, %c0_101, %c0_102] : memref<2x18x18x8xf32, #tpu.memory_space<vmem>>, vector<2x18x1x8xf32>
    tpu.vector_store %arg12[%c0_99, %c0_100, %c0_101, %c0_102], %71 {strides = array<i32>} : memref<2x18x18x8xf32, #tpu.memory_space<vmem>>, vector<2x18x1x8xf32>,
    %cst_103 = arith.constant 0.000000e+00 : f32
    %73 = vector.broadcast %cst_103 : f32 to vector<2x18x1x8xf32>
    %c0_104 = arith.constant 0 : index
    %c0_105 = arith.constant 0 : index
    %c17_106 = arith.constant 17 : index
    %c0_107 = arith.constant 0 : index
    %74 = vector.load %arg12[%c0_104, %c0_105, %c17_106, %c0_107] : memref<2x18x18x8xf32, #tpu.memory_space<vmem>>, vector<2x18x1x8xf32>
    tpu.vector_store %arg12[%c0_104, %c0_105, %c17_106, %c0_107], %73 {strides = array<i32>} : memref<2x18x18x8xf32, #tpu.memory_space<vmem>>, vector<2x18x1x8xf32>,
    %c0_108 = arith.constant 0 : index
    %c0_109 = arith.constant 0 : index
    %c0_110 = arith.constant 0 : index
    %c0_111 = arith.constant 0 : index
    %75 = vector.load %arg12[%c0_108, %c0_109, %c0_110, %c0_111] : memref<2x18x18x8xf32, #tpu.memory_space<vmem>>, vector<2x16x16x8xf32>
    %76 = vector.shape_cast %75 : vector<2x16x16x8xf32> to vector<512x8xf32>
    %c0_112 = arith.constant 0 : index
    %c0_113 = arith.constant 0 : index
    %77 = vector.load %arg14[%c0_112, %c0_113] : memref<512x72xf32, #tpu.memory_space<vmem>>, vector<512x8xf32>
    tpu.vector_store %arg14[%c0_112, %c0_113], %76 {strides = array<i32>} : memref<512x72xf32, #tpu.memory_space<vmem>>, vector<512x8xf32>,
    %c0_114 = arith.constant 0 : index
    %c0_115 = arith.constant 0 : index
    %c1_116 = arith.constant 1 : index
    %c0_117 = arith.constant 0 : index
    %78 = vector.load %arg12[%c0_114, %c0_115, %c1_116, %c0_117] : memref<2x18x18x8xf32, #tpu.memory_space<vmem>>, vector<2x16x16x8xf32>
    %79 = vector.shape_cast %78 : vector<2x16x16x8xf32> to vector<512x8xf32>
    %c0_118 = arith.constant 0 : index
    %c8_119 = arith.constant 8 : index
    %80 = vector.load %arg14[%c0_118, %c8_119] : memref<512x72xf32, #tpu.memory_space<vmem>>, vector<512x8xf32>
    tpu.vector_store %arg14[%c0_118, %c8_119], %79 {strides = array<i32>} : memref<512x72xf32, #tpu.memory_space<vmem>>, vector<512x8xf32>,
    %c0_120 = arith.constant 0 : index
    %c0_121 = arith.constant 0 : index
    %c2_122 = arith.constant 2 : index
    %c0_123 = arith.constant 0 : index
    %81 = vector.load %arg12[%c0_120, %c0_121, %c2_122, %c0_123] : memref<2x18x18x8xf32, #tpu.memory_space<vmem>>, vector<2x16x16x8xf32>
    %82 = vector.shape_cast %81 : vector<2x16x16x8xf32> to vector<512x8xf32>
    %c0_124 = arith.constant 0 : index
    %c16_125 = arith.constant 16 : index
    %83 = vector.load %arg14[%c0_124, %c16_125] : memref<512x72xf32, #tpu.memory_space<vmem>>, vector<512x8xf32>
    tpu.vector_store %arg14[%c0_124, %c16_125], %82 {strides = array<i32>} : memref<512x72xf32, #tpu.memory_space<vmem>>, vector<512x8xf32>,
    %c0_126 = arith.constant 0 : index
    %c1_127 = arith.constant 1 : index
    %c0_128 = arith.constant 0 : index
    %c0_129 = arith.constant 0 : index
    %84 = vector.load %arg12[%c0_126, %c1_127, %c0_128, %c0_129] : memref<2x18x18x8xf32, #tpu.memory_space<vmem>>, vector<2x16x16x8xf32>
    %85 = vector.shape_cast %84 : vector<2x16x16x8xf32> to vector<512x8xf32>
    %c0_130 = arith.constant 0 : index
    %c24_131 = arith.constant 24 : index
    %86 = vector.load %arg14[%c0_130, %c24_131] : memref<512x72xf32, #tpu.memory_space<vmem>>, vector<512x8xf32>
    tpu.vector_store %arg14[%c0_130, %c24_131], %85 {strides = array<i32>} : memref<512x72xf32, #tpu.memory_space<vmem>>, vector<512x8xf32>,
    %c0_132 = arith.constant 0 : index
    %c1_133 = arith.constant 1 : index
    %c1_134 = arith.constant 1 : index
    %c0_135 = arith.constant 0 : index
    %87 = vector.load %arg12[%c0_132, %c1_133, %c1_134, %c0_135] : memref<2x18x18x8xf32, #tpu.memory_space<vmem>>, vector<2x16x16x8xf32>
    %88 = vector.shape_cast %87 : vector<2x16x16x8xf32> to vector<512x8xf32>
    %c0_136 = arith.constant 0 : index
    %c32_137 = arith.constant 32 : index
    %89 = vector.load %arg14[%c0_136, %c32_137] : memref<512x72xf32, #tpu.memory_space<vmem>>, vector<512x8xf32>
    tpu.vector_store %arg14[%c0_136, %c32_137], %88 {strides = array<i32>} : memref<512x72xf32, #tpu.memory_space<vmem>>, vector<512x8xf32>,
    %c0_138 = arith.constant 0 : index
    %c1_139 = arith.constant 1 : index
    %c2_140 = arith.constant 2 : index
    %c0_141 = arith.constant 0 : index
    %90 = vector.load %arg12[%c0_138, %c1_139, %c2_140, %c0_141] : memref<2x18x18x8xf32, #tpu.memory_space<vmem>>, vector<2x16x16x8xf32>
    %91 = vector.shape_cast %90 : vector<2x16x16x8xf32> to vector<512x8xf32>
    %c0_142 = arith.constant 0 : index
    %c40 = arith.constant 40 : index
    %92 = vector.load %arg14[%c0_142, %c40] : memref<512x72xf32, #tpu.memory_space<vmem>>, vector<512x8xf32>
    tpu.vector_store %arg14[%c0_142, %c40], %91 {strides = array<i32>} : memref<512x72xf32, #tpu.memory_space<vmem>>, vector<512x8xf32>,
    %c0_143 = arith.constant 0 : index
    %c2_144 = arith.constant 2 : index
    %c0_145 = arith.constant 0 : index
    %c0_146 = arith.constant 0 : index
    %93 = vector.load %arg12[%c0_143, %c2_144, %c0_145, %c0_146] : memref<2x18x18x8xf32, #tpu.memory_space<vmem>>, vector<2x16x16x8xf32>
    %94 = vector.shape_cast %93 : vector<2x16x16x8xf32> to vector<512x8xf32>
    %c0_147 = arith.constant 0 : index
    %c48 = arith.constant 48 : index
    %95 = vector.load %arg14[%c0_147, %c48] : memref<512x72xf32, #tpu.memory_space<vmem>>, vector<512x8xf32>
    tpu.vector_store %arg14[%c0_147, %c48], %94 {strides = array<i32>} : memref<512x72xf32, #tpu.memory_space<vmem>>, vector<512x8xf32>,
    %c0_148 = arith.constant 0 : index
    %c2_149 = arith.constant 2 : index
    %c1_150 = arith.constant 1 : index
    %c0_151 = arith.constant 0 : index
    %96 = vector.load %arg12[%c0_148, %c2_149, %c1_150, %c0_151] : memref<2x18x18x8xf32, #tpu.memory_space<vmem>>, vector<2x16x16x8xf32>
    %97 = vector.shape_cast %96 : vector<2x16x16x8xf32> to vector<512x8xf32>
    %c0_152 = arith.constant 0 : index
    %c56 = arith.constant 56 : index
    %98 = vector.load %arg14[%c0_152, %c56] : memref<512x72xf32, #tpu.memory_space<vmem>>, vector<512x8xf32>
    tpu.vector_store %arg14[%c0_152, %c56], %97 {strides = array<i32>} : memref<512x72xf32, #tpu.memory_space<vmem>>, vector<512x8xf32>,
    %c0_153 = arith.constant 0 : index
    %c2_154 = arith.constant 2 : index
    %c2_155 = arith.constant 2 : index
    %c0_156 = arith.constant 0 : index
    %99 = vector.load %arg12[%c0_153, %c2_154, %c2_155, %c0_156] : memref<2x18x18x8xf32, #tpu.memory_space<vmem>>, vector<2x16x16x8xf32>
    %100 = vector.shape_cast %99 : vector<2x16x16x8xf32> to vector<512x8xf32>
    %c0_157 = arith.constant 0 : index
    %c64 = arith.constant 64 : index
    %101 = vector.load %arg14[%c0_157, %c64] : memref<512x72xf32, #tpu.memory_space<vmem>>, vector<512x8xf32>
    tpu.vector_store %arg14[%c0_157, %c64], %100 {strides = array<i32>} : memref<512x72xf32, #tpu.memory_space<vmem>>, vector<512x8xf32>,
    %c0_158 = arith.constant 0 : index
    %c0_159 = arith.constant 0 : index
    %102 = vector.load %arg14[%c0_158, %c0_159] : memref<512x72xf32, #tpu.memory_space<vmem>>, vector<512x72xf32>
    %c0_160 = arith.constant 0 : index
    %c0_161 = arith.constant 0 : index
    %103 = vector.load %arg4[%c0_160, %c0_161] : memref<72x8xf32, #tpu.memory_space<vmem>>, vector<72x8xf32>
    %cst_162 = arith.constant dense<0.000000e+00> : vector<512x8xf32>
    %104 = tpu.matmul %102, %103, %cst_162 {dimension_numbers = #tpu.dot_dimension_numbers<[1], [0], [0], [1], [0, 0, 1, 1], [], []>} : vector<512x72xf32>, vector<72x8xf32>, vector<512x8xf32> -> vector<512x8xf32>
    %cst_163 = arith.constant dense<0.000000e+00> : vector<8xf32>
    %105 = vector.multi_reduction <add>, %104, %cst_163 [0] : vector<512x8xf32> to vector<8xf32>
    %106 = vector.shape_cast %105 : vector<8xf32> to vector<1x8xf32>
    %107 = arith.mulf %104, %104 : vector<512x8xf32>
    %cst_164 = arith.constant dense<0.000000e+00> : vector<8xf32>
    %108 = vector.multi_reduction <add>, %107, %cst_164 [0] : vector<512x8xf32> to vector<8xf32>
    %109 = vector.shape_cast %108 : vector<8xf32> to vector<1x8xf32>
    %cst_165 = arith.constant 0.001953125 : f32
    %110 = vector.broadcast %cst_165 : f32 to vector<1x8xf32>
    %111 = arith.mulf %106, %110 : vector<1x8xf32>
    %cst_166 = arith.constant 0.001953125 : f32
    %112 = vector.broadcast %cst_166 : f32 to vector<1x8xf32>
    %113 = arith.mulf %109, %112 : vector<1x8xf32>
    %114 = arith.mulf %111, %111 : vector<1x8xf32>
    %115 = arith.subf %113, %114 : vector<1x8xf32>
    %c0_167 = arith.constant 0 : index
    %c0_168 = arith.constant 0 : index
    %116 = vector.load %arg5[%c0_167, %c0_168] : memref<1x8xf32, #tpu.memory_space<vmem>>, vector<1x8xf32>
    %cst_169 = arith.constant 9.99999974E-6 : f32
    %117 = vector.broadcast %cst_169 : f32 to vector<1x8xf32>
    %118 = arith.addf %115, %117 : vector<1x8xf32>
    %119 = math.rsqrt %118 : vector<1x8xf32>
    %120 = arith.mulf %116, %119 : vector<1x8xf32>
    %c0_170 = arith.constant 0 : index
    %c0_171 = arith.constant 0 : index
    %121 = vector.load %arg6[%c0_170, %c0_171] : memref<1x8xf32, #tpu.memory_space<vmem>>, vector<1x8xf32>
    %122 = arith.mulf %111, %120 : vector<1x8xf32>
    %123 = arith.subf %121, %122 : vector<1x8xf32>
    %124 = vector.broadcast %120 : vector<1x8xf32> to vector<512x8xf32>
    %125 = arith.mulf %104, %124 : vector<512x8xf32>
    %126 = vector.broadcast %123 : vector<1x8xf32> to vector<512x8xf32>
    %127 = arith.addf %125, %126 : vector<512x8xf32>
    %cst_172 = arith.constant 0.000000e+00 : f32
    %128 = vector.broadcast %cst_172 : f32 to vector<512x8xf32>
    %129 = arith.maximumf %127, %128 : vector<512x8xf32>
    %130 = vector.shape_cast %0 : vector<2x16x16x4xf32> to vector<512x4xf32>
    %c0_173 = arith.constant 0 : index
    %c0_174 = arith.constant 0 : index
    %131 = vector.load %arg7[%c0_173, %c0_174] : memref<4x8xf32, #tpu.memory_space<vmem>>, vector<4x8xf32>
    %cst_175 = arith.constant dense<0.000000e+00> : vector<512x8xf32>
    %132 = tpu.matmul %130, %131, %cst_175 {dimension_numbers = #tpu.dot_dimension_numbers<[1], [0], [0], [1], [0, 0, 1, 1], [], []>} : vector<512x4xf32>, vector<4x8xf32>, vector<512x8xf32> -> vector<512x8xf32>
    %c0_176 = arith.constant 0 : index
    %c0_177 = arith.constant 0 : index
    %133 = vector.load %arg8[%c0_176, %c0_177] : memref<1x8xf32, #tpu.memory_space<vmem>>, vector<1x8xf32>
    %134 = vector.broadcast %133 : vector<1x8xf32> to vector<512x8xf32>
    %135 = arith.addf %132, %134 : vector<512x8xf32>
    %136 = arith.addf %129, %135 : vector<512x8xf32>
    %137 = vector.shape_cast %136 : vector<512x8xf32> to vector<2x16x16x8xf32>
    %c0_178 = arith.constant 0 : index
    %c0_179 = arith.constant 0 : index
    %c0_180 = arith.constant 0 : index
    %c0_181 = arith.constant 0 : index
    %138 = vector.load %arg9[%c0_178, %c0_179, %c0_180, %c0_181] : memref<2x16x16x8xf32, #tpu.memory_space<vmem>>, vector<2x16x16x8xf32>
    tpu.vector_store %arg9[%c0_178, %c0_179, %c0_180, %c0_181], %137 {strides = array<i32>} : memref<2x16x16x8xf32, #tpu.memory_space<vmem>>, vector<2x16x16x8xf32>,
    %c0_182 = arith.constant 0 : index
    %c0_183 = arith.constant 0 : index
    %c0_184 = arith.constant 0 : index
    %c0_185 = arith.constant 0 : index
    %139 = tpu.strided_load %arg9[%c0_182, %c0_183, %c0_184, %c0_185] {strides = array<i32: 1, 2, 2, 1>} : memref<2x16x16x8xf32, #tpu.memory_space<vmem>>, vector<2x8x8x8xf32>
    %c0_186 = arith.constant 0 : index
    %c0_187 = arith.constant 0 : index
    %c1_188 = arith.constant 1 : index
    %c0_189 = arith.constant 0 : index
    %140 = tpu.strided_load %arg9[%c0_186, %c0_187, %c1_188, %c0_189] {strides = array<i32: 1, 2, 2, 1>} : memref<2x16x16x8xf32, #tpu.memory_space<vmem>>, vector<2x8x8x8xf32>
    %141 = arith.maximumf %139, %140 : vector<2x8x8x8xf32>
    %c0_190 = arith.constant 0 : index
    %c1_191 = arith.constant 1 : index
    %c0_192 = arith.constant 0 : index
    %c0_193 = arith.constant 0 : index
    %142 = tpu.strided_load %arg9[%c0_190, %c1_191, %c0_192, %c0_193] {strides = array<i32: 1, 2, 2, 1>} : memref<2x16x16x8xf32, #tpu.memory_space<vmem>>, vector<2x8x8x8xf32>
    %c0_194 = arith.constant 0 : index
    %c1_195 = arith.constant 1 : index
    %c1_196 = arith.constant 1 : index
    %c0_197 = arith.constant 0 : index
    %143 = tpu.strided_load %arg9[%c0_194, %c1_195, %c1_196, %c0_197] {strides = array<i32: 1, 2, 2, 1>} : memref<2x16x16x8xf32, #tpu.memory_space<vmem>>, vector<2x8x8x8xf32>
    %144 = arith.maximumf %142, %143 : vector<2x8x8x8xf32>
    %145 = arith.maximumf %141, %144 : vector<2x8x8x8xf32>
    %c0_198 = arith.constant 0 : index
    %c0_199 = arith.constant 0 : index
    %c0_200 = arith.constant 0 : index
    %c0_201 = arith.constant 0 : index
    %146 = vector.load %arg10[%c0_198, %c0_199, %c0_200, %c0_201] : memref<2x8x8x8xf32, #tpu.memory_space<vmem>>, vector<2x8x8x8xf32>
    tpu.vector_store %arg10[%c0_198, %c0_199, %c0_200, %c0_201], %145 {strides = array<i32>} : memref<2x8x8x8xf32, #tpu.memory_space<vmem>>, vector<2x8x8x8xf32>,
    return
  }
}

</mosaic_0001>

<llo_original>
// kernel: encoder_block_forward.1
$region0: #{encoder_block_forward.1}
  #allocation0 [shape = 'u32[]', space=smem, size = 0x4, offset = 0x4, fixed_abs, tag = 'smem constant byte address 0x4 - core index']
  #allocation1 [shape = 'u32[144,128]{1,0:T(1,128)}', space=vmem, size = 0x12000, scoped, tag = 'internal scratch']
  #allocation2 [shape = 'f32[2,18,18,4]{3,2,1,0:T(8,128)}', space=vmem, size = 0x6c000, scoped, tag = 'scratch operand']
  #allocation3 [shape = 'f32[2,18,18,8]{3,2,1,0:T(8,128)}', space=vmem, size = 0x6c000, scoped, tag = 'scratch operand']
  #allocation4 [shape = 'f32[512,36]{1,0:T(8,128)}', space=vmem, size = 0x40000, scoped, tag = 'scratch operand']
  #allocation5 [shape = 'f32[512,72]{1,0:T(8,128)}', space=vmem, size = 0x40000, scoped, tag = 'scratch operand']
  %s0 = inlined_call_operand.vmem [shape: f32[2,16,16,4], index: 0, kind: input, shape index: {}]
  %s1 = inlined_call_operand.vmem [shape: f32[36,8], index: 1, kind: input, shape index: {}]
  %s2 = inlined_call_operand.vmem [shape: f32[1,8], index: 2, kind: input, shape index: {}]
  %s3 = inlined_call_operand.vmem [shape: f32[1,8], index: 3, kind: input, shape index: {}]
  %s4 = inlined_call_operand.vmem [shape: f32[72,8], index: 4, kind: input, shape index: {}]
  %s5 = inlined_call_operand.vmem [shape: f32[1,8], index: 5, kind: input, shape index: {}]
  %s6 = inlined_call_operand.vmem [shape: f32[1,8], index: 6, kind: input, shape index: {}]
  %s7 = inlined_call_operand.vmem [shape: f32[4,8], index: 7, kind: input, shape index: {}]
  %s8 = inlined_call_operand.vmem [shape: f32[1,8], index: 8, kind: input, shape index: {}]
  %s9 = inlined_call_operand.vmem [shape: f32[2,16,16,8], index: 9, kind: output, shape index: {0}]
  %s10 = inlined_call_operand.vmem [shape: f32[2,8,8,8], index: 10, kind: output, shape index: {1}]
  %11 = xla_tuple %s9, %s10
  %s12 = sld [smem:[#allocation0]]
  $region54: #{encoder_block_forward.1} parent=0
    _
  %s14 = ssub.s32 1, %s12
  %s15 = scalar_select 0, %s14, %s12
  // Predicated region
  $region2: #{encoder_block_forward.1} parent=0 // pred_check
    _
  $region3: #{encoder_block_forward.1} parent=0 // pred_check_branch
    %17 = sbr.rel (0) target = $region5
  $region4: #{encoder_block_forward.1} parent=0 // pred_region
    _
  $region5: #{encoder_block_forward.1} parent=0 // pred_fallthru
    _
  // Predicated region
  $region6: #{encoder_block_forward.1} parent=0 // pred_check
    _
  $region7: #{encoder_block_forward.1} parent=0 // pred_check_branch
    %19 = sbr.rel (0) target = $region9
  $region8: #{encoder_block_forward.1} parent=0 // pred_region
    _
  $region9: #{encoder_block_forward.1} parent=0 // pred_fallthru
    _
  // Predicated region
  $region10: #{encoder_block_forward.1} parent=0 // pred_check
    _
  $region11: #{encoder_block_forward.1} parent=0 // pred_check_branch
    %21 = sbr.rel (0) target = $region13
  $region12: #{encoder_block_forward.1} parent=0 // pred_region
    _
  $region13: #{encoder_block_forward.1} parent=0 // pred_fallthru
    _
  // Predicated region
  $region14: #{encoder_block_forward.1} parent=0 // pred_check
    _
  $region15: #{encoder_block_forward.1} parent=0 // pred_check_branch
    %23 = sbr.rel (0) target = $region17
  $region16: #{encoder_block_forward.1} parent=0 // pred_region
    _
  $region17: #{encoder_block_forward.1} parent=0 // pred_fallthru
    _
  // Predicated region
  $region18: #{encoder_block_forward.1} parent=0 // pred_check
    _
  $region19: #{encoder_block_forward.1} parent=0 // pred_check_branch
    %25 = sbr.rel (0) target = $region21
  $region20: #{encoder_block_forward.1} parent=0 // pred_region
    _
  $region21: #{encoder_block_forward.1} parent=0 // pred_fallthru
    _
  // Predicated region
  $region22: #{encoder_block_forward.1} parent=0 // pred_check
    _
  $region23: #{encoder_block_forward.1} parent=0 // pred_check_branch
    %27 = sbr.rel (0) target = $region25
  $region24: #{encoder_block_forward.1} parent=0 // pred_region
    _
  $region25: #{encoder_block_forward.1} parent=0 // pred_fallthru
    _
  // Predicated region
  $region26: #{encoder_block_forward.1} parent=0 // pred_check
    _
  $region27: #{encoder_block_forward.1} parent=0 // pred_check_branch
    %29 = sbr.rel (0) target = $region29
  $region28: #{encoder_block_forward.1} parent=0 // pred_region
    _
  $region29: #{encoder_block_forward.1} parent=0 // pred_fallthru
    _
  // Predicated region
  $region30: #{encoder_block_forward.1} parent=0 // pred_check
    _
  $region31: #{encoder_block_forward.1} parent=0 // pred_check_branch
    %31 = sbr.rel (0) target = $region33
  $region32: #{encoder_block_forward.1} parent=0 // pred_region
    _
  $region33: #{encoder_block_forward.1} parent=0 // pred_fallthru
    _
  // Predicated region
  $region34: #{encoder_block_forward.1} parent=0 // pred_check
    _
  $region35: #{encoder_block_forward.1} parent=0 // pred_check_branch
    %33 = sbr.rel (0) target = $region37
  $region36: #{encoder_block_forward.1} parent=0 // pred_region
    _
  $region37: #{encoder_block_forward.1} parent=0 // pred_fallthru
    _
  %v34 = vld [vmem:[%s0] sm:$0xff]
  %v35 = vld [vmem:[%s0 + $0x8] sm:$0xff]
  %v36 = vld [vmem:[%s0 + $0x10] sm:$0xff]
  %v37 = vld [vmem:[%s0 + $0x18] sm:$0xff]
  %v38 = vld [vmem:[%s0 + $0x20] sm:$0xff]
  %v39 = vld [vmem:[%s0 + $0x28] sm:$0xff]
  %v40 = vld [vmem:[%s0 + $0x30] sm:$0xff]
  %v41 = vld [vmem:[%s0 + $0x38] sm:$0xff]
  %v42 = vld [vmem:[%s0 + $0x40] sm:$0xff]
  %v43 = vld [vmem:[%s0 + $0x48] sm:$0xff]
  %v44 = vld [vmem:[%s0 + $0x50] sm:$0xff]
  %v45 = vld [vmem:[%s0 + $0x58] sm:$0xff]
  %v46 = vld [vmem:[%s0 + $0x60] sm:$0xff]
  %v47 = vld [vmem:[%s0 + $0x68] sm:$0xff]
  %v48 = vld [vmem:[%s0 + $0x70] sm:$0xff]
  %v49 = vld [vmem:[%s0 + $0x78] sm:$0xff]
  %v50 = vld [vmem:[%s0 + $0x80] sm:$0xff]
  %v51 = vld [vmem:[%s0 + $0x88] sm:$0xff]
  %v52 = vld [vmem:[%s0 + $0x90] sm:$0xff]
  %v53 = vld [vmem:[%s0 + $0x98] sm:$0xff]
  %v54 = vld [vmem:[%s0 + $0xa0] sm:$0xff]
  %v55 = vld [vmem:[%s0 + $0xa8] sm:$0xff]
  %v56 = vld [vmem:[%s0 + $0xb0] sm:$0xff]
  %v57 = vld [vmem:[%s0 + $0xb8] sm:$0xff]
  %v58 = vld [vmem:[%s0 + $0xc0] sm:$0xff]
  %v59 = vld [vmem:[%s0 + $0xc8] sm:$0xff]
  %v60 = vld [vmem:[%s0 + $0xd0] sm:$0xff]
  %v61 = vld [vmem:[%s0 + $0xd8] sm:$0xff]
  %v62 = vld [vmem:[%s0 + $0xe0] sm:$0xff]
  %v63 = vld [vmem:[%s0 + $0xe8] sm:$0xff]
  %v64 = vld [vmem:[%s0 + $0xf0] sm:$0xff]
  %v65 = vld [vmem:[%s0 + $0xf8] sm:$0xff]
  %v66 = vld [vmem:[%s0 + $0x100] sm:$0xff]
  %v67 = vld [vmem:[%s0 + $0x108] sm:$0xff]
  %v68 = vld [vmem:[%s0 + $0x110] sm:$0xff]
  %v69 = vld [vmem:[%s0 + $0x118] sm:$0xff]
  %v70 = vld [vmem:[%s0 + $0x120] sm:$0xff]
  %v71 = vld [vmem:[%s0 + $0x128] sm:$0xff]
  %v72 = vld [vmem:[%s0 + $0x130] sm:$0xff]
  %v73 = vld [vmem:[%s0 + $0x138] sm:$0xff]
  %v74 = vld [vmem:[%s0 + $0x140] sm:$0xff]
  %v75 = vld [vmem:[%s0 + $0x148] sm:$0xff]
  %v76 = vld [vmem:[%s0 + $0x150] sm:$0xff]
  %v77 = vld [vmem:[%s0 + $0x158] sm:$0xff]
  %v78 = vld [vmem:[%s0 + $0x160] sm:$0xff]
  %v79 = vld [vmem:[%s0 + $0x168] sm:$0xff]
  %v80 = vld [vmem:[%s0 + $0x170] sm:$0xff]
  %v81 = vld [vmem:[%s0 + $0x178] sm:$0xff]
  %v82 = vld [vmem:[%s0 + $0x180] sm:$0xff]
  %v83 = vld [vmem:[%s0 + $0x188] sm:$0xff]
  %v84 = vld [vmem:[%s0 + $0x190] sm:$0xff]
  %v85 = vld [vmem:[%s0 + $0x198] sm:$0xff]
  %v86 = vld [vmem:[%s0 + $0x1a0] sm:$0xff]
  %v87 = vld [vmem:[%s0 + $0x1a8] sm:$0xff]
  %v88 = vld [vmem:[%s0 + $0x1b0] sm:$0xff]
  %v89 = vld [vmem:[%s0 + $0x1b8] sm:$0xff]
  %v90 = vld [vmem:[%s0 + $0x1c0] sm:$0xff]
  %v91 = vld [vmem:[%s0 + $0x1c8] sm:$0xff]
  %v92 = vld [vmem:[%s0 + $0x1d0] sm:$0xff]
  %v93 = vld [vmem:[%s0 + $0x1d8] sm:$0xff]
  %v94 = vld [vmem:[%s0 + $0x1e0] sm:$0xff]
  %v95 = vld [vmem:[%s0 + $0x1e8] sm:$0xff]
  %v96 = vld [vmem:[%s0 + $0x1f0] sm:$0xff]
  %v97 = vld [vmem:[%s0 + $0x1f8] sm:$0xff]
  %s98 = scalar_lea.vmem [#allocation2], 24
  %vm99 = vcmask 31744
  %100 = vst.msk [vmem:[%s98 + $0x1] sm:$0xff] %vm99, %v34
  %101 = vst.msk [vmem:[%s98 + $0x9] sm:$0xff] %vm99, %v35
  %102 = vst.msk [vmem:[%s98 + $0x19] sm:$0xff] %vm99, %v36
  %103 = vst.msk [vmem:[%s98 + $0x21] sm:$0xff] %vm99, %v37
  %104 = vst.msk [vmem:[%s98 + $0x31] sm:$0xff] %vm99, %v38
  %105 = vst.msk [vmem:[%s98 + $0x39] sm:$0xff] %vm99, %v39
  %106 = vst.msk [vmem:[%s98 + $0x49] sm:$0xff] %vm99, %v40
  %107 = vst.msk [vmem:[%s98 + $0x51] sm:$0xff] %vm99, %v41
  %108 = vst.msk [vmem:[%s98 + $0x61] sm:$0xff] %vm99, %v42
  %109 = vst.msk [vmem:[%s98 + $0x69] sm:$0xff] %vm99, %v43
  %110 = vst.msk [vmem:[%s98 + $0x79] sm:$0xff] %vm99, %v44
  %111 = vst.msk [vmem:[%s98 + $0x81] sm:$0xff] %vm99, %v45
  %112 = vst.msk [vmem:[%s98 + $0x91] sm:$0xff] %vm99, %v46
  %113 = vst.msk [vmem:[%s98 + $0x99] sm:$0xff] %vm99, %v47
  %114 = vst.msk [vmem:[%s98 + $0xa9] sm:$0xff] %vm99, %v48
  %115 = vst.msk [vmem:[%s98 + $0xb1] sm:$0xff] %vm99, %v49
  %116 = vst.msk [vmem:[%s98 + $0xc1] sm:$0xff] %vm99, %v50
  %117 = vst.msk [vmem:[%s98 + $0xc9] sm:$0xff] %vm99, %v51
  %118 = vst.msk [vmem:[%s98 + $0xd9] sm:$0xff] %vm99, %v52
  %119 = vst.msk [vmem:[%s98 + $0xe1] sm:$0xff] %vm99, %v53
  %120 = vst.msk [vmem:[%s98 + $0xf1] sm:$0xff] %vm99, %v54
  %121 = vst.msk [vmem:[%s98 + $0xf9] sm:$0xff] %vm99, %v55
  %122 = vst.msk [vmem:[%s98 + $0x109] sm:$0xff] %vm99, %v56
  %123 = vst.msk [vmem:[%s98 + $0x111] sm:$0xff] %vm99, %v57
  %124 = vst.msk [vmem:[%s98 + $0x121] sm:$0xff] %vm99, %v58
  %125 = vst.msk [vmem:[%s98 + $0x129] sm:$0xff] %vm99, %v59
  %126 = vst.msk [vmem:[%s98 + $0x139] sm:$0xff] %vm99, %v60
  %127 = vst.msk [vmem:[%s98 + $0x141] sm:$0xff] %vm99, %v61
  %128 = vst.msk [vmem:[%s98 + $0x151] sm:$0xff] %vm99, %v62
  %129 = vst.msk [vmem:[%s98 + $0x159] sm:$0xff] %vm99, %v63
  %130 = vst.msk [vmem:[%s98 + $0x169] sm:$0xff] %vm99, %v64
  %131 = vst.msk [vmem:[%s98 + $0x171] sm:$0xff] %vm99, %v65
  %132 = vst.msk [vmem:[%s98 + $0x1b1] sm:$0xff] %vm99, %v66
  %133 = vst.msk [vmem:[%s98 + $0x1b9] sm:$0xff] %vm99, %v67
  %134 = vst.msk [vmem:[%s98 + $0x1c9] sm:$0xff] %vm99, %v68
  %135 = vst.msk [vmem:[%s98 + $0x1d1] sm:$0xff] %vm99, %v69
  %136 = vst.msk [vmem:[%s98 + $0x1e1] sm:$0xff] %vm99, %v70
  %137 = vst.msk [vmem:[%s98 + $0x1e9] sm:$0xff] %vm99, %v71
  %138 = vst.msk [vmem:[%s98 + $0x1f9] sm:$0xff] %vm99, %v72
  %139 = vst.msk [vmem:[%s98 + $0x201] sm:$0xff] %vm99, %v73
  %140 = vst.msk [vmem:[%s98 + $0x211] sm:$0xff] %vm99, %v74
  %141 = vst.msk [vmem:[%s98 + $0x219] sm:$0xff] %vm99, %v75
  %142 = vst.msk [vmem:[%s98 + $0x229] sm:$0xff] %vm99, %v76
  %143 = vst.msk [vmem:[%s98 + $0x231] sm:$0xff] %vm99, %v77
  %144 = vst.msk [vmem:[%s98 + $0x241] sm:$0xff] %vm99, %v78
  %145 = vst.msk [vmem:[%s98 + $0x249] sm:$0xff] %vm99, %v79
  %146 = vst.msk [vmem:[%s98 + $0x259] sm:$0xff] %vm99, %v80
  %147 = vst.msk [vmem:[%s98 + $0x261] sm:$0xff] %vm99, %v81
  %148 = vst.msk [vmem:[%s98 + $0x271] sm:$0xff] %vm99, %v82
  %149 = vst.msk [vmem:[%s98 + $0x279] sm:$0xff] %vm99, %v83
  %150 = vst.msk [vmem:[%s98 + $0x289] sm:$0xff] %vm99, %v84
  %151 = vst.msk [vmem:[%s98 + $0x291] sm:$0xff] %vm99, %v85
  %152 = vst.msk [vmem:[%s98 + $0x2a1] sm:$0xff] %vm99, %v86
  %153 = vst.msk [vmem:[%s98 + $0x2a9] sm:$0xff] %vm99, %v87
  %154 = vst.msk [vmem:[%s98 + $0x2b9] sm:$0xff] %vm99, %v88
  %155 = vst.msk [vmem:[%s98 + $0x2c1] sm:$0xff] %vm99, %v89
  %156 = vst.msk [vmem:[%s98 + $0x2d1] sm:$0xff] %vm99, %v90
  %157 = vst.msk [vmem:[%s98 + $0x2d9] sm:$0xff] %vm99, %v91
  %158 = vst.msk [vmem:[%s98 + $0x2e9] sm:$0xff] %vm99, %v92
  %159 = vst.msk [vmem:[%s98 + $0x2f1] sm:$0xff] %vm99, %v93
  %160 = vst.msk [vmem:[%s98 + $0x301] sm:$0xff] %vm99, %v94
  %161 = vst.msk [vmem:[%s98 + $0x309] sm:$0xff] %vm99, %v95
  %162 = vst.msk [vmem:[%s98 + $0x319] sm:$0xff] %vm99, %v96
  %163 = vst.msk [vmem:[%s98 + $0x321] sm:$0xff] %vm99, %v97
  %164 = vst.msk [vmem:[#allocation2] sm:$0xff] %vm99, 0.0
  %165 = vst.msk [vmem:[#allocation2 + $0x8] sm:$0xff] %vm99, 0.0
  %vm166 = vcmask 25600
  %167 = vst.msk [vmem:[#allocation2 + $0x10] sm:$0x3] %vm166, 0.0
  %168 = vst.msk [vmem:[#allocation2 + $0x1b0] sm:$0xff] %vm99, 0.0
  %169 = vst.msk [vmem:[#allocation2 + $0x1b8] sm:$0xff] %vm99, 0.0
  %170 = vst.msk [vmem:[#allocation2 + $0x1c0] sm:$0x3] %vm166, 0.0
  %s171 = scalar_lea.vmem [#allocation2], 408
  %172 = vst.msk [vmem:[%s171] sm:$0xff] %vm99, 0.0
  %173 = vst.msk [vmem:[%s171 + $0x8] sm:$0xff] %vm99, 0.0
  %174 = vst.msk [vmem:[%s171 + $0x10] sm:$0x3] %vm166, 0.0
  %175 = vst.msk [vmem:[%s171 + $0x1b0] sm:$0xff] %vm99, 0.0
  %176 = vst.msk [vmem:[%s171 + $0x1b8] sm:$0xff] %vm99, 0.0
  %177 = vst.msk [vmem:[%s171 + $0x1c0] sm:$0x3] %vm166, 0.0
  %vm178 = vcmask 24576
  %179 = vst.msk [vmem:[#allocation2] sm:$0x1] %vm178, 0.0
  %180 = vst.msk [vmem:[#allocation2 + $0x18] sm:$0x1] %vm178, 0.0
  %181 = vst.msk [vmem:[#allocation2 + $0x30] sm:$0x1] %vm178, 0.0
  %182 = vst.msk [vmem:[#allocation2 + $0x48] sm:$0x1] %vm178, 0.0
  %183 = vst.msk [vmem:[#allocation2 + $0x60] sm:$0x1] %vm178, 0.0
  %184 = vst.msk [vmem:[#allocation2 + $0x78] sm:$0x1] %vm178, 0.0
  %185 = vst.msk [vmem:[#allocation2 + $0x90] sm:$0x1] %vm178, 0.0
  %186 = vst.msk [vmem:[#allocation2 + $0xa8] sm:$0x1] %vm178, 0.0
  %187 = vst.msk [vmem:[#allocation2 + $0xc0] sm:$0x1] %vm178, 0.0
  %188 = vst.msk [vmem:[#allocation2 + $0xd8] sm:$0x1] %vm178, 0.0
  %189 = vst.msk [vmem:[#allocation2 + $0xf0] sm:$0x1] %vm178, 0.0
  %190 = vst.msk [vmem:[#allocation2 + $0x108] sm:$0x1] %vm178, 0.0
  %191 = vst.msk [vmem:[#allocation2 + $0x120] sm:$0x1] %vm178, 0.0
  %192 = vst.msk [vmem:[#allocation2 + $0x138] sm:$0x1] %vm178, 0.0
  %193 = vst.msk [vmem:[#allocation2 + $0x150] sm:$0x1] %vm178, 0.0
  %194 = vst.msk [vmem:[#allocation2 + $0x168] sm:$0x1] %vm178, 0.0
  %195 = vst.msk [vmem:[#allocation2 + $0x180] sm:$0x1] %vm178, 0.0
  %196 = vst.msk [vmem:[#allocation2 + $0x198] sm:$0x1] %vm178, 0.0
  %197 = vst.msk [vmem:[#allocation2 + $0x1b0] sm:$0x1] %vm178, 0.0
  %198 = vst.msk [vmem:[#allocation2 + $0x1c8] sm:$0x1] %vm178, 0.0
  %199 = vst.msk [vmem:[#allocation2 + $0x1e0] sm:$0x1] %vm178, 0.0
  %200 = vst.msk [vmem:[#allocation2 + $0x1f8] sm:$0x1] %vm178, 0.0
  %201 = vst.msk [vmem:[#allocation2 + $0x210] sm:$0x1] %vm178, 0.0
  %202 = vst.msk [vmem:[#allocation2 + $0x228] sm:$0x1] %vm178, 0.0
  %203 = vst.msk [vmem:[#allocation2 + $0x240] sm:$0x1] %vm178, 0.0
  %204 = vst.msk [vmem:[#allocation2 + $0x258] sm:$0x1] %vm178, 0.0
  %205 = vst.msk [vmem:[#allocation2 + $0x270] sm:$0x1] %vm178, 0.0
  %206 = vst.msk [vmem:[#allocation2 + $0x288] sm:$0x1] %vm178, 0.0
  %207 = vst.msk [vmem:[#allocation2 + $0x2a0] sm:$0x1] %vm178, 0.0
  %208 = vst.msk [vmem:[#allocation2 + $0x2b8] sm:$0x1] %vm178, 0.0
  %209 = vst.msk [vmem:[#allocation2 + $0x2d0] sm:$0x1] %vm178, 0.0
  %210 = vst.msk [vmem:[#allocation2 + $0x2e8] sm:$0x1] %vm178, 0.0
  %211 = vst.msk [vmem:[#allocation2 + $0x300] sm:$0x1] %vm178, 0.0
  %212 = vst.msk [vmem:[#allocation2 + $0x318] sm:$0x1] %vm178, 0.0
  %213 = vst.msk [vmem:[#allocation2 + $0x330] sm:$0x1] %vm178, 0.0
  %214 = vst.msk [vmem:[#allocation2 + $0x348] sm:$0x1] %vm178, 0.0
  %215 = vst.msk [vmem:[#allocation2 + $0x11] sm:$0x1] %vm178, 0.0
  %216 = vst.msk [vmem:[#allocation2 + $0x29] sm:$0x1] %vm178, 0.0
  %217 = vst.msk [vmem:[#allocation2 + $0x41] sm:$0x1] %vm178, 0.0
  %218 = vst.msk [vmem:[#allocation2 + $0x59] sm:$0x1] %vm178, 0.0
  %219 = vst.msk [vmem:[#allocation2 + $0x71] sm:$0x1] %vm178, 0.0
  %220 = vst.msk [vmem:[#allocation2 + $0x89] sm:$0x1] %vm178, 0.0
  %221 = vst.msk [vmem:[#allocation2 + $0xa1] sm:$0x1] %vm178, 0.0
  %222 = vst.msk [vmem:[#allocation2 + $0xb9] sm:$0x1] %vm178, 0.0
  %223 = vst.msk [vmem:[#allocation2 + $0xd1] sm:$0x1] %vm178, 0.0
  %224 = vst.msk [vmem:[#allocation2 + $0xe9] sm:$0x1] %vm178, 0.0
  %225 = vst.msk [vmem:[#allocation2 + $0x101] sm:$0x1] %vm178, 0.0
  %226 = vst.msk [vmem:[#allocation2 + $0x119] sm:$0x1] %vm178, 0.0
  %227 = vst.msk [vmem:[#allocation2 + $0x131] sm:$0x1] %vm178, 0.0
  %228 = vst.msk [vmem:[#allocation2 + $0x149] sm:$0x1] %vm178, 0.0
  %229 = vst.msk [vmem:[#allocation2 + $0x161] sm:$0x1] %vm178, 0.0
  %230 = vst.msk [vmem:[#allocation2 + $0x179] sm:$0x1] %vm178, 0.0
  %231 = vst.msk [vmem:[#allocation2 + $0x191] sm:$0x1] %vm178, 0.0
  %232 = vst.msk [vmem:[#allocation2 + $0x1a9] sm:$0x1] %vm178, 0.0
  %233 = vst.msk [vmem:[#allocation2 + $0x1c1] sm:$0x1] %vm178, 0.0
  %234 = vst.msk [vmem:[#allocation2 + $0x1d9] sm:$0x1] %vm178, 0.0
  %235 = vst.msk [vmem:[#allocation2 + $0x1f1] sm:$0x1] %vm178, 0.0
  %236 = vst.msk [vmem:[#allocation2 + $0x209] sm:$0x1] %vm178, 0.0
  %237 = vst.msk [vmem:[#allocation2 + $0x221] sm:$0x1] %vm178, 0.0
  %238 = vst.msk [vmem:[#allocation2 + $0x239] sm:$0x1] %vm178, 0.0
  %239 = vst.msk [vmem:[#allocation2 + $0x251] sm:$0x1] %vm178, 0.0
  %240 = vst.msk [vmem:[#allocation2 + $0x269] sm:$0x1] %vm178, 0.0
  %241 = vst.msk [vmem:[#allocation2 + $0x281] sm:$0x1] %vm178, 0.0
  %242 = vst.msk [vmem:[#allocation2 + $0x299] sm:$0x1] %vm178, 0.0
  %243 = vst.msk [vmem:[#allocation2 + $0x2b1] sm:$0x1] %vm178, 0.0
  %244 = vst.msk [vmem:[#allocation2 + $0x2c9] sm:$0x1] %vm178, 0.0
  %245 = vst.msk [vmem:[#allocation2 + $0x2e1] sm:$0x1] %vm178, 0.0
  %246 = vst.msk [vmem:[#allocation2 + $0x2f9] sm:$0x1] %vm178, 0.0
  %247 = vst.msk [vmem:[#allocation2 + $0x311] sm:$0x1] %vm178, 0.0
  %248 = vst.msk [vmem:[#allocation2 + $0x329] sm:$0x1] %vm178, 0.0
  %249 = vst.msk [vmem:[#allocation2 + $0x341] sm:$0x1] %vm178, 0.0
  %250 = vst.msk [vmem:[#allocation2 + $0x359] sm:$0x1] %vm178, 0.0
  %v251 = vld [vmem:[#allocation2] sm:$0xff]
  %v252 = vld [vmem:[#allocation2 + $0x8] sm:$0xff]
  %v253 = vld [vmem:[#allocation2 + $0x18] sm:$0xff]
  %v254 = vld [vmem:[#allocation2 + $0x20] sm:$0xff]
  %v255 = vld [vmem:[#allocation2 + $0x30] sm:$0xff]
  %v256 = vld [vmem:[#allocation2 + $0x38] sm:$0xff]
  %v257 = vld [vmem:[#allocation2 + $0x48] sm:$0xff]
  %v258 = vld [vmem:[#allocation2 + $0x50] sm:$0xff]
  %v259 = vld [vmem:[#allocation2 + $0x60] sm:$0xff]
  %v260 = vld [vmem:[#allocation2 + $0x68] sm:$0xff]
  %v261 = vld [vmem:[#allocation2 + $0x78] sm:$0xff]
  %v262 = vld [vmem:[#allocation2 + $0x80] sm:$0xff]
  %v263 = vld [vmem:[#allocation2 + $0x90] sm:$0xff]
  %v264 = vld [vmem:[#allocation2 + $0x98] sm:$0xff]
  %v265 = vld [vmem:[#allocation2 + $0xa8] sm:$0xff]
  %v266 = vld [vmem:[#allocation2 + $0xb0] sm:$0xff]
  %v267 = vld [vmem:[#allocation2 + $0xc0] sm:$0xff]
  %v268 = vld [vmem:[#allocation2 + $0xc8] sm:$0xff]
  %v269 = vld [vmem:[#allocation2 + $0xd8] sm:$0xff]
  %v270 = vld [vmem:[#allocation2 + $0xe0] sm:$0xff]
  %v271 = vld [vmem:[#allocation2 + $0xf0] sm:$0xff]
  %v272 = vld [vmem:[#allocation2 + $0xf8] sm:$0xff]
  %v273 = vld [vmem:[#allocation2 + $0x108] sm:$0xff]
  %v274 = vld [vmem:[#allocation2 + $0x110] sm:$0xff]
  %v275 = vld [vmem:[#allocation2 + $0x120] sm:$0xff]
  %v276 = vld [vmem:[#allocation2 + $0x128] sm:$0xff]
  %v277 = vld [vmem:[#allocation2 + $0x138] sm:$0xff]
  %v278 = vld [vmem:[#allocation2 + $0x140] sm:$0xff]
  %v279 = vld [vmem:[#allocation2 + $0x150] sm:$0xff]
  %v280 = vld [vmem:[#allocation2 + $0x158] sm:$0xff]
  %v281 = vld [vmem:[#allocation2 + $0x168] sm:$0xff]
  %v282 = vld [vmem:[#allocation2 + $0x170] sm:$0xff]
  %v283 = vld [vmem:[#allocation2 + $0x1b0] sm:$0xff]
  %v284 = vld [vmem:[#allocation2 + $0x1b8] sm:$0xff]
  %v285 = vld [vmem:[#allocation2 + $0x1c8] sm:$0xff]
  %v286 = vld [vmem:[#allocation2 + $0x1d0] sm:$0xff]
  %v287 = vld [vmem:[#allocation2 + $0x1e0] sm:$0xff]
  %v288 = vld [vmem:[#allocation2 + $0x1e8] sm:$0xff]
  %v289 = vld [vmem:[#allocation2 + $0x1f8] sm:$0xff]
  %v290 = vld [vmem:[#allocation2 + $0x200] sm:$0xff]
  %v291 = vld [vmem:[#allocation2 + $0x210] sm:$0xff]
  %v292 = vld [vmem:[#allocation2 + $0x218] sm:$0xff]
  %v293 = vld [vmem:[#allocation2 + $0x228] sm:$0xff]
  %v294 = vld [vmem:[#allocation2 + $0x230] sm:$0xff]
  %v295 = vld [vmem:[#allocation2 + $0x240] sm:$0xff]
  %v296 = vld [vmem:[#allocation2 + $0x248] sm:$0xff]
  %v297 = vld [vmem:[#allocation2 + $0x258] sm:$0xff]
  %v298 = vld [vmem:[#allocation2 + $0x260] sm:$0xff]
  %v299 = vld [vmem:[#allocation2 + $0x270] sm:$0xff]
  %v300 = vld [vmem:[#allocation2 + $0x278] sm:$0xff]
  %v301 = vld [vmem:[#allocation2 + $0x288] sm:$0xff]
  %v302 = vld [vmem:[#allocation2 + $0x290] sm:$0xff]
  %v303 = vld [vmem:[#allocation2 + $0x2a0] sm:$0xff]
  %v304 = vld [vmem:[#allocation2 + $0x2a8] sm:$0xff]
  %v305 = vld [vmem:[#allocation2 + $0x2b8] sm:$0xff]
  %v306 = vld [vmem:[#allocation2 + $0x2c0] sm:$0xff]
  %v307 = vld [vmem:[#allocation2 + $0x2d0] sm:$0xff]
  %v308 = vld [vmem:[#allocation2 + $0x2d8] sm:$0xff]
  %v309 = vld [vmem:[#allocation2 + $0x2e8] sm:$0xff]
  %v310 = vld [vmem:[#allocation2 + $0x2f0] sm:$0xff]
  %v311 = vld [vmem:[#allocation2 + $0x300] sm:$0xff]
  %v312 = vld [vmem:[#allocation2 + $0x308] sm:$0xff]
  %v313 = vld [vmem:[#allocation2 + $0x318] sm:$0xff]
  %v314 = vld [vmem:[#allocation2 + $0x320] sm:$0xff]
  %315 = vst.msk [vmem:[#allocation4] sm:$0xff] %vm99, %v251
  %316 = vst.msk [vmem:[#allocation4 + $0x8] sm:$0xff] %vm99, %v252
  %317 = vst.msk [vmem:[#allocation4 + $0x10] sm:$0xff] %vm99, %v253
  %318 = vst.msk [vmem:[#allocation4 + $0x18] sm:$0xff] %vm99, %v254
  %319 = vst.msk [vmem:[#allocation4 + $0x20] sm:$0xff] %vm99, %v255
  %320 = vst.msk [vmem:[#allocation4 + $0x28] sm:$0xff] %vm99, %v256
  %321 = vst.msk [vmem:[#allocation4 + $0x30] sm:$0xff] %vm99, %v257
  %322 = vst.msk [vmem:[#allocation4 + $0x38] sm:$0xff] %vm99, %v258
  %323 = vst.msk [vmem:[#allocation4 + $0x40] sm:$0xff] %vm99, %v259
  %324 = vst.msk [vmem:[#allocation4 + $0x48] sm:$0xff] %vm99, %v260
  %325 = vst.msk [vmem:[#allocation4 + $0x50] sm:$0xff] %vm99, %v261
  %326 = vst.msk [vmem:[#allocation4 + $0x58] sm:$0xff] %vm99, %v262
  %327 = vst.msk [vmem:[#allocation4 + $0x60] sm:$0xff] %vm99, %v263
  %328 = vst.msk [vmem:[#allocation4 + $0x68] sm:$0xff] %vm99, %v264
  %329 = vst.msk [vmem:[#allocation4 + $0x70] sm:$0xff] %vm99, %v265
  %330 = vst.msk [vmem:[#allocation4 + $0x78] sm:$0xff] %vm99, %v266
  %331 = vst.msk [vmem:[#allocation4 + $0x80] sm:$0xff] %vm99, %v267
  %332 = vst.msk [vmem:[#allocation4 + $0x88] sm:$0xff] %vm99, %v268
  %333 = vst.msk [vmem:[#allocation4 + $0x90] sm:$0xff] %vm99, %v269
  %334 = vst.msk [vmem:[#allocation4 + $0x98] sm:$0xff] %vm99, %v270
  %335 = vst.msk [vmem:[#allocation4 + $0xa0] sm:$0xff] %vm99, %v271
  %336 = vst.msk [vmem:[#allocation4 + $0xa8] sm:$0xff] %vm99, %v272
  %337 = vst.msk [vmem:[#allocation4 + $0xb0] sm:$0xff] %vm99, %v273
  %338 = vst.msk [vmem:[#allocation4 + $0xb8] sm:$0xff] %vm99, %v274
  %339 = vst.msk [vmem:[#allocation4 + $0xc0] sm:$0xff] %vm99, %v275
  %340 = vst.msk [vmem:[#allocation4 + $0xc8] sm:$0xff] %vm99, %v276
  %341 = vst.msk [vmem:[#allocation4 + $0xd0] sm:$0xff] %vm99, %v277
  %342 = vst.msk [vmem:[#allocation4 + $0xd8] sm:$0xff] %vm99, %v278
  %343 = vst.msk [vmem:[#allocation4 + $0xe0] sm:$0xff] %vm99, %v279
  %344 = vst.msk [vmem:[#allocation4 + $0xe8] sm:$0xff] %vm99, %v280
  %345 = vst.msk [vmem:[#allocation4 + $0xf0] sm:$0xff] %vm99, %v281
  %346 = vst.msk [vmem:[#allocation4 + $0xf8] sm:$0xff] %vm99, %v282
  %347 = vst.msk [vmem:[#allocation4 + $0x100] sm:$0xff] %vm99, %v283
  %348 = vst.msk [vmem:[#allocation4 + $0x108] sm:$0xff] %vm99, %v284
  %349 = vst.msk [vmem:[#allocation4 + $0x110] sm:$0xff] %vm99, %v285
  %350 = vst.msk [vmem:[#allocation4 + $0x118] sm:$0xff] %vm99, %v286
  %351 = vst.msk [vmem:[#allocation4 + $0x120] sm:$0xff] %vm99, %v287
  %352 = vst.msk [vmem:[#allocation4 + $0x128] sm:$0xff] %vm99, %v288
  %353 = vst.msk [vmem:[#allocation4 + $0x130] sm:$0xff] %vm99, %v289
  %354 = vst.msk [vmem:[#allocation4 + $0x138] sm:$0xff] %vm99, %v290
  %355 = vst.msk [vmem:[#allocation4 + $0x140] sm:$0xff] %vm99, %v291
  %356 = vst.msk [vmem:[#allocation4 + $0x148] sm:$0xff] %vm99, %v292
  %357 = vst.msk [vmem:[#allocation4 + $0x150] sm:$0xff] %vm99, %v293
  %358 = vst.msk [vmem:[#allocation4 + $0x158] sm:$0xff] %vm99, %v294
  %359 = vst.msk [vmem:[#allocation4 + $0x160] sm:$0xff] %vm99, %v295
  %360 = vst.msk [vmem:[#allocation4 + $0x168] sm:$0xff] %vm99, %v296
  %361 = vst.msk [vmem:[#allocation4 + $0x170] sm:$0xff] %vm99, %v297
  %362 = vst.msk [vmem:[#allocation4 + $0x178] sm:$0xff] %vm99, %v298
  %363 = vst.msk [vmem:[#allocation4 + $0x180] sm:$0xff] %vm99, %v299
  %364 = vst.msk [vmem:[#allocation4 + $0x188] sm:$0xff] %vm99, %v300
  %365 = vst.msk [vmem:[#allocation4 + $0x190] sm:$0xff] %vm99, %v301
  %366 = vst.msk [vmem:[#allocation4 + $0x198] sm:$0xff] %vm99, %v302
  %367 = vst.msk [vmem:[#allocation4 + $0x1a0] sm:$0xff] %vm99, %v303
  %368 = vst.msk [vmem:[#allocation4 + $0x1a8] sm:$0xff] %vm99, %v304
  %369 = vst.msk [vmem:[#allocation4 + $0x1b0] sm:$0xff] %vm99, %v305
  %370 = vst.msk [vmem:[#allocation4 + $0x1b8] sm:$0xff] %vm99, %v306
  %371 = vst.msk [vmem:[#allocation4 + $0x1c0] sm:$0xff] %vm99, %v307
  %372 = vst.msk [vmem:[#allocation4 + $0x1c8] sm:$0xff] %vm99, %v308
  %373 = vst.msk [vmem:[#allocation4 + $0x1d0] sm:$0xff] %vm99, %v309
  %374 = vst.msk [vmem:[#allocation4 + $0x1d8] sm:$0xff] %vm99, %v310
  %375 = vst.msk [vmem:[#allocation4 + $0x1e0] sm:$0xff] %vm99, %v311
  %376 = vst.msk [vmem:[#allocation4 + $0x1e8] sm:$0xff] %vm99, %v312
  %377 = vst.msk [vmem:[#allocation4 + $0x1f0] sm:$0xff] %vm99, %v313
  %378 = vst.msk [vmem:[#allocation4 + $0x1f8] sm:$0xff] %vm99, %v314
  %v379 = vld [vmem:[#allocation2 + $0x1] sm:$0xff]
  %v380 = vld [vmem:[#allocation2 + $0x9] sm:$0xff]
  %v381 = vld [vmem:[#allocation2 + $0x19] sm:$0xff]
  %v382 = vld [vmem:[#allocation2 + $0x21] sm:$0xff]
  %v383 = vld [vmem:[#allocation2 + $0x31] sm:$0xff]
  %v384 = vld [vmem:[#allocation2 + $0x39] sm:$0xff]
  %v385 = vld [vmem:[#allocation2 + $0x49] sm:$0xff]
  %v386 = vld [vmem:[#allocation2 + $0x51] sm:$0xff]
  %v387 = vld [vmem:[#allocation2 + $0x61] sm:$0xff]
  %v388 = vld [vmem:[#allocation2 + $0x69] sm:$0xff]
  %v389 = vld [vmem:[#allocation2 + $0x79] sm:$0xff]
  %v390 = vld [vmem:[#allocation2 + $0x81] sm:$0xff]
  %v391 = vld [vmem:[#allocation2 + $0x91] sm:$0xff]
  %v392 = vld [vmem:[#allocation2 + $0x99] sm:$0xff]
  %v393 = vld [vmem:[#allocation2 + $0xa9] sm:$0xff]
  %v394 = vld [vmem:[#allocation2 + $0xb1] sm:$0xff]
  %v395 = vld [vmem:[#allocation2 + $0xc1] sm:$0xff]
  %v396 = vld [vmem:[#allocation2 + $0xc9] sm:$0xff]
  %v397 = vld [vmem:[#allocation2 + $0xd9] sm:$0xff]
  %v398 = vld [vmem:[#allocation2 + $0xe1] sm:$0xff]
  %v399 = vld [vmem:[#allocation2 + $0xf1] sm:$0xff]
  %v400 = vld [vmem:[#allocation2 + $0xf9] sm:$0xff]
  %v401 = vld [vmem:[#allocation2 + $0x109] sm:$0xff]
  %v402 = vld [vmem:[#allocation2 + $0x111] sm:$0xff]
  %v403 = vld [vmem:[#allocation2 + $0x121] sm:$0xff]
  %v404 = vld [vmem:[#allocation2 + $0x129] sm:$0xff]
  %v405 = vld [vmem:[#allocation2 + $0x139] sm:$0xff]
  %v406 = vld [vmem:[#allocation2 + $0x141] sm:$0xff]
  %v407 = vld [vmem:[#allocation2 + $0x151] sm:$0xff]
  %v408 = vld [vmem:[#allocation2 + $0x159] sm:$0xff]
  %v409 = vld [vmem:[#allocation2 + $0x169] sm:$0xff]
  %v410 = vld [vmem:[#allocation2 + $0x171] sm:$0xff]
  %v411 = vld [vmem:[#allocation2 + $0x1b1] sm:$0xff]
  %v412 = vld [vmem:[#allocation2 + $0x1b9] sm:$0xff]
  %v413 = vld [vmem:[#allocation2 + $0x1c9] sm:$0xff]
  %v414 = vld [vmem:[#allocation2 + $0x1d1] sm:$0xff]
  %v415 = vld [vmem:[#allocation2 + $0x1e1] sm:$0xff]
  %v416 = vld [vmem:[#allocation2 + $0x1e9] sm:$0xff]
  %v417 = vld [vmem:[#allocation2 + $0x1f9] sm:$0xff]
  %v418 = vld [vmem:[#allocation2 + $0x201] sm:$0xff]
  %v419 = vld [vmem:[#allocation2 + $0x211] sm:$0xff]
  %v420 = vld [vmem:[#allocation2 + $0x219] sm:$0xff]
  %v421 = vld [vmem:[#allocation2 + $0x229] sm:$0xff]
  %v422 = vld [vmem:[#allocation2 + $0x231] sm:$0xff]
  %v423 = vld [vmem:[#allocation2 + $0x241] sm:$0xff]
  %v424 = vld [vmem:[#allocation2 + $0x249] sm:$0xff]
  %v425 = vld [vmem:[#allocation2 + $0x259] sm:$0xff]
  %v426 = vld [vmem:[#allocation2 + $0x261] sm:$0xff]
  %v427 = vld [vmem:[#allocation2 + $0x271] sm:$0xff]
  %v428 = vld [vmem:[#allocation2 + $0x279] sm:$0xff]
  %v429 = vld [vmem:[#allocation2 + $0x289] sm:$0xff]
  %v430 = vld [vmem:[#allocation2 + $0x291] sm:$0xff]
  %v431 = vld [vmem:[#allocation2 + $0x2a1] sm:$0xff]
  %v432 = vld [vmem:[#allocation2 + $0x2a9] sm:$0xff]
  %v433 = vld [vmem:[#allocation2 + $0x2b9] sm:$0xff]
  %v434 = vld [vmem:[#allocation2 + $0x2c1] sm:$0xff]
  %v435 = vld [vmem:[#allocation2 + $0x2d1] sm:$0xff]
  %v436 = vld [vmem:[#allocation2 + $0x2d9] sm:$0xff]
  %v437 = vld [vmem:[#allocation2 + $0x2e9] sm:$0xff]
  %v438 = vld [vmem:[#allocation2 + $0x2f1] sm:$0xff]
  %v439 = vld [vmem:[#allocation2 + $0x301] sm:$0xff]
  %v440 = vld [vmem:[#allocation2 + $0x309] sm:$0xff]
  %v441 = vld [vmem:[#allocation2 + $0x319] sm:$0xff]
  %v442 = vld [vmem:[#allocation2 + $0x321] sm:$0xff]
  %507 = vrot.lane.b32.xlu0 %v379, 4
  %v508 = vpop.permute.xlu0 %507
  %509 = vrot.lane.b32.xlu0 %v380, 4
  %v510 = vpop.permute.xlu0 %509
  %511 = vrot.lane.b32.xlu0 %v381, 4
  %v512 = vpop.permute.xlu0 %511
  %513 = vrot.lane.b32.xlu0 %v382, 4
  %v514 = vpop.permute.xlu0 %513
  %515 = vrot.lane.b32.xlu0 %v383, 4
  %v516 = vpop.permute.xlu0 %515
  %517 = vrot.lane.b32.xlu0 %v384, 4
  %v518 = vpop.permute.xlu0 %517
  %519 = vrot.lane.b32.xlu0 %v385, 4
  %v520 = vpop.permute.xlu0 %519
  %521 = vrot.lane.b32.xlu0 %v386, 4
  %v522 = vpop.permute.xlu0 %521
  %523 = vrot.lane.b32.xlu0 %v387, 4
  %v524 = vpop.permute.xlu0 %523
  %525 = vrot.lane.b32.xlu0 %v388, 4
  %v526 = vpop.permute.xlu0 %525
  %527 = vrot.lane.b32.xlu0 %v389, 4
  %v528 = vpop.permute.xlu0 %527
  %529 = vrot.lane.b32.xlu0 %v390, 4
  %v530 = vpop.permute.xlu0 %529
  %531 = vrot.lane.b32.xlu0 %v391, 4
  %v532 = vpop.permute.xlu0 %531
  %533 = vrot.lane.b32.xlu0 %v392, 4
  %v534 = vpop.permute.xlu0 %533
  %535 = vrot.lane.b32.xlu0 %v393, 4
  %v536 = vpop.permute.xlu0 %535
  %537 = vrot.lane.b32.xlu0 %v394, 4
  %v538 = vpop.permute.xlu0 %537
  %539 = vrot.lane.b32.xlu0 %v395, 4
  %v540 = vpop.permute.xlu0 %539
  %541 = vrot.lane.b32.xlu0 %v396, 4
  %v542 = vpop.permute.xlu0 %541
  %543 = vrot.lane.b32.xlu0 %v397, 4
  %v544 = vpop.permute.xlu0 %543
  %545 = vrot.lane.b32.xlu0 %v398, 4
  %v546 = vpop.permute.xlu0 %545
  %547 = vrot.lane.b32.xlu0 %v399, 4
  %v548 = vpop.permute.xlu0 %547
  %549 = vrot.lane.b32.xlu0 %v400, 4
  %v550 = vpop.permute.xlu0 %549
  %551 = vrot.lane.b32.xlu0 %v401, 4
  %v552 = vpop.permute.xlu0 %551
  %553 = vrot.lane.b32.xlu0 %v402, 4
  %v554 = vpop.permute.xlu0 %553
  %555 = vrot.lane.b32.xlu0 %v403, 4
  %v556 = vpop.permute.xlu0 %555
  %557 = vrot.lane.b32.xlu0 %v404, 4
  %v558 = vpop.permute.xlu0 %557
  %559 = vrot.lane.b32.xlu0 %v405, 4
  %v560 = vpop.permute.xlu0 %559
  %561 = vrot.lane.b32.xlu0 %v406, 4
  %v562 = vpop.permute.xlu0 %561
  %563 = vrot.lane.b32.xlu0 %v407, 4
  %v564 = vpop.permute.xlu0 %563
  %565 = vrot.lane.b32.xlu0 %v408, 4
  %v566 = vpop.permute.xlu0 %565
  %567 = vrot.lane.b32.xlu0 %v409, 4
  %v568 = vpop.permute.xlu0 %567
  %569 = vrot.lane.b32.xlu0 %v410, 4
  %v570 = vpop.permute.xlu0 %569
  %571 = vrot.lane.b32.xlu0 %v411, 4
  %v572 = vpop.permute.xlu0 %571
  %573 = vrot.lane.b32.xlu0 %v412, 4
  %v574 = vpop.permute.xlu0 %573
  %575 = vrot.lane.b32.xlu0 %v413, 4
  %v576 = vpop.permute.xlu0 %575
  %577 = vrot.lane.b32.xlu0 %v414, 4
  %v578 = vpop.permute.xlu0 %577
  %579 = vrot.lane.b32.xlu0 %v415, 4
  %v580 = vpop.permute.xlu0 %579
  %581 = vrot.lane.b32.xlu0 %v416, 4
  %v582 = vpop.permute.xlu0 %581
  %583 = vrot.lane.b32.xlu0 %v417, 4
  %v584 = vpop.permute.xlu0 %583
  %585 = vrot.lane.b32.xlu0 %v418, 4
  %v586 = vpop.permute.xlu0 %585
  %587 = vrot.lane.b32.xlu0 %v419, 4
  %v588 = vpop.permute.xlu0 %587
  %589 = vrot.lane.b32.xlu0 %v420, 4
  %v590 = vpop.permute.xlu0 %589
  %591 = vrot.lane.b32.xlu0 %v421, 4
  %v592 = vpop.permute.xlu0 %591
  %593 = vrot.lane.b32.xlu0 %v422, 4
  %v594 = vpop.permute.xlu0 %593
  %595 = vrot.lane.b32.xlu0 %v423, 4
  %v596 = vpop.permute.xlu0 %595
  %597 = vrot.lane.b32.xlu0 %v424, 4
  %v598 = vpop.permute.xlu0 %597
  %599 = vrot.lane.b32.xlu0 %v425, 4
  %v600 = vpop.permute.xlu0 %599
  %601 = vrot.lane.b32.xlu0 %v426, 4
  %v602 = vpop.permute.xlu0 %601
  %603 = vrot.lane.b32.xlu0 %v427, 4
  %v604 = vpop.permute.xlu0 %603
  %605 = vrot.lane.b32.xlu0 %v428, 4
  %v606 = vpop.permute.xlu0 %605
  %607 = vrot.lane.b32.xlu0 %v429, 4
  %v608 = vpop.permute.xlu0 %607
  %609 = vrot.lane.b32.xlu0 %v430, 4
  %v610 = vpop.permute.xlu0 %609
  %611 = vrot.lane.b32.xlu0 %v431, 4
  %v612 = vpop.permute.xlu0 %611
  %613 = vrot.lane.b32.xlu0 %v432, 4
  %v614 = vpop.permute.xlu0 %613
  %615 = vrot.lane.b32.xlu0 %v433, 4
  %v616 = vpop.permute.xlu0 %615
  %617 = vrot.lane.b32.xlu0 %v434, 4
  %v618 = vpop.permute.xlu0 %617
  %619 = vrot.lane.b32.xlu0 %v435, 4
  %v620 = vpop.permute.xlu0 %619
  %621 = vrot.lane.b32.xlu0 %v436, 4
  %v622 = vpop.permute.xlu0 %621
  %623 = vrot.lane.b32.xlu0 %v437, 4
  %v624 = vpop.permute.xlu0 %623
  %625 = vrot.lane.b32.xlu0 %v438, 4
  %v626 = vpop.permute.xlu0 %625
  %627 = vrot.lane.b32.xlu0 %v439, 4
  %v628 = vpop.permute.xlu0 %627
  %629 = vrot.lane.b32.xlu0 %v440, 4
  %v630 = vpop.permute.xlu0 %629
  %631 = vrot.lane.b32.xlu0 %v441, 4
  %v632 = vpop.permute.xlu0 %631
  %633 = vrot.lane.b32.xlu0 %v442, 4
  %v634 = vpop.permute.xlu0 %633
  %vm699 = vcmask 64544
  %700 = vst.msk [vmem:[#allocation4] sm:$0xff] %vm699, %v508
  %701 = vst.msk [vmem:[#allocation4 + $0x8] sm:$0xff] %vm699, %v510
  %702 = vst.msk [vmem:[#allocation4 + $0x10] sm:$0xff] %vm699, %v512
  %703 = vst.msk [vmem:[#allocation4 + $0x18] sm:$0xff] %vm699, %v514
  %704 = vst.msk [vmem:[#allocation4 + $0x20] sm:$0xff] %vm699, %v516
  %705 = vst.msk [vmem:[#allocation4 + $0x28] sm:$0xff] %vm699, %v518
  %706 = vst.msk [vmem:[#allocation4 + $0x30] sm:$0xff] %vm699, %v520
  %707 = vst.msk [vmem:[#allocation4 + $0x38] sm:$0xff] %vm699, %v522
  %708 = vst.msk [vmem:[#allocation4 + $0x40] sm:$0xff] %vm699, %v524
  %709 = vst.msk [vmem:[#allocation4 + $0x48] sm:$0xff] %vm699, %v526
  %710 = vst.msk [vmem:[#allocation4 + $0x50] sm:$0xff] %vm699, %v528
  %711 = vst.msk [vmem:[#allocation4 + $0x58] sm:$0xff] %vm699, %v530
  %712 = vst.msk [vmem:[#allocation4 + $0x60] sm:$0xff] %vm699, %v532
  %713 = vst.msk [vmem:[#allocation4 + $0x68] sm:$0xff] %vm699, %v534
  %714 = vst.msk [vmem:[#allocation4 + $0x70] sm:$0xff] %vm699, %v536
  %715 = vst.msk [vmem:[#allocation4 + $0x78] sm:$0xff] %vm699, %v538
  %716 = vst.msk [vmem:[#allocation4 + $0x80] sm:$0xff] %vm699, %v540
  %717 = vst.msk [vmem:[#allocation4 + $0x88] sm:$0xff] %vm699, %v542
  %718 = vst.msk [vmem:[#allocation4 + $0x90] sm:$0xff] %vm699, %v544
  %719 = vst.msk [vmem:[#allocation4 + $0x98] sm:$0xff] %vm699, %v546
  %720 = vst.msk [vmem:[#allocation4 + $0xa0] sm:$0xff] %vm699, %v548
  %721 = vst.msk [vmem:[#allocation4 + $0xa8] sm:$0xff] %vm699, %v550
  %722 = vst.msk [vmem:[#allocation4 + $0xb0] sm:$0xff] %vm699, %v552
  %723 = vst.msk [vmem:[#allocation4 + $0xb8] sm:$0xff] %vm699, %v554
  %724 = vst.msk [vmem:[#allocation4 + $0xc0] sm:$0xff] %vm699, %v556
  %725 = vst.msk [vmem:[#allocation4 + $0xc8] sm:$0xff] %vm699, %v558
  %726 = vst.msk [vmem:[#allocation4 + $0xd0] sm:$0xff] %vm699, %v560
  %727 = vst.msk [vmem:[#allocation4 + $0xd8] sm:$0xff] %vm699, %v562
  %728 = vst.msk [vmem:[#allocation4 + $0xe0] sm:$0xff] %vm699, %v564
  %729 = vst.msk [vmem:[#allocation4 + $0xe8] sm:$0xff] %vm699, %v566
  %730 = vst.msk [vmem:[#allocation4 + $0xf0] sm:$0xff] %vm699, %v568
  %731 = vst.msk [vmem:[#allocation4 + $0xf8] sm:$0xff] %vm699, %v570
  %732 = vst.msk [vmem:[#allocation4 + $0x100] sm:$0xff] %vm699, %v572
  %733 = vst.msk [vmem:[#allocation4 + $0x108] sm:$0xff] %vm699, %v574
  %734 = vst.msk [vmem:[#allocation4 + $0x110] sm:$0xff] %vm699, %v576
  %735 = vst.msk [vmem:[#allocation4 + $0x118] sm:$0xff] %vm699, %v578
  %736 = vst.msk [vmem:[#allocation4 + $0x120] sm:$0xff] %vm699, %v580
  %737 = vst.msk [vmem:[#allocation4 + $0x128] sm:$0xff] %vm699, %v582
  %738 = vst.msk [vmem:[#allocation4 + $0x130] sm:$0xff] %vm699, %v584
  %739 = vst.msk [vmem:[#allocation4 + $0x138] sm:$0xff] %vm699, %v586
  %740 = vst.msk [vmem:[#allocation4 + $0x140] sm:$0xff] %vm699, %v588
  %741 = vst.msk [vmem:[#allocation4 + $0x148] sm:$0xff] %vm699, %v590
  %742 = vst.msk [vmem:[#allocation4 + $0x150] sm:$0xff] %vm699, %v592
  %743 = vst.msk [vmem:[#allocation4 + $0x158] sm:$0xff] %vm699, %v594
  %744 = vst.msk [vmem:[#allocation4 + $0x160] sm:$0xff] %vm699, %v596
  %745 = vst.msk [vmem:[#allocation4 + $0x168] sm:$0xff] %vm699, %v598
  %746 = vst.msk [vmem:[#allocation4 + $0x170] sm:$0xff] %vm699, %v600
  %747 = vst.msk [vmem:[#allocation4 + $0x178] sm:$0xff] %vm699, %v602
  %748 = vst.msk [vmem:[#allocation4 + $0x180] sm:$0xff] %vm699, %v604
  %749 = vst.msk [vmem:[#allocation4 + $0x188] sm:$0xff] %vm699, %v606
  %750 = vst.msk [vmem:[#allocation4 + $0x190] sm:$0xff] %vm699, %v608
  %751 = vst.msk [vmem:[#allocation4 + $0x198] sm:$0xff] %vm699, %v610
  %752 = vst.msk [vmem:[#allocation4 + $0x1a0] sm:$0xff] %vm699, %v612
  %753 = vst.msk [vmem:[#allocation4 + $0x1a8] sm:$0xff] %vm699, %v614
  %754 = vst.msk [vmem:[#allocation4 + $0x1b0] sm:$0xff] %vm699, %v616
  %755 = vst.msk [vmem:[#allocation4 + $0x1b8] sm:$0xff] %vm699, %v618
  %756 = vst.msk [vmem:[#allocation4 + $0x1c0] sm:$0xff] %vm699, %v620
  %757 = vst.msk [vmem:[#allocation4 + $0x1c8] sm:$0xff] %vm699, %v622
  %758 = vst.msk [vmem:[#allocation4 + $0x1d0] sm:$0xff] %vm699, %v624
  %759 = vst.msk [vmem:[#allocation4 + $0x1d8] sm:$0xff] %vm699, %v626
  %760 = vst.msk [vmem:[#allocation4 + $0x1e0] sm:$0xff] %vm699, %v628
  %761 = vst.msk [vmem:[#allocation4 + $0x1e8] sm:$0xff] %vm699, %v630
  %762 = vst.msk [vmem:[#allocation4 + $0x1f0] sm:$0xff] %vm699, %v632
  %763 = vst.msk [vmem:[#allocation4 + $0x1f8] sm:$0xff] %vm699, %v634
  %v764 = vld [vmem:[#allocation2 + $0x2] sm:$0xff]
  %v765 = vld [vmem:[#allocation2 + $0xa] sm:$0xff]
  %v766 = vld [vmem:[#allocation2 + $0x1a] sm:$0xff]
  %v767 = vld [vmem:[#allocation2 + $0x22] sm:$0xff]
  %v768 = vld [vmem:[#allocation2 + $0x32] sm:$0xff]
  %v769 = vld [vmem:[#allocation2 + $0x3a] sm:$0xff]
  %v770 = vld [vmem:[#allocation2 + $0x4a] sm:$0xff]
  %v771 = vld [vmem:[#allocation2 + $0x52] sm:$0xff]
  %v772 = vld [vmem:[#allocation2 + $0x62] sm:$0xff]
  %v773 = vld [vmem:[#allocation2 + $0x6a] sm:$0xff]
  %v774 = vld [vmem:[#allocation2 + $0x7a] sm:$0xff]
  %v775 = vld [vmem:[#allocation2 + $0x82] sm:$0xff]
  %v776 = vld [vmem:[#allocation2 + $0x92] sm:$0xff]
  %v777 = vld [vmem:[#allocation2 + $0x9a] sm:$0xff]
  %v778 = vld [vmem:[#allocation2 + $0xaa] sm:$0xff]
  %v779 = vld [vmem:[#allocation2 + $0xb2] sm:$0xff]
  %v780 = vld [vmem:[#allocation2 + $0xc2] sm:$0xff]
  %v781 = vld [vmem:[#allocation2 + $0xca] sm:$0xff]
  %v782 = vld [vmem:[#allocation2 + $0xda] sm:$0xff]
  %v783 = vld [vmem:[#allocation2 + $0xe2] sm:$0xff]
  %v784 = vld [vmem:[#allocation2 + $0xf2] sm:$0xff]
  %v785 = vld [vmem:[#allocation2 + $0xfa] sm:$0xff]
  %v786 = vld [vmem:[#allocation2 + $0x10a] sm:$0xff]
  %v787 = vld [vmem:[#allocation2 + $0x112] sm:$0xff]
  %v788 = vld [vmem:[#allocation2 + $0x122] sm:$0xff]
  %v789 = vld [vmem:[#allocation2 + $0x12a] sm:$0xff]
  %v790 = vld [vmem:[#allocation2 + $0x13a] sm:$0xff]
  %v791 = vld [vmem:[#allocation2 + $0x142] sm:$0xff]
  %v792 = vld [vmem:[#allocation2 + $0x152] sm:$0xff]
  %v793 = vld [vmem:[#allocation2 + $0x15a] sm:$0xff]
  %v794 = vld [vmem:[#allocation2 + $0x16a] sm:$0xff]
  %v795 = vld [vmem:[#allocation2 + $0x172] sm:$0xff]
  %v796 = vld [vmem:[#allocation2 + $0x1b2] sm:$0xff]
  %v797 = vld [vmem:[#allocation2 + $0x1ba] sm:$0xff]
  %v798 = vld [vmem:[#allocation2 + $0x1ca] sm:$0xff]
  %v799 = vld [vmem:[#allocation2 + $0x1d2] sm:$0xff]
  %v800 = vld [vmem:[#allocation2 + $0x1e2] sm:$0xff]
  %v801 = vld [vmem:[#allocation2 + $0x1ea] sm:$0xff]
  %v802 = vld [vmem:[#allocation2 + $0x1fa] sm:$0xff]
  %v803 = vld [vmem:[#allocation2 + $0x202] sm:$0xff]
  %v804 = vld [vmem:[#allocation2 + $0x212] sm:$0xff]
  %v805 = vld [vmem:[#allocation2 + $0x21a] sm:$0xff]
  %v806 = vld [vmem:[#allocation2 + $0x22a] sm:$0xff]
  %v807 = vld [vmem:[#allocation2 + $0x232] sm:$0xff]
  %v808 = vld [vmem:[#allocation2 + $0x242] sm:$0xff]
  %v809 = vld [vmem:[#allocation2 + $0x24a] sm:$0xff]
  %v810 = vld [vmem:[#allocation2 + $0x25a] sm:$0xff]
  %v811 = vld [vmem:[#allocation2 + $0x262] sm:$0xff]
  %v812 = vld [vmem:[#allocation2 + $0x272] sm:$0xff]
  %v813 = vld [vmem:[#allocation2 + $0x27a] sm:$0xff]
  %v814 = vld [vmem:[#allocation2 + $0x28a] sm:$0xff]
  %v815 = vld [vmem:[#allocation2 + $0x292] sm:$0xff]
  %v816 = vld [vmem:[#allocation2 + $0x2a2] sm:$0xff]
  %v817 = vld [vmem:[#allocation2 + $0x2aa] sm:$0xff]
  %v818 = vld [vmem:[#allocation2 + $0x2ba] sm:$0xff]
  %v819 = vld [vmem:[#allocation2 + $0x2c2] sm:$0xff]
  %v820 = vld [vmem:[#allocation2 + $0x2d2] sm:$0xff]
  %v821 = vld [vmem:[#allocation2 + $0x2da] sm:$0xff]
  %v822 = vld [vmem:[#allocation2 + $0x2ea] sm:$0xff]
  %v823 = vld [vmem:[#allocation2 + $0x2f2] sm:$0xff]
  %v824 = vld [vmem:[#allocation2 + $0x302] sm:$0xff]
  %v825 = vld [vmem:[#allocation2 + $0x30a] sm:$0xff]
  %v826 = vld [vmem:[#allocation2 + $0x31a] sm:$0xff]
  %v827 = vld [vmem:[#allocation2 + $0x322] sm:$0xff]
  %892 = vrot.lane.b32.xlu0 %v764, 8
  %v893 = vpop.permute.xlu0 %892
  %894 = vrot.lane.b32.xlu0 %v765, 8
  %v895 = vpop.permute.xlu0 %894
  %896 = vrot.lane.b32.xlu0 %v766, 8
  %v897 = vpop.permute.xlu0 %896
  %898 = vrot.lane.b32.xlu0 %v767, 8
  %v899 = vpop.permute.xlu0 %898
  %900 = vrot.lane.b32.xlu0 %v768, 8
  %v901 = vpop.permute.xlu0 %900
  %902 = vrot.lane.b32.xlu0 %v769, 8
  %v903 = vpop.permute.xlu0 %902
  %904 = vrot.lane.b32.xlu0 %v770, 8
  %v905 = vpop.permute.xlu0 %904
  %906 = vrot.lane.b32.xlu0 %v771, 8
  %v907 = vpop.permute.xlu0 %906
  %908 = vrot.lane.b32.xlu0 %v772, 8
  %v909 = vpop.permute.xlu0 %908
  %910 = vrot.lane.b32.xlu0 %v773, 8
  %v911 = vpop.permute.xlu0 %910
  %912 = vrot.lane.b32.xlu0 %v774, 8
  %v913 = vpop.permute.xlu0 %912
  %914 = vrot.lane.b32.xlu0 %v775, 8
  %v915 = vpop.permute.xlu0 %914
  %916 = vrot.lane.b32.xlu0 %v776, 8
  %v917 = vpop.permute.xlu0 %916
  %918 = vrot.lane.b32.xlu0 %v777, 8
  %v919 = vpop.permute.xlu0 %918
  %920 = vrot.lane.b32.xlu0 %v778, 8
  %v921 = vpop.permute.xlu0 %920
  %922 = vrot.lane.b32.xlu0 %v779, 8
  %v923 = vpop.permute.xlu0 %922
  %924 = vrot.lane.b32.xlu0 %v780, 8
  %v925 = vpop.permute.xlu0 %924
  %926 = vrot.lane.b32.xlu0 %v781, 8
  %v927 = vpop.permute.xlu0 %926
  %928 = vrot.lane.b32.xlu0 %v782, 8
  %v929 = vpop.permute.xlu0 %928
  %930 = vrot.lane.b32.xlu0 %v783, 8
  %v931 = vpop.permute.xlu0 %930
  %932 = vrot.lane.b32.xlu0 %v784, 8
  %v933 = vpop.permute.xlu0 %932
  %934 = vrot.lane.b32.xlu0 %v785, 8
  %v935 = vpop.permute.xlu0 %934
  %936 = vrot.lane.b32.xlu0 %v786, 8
  %v937 = vpop.permute.xlu0 %936
  %938 = vrot.lane.b32.xlu0 %v787, 8
  %v939 = vpop.permute.xlu0 %938
  %940 = vrot.lane.b32.xlu0 %v788, 8
  %v941 = vpop.permute.xlu0 %940
  %942 = vrot.lane.b32.xlu0 %v789, 8
  %v943 = vpop.permute.xlu0 %942
  %944 = vrot.lane.b32.xlu0 %v790, 8
  %v945 = vpop.permute.xlu0 %944
  %946 = vrot.lane.b32.xlu0 %v791, 8
  %v947 = vpop.permute.xlu0 %946
  %948 = vrot.lane.b32.xlu0 %v792, 8
  %v949 = vpop.permute.xlu0 %948
  %950 = vrot.lane.b32.xlu0 %v793, 8
  %v951 = vpop.permute.xlu0 %950
  %952 = vrot.lane.b32.xlu0 %v794, 8
  %v953 = vpop.permute.xlu0 %952
  %954 = vrot.lane.b32.xlu0 %v795, 8
  %v955 = vpop.permute.xlu0 %954
  %956 = vrot.lane.b32.xlu0 %v796, 8
  %v957 = vpop.permute.xlu0 %956
  %958 = vrot.lane.b32.xlu0 %v797, 8
  %v959 = vpop.permute.xlu0 %958
  %960 = vrot.lane.b32.xlu0 %v798, 8
  %v961 = vpop.permute.xlu0 %960
  %962 = vrot.lane.b32.xlu0 %v799, 8
  %v963 = vpop.permute.xlu0 %962
  %964 = vrot.lane.b32.xlu0 %v800, 8
  %v965 = vpop.permute.xlu0 %964
  %966 = vrot.lane.b32.xlu0 %v801, 8
  %v967 = vpop.permute.xlu0 %966
  %968 = vrot.lane.b32.xlu0 %v802, 8
  %v969 = vpop.permute.xlu0 %968
  %970 = vrot.lane.b32.xlu0 %v803, 8
  %v971 = vpop.permute.xlu0 %970
  %972 = vrot.lane.b32.xlu0 %v804, 8
  %v973 = vpop.permute.xlu0 %972
  %974 = vrot.lane.b32.xlu0 %v805, 8
  %v975 = vpop.permute.xlu0 %974
  %976 = vrot.lane.b32.xlu0 %v806, 8
  %v977 = vpop.permute.xlu0 %976
  %978 = vrot.lane.b32.xlu0 %v807, 8
  %v979 = vpop.permute.xlu0 %978
  %980 = vrot.lane.b32.xlu0 %v808, 8
  %v981 = vpop.permute.xlu0 %980
  %982 = vrot.lane.b32.xlu0 %v809, 8
  %v983 = vpop.permute.xlu0 %982
  %984 = vrot.lane.b32.xlu0 %v810, 8
  %v985 = vpop.permute.xlu0 %984
  %986 = vrot.lane.b32.xlu0 %v811, 8
  %v987 = vpop.permute.xlu0 %986
  %988 = vrot.lane.b32.xlu0 %v812, 8
  %v989 = vpop.permute.xlu0 %988
  %990 = vrot.lane.b32.xlu0 %v813, 8
  %v991 = vpop.permute.xlu0 %990
  %992 = vrot.lane.b32.xlu0 %v814, 8
  %v993 = vpop.permute.xlu0 %992
  %994 = vrot.lane.b32.xlu0 %v815, 8
  %v995 = vpop.permute.xlu0 %994
  %996 = vrot.lane.b32.xlu0 %v816, 8
  %v997 = vpop.permute.xlu0 %996
  %998 = vrot.lane.b32.xlu0 %v817, 8
  %v999 = vpop.permute.xlu0 %998
  %1000 = vrot.lane.b32.xlu0 %v818, 8
  %v1001 = vpop.permute.xlu0 %1000
  %1002 = vrot.lane.b32.xlu0 %v819, 8
  %v1003 = vpop.permute.xlu0 %1002
  %1004 = vrot.lane.b32.xlu0 %v820, 8
  %v1005 = vpop.permute.xlu0 %1004
  %1006 = vrot.lane.b32.xlu0 %v821, 8
  %v1007 = vpop.permute.xlu0 %1006
  %1008 = vrot.lane.b32.xlu0 %v822, 8
  %v1009 = vpop.permute.xlu0 %1008
  %1010 = vrot.lane.b32.xlu0 %v823, 8
  %v1011 = vpop.permute.xlu0 %1010
  %1012 = vrot.lane.b32.xlu0 %v824, 8
  %v1013 = vpop.permute.xlu0 %1012
  %1014 = vrot.lane.b32.xlu0 %v825, 8
  %v1015 = vpop.permute.xlu0 %1014
  %1016 = vrot.lane.b32.xlu0 %v826, 8
  %v1017 = vpop.permute.xlu0 %1016
  %1018 = vrot.lane.b32.xlu0 %v827, 8
  %v1019 = vpop.permute.xlu0 %1018
  %vm1084 = vcmask 97344
  %1085 = vst.msk [vmem:[#allocation4] sm:$0xff] %vm1084, %v893
  %1086 = vst.msk [vmem:[#allocation4 + $0x8] sm:$0xff] %vm1084, %v895
  %1087 = vst.msk [vmem:[#allocation4 + $0x10] sm:$0xff] %vm1084, %v897
  %1088 = vst.msk [vmem:[#allocation4 + $0x18] sm:$0xff] %vm1084, %v899
  %1089 = vst.msk [vmem:[#allocation4 + $0x20] sm:$0xff] %vm1084, %v901
  %1090 = vst.msk [vmem:[#allocation4 + $0x28] sm:$0xff] %vm1084, %v903
  %1091 = vst.msk [vmem:[#allocation4 + $0x30] sm:$0xff] %vm1084, %v905
  %1092 = vst.msk [vmem:[#allocation4 + $0x38] sm:$0xff] %vm1084, %v907
  %1093 = vst.msk [vmem:[#allocation4 + $0x40] sm:$0xff] %vm1084, %v909
  %1094 = vst.msk [vmem:[#allocation4 + $0x48] sm:$0xff] %vm1084, %v911
  %1095 = vst.msk [vmem:[#allocation4 + $0x50] sm:$0xff] %vm1084, %v913
  %1096 = vst.msk [vmem:[#allocation4 + $0x58] sm:$0xff] %vm1084, %v915
  %1097 = vst.msk [vmem:[#allocation4 + $0x60] sm:$0xff] %vm1084, %v917
  %1098 = vst.msk [vmem:[#allocation4 + $0x68] sm:$0xff] %vm1084, %v919
  %1099 = vst.msk [vmem:[#allocation4 + $0x70] sm:$0xff] %vm1084, %v921
  %1100 = vst.msk [vmem:[#allocation4 + $0x78] sm:$0xff] %vm1084, %v923
  %1101 = vst.msk [vmem:[#allocation4 + $0x80] sm:$0xff] %vm1084, %v925
  %1102 = vst.msk [vmem:[#allocation4 + $0x88] sm:$0xff] %vm1084, %v927
  %1103 = vst.msk [vmem:[#allocation4 + $0x90] sm:$0xff] %vm1084, %v929
  %1104 = vst.msk [vmem:[#allocation4 + $0x98] sm:$0xff] %vm1084, %v931
  %1105 = vst.msk [vmem:[#allocation4 + $0xa0] sm:$0xff] %vm1084, %v933
  %1106 = vst.msk [vmem:[#allocation4 + $0xa8] sm:$0xff] %vm1084, %v935
  %1107 = vst.msk [vmem:[#allocation4 + $0xb0] sm:$0xff] %vm1084, %v937
  %1108 = vst.msk [vmem:[#allocation4 + $0xb8] sm:$0xff] %vm1084, %v939
  %1109 = vst.msk [vmem:[#allocation4 + $0xc0] sm:$0xff] %vm1084, %v941
  %1110 = vst.msk [vmem:[#allocation4 + $0xc8] sm:$0xff] %vm1084, %v943
  %1111 = vst.msk [vmem:[#allocation4 + $0xd0] sm:$0xff] %vm1084, %v945
  %1112 = vst.msk [vmem:[#allocation4 + $0xd8] sm:$0xff] %vm1084, %v947
  %1113 = vst.msk [vmem:[#allocation4 + $0xe0] sm:$0xff] %vm1084, %v949
  %1114 = vst.msk [vmem:[#allocation4 + $0xe8] sm:$0xff] %vm1084, %v951
  %1115 = vst.msk [vmem:[#allocation4 + $0xf0] sm:$0xff] %vm1084, %v953
  %1116 = vst.msk [vmem:[#allocation4 + $0xf8] sm:$0xff] %vm1084, %v955
  %1117 = vst.msk [vmem:[#allocation4 + $0x100] sm:$0xff] %vm1084, %v957
  %1118 = vst.msk [vmem:[#allocation4 + $0x108] sm:$0xff] %vm1084, %v959
  %1119 = vst.msk [vmem:[#allocation4 + $0x110] sm:$0xff] %vm1084, %v961
  %1120 = vst.msk [vmem:[#allocation4 + $0x118] sm:$0xff] %vm1084, %v963
  %1121 = vst.msk [vmem:[#allocation4 + $0x120] sm:$0xff] %vm1084, %v965
  %1122 = vst.msk [vmem:[#allocation4 + $0x128] sm:$0xff] %vm1084, %v967
  %1123 = vst.msk [vmem:[#allocation4 + $0x130] sm:$0xff] %vm1084, %v969
  %1124 = vst.msk [vmem:[#allocation4 + $0x138] sm:$0xff] %vm1084, %v971
  %1125 = vst.msk [vmem:[#allocation4 + $0x140] sm:$0xff] %vm1084, %v973
  %1126 = vst.msk [vmem:[#allocation4 + $0x148] sm:$0xff] %vm1084, %v975
  %1127 = vst.msk [vmem:[#allocation4 + $0x150] sm:$0xff] %vm1084, %v977
  %1128 = vst.msk [vmem:[#allocation4 + $0x158] sm:$0xff] %vm1084, %v979
  %1129 = vst.msk [vmem:[#allocation4 + $0x160] sm:$0xff] %vm1084, %v981
  %1130 = vst.msk [vmem:[#allocation4 + $0x168] sm:$0xff] %vm1084, %v983
  %1131 = vst.msk [vmem:[#allocation4 + $0x170] sm:$0xff] %vm1084, %v985
  %1132 = vst.msk [vmem:[#allocation4 + $0x178] sm:$0xff] %vm1084, %v987
  %1133 = vst.msk [vmem:[#allocation4 + $0x180] sm:$0xff] %vm1084, %v989
  %1134 = vst.msk [vmem:[#allocation4 + $0x188] sm:$0xff] %vm1084, %v991
  %1135 = vst.msk [vmem:[#allocation4 + $0x190] sm:$0xff] %vm1084, %v993
  %1136 = vst.msk [vmem:[#allocation4 + $0x198] sm:$0xff] %vm1084, %v995
  %1137 = vst.msk [vmem:[#allocation4 + $0x1a0] sm:$0xff] %vm1084, %v997
  %1138 = vst.msk [vmem:[#allocation4 + $0x1a8] sm:$0xff] %vm1084, %v999
  %1139 = vst.msk [vmem:[#allocation4 + $0x1b0] sm:$0xff] %vm1084, %v1001
  %1140 = vst.msk [vmem:[#allocation4 + $0x1b8] sm:$0xff] %vm1084, %v1003
  %1141 = vst.msk [vmem:[#allocation4 + $0x1c0] sm:$0xff] %vm1084, %v1005
  %1142 = vst.msk [vmem:[#allocation4 + $0x1c8] sm:$0xff] %vm1084, %v1007
  %1143 = vst.msk [vmem:[#allocation4 + $0x1d0] sm:$0xff] %vm1084, %v1009
  %1144 = vst.msk [vmem:[#allocation4 + $0x1d8] sm:$0xff] %vm1084, %v1011
  %1145 = vst.msk [vmem:[#allocation4 + $0x1e0] sm:$0xff] %vm1084, %v1013
  %1146 = vst.msk [vmem:[#allocation4 + $0x1e8] sm:$0xff] %vm1084, %v1015
  %1147 = vst.msk [vmem:[#allocation4 + $0x1f0] sm:$0xff] %vm1084, %v1017
  %1148 = vst.msk [vmem:[#allocation4 + $0x1f8] sm:$0xff] %vm1084, %v1019
  %v1149 = vld [vmem:[%s98] sm:$0xff]
  %v1150 = vld [vmem:[%s98 + $0x8] sm:$0xff]
  %v1151 = vld [vmem:[%s98 + $0x18] sm:$0xff]
  %v1152 = vld [vmem:[%s98 + $0x20] sm:$0xff]
  %v1153 = vld [vmem:[%s98 + $0x30] sm:$0xff]
  %v1154 = vld [vmem:[%s98 + $0x38] sm:$0xff]
  %v1155 = vld [vmem:[%s98 + $0x48] sm:$0xff]
  %v1156 = vld [vmem:[%s98 + $0x50] sm:$0xff]
  %v1157 = vld [vmem:[%s98 + $0x60] sm:$0xff]
  %v1158 = vld [vmem:[%s98 + $0x68] sm:$0xff]
  %v1159 = vld [vmem:[%s98 + $0x78] sm:$0xff]
  %v1160 = vld [vmem:[%s98 + $0x80] sm:$0xff]
  %v1161 = vld [vmem:[%s98 + $0x90] sm:$0xff]
  %v1162 = vld [vmem:[%s98 + $0x98] sm:$0xff]
  %v1163 = vld [vmem:[%s98 + $0xa8] sm:$0xff]
  %v1164 = vld [vmem:[%s98 + $0xb0] sm:$0xff]
  %v1165 = vld [vmem:[%s98 + $0xc0] sm:$0xff]
  %v1166 = vld [vmem:[%s98 + $0xc8] sm:$0xff]
  %v1167 = vld [vmem:[%s98 + $0xd8] sm:$0xff]
  %v1168 = vld [vmem:[%s98 + $0xe0] sm:$0xff]
  %v1169 = vld [vmem:[%s98 + $0xf0] sm:$0xff]
  %v1170 = vld [vmem:[%s98 + $0xf8] sm:$0xff]
  %v1171 = vld [vmem:[%s98 + $0x108] sm:$0xff]
  %v1172 = vld [vmem:[%s98 + $0x110] sm:$0xff]
  %v1173 = vld [vmem:[%s98 + $0x120] sm:$0xff]
  %v1174 = vld [vmem:[%s98 + $0x128] sm:$0xff]
  %v1175 = vld [vmem:[%s98 + $0x138] sm:$0xff]
  %v1176 = vld [vmem:[%s98 + $0x140] sm:$0xff]
  %v1177 = vld [vmem:[%s98 + $0x150] sm:$0xff]
  %v1178 = vld [vmem:[%s98 + $0x158] sm:$0xff]
  %v1179 = vld [vmem:[%s98 + $0x168] sm:$0xff]
  %v1180 = vld [vmem:[%s98 + $0x170] sm:$0xff]
  %v1181 = vld [vmem:[%s98 + $0x1b0] sm:$0xff]
  %v1182 = vld [vmem:[%s98 + $0x1b8] sm:$0xff]
  %v1183 = vld [vmem:[%s98 + $0x1c8] sm:$0xff]
  %v1184 = vld [vmem:[%s98 + $0x1d0] sm:$0xff]
  %v1185 = vld [vmem:[%s98 + $0x1e0] sm:$0xff]
  %v1186 = vld [vmem:[%s98 + $0x1e8] sm:$0xff]
  %v1187 = vld [vmem:[%s98 + $0x1f8] sm:$0xff]
  %v1188 = vld [vmem:[%s98 + $0x200] sm:$0xff]
  %v1189 = vld [vmem:[%s98 + $0x210] sm:$0xff]
  %v1190 = vld [vmem:[%s98 + $0x218] sm:$0xff]
  %v1191 = vld [vmem:[%s98 + $0x228] sm:$0xff]
  %v1192 = vld [vmem:[%s98 + $0x230] sm:$0xff]
  %v1193 = vld [vmem:[%s98 + $0x240] sm:$0xff]
  %v1194 = vld [vmem:[%s98 + $0x248] sm:$0xff]
  %v1195 = vld [vmem:[%s98 + $0x258] sm:$0xff]
  %v1196 = vld [vmem:[%s98 + $0x260] sm:$0xff]
  %v1197 = vld [vmem:[%s98 + $0x270] sm:$0xff]
  %v1198 = vld [vmem:[%s98 + $0x278] sm:$0xff]
  %v1199 = vld [vmem:[%s98 + $0x288] sm:$0xff]
  %v1200 = vld [vmem:[%s98 + $0x290] sm:$0xff]
  %v1201 = vld [vmem:[%s98 + $0x2a0] sm:$0xff]
  %v1202 = vld [vmem:[%s98 + $0x2a8] sm:$0xff]
  %v1203 = vld [vmem:[%s98 + $0x2b8] sm:$0xff]
  %v1204 = vld [vmem:[%s98 + $0x2c0] sm:$0xff]
  %v1205 = vld [vmem:[%s98 + $0x2d0] sm:$0xff]
  %v1206 = vld [vmem:[%s98 + $0x2d8] sm:$0xff]
  %v1207 = vld [vmem:[%s98 + $0x2e8] sm:$0xff]
  %v1208 = vld [vmem:[%s98 + $0x2f0] sm:$0xff]
  %v1209 = vld [vmem:[%s98 + $0x300] sm:$0xff]
  %v1210 = vld [vmem:[%s98 + $0x308] sm:$0xff]
  %v1211 = vld [vmem:[%s98 + $0x318] sm:$0xff]
  %v1212 = vld [vmem:[%s98 + $0x320] sm:$0xff]
  %1277 = vrot.lane.b32.xlu0 %v1149, 12
  %v1278 = vpop.permute.xlu0 %1277
  %1279 = vrot.lane.b32.xlu0 %v1150, 12
  %v1280 = vpop.permute.xlu0 %1279
  %1281 = vrot.lane.b32.xlu0 %v1151, 12
  %v1282 = vpop.permute.xlu0 %1281
  %1283 = vrot.lane.b32.xlu0 %v1152, 12
  %v1284 = vpop.permute.xlu0 %1283
  %1285 = vrot.lane.b32.xlu0 %v1153, 12
  %v1286 = vpop.permute.xlu0 %1285
  %1287 = vrot.lane.b32.xlu0 %v1154, 12
  %v1288 = vpop.permute.xlu0 %1287
  %1289 = vrot.lane.b32.xlu0 %v1155, 12
  %v1290 = vpop.permute.xlu0 %1289
  %1291 = vrot.lane.b32.xlu0 %v1156, 12
  %v1292 = vpop.permute.xlu0 %1291
  %1293 = vrot.lane.b32.xlu0 %v1157, 12
  %v1294 = vpop.permute.xlu0 %1293
  %1295 = vrot.lane.b32.xlu0 %v1158, 12
  %v1296 = vpop.permute.xlu0 %1295
  %1297 = vrot.lane.b32.xlu0 %v1159, 12
  %v1298 = vpop.permute.xlu0 %1297
  %1299 = vrot.lane.b32.xlu0 %v1160, 12
  %v1300 = vpop.permute.xlu0 %1299
  %1301 = vrot.lane.b32.xlu0 %v1161, 12
  %v1302 = vpop.permute.xlu0 %1301
  %1303 = vrot.lane.b32.xlu0 %v1162, 12
  %v1304 = vpop.permute.xlu0 %1303
  %1305 = vrot.lane.b32.xlu0 %v1163, 12
  %v1306 = vpop.permute.xlu0 %1305
  %1307 = vrot.lane.b32.xlu0 %v1164, 12
  %v1308 = vpop.permute.xlu0 %1307
  %1309 = vrot.lane.b32.xlu0 %v1165, 12
  %v1310 = vpop.permute.xlu0 %1309
  %1311 = vrot.lane.b32.xlu0 %v1166, 12
  %v1312 = vpop.permute.xlu0 %1311
  %1313 = vrot.lane.b32.xlu0 %v1167, 12
  %v1314 = vpop.permute.xlu0 %1313
  %1315 = vrot.lane.b32.xlu0 %v1168, 12
  %v1316 = vpop.permute.xlu0 %1315
  %1317 = vrot.lane.b32.xlu0 %v1169, 12
  %v1318 = vpop.permute.xlu0 %1317
  %1319 = vrot.lane.b32.xlu0 %v1170, 12
  %v1320 = vpop.permute.xlu0 %1319
  %1321 = vrot.lane.b32.xlu0 %v1171, 12
  %v1322 = vpop.permute.xlu0 %1321
  %1323 = vrot.lane.b32.xlu0 %v1172, 12
  %v1324 = vpop.permute.xlu0 %1323
  %1325 = vrot.lane.b32.xlu0 %v1173, 12
  %v1326 = vpop.permute.xlu0 %1325
  %1327 = vrot.lane.b32.xlu0 %v1174, 12
  %v1328 = vpop.permute.xlu0 %1327
  %1329 = vrot.lane.b32.xlu0 %v1175, 12
  %v1330 = vpop.permute.xlu0 %1329
  %1331 = vrot.lane.b32.xlu0 %v1176, 12
  %v1332 = vpop.permute.xlu0 %1331
  %1333 = vrot.lane.b32.xlu0 %v1177, 12
  %v1334 = vpop.permute.xlu0 %1333
  %1335 = vrot.lane.b32.xlu0 %v1178, 12
  %v1336 = vpop.permute.xlu0 %1335
  %1337 = vrot.lane.b32.xlu0 %v1179, 12
  %v1338 = vpop.permute.xlu0 %1337
  %1339 = vrot.lane.b32.xlu0 %v1180, 12
  %v1340 = vpop.permute.xlu0 %1339
  %1341 = vrot.lane.b32.xlu0 %v1181, 12
  %v1342 = vpop.permute.xlu0 %1341
  %1343 = vrot.lane.b32.xlu0 %v1182, 12
  %v1344 = vpop.permute.xlu0 %1343
  %1345 = vrot.lane.b32.xlu0 %v1183, 12
  %v1346 = vpop.permute.xlu0 %1345
  %1347 = vrot.lane.b32.xlu0 %v1184, 12
  %v1348 = vpop.permute.xlu0 %1347
  %1349 = vrot.lane.b32.xlu0 %v1185, 12
  %v1350 = vpop.permute.xlu0 %1349
  %1351 = vrot.lane.b32.xlu0 %v1186, 12
  %v1352 = vpop.permute.xlu0 %1351
  %1353 = vrot.lane.b32.xlu0 %v1187, 12
  %v1354 = vpop.permute.xlu0 %1353
  %1355 = vrot.lane.b32.xlu0 %v1188, 12
  %v1356 = vpop.permute.xlu0 %1355
  %1357 = vrot.lane.b32.xlu0 %v1189, 12
  %v1358 = vpop.permute.xlu0 %1357
  %1359 = vrot.lane.b32.xlu0 %v1190, 12
  %v1360 = vpop.permute.xlu0 %1359
  %1361 = vrot.lane.b32.xlu0 %v1191, 12
  %v1362 = vpop.permute.xlu0 %1361
  %1363 = vrot.lane.b32.xlu0 %v1192, 12
  %v1364 = vpop.permute.xlu0 %1363
  %1365 = vrot.lane.b32.xlu0 %v1193, 12
  %v1366 = vpop.permute.xlu0 %1365
  %1367 = vrot.lane.b32.xlu0 %v1194, 12
  %v1368 = vpop.permute.xlu0 %1367
  %1369 = vrot.lane.b32.xlu0 %v1195, 12
  %v1370 = vpop.permute.xlu0 %1369
  %1371 = vrot.lane.b32.xlu0 %v1196, 12
  %v1372 = vpop.permute.xlu0 %1371
  %1373 = vrot.lane.b32.xlu0 %v1197, 12
  %v1374 = vpop.permute.xlu0 %1373
  %1375 = vrot.lane.b32.xlu0 %v1198, 12
  %v1376 = vpop.permute.xlu0 %1375
  %1377 = vrot.lane.b32.xlu0 %v1199, 12
  %v1378 = vpop.permute.xlu0 %1377
  %1379 = vrot.lane.b32.xlu0 %v1200, 12
  %v1380 = vpop.permute.xlu0 %1379
  %1381 = vrot.lane.b32.xlu0 %v1201, 12
  %v1382 = vpop.permute.xlu0 %1381
  %1383 = vrot.lane.b32.xlu0 %v1202, 12
  %v1384 = vpop.permute.xlu0 %1383
  %1385 = vrot.lane.b32.xlu0 %v1203, 12
  %v1386 = vpop.permute.xlu0 %1385
  %1387 = vrot.lane.b32.xlu0 %v1204, 12
  %v1388 = vpop.permute.xlu0 %1387
  %1389 = vrot.lane.b32.xlu0 %v1205, 12
  %v1390 = vpop.permute.xlu0 %1389
  %1391 = vrot.lane.b32.xlu0 %v1206, 12
  %v1392 = vpop.permute.xlu0 %1391
  %1393 = vrot.lane.b32.xlu0 %v1207, 12
  %v1394 = vpop.permute.xlu0 %1393
  %1395 = vrot.lane.b32.xlu0 %v1208, 12
  %v1396 = vpop.permute.xlu0 %1395
  %1397 = vrot.lane.b32.xlu0 %v1209, 12
  %v1398 = vpop.permute.xlu0 %1397
  %1399 = vrot.lane.b32.xlu0 %v1210, 12
  %v1400 = vpop.permute.xlu0 %1399
  %1401 = vrot.lane.b32.xlu0 %v1211, 12
  %v1402 = vpop.permute.xlu0 %1401
  %1403 = vrot.lane.b32.xlu0 %v1212, 12
  %v1404 = vpop.permute.xlu0 %1403
  %vm1469 = vcmask 130144
  %1470 = vst.msk [vmem:[#allocation4] sm:$0xff] %vm1469, %v1278
  %1471 = vst.msk [vmem:[#allocation4 + $0x8] sm:$0xff] %vm1469, %v1280
  %1472 = vst.msk [vmem:[#allocation4 + $0x10] sm:$0xff] %vm1469, %v1282
  %1473 = vst.msk [vmem:[#allocation4 + $0x18] sm:$0xff] %vm1469, %v1284
  %1474 = vst.msk [vmem:[#allocation4 + $0x20] sm:$0xff] %vm1469, %v1286
  %1475 = vst.msk [vmem:[#allocation4 + $0x28] sm:$0xff] %vm1469, %v1288
  %1476 = vst.msk [vmem:[#allocation4 + $0x30] sm:$0xff] %vm1469, %v1290
  %1477 = vst.msk [vmem:[#allocation4 + $0x38] sm:$0xff] %vm1469, %v1292
  %1478 = vst.msk [vmem:[#allocation4 + $0x40] sm:$0xff] %vm1469, %v1294
  %1479 = vst.msk [vmem:[#allocation4 + $0x48] sm:$0xff] %vm1469, %v1296
  %1480 = vst.msk [vmem:[#allocation4 + $0x50] sm:$0xff] %vm1469, %v1298
  %1481 = vst.msk [vmem:[#allocation4 + $0x58] sm:$0xff] %vm1469, %v1300
  %1482 = vst.msk [vmem:[#allocation4 + $0x60] sm:$0xff] %vm1469, %v1302
  %1483 = vst.msk [vmem:[#allocation4 + $0x68] sm:$0xff] %vm1469, %v1304
  %1484 = vst.msk [vmem:[#allocation4 + $0x70] sm:$0xff] %vm1469, %v1306
  %1485 = vst.msk [vmem:[#allocation4 + $0x78] sm:$0xff] %vm1469, %v1308
  %1486 = vst.msk [vmem:[#allocation4 + $0x80] sm:$0xff] %vm1469, %v1310
  %1487 = vst.msk [vmem:[#allocation4 + $0x88] sm:$0xff] %vm1469, %v1312
  %1488 = vst.msk [vmem:[#allocation4 + $0x90] sm:$0xff] %vm1469, %v1314
  %1489 = vst.msk [vmem:[#allocation4 + $0x98] sm:$0xff] %vm1469, %v1316
  %1490 = vst.msk [vmem:[#allocation4 + $0xa0] sm:$0xff] %vm1469, %v1318
  %1491 = vst.msk [vmem:[#allocation4 + $0xa8] sm:$0xff] %vm1469, %v1320
  %1492 = vst.msk [vmem:[#allocation4 + $0xb0] sm:$0xff] %vm1469, %v1322
  %1493 = vst.msk [vmem:[#allocation4 + $0xb8] sm:$0xff] %vm1469, %v1324
  %1494 = vst.msk [vmem:[#allocation4 + $0xc0] sm:$0xff] %vm1469, %v1326
  %1495 = vst.msk [vmem:[#allocation4 + $0xc8] sm:$0xff] %vm1469, %v1328
  %1496 = vst.msk [vmem:[#allocation4 + $0xd0] sm:$0xff] %vm1469, %v1330
  %1497 = vst.msk [vmem:[#allocation4 + $0xd8] sm:$0xff] %vm1469, %v1332
  %1498 = vst.msk [vmem:[#allocation4 + $0xe0] sm:$0xff] %vm1469, %v1334
  %1499 = vst.msk [vmem:[#allocation4 + $0xe8] sm:$0xff] %vm1469, %v1336
  %1500 = vst.msk [vmem:[#allocation4 + $0xf0] sm:$0xff] %vm1469, %v1338
  %1501 = vst.msk [vmem:[#allocation4 + $0xf8] sm:$0xff] %vm1469, %v1340
  %1502 = vst.msk [vmem:[#allocation4 + $0x100] sm:$0xff] %vm1469, %v1342
  %1503 = vst.msk [vmem:[#allocation4 + $0x108] sm:$0xff] %vm1469, %v1344
  %1504 = vst.msk [vmem:[#allocation4 + $0x110] sm:$0xff] %vm1469, %v1346
  %1505 = vst.msk [vmem:[#allocation4 + $0x118] sm:$0xff] %vm1469, %v1348
  %1506 = vst.msk [vmem:[#allocation4 + $0x120] sm:$0xff] %vm1469, %v1350
  %1507 = vst.msk [vmem:[#allocation4 + $0x128] sm:$0xff] %vm1469, %v1352
  %1508 = vst.msk [vmem:[#allocation4 + $0x130] sm:$0xff] %vm1469, %v1354
  %1509 = vst.msk [vmem:[#allocation4 + $0x138] sm:$0xff] %vm1469, %v1356
  %1510 = vst.msk [vmem:[#allocation4 + $0x140] sm:$0xff] %vm1469, %v1358
  %1511 = vst.msk [vmem:[#allocation4 + $0x148] sm:$0xff] %vm1469, %v1360
  %1512 = vst.msk [vmem:[#allocation4 + $0x150] sm:$0xff] %vm1469, %v1362
  %1513 = vst.msk [vmem:[#allocation4 + $0x158] sm:$0xff] %vm1469, %v1364
  %1514 = vst.msk [vmem:[#allocation4 + $0x160] sm:$0xff] %vm1469, %v1366
  %1515 = vst.msk [vmem:[#allocation4 + $0x168] sm:$0xff] %vm1469, %v1368
  %1516 = vst.msk [vmem:[#allocation4 + $0x170] sm:$0xff] %vm1469, %v1370
  %1517 = vst.msk [vmem:[#allocation4 + $0x178] sm:$0xff] %vm1469, %v1372
  %1518 = vst.msk [vmem:[#allocation4 + $0x180] sm:$0xff] %vm1469, %v1374
  %1519 = vst.msk [vmem:[#allocation4 + $0x188] sm:$0xff] %vm1469, %v1376
  %1520 = vst.msk [vmem:[#allocation4 + $0x190] sm:$0xff] %vm1469, %v1378
  %1521 = vst.msk [vmem:[#allocation4 + $0x198] sm:$0xff] %vm1469, %v1380
  %1522 = vst.msk [vmem:[#allocation4 + $0x1a0] sm:$0xff] %vm1469, %v1382
  %1523 = vst.msk [vmem:[#allocation4 + $0x1a8] sm:$0xff] %vm1469, %v1384
  %1524 = vst.msk [vmem:[#allocation4 + $0x1b0] sm:$0xff] %vm1469, %v1386
  %1525 = vst.msk [vmem:[#allocation4 + $0x1b8] sm:$0xff] %vm1469, %v1388
  %1526 = vst.msk [vmem:[#allocation4 + $0x1c0] sm:$0xff] %vm1469, %v1390
  %1527 = vst.msk [vmem:[#allocation4 + $0x1c8] sm:$0xff] %vm1469, %v1392
  %1528 = vst.msk [vmem:[#allocation4 + $0x1d0] sm:$0xff] %vm1469, %v1394
  %1529 = vst.msk [vmem:[#allocation4 + $0x1d8] sm:$0xff] %vm1469, %v1396
  %1530 = vst.msk [vmem:[#allocation4 + $0x1e0] sm:$0xff] %vm1469, %v1398
  %1531 = vst.msk [vmem:[#allocation4 + $0x1e8] sm:$0xff] %vm1469, %v1400
  %1532 = vst.msk [vmem:[#allocation4 + $0x1f0] sm:$0xff] %vm1469, %v1402
  %1533 = vst.msk [vmem:[#allocation4 + $0x1f8] sm:$0xff] %vm1469, %v1404
  %v1534 = vld [vmem:[%s98 + $0x1] sm:$0xff]
  %v1535 = vld [vmem:[%s98 + $0x9] sm:$0xff]
  %v1536 = vld [vmem:[%s98 + $0x19] sm:$0xff]
  %v1537 = vld [vmem:[%s98 + $0x21] sm:$0xff]
  %v1538 = vld [vmem:[%s98 + $0x31] sm:$0xff]
  %v1539 = vld [vmem:[%s98 + $0x39] sm:$0xff]
  %v1540 = vld [vmem:[%s98 + $0x49] sm:$0xff]
  %v1541 = vld [vmem:[%s98 + $0x51] sm:$0xff]
  %v1542 = vld [vmem:[%s98 + $0x61] sm:$0xff]
  %v1543 = vld [vmem:[%s98 + $0x69] sm:$0xff]
  %v1544 = vld [vmem:[%s98 + $0x79] sm:$0xff]
  %v1545 = vld [vmem:[%s98 + $0x81] sm:$0xff]
  %v1546 = vld [vmem:[%s98 + $0x91] sm:$0xff]
  %v1547 = vld [vmem:[%s98 + $0x99] sm:$0xff]
  %v1548 = vld [vmem:[%s98 + $0xa9] sm:$0xff]
  %v1549 = vld [vmem:[%s98 + $0xb1] sm:$0xff]
  %v1550 = vld [vmem:[%s98 + $0xc1] sm:$0xff]
  %v1551 = vld [vmem:[%s98 + $0xc9] sm:$0xff]
  %v1552 = vld [vmem:[%s98 + $0xd9] sm:$0xff]
  %v1553 = vld [vmem:[%s98 + $0xe1] sm:$0xff]
  %v1554 = vld [vmem:[%s98 + $0xf1] sm:$0xff]
  %v1555 = vld [vmem:[%s98 + $0xf9] sm:$0xff]
  %v1556 = vld [vmem:[%s98 + $0x109] sm:$0xff]
  %v1557 = vld [vmem:[%s98 + $0x111] sm:$0xff]
  %v1558 = vld [vmem:[%s98 + $0x121] sm:$0xff]
  %v1559 = vld [vmem:[%s98 + $0x129] sm:$0xff]
  %v1560 = vld [vmem:[%s98 + $0x139] sm:$0xff]
  %v1561 = vld [vmem:[%s98 + $0x141] sm:$0xff]
  %v1562 = vld [vmem:[%s98 + $0x151] sm:$0xff]
  %v1563 = vld [vmem:[%s98 + $0x159] sm:$0xff]
  %v1564 = vld [vmem:[%s98 + $0x169] sm:$0xff]
  %v1565 = vld [vmem:[%s98 + $0x171] sm:$0xff]
  %v1566 = vld [vmem:[%s98 + $0x1b1] sm:$0xff]
  %v1567 = vld [vmem:[%s98 + $0x1b9] sm:$0xff]
  %v1568 = vld [vmem:[%s98 + $0x1c9] sm:$0xff]
  %v1569 = vld [vmem:[%s98 + $0x1d1] sm:$0xff]
  %v1570 = vld [vmem:[%s98 + $0x1e1] sm:$0xff]
  %v1571 = vld [vmem:[%s98 + $0x1e9] sm:$0xff]
  %v1572 = vld [vmem:[%s98 + $0x1f9] sm:$0xff]
  %v1573 = vld [vmem:[%s98 + $0x201] sm:$0xff]
  %v1574 = vld [vmem:[%s98 + $0x211] sm:$0xff]
  %v1575 = vld [vmem:[%s98 + $0x219] sm:$0xff]
  %v1576 = vld [vmem:[%s98 + $0x229] sm:$0xff]
  %v1577 = vld [vmem:[%s98 + $0x231] sm:$0xff]
  %v1578 = vld [vmem:[%s98 + $0x241] sm:$0xff]
  %v1579 = vld [vmem:[%s98 + $0x249] sm:$0xff]
  %v1580 = vld [vmem:[%s98 + $0x259] sm:$0xff]
  %v1581 = vld [vmem:[%s98 + $0x261] sm:$0xff]
  %v1582 = vld [vmem:[%s98 + $0x271] sm:$0xff]
  %v1583 = vld [vmem:[%s98 + $0x279] sm:$0xff]
  %v1584 = vld [vmem:[%s98 + $0x289] sm:$0xff]
  %v1585 = vld [vmem:[%s98 + $0x291] sm:$0xff]
  %v1586 = vld [vmem:[%s98 + $0x2a1] sm:$0xff]
  %v1587 = vld [vmem:[%s98 + $0x2a9] sm:$0xff]
  %v1588 = vld [vmem:[%s98 + $0x2b9] sm:$0xff]
  %v1589 = vld [vmem:[%s98 + $0x2c1] sm:$0xff]
  %v1590 = vld [vmem:[%s98 + $0x2d1] sm:$0xff]
  %v1591 = vld [vmem:[%s98 + $0x2d9] sm:$0xff]
  %v1592 = vld [vmem:[%s98 + $0x2e9] sm:$0xff]
  %v1593 = vld [vmem:[%s98 + $0x2f1] sm:$0xff]
  %v1594 = vld [vmem:[%s98 + $0x301] sm:$0xff]
  %v1595 = vld [vmem:[%s98 + $0x309] sm:$0xff]
  %v1596 = vld [vmem:[%s98 + $0x319] sm:$0xff]
  %v1597 = vld [vmem:[%s98 + $0x321] sm:$0xff]
  %1662 = vrot.lane.b32.xlu0 %v1534, 16
  %v1663 = vpop.permute.xlu0 %1662
  %1664 = vrot.lane.b32.xlu0 %v1535, 16
  %v1665 = vpop.permute.xlu0 %1664
  %1666 = vrot.lane.b32.xlu0 %v1536, 16
  %v1667 = vpop.permute.xlu0 %1666
  %1668 = vrot.lane.b32.xlu0 %v1537, 16
  %v1669 = vpop.permute.xlu0 %1668
  %1670 = vrot.lane.b32.xlu0 %v1538, 16
  %v1671 = vpop.permute.xlu0 %1670
  %1672 = vrot.lane.b32.xlu0 %v1539, 16
  %v1673 = vpop.permute.xlu0 %1672
  %1674 = vrot.lane.b32.xlu0 %v1540, 16
  %v1675 = vpop.permute.xlu0 %1674
  %1676 = vrot.lane.b32.xlu0 %v1541, 16
  %v1677 = vpop.permute.xlu0 %1676
  %1678 = vrot.lane.b32.xlu0 %v1542, 16
  %v1679 = vpop.permute.xlu0 %1678
  %1680 = vrot.lane.b32.xlu0 %v1543, 16
  %v1681 = vpop.permute.xlu0 %1680
  %1682 = vrot.lane.b32.xlu0 %v1544, 16
  %v1683 = vpop.permute.xlu0 %1682
  %1684 = vrot.lane.b32.xlu0 %v1545, 16
  %v1685 = vpop.permute.xlu0 %1684
  %1686 = vrot.lane.b32.xlu0 %v1546, 16
  %v1687 = vpop.permute.xlu0 %1686
  %1688 = vrot.lane.b32.xlu0 %v1547, 16
  %v1689 = vpop.permute.xlu0 %1688
  %1690 = vrot.lane.b32.xlu0 %v1548, 16
  %v1691 = vpop.permute.xlu0 %1690
  %1692 = vrot.lane.b32.xlu0 %v1549, 16
  %v1693 = vpop.permute.xlu0 %1692
  %1694 = vrot.lane.b32.xlu0 %v1550, 16
  %v1695 = vpop.permute.xlu0 %1694
  %1696 = vrot.lane.b32.xlu0 %v1551, 16
  %v1697 = vpop.permute.xlu0 %1696
  %1698 = vrot.lane.b32.xlu0 %v1552, 16
  %v1699 = vpop.permute.xlu0 %1698
  %1700 = vrot.lane.b32.xlu0 %v1553, 16
  %v1701 = vpop.permute.xlu0 %1700
  %1702 = vrot.lane.b32.xlu0 %v1554, 16
  %v1703 = vpop.permute.xlu0 %1702
  %1704 = vrot.lane.b32.xlu0 %v1555, 16
  %v1705 = vpop.permute.xlu0 %1704
  %1706 = vrot.lane.b32.xlu0 %v1556, 16
  %v1707 = vpop.permute.xlu0 %1706
  %1708 = vrot.lane.b32.xlu0 %v1557, 16
  %v1709 = vpop.permute.xlu0 %1708
  %1710 = vrot.lane.b32.xlu0 %v1558, 16
  %v1711 = vpop.permute.xlu0 %1710
  %1712 = vrot.lane.b32.xlu0 %v1559, 16
  %v1713 = vpop.permute.xlu0 %1712
  %1714 = vrot.lane.b32.xlu0 %v1560, 16
  %v1715 = vpop.permute.xlu0 %1714
  %1716 = vrot.lane.b32.xlu0 %v1561, 16
  %v1717 = vpop.permute.xlu0 %1716
  %1718 = vrot.lane.b32.xlu0 %v1562, 16
  %v1719 = vpop.permute.xlu0 %1718
  %1720 = vrot.lane.b32.xlu0 %v1563, 16
  %v1721 = vpop.permute.xlu0 %1720
  %1722 = vrot.lane.b32.xlu0 %v1564, 16
  %v1723 = vpop.permute.xlu0 %1722
  %1724 = vrot.lane.b32.xlu0 %v1565, 16
  %v1725 = vpop.permute.xlu0 %1724
  %1726 = vrot.lane.b32.xlu0 %v1566, 16
  %v1727 = vpop.permute.xlu0 %1726
  %1728 = vrot.lane.b32.xlu0 %v1567, 16
  %v1729 = vpop.permute.xlu0 %1728
  %1730 = vrot.lane.b32.xlu0 %v1568, 16
  %v1731 = vpop.permute.xlu0 %1730
  %1732 = vrot.lane.b32.xlu0 %v1569, 16
  %v1733 = vpop.permute.xlu0 %1732
  %1734 = vrot.lane.b32.xlu0 %v1570, 16
  %v1735 = vpop.permute.xlu0 %1734
  %1736 = vrot.lane.b32.xlu0 %v1571, 16
  %v1737 = vpop.permute.xlu0 %1736
  %1738 = vrot.lane.b32.xlu0 %v1572, 16
  %v1739 = vpop.permute.xlu0 %1738
  %1740 = vrot.lane.b32.xlu0 %v1573, 16
  %v1741 = vpop.permute.xlu0 %1740
  %1742 = vrot.lane.b32.xlu0 %v1574, 16
  %v1743 = vpop.permute.xlu0 %1742
  %1744 = vrot.lane.b32.xlu0 %v1575, 16
  %v1745 = vpop.permute.xlu0 %1744
  %1746 = vrot.lane.b32.xlu0 %v1576, 16
  %v1747 = vpop.permute.xlu0 %1746
  %1748 = vrot.lane.b32.xlu0 %v1577, 16
  %v1749 = vpop.permute.xlu0 %1748
  %1750 = vrot.lane.b32.xlu0 %v1578, 16
  %v1751 = vpop.permute.xlu0 %1750
  %1752 = vrot.lane.b32.xlu0 %v1579, 16
  %v1753 = vpop.permute.xlu0 %1752
  %1754 = vrot.lane.b32.xlu0 %v1580, 16
  %v1755 = vpop.permute.xlu0 %1754
  %1756 = vrot.lane.b32.xlu0 %v1581, 16
  %v1757 = vpop.permute.xlu0 %1756
  %1758 = vrot.lane.b32.xlu0 %v1582, 16
  %v1759 = vpop.permute.xlu0 %1758
  %1760 = vrot.lane.b32.xlu0 %v1583, 16
  %v1761 = vpop.permute.xlu0 %1760
  %1762 = vrot.lane.b32.xlu0 %v1584, 16
  %v1763 = vpop.permute.xlu0 %1762
  %1764 = vrot.lane.b32.xlu0 %v1585, 16
  %v1765 = vpop.permute.xlu0 %1764
  %1766 = vrot.lane.b32.xlu0 %v1586, 16
  %v1767 = vpop.permute.xlu0 %1766
  %1768 = vrot.lane.b32.xlu0 %v1587, 16
  %v1769 = vpop.permute.xlu0 %1768
  %1770 = vrot.lane.b32.xlu0 %v1588, 16
  %v1771 = vpop.permute.xlu0 %1770
  %1772 = vrot.lane.b32.xlu0 %v1589, 16
  %v1773 = vpop.permute.xlu0 %1772
  %1774 = vrot.lane.b32.xlu0 %v1590, 16
  %v1775 = vpop.permute.xlu0 %1774
  %1776 = vrot.lane.b32.xlu0 %v1591, 16
  %v1777 = vpop.permute.xlu0 %1776
  %1778 = vrot.lane.b32.xlu0 %v1592, 16
  %v1779 = vpop.permute.xlu0 %1778
  %1780 = vrot.lane.b32.xlu0 %v1593, 16
  %v1781 = vpop.permute.xlu0 %1780
  %1782 = vrot.lane.b32.xlu0 %v1594, 16
  %v1783 = vpop.permute.xlu0 %1782
  %1784 = vrot.lane.b32.xlu0 %v1595, 16
  %v1785 = vpop.permute.xlu0 %1784
  %1786 = vrot.lane.b32.xlu0 %v1596, 16
  %v1787 = vpop.permute.xlu0 %1786
  %1788 = vrot.lane.b32.xlu0 %v1597, 16
  %v1789 = vpop.permute.xlu0 %1788
  %vm1854 = vcmask 162944
  %1855 = vst.msk [vmem:[#allocation4] sm:$0xff] %vm1854, %v1663
  %1856 = vst.msk [vmem:[#allocation4 + $0x8] sm:$0xff] %vm1854, %v1665
  %1857 = vst.msk [vmem:[#allocation4 + $0x10] sm:$0xff] %vm1854, %v1667
  %1858 = vst.msk [vmem:[#allocation4 + $0x18] sm:$0xff] %vm1854, %v1669
  %1859 = vst.msk [vmem:[#allocation4 + $0x20] sm:$0xff] %vm1854, %v1671
  %1860 = vst.msk [vmem:[#allocation4 + $0x28] sm:$0xff] %vm1854, %v1673
  %1861 = vst.msk [vmem:[#allocation4 + $0x30] sm:$0xff] %vm1854, %v1675
  %1862 = vst.msk [vmem:[#allocation4 + $0x38] sm:$0xff] %vm1854, %v1677
  %1863 = vst.msk [vmem:[#allocation4 + $0x40] sm:$0xff] %vm1854, %v1679
  %1864 = vst.msk [vmem:[#allocation4 + $0x48] sm:$0xff] %vm1854, %v1681
  %1865 = vst.msk [vmem:[#allocation4 + $0x50] sm:$0xff] %vm1854, %v1683
  %1866 = vst.msk [vmem:[#allocation4 + $0x58] sm:$0xff] %vm1854, %v1685
  %1867 = vst.msk [vmem:[#allocation4 + $0x60] sm:$0xff] %vm1854, %v1687
  %1868 = vst.msk [vmem:[#allocation4 + $0x68] sm:$0xff] %vm1854, %v1689
  %1869 = vst.msk [vmem:[#allocation4 + $0x70] sm:$0xff] %vm1854, %v1691
  %1870 = vst.msk [vmem:[#allocation4 + $0x78] sm:$0xff] %vm1854, %v1693
  %1871 = vst.msk [vmem:[#allocation4 + $0x80] sm:$0xff] %vm1854, %v1695
  %1872 = vst.msk [vmem:[#allocation4 + $0x88] sm:$0xff] %vm1854, %v1697
  %1873 = vst.msk [vmem:[#allocation4 + $0x90] sm:$0xff] %vm1854, %v1699
  %1874 = vst.msk [vmem:[#allocation4 + $0x98] sm:$0xff] %vm1854, %v1701
  %1875 = vst.msk [vmem:[#allocation4 + $0xa0] sm:$0xff] %vm1854, %v1703
  %1876 = vst.msk [vmem:[#allocation4 + $0xa8] sm:$0xff] %vm1854, %v1705
  %1877 = vst.msk [vmem:[#allocation4 + $0xb0] sm:$0xff] %vm1854, %v1707
  %1878 = vst.msk [vmem:[#allocation4 + $0xb8] sm:$0xff] %vm1854, %v1709
  %1879 = vst.msk [vmem:[#allocation4 + $0xc0] sm:$0xff] %vm1854, %v1711
  %1880 = vst.msk [vmem:[#allocation4 + $0xc8] sm:$0xff] %vm1854, %v1713
  %1881 = vst.msk [vmem:[#allocation4 + $0xd0] sm:$0xff] %vm1854, %v1715
  %1882 = vst.msk [vmem:[#allocation4 + $0xd8] sm:$0xff] %vm1854, %v1717
  %1883 = vst.msk [vmem:[#allocation4 + $0xe0] sm:$0xff] %vm1854, %v1719
  %1884 = vst.msk [vmem:[#allocation4 + $0xe8] sm:$0xff] %vm1854, %v1721
  %1885 = vst.msk [vmem:[#allocation4 + $0xf0] sm:$0xff] %vm1854, %v1723
  %1886 = vst.msk [vmem:[#allocation4 + $0xf8] sm:$0xff] %vm1854, %v1725
  %1887 = vst.msk [vmem:[#allocation4 + $0x100] sm:$0xff] %vm1854, %v1727
  %1888 = vst.msk [vmem:[#allocation4 + $0x108] sm:$0xff] %vm1854, %v1729
  %1889 = vst.msk [vmem:[#allocation4 + $0x110] sm:$0xff] %vm1854, %v1731
  %1890 = vst.msk [vmem:[#allocation4 + $0x118] sm:$0xff] %vm1854, %v1733
  %1891 = vst.msk [vmem:[#allocation4 + $0x120] sm:$0xff] %vm1854, %v1735
  %1892 = vst.msk [vmem:[#allocation4 + $0x128] sm:$0xff] %vm1854, %v1737
  %1893 = vst.msk [vmem:[#allocation4 + $0x130] sm:$0xff] %vm1854, %v1739
  %1894 = vst.msk [vmem:[#allocation4 + $0x138] sm:$0xff] %vm1854, %v1741
  %1895 = vst.msk [vmem:[#allocation4 + $0x140] sm:$0xff] %vm1854, %v1743
  %1896 = vst.msk [vmem:[#allocation4 + $0x148] sm:$0xff] %vm1854, %v1745
  %1897 = vst.msk [vmem:[#allocation4 + $0x150] sm:$0xff] %vm1854, %v1747
  %1898 = vst.msk [vmem:[#allocation4 + $0x158] sm:$0xff] %vm1854, %v1749
  %1899 = vst.msk [vmem:[#allocation4 + $0x160] sm:$0xff] %vm1854, %v1751
  %1900 = vst.msk [vmem:[#allocation4 + $0x168] sm:$0xff] %vm1854, %v1753
  %1901 = vst.msk [vmem:[#allocation4 + $0x170] sm:$0xff] %vm1854, %v1755
  %1902 = vst.msk [vmem:[#allocation4 + $0x178] sm:$0xff] %vm1854, %v1757
  %1903 = vst.msk [vmem:[#allocation4 + $0x180] sm:$0xff] %vm1854, %v1759
  %1904 = vst.msk [vmem:[#allocation4 + $0x188] sm:$0xff] %vm1854, %v1761
  %1905 = vst.msk [vmem:[#allocation4 + $0x190] sm:$0xff] %vm1854, %v1763
  %1906 = vst.msk [vmem:[#allocation4 + $0x198] sm:$0xff] %vm1854, %v1765
  %1907 = vst.msk [vmem:[#allocation4 + $0x1a0] sm:$0xff] %vm1854, %v1767
  %1908 = vst.msk [vmem:[#allocation4 + $0x1a8] sm:$0xff] %vm1854, %v1769
  %1909 = vst.msk [vmem:[#allocation4 + $0x1b0] sm:$0xff] %vm1854, %v1771
  %1910 = vst.msk [vmem:[#allocation4 + $0x1b8] sm:$0xff] %vm1854, %v1773
  %1911 = vst.msk [vmem:[#allocation4 + $0x1c0] sm:$0xff] %vm1854, %v1775
  %1912 = vst.msk [vmem:[#allocation4 + $0x1c8] sm:$0xff] %vm1854, %v1777
  %1913 = vst.msk [vmem:[#allocation4 + $0x1d0] sm:$0xff] %vm1854, %v1779
  %1914 = vst.msk [vmem:[#allocation4 + $0x1d8] sm:$0xff] %vm1854, %v1781
  %1915 = vst.msk [vmem:[#allocation4 + $0x1e0] sm:$0xff] %vm1854, %v1783
  %1916 = vst.msk [vmem:[#allocation4 + $0x1e8] sm:$0xff] %vm1854, %v1785
  %1917 = vst.msk [vmem:[#allocation4 + $0x1f0] sm:$0xff] %vm1854, %v1787
  %1918 = vst.msk [vmem:[#allocation4 + $0x1f8] sm:$0xff] %vm1854, %v1789
  %v1919 = vld [vmem:[%s98 + $0x2] sm:$0xff]
  %v1920 = vld [vmem:[%s98 + $0xa] sm:$0xff]
  %v1921 = vld [vmem:[%s98 + $0x1a] sm:$0xff]
  %v1922 = vld [vmem:[%s98 + $0x22] sm:$0xff]
  %v1923 = vld [vmem:[%s98 + $0x32] sm:$0xff]
  %v1924 = vld [vmem:[%s98 + $0x3a] sm:$0xff]
  %v1925 = vld [vmem:[%s98 + $0x4a] sm:$0xff]
  %v1926 = vld [vmem:[%s98 + $0x52] sm:$0xff]
  %v1927 = vld [vmem:[%s98 + $0x62] sm:$0xff]
  %v1928 = vld [vmem:[%s98 + $0x6a] sm:$0xff]
  %v1929 = vld [vmem:[%s98 + $0x7a] sm:$0xff]
  %v1930 = vld [vmem:[%s98 + $0x82] sm:$0xff]
  %v1931 = vld [vmem:[%s98 + $0x92] sm:$0xff]
  %v1932 = vld [vmem:[%s98 + $0x9a] sm:$0xff]
  %v1933 = vld [vmem:[%s98 + $0xaa] sm:$0xff]
  %v1934 = vld [vmem:[%s98 + $0xb2] sm:$0xff]
  %v1935 = vld [vmem:[%s98 + $0xc2] sm:$0xff]
  %v1936 = vld [vmem:[%s98 + $0xca] sm:$0xff]
  %v1937 = vld [vmem:[%s98 + $0xda] sm:$0xff]
  %v1938 = vld [vmem:[%s98 + $0xe2] sm:$0xff]
  %v1939 = vld [vmem:[%s98 + $0xf2] sm:$0xff]
  %v1940 = vld [vmem:[%s98 + $0xfa] sm:$0xff]
  %v1941 = vld [vmem:[%s98 + $0x10a] sm:$0xff]
  %v1942 = vld [vmem:[%s98 + $0x112] sm:$0xff]
  %v1943 = vld [vmem:[%s98 + $0x122] sm:$0xff]
  %v1944 = vld [vmem:[%s98 + $0x12a] sm:$0xff]
  %v1945 = vld [vmem:[%s98 + $0x13a] sm:$0xff]
  %v1946 = vld [vmem:[%s98 + $0x142] sm:$0xff]
  %v1947 = vld [vmem:[%s98 + $0x152] sm:$0xff]
  %v1948 = vld [vmem:[%s98 + $0x15a] sm:$0xff]
  %v1949 = vld [vmem:[%s98 + $0x16a] sm:$0xff]
  %v1950 = vld [vmem:[%s98 + $0x172] sm:$0xff]
  %v1951 = vld [vmem:[%s98 + $0x1b2] sm:$0xff]
  %v1952 = vld [vmem:[%s98 + $0x1ba] sm:$0xff]
  %v1953 = vld [vmem:[%s98 + $0x1ca] sm:$0xff]
  %v1954 = vld [vmem:[%s98 + $0x1d2] sm:$0xff]
  %v1955 = vld [vmem:[%s98 + $0x1e2] sm:$0xff]
  %v1956 = vld [vmem:[%s98 + $0x1ea] sm:$0xff]
  %v1957 = vld [vmem:[%s98 + $0x1fa] sm:$0xff]
  %v1958 = vld [vmem:[%s98 + $0x202] sm:$0xff]
  %v1959 = vld [vmem:[%s98 + $0x212] sm:$0xff]
  %v1960 = vld [vmem:[%s98 + $0x21a] sm:$0xff]
  %v1961 = vld [vmem:[%s98 + $0x22a] sm:$0xff]
  %v1962 = vld [vmem:[%s98 + $0x232] sm:$0xff]
  %v1963 = vld [vmem:[%s98 + $0x242] sm:$0xff]
  %v1964 = vld [vmem:[%s98 + $0x24a] sm:$0xff]
  %v1965 = vld [vmem:[%s98 + $0x25a] sm:$0xff]
  %v1966 = vld [vmem:[%s98 + $0x262] sm:$0xff]
  %v1967 = vld [vmem:[%s98 + $0x272] sm:$0xff]
  %v1968 = vld [vmem:[%s98 + $0x27a] sm:$0xff]
  %v1969 = vld [vmem:[%s98 + $0x28a] sm:$0xff]
  %v1970 = vld [vmem:[%s98 + $0x292] sm:$0xff]
  %v1971 = vld [vmem:[%s98 + $0x2a2] sm:$0xff]
  %v1972 = vld [vmem:[%s98 + $0x2aa] sm:$0xff]
  %v1973 = vld [vmem:[%s98 + $0x2ba] sm:$0xff]
  %v1974 = vld [vmem:[%s98 + $0x2c2] sm:$0xff]
  %v1975 = vld [vmem:[%s98 + $0x2d2] sm:$0xff]
  %v1976 = vld [vmem:[%s98 + $0x2da] sm:$0xff]
  %v1977 = vld [vmem:[%s98 + $0x2ea] sm:$0xff]
  %v1978 = vld [vmem:[%s98 + $0x2f2] sm:$0xff]
  %v1979 = vld [vmem:[%s98 + $0x302] sm:$0xff]
  %v1980 = vld [vmem:[%s98 + $0x30a] sm:$0xff]
  %v1981 = vld [vmem:[%s98 + $0x31a] sm:$0xff]
  %v1982 = vld [vmem:[%s98 + $0x322] sm:$0xff]
  %2047 = vrot.lane.b32.xlu0 %v1919, 20
  %v2048 = vpop.permute.xlu0 %2047
  %2049 = vrot.lane.b32.xlu0 %v1920, 20
  %v2050 = vpop.permute.xlu0 %2049
  %2051 = vrot.lane.b32.xlu0 %v1921, 20
  %v2052 = vpop.permute.xlu0 %2051
  %2053 = vrot.lane.b32.xlu0 %v1922, 20
  %v2054 = vpop.permute.xlu0 %2053
  %2055 = vrot.lane.b32.xlu0 %v1923, 20
  %v2056 = vpop.permute.xlu0 %2055
  %2057 = vrot.lane.b32.xlu0 %v1924, 20
  %v2058 = vpop.permute.xlu0 %2057
  %2059 = vrot.lane.b32.xlu0 %v1925, 20
  %v2060 = vpop.permute.xlu0 %2059
  %2061 = vrot.lane.b32.xlu0 %v1926, 20
  %v2062 = vpop.permute.xlu0 %2061
  %2063 = vrot.lane.b32.xlu0 %v1927, 20
  %v2064 = vpop.permute.xlu0 %2063
  %2065 = vrot.lane.b32.xlu0 %v1928, 20
  %v2066 = vpop.permute.xlu0 %2065
  %2067 = vrot.lane.b32.xlu0 %v1929, 20
  %v2068 = vpop.permute.xlu0 %2067
  %2069 = vrot.lane.b32.xlu0 %v1930, 20
  %v2070 = vpop.permute.xlu0 %2069
  %2071 = vrot.lane.b32.xlu0 %v1931, 20
  %v2072 = vpop.permute.xlu0 %2071
  %2073 = vrot.lane.b32.xlu0 %v1932, 20
  %v2074 = vpop.permute.xlu0 %2073
  %2075 = vrot.lane.b32.xlu0 %v1933, 20
  %v2076 = vpop.permute.xlu0 %2075
  %2077 = vrot.lane.b32.xlu0 %v1934, 20
  %v2078 = vpop.permute.xlu0 %2077
  %2079 = vrot.lane.b32.xlu0 %v1935, 20
  %v2080 = vpop.permute.xlu0 %2079
  %2081 = vrot.lane.b32.xlu0 %v1936, 20
  %v2082 = vpop.permute.xlu0 %2081
  %2083 = vrot.lane.b32.xlu0 %v1937, 20
  %v2084 = vpop.permute.xlu0 %2083
  %2085 = vrot.lane.b32.xlu0 %v1938, 20
  %v2086 = vpop.permute.xlu0 %2085
  %2087 = vrot.lane.b32.xlu0 %v1939, 20
  %v2088 = vpop.permute.xlu0 %2087
  %2089 = vrot.lane.b32.xlu0 %v1940, 20
  %v2090 = vpop.permute.xlu0 %2089
  %2091 = vrot.lane.b32.xlu0 %v1941, 20
  %v2092 = vpop.permute.xlu0 %2091
  %2093 = vrot.lane.b32.xlu0 %v1942, 20
  %v2094 = vpop.permute.xlu0 %2093
  %2095 = vrot.lane.b32.xlu0 %v1943, 20
  %v2096 = vpop.permute.xlu0 %2095
  %2097 = vrot.lane.b32.xlu0 %v1944, 20
  %v2098 = vpop.permute.xlu0 %2097
  %2099 = vrot.lane.b32.xlu0 %v1945, 20
  %v2100 = vpop.permute.xlu0 %2099
  %2101 = vrot.lane.b32.xlu0 %v1946, 20
  %v2102 = vpop.permute.xlu0 %2101
  %2103 = vrot.lane.b32.xlu0 %v1947, 20
  %v2104 = vpop.permute.xlu0 %2103
  %2105 = vrot.lane.b32.xlu0 %v1948, 20
  %v2106 = vpop.permute.xlu0 %2105
  %2107 = vrot.lane.b32.xlu0 %v1949, 20
  %v2108 = vpop.permute.xlu0 %2107
  %2109 = vrot.lane.b32.xlu0 %v1950, 20
  %v2110 = vpop.permute.xlu0 %2109
  %2111 = vrot.lane.b32.xlu0 %v1951, 20
  %v2112 = vpop.permute.xlu0 %2111
  %2113 = vrot.lane.b32.xlu0 %v1952, 20
  %v2114 = vpop.permute.xlu0 %2113
  %2115 = vrot.lane.b32.xlu0 %v1953, 20
  %v2116 = vpop.permute.xlu0 %2115
  %2117 = vrot.lane.b32.xlu0 %v1954, 20
  %v2118 = vpop.permute.xlu0 %2117
  %2119 = vrot.lane.b32.xlu0 %v1955, 20
  %v2120 = vpop.permute.xlu0 %2119
  %2121 = vrot.lane.b32.xlu0 %v1956, 20
  %v2122 = vpop.permute.xlu0 %2121
  %2123 = vrot.lane.b32.xlu0 %v1957, 20
  %v2124 = vpop.permute.xlu0 %2123
  %2125 = vrot.lane.b32.xlu0 %v1958, 20
  %v2126 = vpop.permute.xlu0 %2125
  %2127 = vrot.lane.b32.xlu0 %v1959, 20
  %v2128 = vpop.permute.xlu0 %2127
  %2129 = vrot.lane.b32.xlu0 %v1960, 20
  %v2130 = vpop.permute.xlu0 %2129
  %2131 = vrot.lane.b32.xlu0 %v1961, 20
  %v2132 = vpop.permute.xlu0 %2131
  %2133 = vrot.lane.b32.xlu0 %v1962, 20
  %v2134 = vpop.permute.xlu0 %2133
  %2135 = vrot.lane.b32.xlu0 %v1963, 20
  %v2136 = vpop.permute.xlu0 %2135
  %2137 = vrot.lane.b32.xlu0 %v1964, 20
  %v2138 = vpop.permute.xlu0 %2137
  %2139 = vrot.lane.b32.xlu0 %v1965, 20
  %v2140 = vpop.permute.xlu0 %2139
  %2141 = vrot.lane.b32.xlu0 %v1966, 20
  %v2142 = vpop.permute.xlu0 %2141
  %2143 = vrot.lane.b32.xlu0 %v1967, 20
  %v2144 = vpop.permute.xlu0 %2143
  %2145 = vrot.lane.b32.xlu0 %v1968, 20
  %v2146 = vpop.permute.xlu0 %2145
  %2147 = vrot.lane.b32.xlu0 %v1969, 20
  %v2148 = vpop.permute.xlu0 %2147
  %2149 = vrot.lane.b32.xlu0 %v1970, 20
  %v2150 = vpop.permute.xlu0 %2149
  %2151 = vrot.lane.b32.xlu0 %v1971, 20
  %v2152 = vpop.permute.xlu0 %2151
  %2153 = vrot.lane.b32.xlu0 %v1972, 20
  %v2154 = vpop.permute.xlu0 %2153
  %2155 = vrot.lane.b32.xlu0 %v1973, 20
  %v2156 = vpop.permute.xlu0 %2155
  %2157 = vrot.lane.b32.xlu0 %v1974, 20
  %v2158 = vpop.permute.xlu0 %2157
  %2159 = vrot.lane.b32.xlu0 %v1975, 20
  %v2160 = vpop.permute.xlu0 %2159
  %2161 = vrot.lane.b32.xlu0 %v1976, 20
  %v2162 = vpop.permute.xlu0 %2161
  %2163 = vrot.lane.b32.xlu0 %v1977, 20
  %v2164 = vpop.permute.xlu0 %2163
  %2165 = vrot.lane.b32.xlu0 %v1978, 20
  %v2166 = vpop.permute.xlu0 %2165
  %2167 = vrot.lane.b32.xlu0 %v1979, 20
  %v2168 = vpop.permute.xlu0 %2167
  %2169 = vrot.lane.b32.xlu0 %v1980, 20
  %v2170 = vpop.permute.xlu0 %2169
  %2171 = vrot.lane.b32.xlu0 %v1981, 20
  %v2172 = vpop.permute.xlu0 %2171
  %2173 = vrot.lane.b32.xlu0 %v1982, 20
  %v2174 = vpop.permute.xlu0 %2173
  %vm2239 = vcmask 195744
  %2240 = vst.msk [vmem:[#allocation4] sm:$0xff] %vm2239, %v2048
  %2241 = vst.msk [vmem:[#allocation4 + $0x8] sm:$0xff] %vm2239, %v2050
  %2242 = vst.msk [vmem:[#allocation4 + $0x10] sm:$0xff] %vm2239, %v2052
  %2243 = vst.msk [vmem:[#allocation4 + $0x18] sm:$0xff] %vm2239, %v2054
  %2244 = vst.msk [vmem:[#allocation4 + $0x20] sm:$0xff] %vm2239, %v2056
  %2245 = vst.msk [vmem:[#allocation4 + $0x28] sm:$0xff] %vm2239, %v2058
  %2246 = vst.msk [vmem:[#allocation4 + $0x30] sm:$0xff] %vm2239, %v2060
  %2247 = vst.msk [vmem:[#allocation4 + $0x38] sm:$0xff] %vm2239, %v2062
  %2248 = vst.msk [vmem:[#allocation4 + $0x40] sm:$0xff] %vm2239, %v2064
  %2249 = vst.msk [vmem:[#allocation4 + $0x48] sm:$0xff] %vm2239, %v2066
  %2250 = vst.msk [vmem:[#allocation4 + $0x50] sm:$0xff] %vm2239, %v2068
  %2251 = vst.msk [vmem:[#allocation4 + $0x58] sm:$0xff] %vm2239, %v2070
  %2252 = vst.msk [vmem:[#allocation4 + $0x60] sm:$0xff] %vm2239, %v2072
  %2253 = vst.msk [vmem:[#allocation4 + $0x68] sm:$0xff] %vm2239, %v2074
  %2254 = vst.msk [vmem:[#allocation4 + $0x70] sm:$0xff] %vm2239, %v2076
  %2255 = vst.msk [vmem:[#allocation4 + $0x78] sm:$0xff] %vm2239, %v2078
  %2256 = vst.msk [vmem:[#allocation4 + $0x80] sm:$0xff] %vm2239, %v2080
  %2257 = vst.msk [vmem:[#allocation4 + $0x88] sm:$0xff] %vm2239, %v2082
  %2258 = vst.msk [vmem:[#allocation4 + $0x90] sm:$0xff] %vm2239, %v2084
  %2259 = vst.msk [vmem:[#allocation4 + $0x98] sm:$0xff] %vm2239, %v2086
  %2260 = vst.msk [vmem:[#allocation4 + $0xa0] sm:$0xff] %vm2239, %v2088
  %2261 = vst.msk [vmem:[#allocation4 + $0xa8] sm:$0xff] %vm2239, %v2090
  %2262 = vst.msk [vmem:[#allocation4 + $0xb0] sm:$0xff] %vm2239, %v2092
  %2263 = vst.msk [vmem:[#allocation4 + $0xb8] sm:$0xff] %vm2239, %v2094
  %2264 = vst.msk [vmem:[#allocation4 + $0xc0] sm:$0xff] %vm2239, %v2096
  %2265 = vst.msk [vmem:[#allocation4 + $0xc8] sm:$0xff] %vm2239, %v2098
  %2266 = vst.msk [vmem:[#allocation4 + $0xd0] sm:$0xff] %vm2239, %v2100
  %2267 = vst.msk [vmem:[#allocation4 + $0xd8] sm:$0xff] %vm2239, %v2102
  %2268 = vst.msk [vmem:[#allocation4 + $0xe0] sm:$0xff] %vm2239, %v2104
  %2269 = vst.msk [vmem:[#allocation4 + $0xe8] sm:$0xff] %vm2239, %v2106
  %2270 = vst.msk [vmem:[#allocation4 + $0xf0] sm:$0xff] %vm2239, %v2108
  %2271 = vst.msk [vmem:[#allocation4 + $0xf8] sm:$0xff] %vm2239, %v2110
  %2272 = vst.msk [vmem:[#allocation4 + $0x100] sm:$0xff] %vm2239, %v2112
  %2273 = vst.msk [vmem:[#allocation4 + $0x108] sm:$0xff] %vm2239, %v2114
  %2274 = vst.msk [vmem:[#allocation4 + $0x110] sm:$0xff] %vm2239, %v2116
  %2275 = vst.msk [vmem:[#allocation4 + $0x118] sm:$0xff] %vm2239, %v2118
  %2276 = vst.msk [vmem:[#allocation4 + $0x120] sm:$0xff] %vm2239, %v2120
  %2277 = vst.msk [vmem:[#allocation4 + $0x128] sm:$0xff] %vm2239, %v2122
  %2278 = vst.msk [vmem:[#allocation4 + $0x130] sm:$0xff] %vm2239, %v2124
  %2279 = vst.msk [vmem:[#allocation4 + $0x138] sm:$0xff] %vm2239, %v2126
  %2280 = vst.msk [vmem:[#allocation4 + $0x140] sm:$0xff] %vm2239, %v2128
  %2281 = vst.msk [vmem:[#allocation4 + $0x148] sm:$0xff] %vm2239, %v2130
  %2282 = vst.msk [vmem:[#allocation4 + $0x150] sm:$0xff] %vm2239, %v2132
  %2283 = vst.msk [vmem:[#allocation4 + $0x158] sm:$0xff] %vm2239, %v2134
  %2284 = vst.msk [vmem:[#allocation4 + $0x160] sm:$0xff] %vm2239, %v2136
  %2285 = vst.msk [vmem:[#allocation4 + $0x168] sm:$0xff] %vm2239, %v2138
  %2286 = vst.msk [vmem:[#allocation4 + $0x170] sm:$0xff] %vm2239, %v2140
  %2287 = vst.msk [vmem:[#allocation4 + $0x178] sm:$0xff] %vm2239, %v2142
  %2288 = vst.msk [vmem:[#allocation4 + $0x180] sm:$0xff] %vm2239, %v2144
  %2289 = vst.msk [vmem:[#allocation4 + $0x188] sm:$0xff] %vm2239, %v2146
  %2290 = vst.msk [vmem:[#allocation4 + $0x190] sm:$0xff] %vm2239, %v2148
  %2291 = vst.msk [vmem:[#allocation4 + $0x198] sm:$0xff] %vm2239, %v2150
  %2292 = vst.msk [vmem:[#allocation4 + $0x1a0] sm:$0xff] %vm2239, %v2152
  %2293 = vst.msk [vmem:[#allocation4 + $0x1a8] sm:$0xff] %vm2239, %v2154
  %2294 = vst.msk [vmem:[#allocation4 + $0x1b0] sm:$0xff] %vm2239, %v2156
  %2295 = vst.msk [vmem:[#allocation4 + $0x1b8] sm:$0xff] %vm2239, %v2158
  %2296 = vst.msk [vmem:[#allocation4 + $0x1c0] sm:$0xff] %vm2239, %v2160
  %2297 = vst.msk [vmem:[#allocation4 + $0x1c8] sm:$0xff] %vm2239, %v2162
  %2298 = vst.msk [vmem:[#allocation4 + $0x1d0] sm:$0xff] %vm2239, %v2164
  %2299 = vst.msk [vmem:[#allocation4 + $0x1d8] sm:$0xff] %vm2239, %v2166
  %2300 = vst.msk [vmem:[#allocation4 + $0x1e0] sm:$0xff] %vm2239, %v2168
  %2301 = vst.msk [vmem:[#allocation4 + $0x1e8] sm:$0xff] %vm2239, %v2170
  %2302 = vst.msk [vmem:[#allocation4 + $0x1f0] sm:$0xff] %vm2239, %v2172
  %2303 = vst.msk [vmem:[#allocation4 + $0x1f8] sm:$0xff] %vm2239, %v2174
  %s2304 = scalar_lea.vmem [#allocation2], 48
  %v2305 = vld [vmem:[%s2304] sm:$0xff]
  %v2306 = vld [vmem:[%s2304 + $0x8] sm:$0xff]
  %v2307 = vld [vmem:[%s2304 + $0x18] sm:$0xff]
  %v2308 = vld [vmem:[%s2304 + $0x20] sm:$0xff]
  %v2309 = vld [vmem:[%s2304 + $0x30] sm:$0xff]
  %v2310 = vld [vmem:[%s2304 + $0x38] sm:$0xff]
  %v2311 = vld [vmem:[%s2304 + $0x48] sm:$0xff]
  %v2312 = vld [vmem:[%s2304 + $0x50] sm:$0xff]
  %v2313 = vld [vmem:[%s2304 + $0x60] sm:$0xff]
  %v2314 = vld [vmem:[%s2304 + $0x68] sm:$0xff]
  %v2315 = vld [vmem:[%s2304 + $0x78] sm:$0xff]
  %v2316 = vld [vmem:[%s2304 + $0x80] sm:$0xff]
  %v2317 = vld [vmem:[%s2304 + $0x90] sm:$0xff]
  %v2318 = vld [vmem:[%s2304 + $0x98] sm:$0xff]
  %v2319 = vld [vmem:[%s2304 + $0xa8] sm:$0xff]
  %v2320 = vld [vmem:[%s2304 + $0xb0] sm:$0xff]
  %v2321 = vld [vmem:[%s2304 + $0xc0] sm:$0xff]
  %v2322 = vld [vmem:[%s2304 + $0xc8] sm:$0xff]
  %v2323 = vld [vmem:[%s2304 + $0xd8] sm:$0xff]
  %v2324 = vld [vmem:[%s2304 + $0xe0] sm:$0xff]
  %v2325 = vld [vmem:[%s2304 + $0xf0] sm:$0xff]
  %v2326 = vld [vmem:[%s2304 + $0xf8] sm:$0xff]
  %v2327 = vld [vmem:[%s2304 + $0x108] sm:$0xff]
  %v2328 = vld [vmem:[%s2304 + $0x110] sm:$0xff]
  %v2329 = vld [vmem:[%s2304 + $0x120] sm:$0xff]
  %v2330 = vld [vmem:[%s2304 + $0x128] sm:$0xff]
  %v2331 = vld [vmem:[%s2304 + $0x138] sm:$0xff]
  %v2332 = vld [vmem:[%s2304 + $0x140] sm:$0xff]
  %v2333 = vld [vmem:[%s2304 + $0x150] sm:$0xff]
  %v2334 = vld [vmem:[%s2304 + $0x158] sm:$0xff]
  %v2335 = vld [vmem:[%s2304 + $0x168] sm:$0xff]
  %v2336 = vld [vmem:[%s2304 + $0x170] sm:$0xff]
  %v2337 = vld [vmem:[%s2304 + $0x1b0] sm:$0xff]
  %v2338 = vld [vmem:[%s2304 + $0x1b8] sm:$0xff]
  %v2339 = vld [vmem:[%s2304 + $0x1c8] sm:$0xff]
  %v2340 = vld [vmem:[%s2304 + $0x1d0] sm:$0xff]
  %v2341 = vld [vmem:[%s2304 + $0x1e0] sm:$0xff]
  %v2342 = vld [vmem:[%s2304 + $0x1e8] sm:$0xff]
  %v2343 = vld [vmem:[%s2304 + $0x1f8] sm:$0xff]
  %v2344 = vld [vmem:[%s2304 + $0x200] sm:$0xff]
  %v2345 = vld [vmem:[%s2304 + $0x210] sm:$0xff]
  %v2346 = vld [vmem:[%s2304 + $0x218] sm:$0xff]
  %v2347 = vld [vmem:[%s2304 + $0x228] sm:$0xff]
  %v2348 = vld [vmem:[%s2304 + $0x230] sm:$0xff]
  %v2349 = vld [vmem:[%s2304 + $0x240] sm:$0xff]
  %v2350 = vld [vmem:[%s2304 + $0x248] sm:$0xff]
  %v2351 = vld [vmem:[%s2304 + $0x258] sm:$0xff]
  %v2352 = vld [vmem:[%s2304 + $0x260] sm:$0xff]
  %v2353 = vld [vmem:[%s2304 + $0x270] sm:$0xff]
  %v2354 = vld [vmem:[%s2304 + $0x278] sm:$0xff]
  %v2355 = vld [vmem:[%s2304 + $0x288] sm:$0xff]
  %v2356 = vld [vmem:[%s2304 + $0x290] sm:$0xff]
  %v2357 = vld [vmem:[%s2304 + $0x2a0] sm:$0xff]
  %v2358 = vld [vmem:[%s2304 + $0x2a8] sm:$0xff]
  %v2359 = vld [vmem:[%s2304 + $0x2b8] sm:$0xff]
  %v2360 = vld [vmem:[%s2304 + $0x2c0] sm:$0xff]
  %v2361 = vld [vmem:[%s2304 + $0x2d0] sm:$0xff]
  %v2362 = vld [vmem:[%s2304 + $0x2d8] sm:$0xff]
  %v2363 = vld [vmem:[%s2304 + $0x2e8] sm:$0xff]
  %v2364 = vld [vmem:[%s2304 + $0x2f0] sm:$0xff]
  %v2365 = vld [vmem:[%s2304 + $0x300] sm:$0xff]
  %v2366 = vld [vmem:[%s2304 + $0x308] sm:$0xff]
  %v2367 = vld [vmem:[%s2304 + $0x318] sm:$0xff]
  %v2368 = vld [vmem:[%s2304 + $0x320] sm:$0xff]
  %2433 = vrot.lane.b32.xlu0 %v2305, 24
  %v2434 = vpop.permute.xlu0 %2433
  %2435 = vrot.lane.b32.xlu0 %v2306, 24
  %v2436 = vpop.permute.xlu0 %2435
  %2437 = vrot.lane.b32.xlu0 %v2307, 24
  %v2438 = vpop.permute.xlu0 %2437
  %2439 = vrot.lane.b32.xlu0 %v2308, 24
  %v2440 = vpop.permute.xlu0 %2439
  %2441 = vrot.lane.b32.xlu0 %v2309, 24
  %v2442 = vpop.permute.xlu0 %2441
  %2443 = vrot.lane.b32.xlu0 %v2310, 24
  %v2444 = vpop.permute.xlu0 %2443
  %2445 = vrot.lane.b32.xlu0 %v2311, 24
  %v2446 = vpop.permute.xlu0 %2445
  %2447 = vrot.lane.b32.xlu0 %v2312, 24
  %v2448 = vpop.permute.xlu0 %2447
  %2449 = vrot.lane.b32.xlu0 %v2313, 24
  %v2450 = vpop.permute.xlu0 %2449
  %2451 = vrot.lane.b32.xlu0 %v2314, 24
  %v2452 = vpop.permute.xlu0 %2451
  %2453 = vrot.lane.b32.xlu0 %v2315, 24
  %v2454 = vpop.permute.xlu0 %2453
  %2455 = vrot.lane.b32.xlu0 %v2316, 24
  %v2456 = vpop.permute.xlu0 %2455
  %2457 = vrot.lane.b32.xlu0 %v2317, 24
  %v2458 = vpop.permute.xlu0 %2457
  %2459 = vrot.lane.b32.xlu0 %v2318, 24
  %v2460 = vpop.permute.xlu0 %2459
  %2461 = vrot.lane.b32.xlu0 %v2319, 24
  %v2462 = vpop.permute.xlu0 %2461
  %2463 = vrot.lane.b32.xlu0 %v2320, 24
  %v2464 = vpop.permute.xlu0 %2463
  %2465 = vrot.lane.b32.xlu0 %v2321, 24
  %v2466 = vpop.permute.xlu0 %2465
  %2467 = vrot.lane.b32.xlu0 %v2322, 24
  %v2468 = vpop.permute.xlu0 %2467
  %2469 = vrot.lane.b32.xlu0 %v2323, 24
  %v2470 = vpop.permute.xlu0 %2469
  %2471 = vrot.lane.b32.xlu0 %v2324, 24
  %v2472 = vpop.permute.xlu0 %2471
  %2473 = vrot.lane.b32.xlu0 %v2325, 24
  %v2474 = vpop.permute.xlu0 %2473
  %2475 = vrot.lane.b32.xlu0 %v2326, 24
  %v2476 = vpop.permute.xlu0 %2475
  %2477 = vrot.lane.b32.xlu0 %v2327, 24
  %v2478 = vpop.permute.xlu0 %2477
  %2479 = vrot.lane.b32.xlu0 %v2328, 24
  %v2480 = vpop.permute.xlu0 %2479
  %2481 = vrot.lane.b32.xlu0 %v2329, 24
  %v2482 = vpop.permute.xlu0 %2481
  %2483 = vrot.lane.b32.xlu0 %v2330, 24
  %v2484 = vpop.permute.xlu0 %2483
  %2485 = vrot.lane.b32.xlu0 %v2331, 24
  %v2486 = vpop.permute.xlu0 %2485
  %2487 = vrot.lane.b32.xlu0 %v2332, 24
  %v2488 = vpop.permute.xlu0 %2487
  %2489 = vrot.lane.b32.xlu0 %v2333, 24
  %v2490 = vpop.permute.xlu0 %2489
  %2491 = vrot.lane.b32.xlu0 %v2334, 24
  %v2492 = vpop.permute.xlu0 %2491
  %2493 = vrot.lane.b32.xlu0 %v2335, 24
  %v2494 = vpop.permute.xlu0 %2493
  %2495 = vrot.lane.b32.xlu0 %v2336, 24
  %v2496 = vpop.permute.xlu0 %2495
  %2497 = vrot.lane.b32.xlu0 %v2337, 24
  %v2498 = vpop.permute.xlu0 %2497
  %2499 = vrot.lane.b32.xlu0 %v2338, 24
  %v2500 = vpop.permute.xlu0 %2499
  %2501 = vrot.lane.b32.xlu0 %v2339, 24
  %v2502 = vpop.permute.xlu0 %2501
  %2503 = vrot.lane.b32.xlu0 %v2340, 24
  %v2504 = vpop.permute.xlu0 %2503
  %2505 = vrot.lane.b32.xlu0 %v2341, 24
  %v2506 = vpop.permute.xlu0 %2505
  %2507 = vrot.lane.b32.xlu0 %v2342, 24
  %v2508 = vpop.permute.xlu0 %2507
  %2509 = vrot.lane.b32.xlu0 %v2343, 24
  %v2510 = vpop.permute.xlu0 %2509
  %2511 = vrot.lane.b32.xlu0 %v2344, 24
  %v2512 = vpop.permute.xlu0 %2511
  %2513 = vrot.lane.b32.xlu0 %v2345, 24
  %v2514 = vpop.permute.xlu0 %2513
  %2515 = vrot.lane.b32.xlu0 %v2346, 24
  %v2516 = vpop.permute.xlu0 %2515
  %2517 = vrot.lane.b32.xlu0 %v2347, 24
  %v2518 = vpop.permute.xlu0 %2517
  %2519 = vrot.lane.b32.xlu0 %v2348, 24
  %v2520 = vpop.permute.xlu0 %2519
  %2521 = vrot.lane.b32.xlu0 %v2349, 24
  %v2522 = vpop.permute.xlu0 %2521
  %2523 = vrot.lane.b32.xlu0 %v2350, 24
  %v2524 = vpop.permute.xlu0 %2523
  %2525 = vrot.lane.b32.xlu0 %v2351, 24
  %v2526 = vpop.permute.xlu0 %2525
  %2527 = vrot.lane.b32.xlu0 %v2352, 24
  %v2528 = vpop.permute.xlu0 %2527
  %2529 = vrot.lane.b32.xlu0 %v2353, 24
  %v2530 = vpop.permute.xlu0 %2529
  %2531 = vrot.lane.b32.xlu0 %v2354, 24
  %v2532 = vpop.permute.xlu0 %2531
  %2533 = vrot.lane.b32.xlu0 %v2355, 24
  %v2534 = vpop.permute.xlu0 %2533
  %2535 = vrot.lane.b32.xlu0 %v2356, 24
  %v2536 = vpop.permute.xlu0 %2535
  %2537 = vrot.lane.b32.xlu0 %v2357, 24
  %v2538 = vpop.permute.xlu0 %2537
  %2539 = vrot.lane.b32.xlu0 %v2358, 24
  %v2540 = vpop.permute.xlu0 %2539
  %2541 = vrot.lane.b32.xlu0 %v2359, 24
  %v2542 = vpop.permute.xlu0 %2541
  %2543 = vrot.lane.b32.xlu0 %v2360, 24
  %v2544 = vpop.permute.xlu0 %2543
  %2545 = vrot.lane.b32.xlu0 %v2361, 24
  %v2546 = vpop.permute.xlu0 %2545
  %2547 = vrot.lane.b32.xlu0 %v2362, 24
  %v2548 = vpop.permute.xlu0 %2547
  %2549 = vrot.lane.b32.xlu0 %v2363, 24
  %v2550 = vpop.permute.xlu0 %2549
  %2551 = vrot.lane.b32.xlu0 %v2364, 24
  %v2552 = vpop.permute.xlu0 %2551
  %2553 = vrot.lane.b32.xlu0 %v2365, 24
  %v2554 = vpop.permute.xlu0 %2553
  %2555 = vrot.lane.b32.xlu0 %v2366, 24
  %v2556 = vpop.permute.xlu0 %2555
  %2557 = vrot.lane.b32.xlu0 %v2367, 24
  %v2558 = vpop.permute.xlu0 %2557
  %2559 = vrot.lane.b32.xlu0 %v2368, 24
  %v2560 = vpop.permute.xlu0 %2559
  %vm2625 = vcmask 228544
  %2626 = vst.msk [vmem:[#allocation4] sm:$0xff] %vm2625, %v2434
  %2627 = vst.msk [vmem:[#allocation4 + $0x8] sm:$0xff] %vm2625, %v2436
  %2628 = vst.msk [vmem:[#allocation4 + $0x10] sm:$0xff] %vm2625, %v2438
  %2629 = vst.msk [vmem:[#allocation4 + $0x18] sm:$0xff] %vm2625, %v2440
  %2630 = vst.msk [vmem:[#allocation4 + $0x20] sm:$0xff] %vm2625, %v2442
  %2631 = vst.msk [vmem:[#allocation4 + $0x28] sm:$0xff] %vm2625, %v2444
  %2632 = vst.msk [vmem:[#allocation4 + $0x30] sm:$0xff] %vm2625, %v2446
  %2633 = vst.msk [vmem:[#allocation4 + $0x38] sm:$0xff] %vm2625, %v2448
  %2634 = vst.msk [vmem:[#allocation4 + $0x40] sm:$0xff] %vm2625, %v2450
  %2635 = vst.msk [vmem:[#allocation4 + $0x48] sm:$0xff] %vm2625, %v2452
  %2636 = vst.msk [vmem:[#allocation4 + $0x50] sm:$0xff] %vm2625, %v2454
  %2637 = vst.msk [vmem:[#allocation4 + $0x58] sm:$0xff] %vm2625, %v2456
  %2638 = vst.msk [vmem:[#allocation4 + $0x60] sm:$0xff] %vm2625, %v2458
  %2639 = vst.msk [vmem:[#allocation4 + $0x68] sm:$0xff] %vm2625, %v2460
  %2640 = vst.msk [vmem:[#allocation4 + $0x70] sm:$0xff] %vm2625, %v2462
  %2641 = vst.msk [vmem:[#allocation4 + $0x78] sm:$0xff] %vm2625, %v2464
  %2642 = vst.msk [vmem:[#allocation4 + $0x80] sm:$0xff] %vm2625, %v2466
  %2643 = vst.msk [vmem:[#allocation4 + $0x88] sm:$0xff] %vm2625, %v2468
  %2644 = vst.msk [vmem:[#allocation4 + $0x90] sm:$0xff] %vm2625, %v2470
  %2645 = vst.msk [vmem:[#allocation4 + $0x98] sm:$0xff] %vm2625, %v2472
  %2646 = vst.msk [vmem:[#allocation4 + $0xa0] sm:$0xff] %vm2625, %v2474
  %2647 = vst.msk [vmem:[#allocation4 + $0xa8] sm:$0xff] %vm2625, %v2476
  %2648 = vst.msk [vmem:[#allocation4 + $0xb0] sm:$0xff] %vm2625, %v2478
  %2649 = vst.msk [vmem:[#allocation4 + $0xb8] sm:$0xff] %vm2625, %v2480
  %2650 = vst.msk [vmem:[#allocation4 + $0xc0] sm:$0xff] %vm2625, %v2482
  %2651 = vst.msk [vmem:[#allocation4 + $0xc8] sm:$0xff] %vm2625, %v2484
  %2652 = vst.msk [vmem:[#allocation4 + $0xd0] sm:$0xff] %vm2625, %v2486
  %2653 = vst.msk [vmem:[#allocation4 + $0xd8] sm:$0xff] %vm2625, %v2488
  %2654 = vst.msk [vmem:[#allocation4 + $0xe0] sm:$0xff] %vm2625, %v2490
  %2655 = vst.msk [vmem:[#allocation4 + $0xe8] sm:$0xff] %vm2625, %v2492
  %2656 = vst.msk [vmem:[#allocation4 + $0xf0] sm:$0xff] %vm2625, %v2494
  %2657 = vst.msk [vmem:[#allocation4 + $0xf8] sm:$0xff] %vm2625, %v2496
  %2658 = vst.msk [vmem:[#allocation4 + $0x100] sm:$0xff] %vm2625, %v2498
  %2659 = vst.msk [vmem:[#allocation4 + $0x108] sm:$0xff] %vm2625, %v2500
  %2660 = vst.msk [vmem:[#allocation4 + $0x110] sm:$0xff] %vm2625, %v2502
  %2661 = vst.msk [vmem:[#allocation4 + $0x118] sm:$0xff] %vm2625, %v2504
  %2662 = vst.msk [vmem:[#allocation4 + $0x120] sm:$0xff] %vm2625, %v2506
  %2663 = vst.msk [vmem:[#allocation4 + $0x128] sm:$0xff] %vm2625, %v2508
  %2664 = vst.msk [vmem:[#allocation4 + $0x130] sm:$0xff] %vm2625, %v2510
  %2665 = vst.msk [vmem:[#allocation4 + $0x138] sm:$0xff] %vm2625, %v2512
  %2666 = vst.msk [vmem:[#allocation4 + $0x140] sm:$0xff] %vm2625, %v2514
  %2667 = vst.msk [vmem:[#allocation4 + $0x148] sm:$0xff] %vm2625, %v2516
  %2668 = vst.msk [vmem:[#allocation4 + $0x150] sm:$0xff] %vm2625, %v2518
  %2669 = vst.msk [vmem:[#allocation4 + $0x158] sm:$0xff] %vm2625, %v2520
  %2670 = vst.msk [vmem:[#allocation4 + $0x160] sm:$0xff] %vm2625, %v2522
  %2671 = vst.msk [vmem:[#allocation4 + $0x168] sm:$0xff] %vm2625, %v2524
  %2672 = vst.msk [vmem:[#allocation4 + $0x170] sm:$0xff] %vm2625, %v2526
  %2673 = vst.msk [vmem:[#allocation4 + $0x178] sm:$0xff] %vm2625, %v2528
  %2674 = vst.msk [vmem:[#allocation4 + $0x180] sm:$0xff] %vm2625, %v2530
  %2675 = vst.msk [vmem:[#allocation4 + $0x188] sm:$0xff] %vm2625, %v2532
  %2676 = vst.msk [vmem:[#allocation4 + $0x190] sm:$0xff] %vm2625, %v2534
  %2677 = vst.msk [vmem:[#allocation4 + $0x198] sm:$0xff] %vm2625, %v2536
  %2678 = vst.msk [vmem:[#allocation4 + $0x1a0] sm:$0xff] %vm2625, %v2538
  %2679 = vst.msk [vmem:[#allocation4 + $0x1a8] sm:$0xff] %vm2625, %v2540
  %2680 = vst.msk [vmem:[#allocation4 + $0x1b0] sm:$0xff] %vm2625, %v2542
  %2681 = vst.msk [vmem:[#allocation4 + $0x1b8] sm:$0xff] %vm2625, %v2544
  %2682 = vst.msk [vmem:[#allocation4 + $0x1c0] sm:$0xff] %vm2625, %v2546
  %2683 = vst.msk [vmem:[#allocation4 + $0x1c8] sm:$0xff] %vm2625, %v2548
  %2684 = vst.msk [vmem:[#allocation4 + $0x1d0] sm:$0xff] %vm2625, %v2550
  %2685 = vst.msk [vmem:[#allocation4 + $0x1d8] sm:$0xff] %vm2625, %v2552
  %2686 = vst.msk [vmem:[#allocation4 + $0x1e0] sm:$0xff] %vm2625, %v2554
  %2687 = vst.msk [vmem:[#allocation4 + $0x1e8] sm:$0xff] %vm2625, %v2556
  %2688 = vst.msk [vmem:[#allocation4 + $0x1f0] sm:$0xff] %vm2625, %v2558
  %2689 = vst.msk [vmem:[#allocation4 + $0x1f8] sm:$0xff] %vm2625, %v2560
  %v2690 = vld [vmem:[%s2304 + $0x1] sm:$0xff]
  %v2691 = vld [vmem:[%s2304 + $0x9] sm:$0xff]
  %v2692 = vld [vmem:[%s2304 + $0x19] sm:$0xff]
  %v2693 = vld [vmem:[%s2304 + $0x21] sm:$0xff]
  %v2694 = vld [vmem:[%s2304 + $0x31] sm:$0xff]
  %v2695 = vld [vmem:[%s2304 + $0x39] sm:$0xff]
  %v2696 = vld [vmem:[%s2304 + $0x49] sm:$0xff]
  %v2697 = vld [vmem:[%s2304 + $0x51] sm:$0xff]
  %v2698 = vld [vmem:[%s2304 + $0x61] sm:$0xff]
  %v2699 = vld [vmem:[%s2304 + $0x69] sm:$0xff]
  %v2700 = vld [vmem:[%s2304 + $0x79] sm:$0xff]
  %v2701 = vld [vmem:[%s2304 + $0x81] sm:$0xff]
  %v2702 = vld [vmem:[%s2304 + $0x91] sm:$0xff]
  %v2703 = vld [vmem:[%s2304 + $0x99] sm:$0xff]
  %v2704 = vld [vmem:[%s2304 + $0xa9] sm:$0xff]
  %v2705 = vld [vmem:[%s2304 + $0xb1] sm:$0xff]
  %v2706 = vld [vmem:[%s2304 + $0xc1] sm:$0xff]
  %v2707 = vld [vmem:[%s2304 + $0xc9] sm:$0xff]
  %v2708 = vld [vmem:[%s2304 + $0xd9] sm:$0xff]
  %v2709 = vld [vmem:[%s2304 + $0xe1] sm:$0xff]
  %v2710 = vld [vmem:[%s2304 + $0xf1] sm:$0xff]
  %v2711 = vld [vmem:[%s2304 + $0xf9] sm:$0xff]
  %v2712 = vld [vmem:[%s2304 + $0x109] sm:$0xff]
  %v2713 = vld [vmem:[%s2304 + $0x111] sm:$0xff]
  %v2714 = vld [vmem:[%s2304 + $0x121] sm:$0xff]
  %v2715 = vld [vmem:[%s2304 + $0x129] sm:$0xff]
  %v2716 = vld [vmem:[%s2304 + $0x139] sm:$0xff]
  %v2717 = vld [vmem:[%s2304 + $0x141] sm:$0xff]
  %v2718 = vld [vmem:[%s2304 + $0x151] sm:$0xff]
  %v2719 = vld [vmem:[%s2304 + $0x159] sm:$0xff]
  %v2720 = vld [vmem:[%s2304 + $0x169] sm:$0xff]
  %v2721 = vld [vmem:[%s2304 + $0x171] sm:$0xff]
  %v2722 = vld [vmem:[%s2304 + $0x1b1] sm:$0xff]
  %v2723 = vld [vmem:[%s2304 + $0x1b9] sm:$0xff]
  %v2724 = vld [vmem:[%s2304 + $0x1c9] sm:$0xff]
  %v2725 = vld [vmem:[%s2304 + $0x1d1] sm:$0xff]
  %v2726 = vld [vmem:[%s2304 + $0x1e1] sm:$0xff]
  %v2727 = vld [vmem:[%s2304 + $0x1e9] sm:$0xff]
  %v2728 = vld [vmem:[%s2304 + $0x1f9] sm:$0xff]
  %v2729 = vld [vmem:[%s2304 + $0x201] sm:$0xff]
  %v2730 = vld [vmem:[%s2304 + $0x211] sm:$0xff]
  %v2731 = vld [vmem:[%s2304 + $0x219] sm:$0xff]
  %v2732 = vld [vmem:[%s2304 + $0x229] sm:$0xff]
  %v2733 = vld [vmem:[%s2304 + $0x231] sm:$0xff]
  %v2734 = vld [vmem:[%s2304 + $0x241] sm:$0xff]
  %v2735 = vld [vmem:[%s2304 + $0x249] sm:$0xff]
  %v2736 = vld [vmem:[%s2304 + $0x259] sm:$0xff]
  %v2737 = vld [vmem:[%s2304 + $0x261] sm:$0xff]
  %v2738 = vld [vmem:[%s2304 + $0x271] sm:$0xff]
  %v2739 = vld [vmem:[%s2304 + $0x279] sm:$0xff]
  %v2740 = vld [vmem:[%s2304 + $0x289] sm:$0xff]
  %v2741 = vld [vmem:[%s2304 + $0x291] sm:$0xff]
  %v2742 = vld [vmem:[%s2304 + $0x2a1] sm:$0xff]
  %v2743 = vld [vmem:[%s2304 + $0x2a9] sm:$0xff]
  %v2744 = vld [vmem:[%s2304 + $0x2b9] sm:$0xff]
  %v2745 = vld [vmem:[%s2304 + $0x2c1] sm:$0xff]
  %v2746 = vld [vmem:[%s2304 + $0x2d1] sm:$0xff]
  %v2747 = vld [vmem:[%s2304 + $0x2d9] sm:$0xff]
  %v2748 = vld [vmem:[%s2304 + $0x2e9] sm:$0xff]
  %v2749 = vld [vmem:[%s2304 + $0x2f1] sm:$0xff]
  %v2750 = vld [vmem:[%s2304 + $0x301] sm:$0xff]
  %v2751 = vld [vmem:[%s2304 + $0x309] sm:$0xff]
  %v2752 = vld [vmem:[%s2304 + $0x319] sm:$0xff]
  %v2753 = vld [vmem:[%s2304 + $0x321] sm:$0xff]
  %2818 = vrot.lane.b32.xlu0 %v2690, 28
  %v2819 = vpop.permute.xlu0 %2818
  %2820 = vrot.lane.b32.xlu0 %v2691, 28
  %v2821 = vpop.permute.xlu0 %2820
  %2822 = vrot.lane.b32.xlu0 %v2692, 28
  %v2823 = vpop.permute.xlu0 %2822
  %2824 = vrot.lane.b32.xlu0 %v2693, 28
  %v2825 = vpop.permute.xlu0 %2824
  %2826 = vrot.lane.b32.xlu0 %v2694, 28
  %v2827 = vpop.permute.xlu0 %2826
  %2828 = vrot.lane.b32.xlu0 %v2695, 28
  %v2829 = vpop.permute.xlu0 %2828
  %2830 = vrot.lane.b32.xlu0 %v2696, 28
  %v2831 = vpop.permute.xlu0 %2830
  %2832 = vrot.lane.b32.xlu0 %v2697, 28
  %v2833 = vpop.permute.xlu0 %2832
  %2834 = vrot.lane.b32.xlu0 %v2698, 28
  %v2835 = vpop.permute.xlu0 %2834
  %2836 = vrot.lane.b32.xlu0 %v2699, 28
  %v2837 = vpop.permute.xlu0 %2836
  %2838 = vrot.lane.b32.xlu0 %v2700, 28
  %v2839 = vpop.permute.xlu0 %2838
  %2840 = vrot.lane.b32.xlu0 %v2701, 28
  %v2841 = vpop.permute.xlu0 %2840
  %2842 = vrot.lane.b32.xlu0 %v2702, 28
  %v2843 = vpop.permute.xlu0 %2842
  %2844 = vrot.lane.b32.xlu0 %v2703, 28
  %v2845 = vpop.permute.xlu0 %2844
  %2846 = vrot.lane.b32.xlu0 %v2704, 28
  %v2847 = vpop.permute.xlu0 %2846
  %2848 = vrot.lane.b32.xlu0 %v2705, 28
  %v2849 = vpop.permute.xlu0 %2848
  %2850 = vrot.lane.b32.xlu0 %v2706, 28
  %v2851 = vpop.permute.xlu0 %2850
  %2852 = vrot.lane.b32.xlu0 %v2707, 28
  %v2853 = vpop.permute.xlu0 %2852
  %2854 = vrot.lane.b32.xlu0 %v2708, 28
  %v2855 = vpop.permute.xlu0 %2854
  %2856 = vrot.lane.b32.xlu0 %v2709, 28
  %v2857 = vpop.permute.xlu0 %2856
  %2858 = vrot.lane.b32.xlu0 %v2710, 28
  %v2859 = vpop.permute.xlu0 %2858
  %2860 = vrot.lane.b32.xlu0 %v2711, 28
  %v2861 = vpop.permute.xlu0 %2860
  %2862 = vrot.lane.b32.xlu0 %v2712, 28
  %v2863 = vpop.permute.xlu0 %2862
  %2864 = vrot.lane.b32.xlu0 %v2713, 28
  %v2865 = vpop.permute.xlu0 %2864
  %2866 = vrot.lane.b32.xlu0 %v2714, 28
  %v2867 = vpop.permute.xlu0 %2866
  %2868 = vrot.lane.b32.xlu0 %v2715, 28
  %v2869 = vpop.permute.xlu0 %2868
  %2870 = vrot.lane.b32.xlu0 %v2716, 28
  %v2871 = vpop.permute.xlu0 %2870
  %2872 = vrot.lane.b32.xlu0 %v2717, 28
  %v2873 = vpop.permute.xlu0 %2872
  %2874 = vrot.lane.b32.xlu0 %v2718, 28
  %v2875 = vpop.permute.xlu0 %2874
  %2876 = vrot.lane.b32.xlu0 %v2719, 28
  %v2877 = vpop.permute.xlu0 %2876
  %2878 = vrot.lane.b32.xlu0 %v2720, 28
  %v2879 = vpop.permute.xlu0 %2878
  %2880 = vrot.lane.b32.xlu0 %v2721, 28
  %v2881 = vpop.permute.xlu0 %2880
  %2882 = vrot.lane.b32.xlu0 %v2722, 28
  %v2883 = vpop.permute.xlu0 %2882
  %2884 = vrot.lane.b32.xlu0 %v2723, 28
  %v2885 = vpop.permute.xlu0 %2884
  %2886 = vrot.lane.b32.xlu0 %v2724, 28
  %v2887 = vpop.permute.xlu0 %2886
  %2888 = vrot.lane.b32.xlu0 %v2725, 28
  %v2889 = vpop.permute.xlu0 %2888
  %2890 = vrot.lane.b32.xlu0 %v2726, 28
  %v2891 = vpop.permute.xlu0 %2890
  %2892 = vrot.lane.b32.xlu0 %v2727, 28
  %v2893 = vpop.permute.xlu0 %2892
  %2894 = vrot.lane.b32.xlu0 %v2728, 28
  %v2895 = vpop.permute.xlu0 %2894
  %2896 = vrot.lane.b32.xlu0 %v2729, 28
  %v2897 = vpop.permute.xlu0 %2896
  %2898 = vrot.lane.b32.xlu0 %v2730, 28
  %v2899 = vpop.permute.xlu0 %2898
  %2900 = vrot.lane.b32.xlu0 %v2731, 28
  %v2901 = vpop.permute.xlu0 %2900
  %2902 = vrot.lane.b32.xlu0 %v2732, 28
  %v2903 = vpop.permute.xlu0 %2902
  %2904 = vrot.lane.b32.xlu0 %v2733, 28
  %v2905 = vpop.permute.xlu0 %2904
  %2906 = vrot.lane.b32.xlu0 %v2734, 28
  %v2907 = vpop.permute.xlu0 %2906
  %2908 = vrot.lane.b32.xlu0 %v2735, 28
  %v2909 = vpop.permute.xlu0 %2908
  %2910 = vrot.lane.b32.xlu0 %v2736, 28
  %v2911 = vpop.permute.xlu0 %2910
  %2912 = vrot.lane.b32.xlu0 %v2737, 28
  %v2913 = vpop.permute.xlu0 %2912
  %2914 = vrot.lane.b32.xlu0 %v2738, 28
  %v2915 = vpop.permute.xlu0 %2914
  %2916 = vrot.lane.b32.xlu0 %v2739, 28
  %v2917 = vpop.permute.xlu0 %2916
  %2918 = vrot.lane.b32.xlu0 %v2740, 28
  %v2919 = vpop.permute.xlu0 %2918
  %2920 = vrot.lane.b32.xlu0 %v2741, 28
  %v2921 = vpop.permute.xlu0 %2920
  %2922 = vrot.lane.b32.xlu0 %v2742, 28
  %v2923 = vpop.permute.xlu0 %2922
  %2924 = vrot.lane.b32.xlu0 %v2743, 28
  %v2925 = vpop.permute.xlu0 %2924
  %2926 = vrot.lane.b32.xlu0 %v2744, 28
  %v2927 = vpop.permute.xlu0 %2926
  %2928 = vrot.lane.b32.xlu0 %v2745, 28
  %v2929 = vpop.permute.xlu0 %2928
  %2930 = vrot.lane.b32.xlu0 %v2746, 28
  %v2931 = vpop.permute.xlu0 %2930
  %2932 = vrot.lane.b32.xlu0 %v2747, 28
  %v2933 = vpop.permute.xlu0 %2932
  %2934 = vrot.lane.b32.xlu0 %v2748, 28
  %v2935 = vpop.permute.xlu0 %2934
  %2936 = vrot.lane.b32.xlu0 %v2749, 28
  %v2937 = vpop.permute.xlu0 %2936
  %2938 = vrot.lane.b32.xlu0 %v2750, 28
  %v2939 = vpop.permute.xlu0 %2938
  %2940 = vrot.lane.b32.xlu0 %v2751, 28
  %v2941 = vpop.permute.xlu0 %2940
  %2942 = vrot.lane.b32.xlu0 %v2752, 28
  %v2943 = vpop.permute.xlu0 %2942
  %2944 = vrot.lane.b32.xlu0 %v2753, 28
  %v2945 = vpop.permute.xlu0 %2944
  %vm3010 = vcmask 261344
  %3011 = vst.msk [vmem:[#allocation4] sm:$0xff] %vm3010, %v2819
  %3012 = vst.msk [vmem:[#allocation4 + $0x8] sm:$0xff] %vm3010, %v2821
  %3013 = vst.msk [vmem:[#allocation4 + $0x10] sm:$0xff] %vm3010, %v2823
  %3014 = vst.msk [vmem:[#allocation4 + $0x18] sm:$0xff] %vm3010, %v2825
  %3015 = vst.msk [vmem:[#allocation4 + $0x20] sm:$0xff] %vm3010, %v2827
  %3016 = vst.msk [vmem:[#allocation4 + $0x28] sm:$0xff] %vm3010, %v2829
  %3017 = vst.msk [vmem:[#allocation4 + $0x30] sm:$0xff] %vm3010, %v2831
  %3018 = vst.msk [vmem:[#allocation4 + $0x38] sm:$0xff] %vm3010, %v2833
  %3019 = vst.msk [vmem:[#allocation4 + $0x40] sm:$0xff] %vm3010, %v2835
  %3020 = vst.msk [vmem:[#allocation4 + $0x48] sm:$0xff] %vm3010, %v2837
  %3021 = vst.msk [vmem:[#allocation4 + $0x50] sm:$0xff] %vm3010, %v2839
  %3022 = vst.msk [vmem:[#allocation4 + $0x58] sm:$0xff] %vm3010, %v2841
  %3023 = vst.msk [vmem:[#allocation4 + $0x60] sm:$0xff] %vm3010, %v2843
  %3024 = vst.msk [vmem:[#allocation4 + $0x68] sm:$0xff] %vm3010, %v2845
  %3025 = vst.msk [vmem:[#allocation4 + $0x70] sm:$0xff] %vm3010, %v2847
  %3026 = vst.msk [vmem:[#allocation4 + $0x78] sm:$0xff] %vm3010, %v2849
  %3027 = vst.msk [vmem:[#allocation4 + $0x80] sm:$0xff] %vm3010, %v2851
  %3028 = vst.msk [vmem:[#allocation4 + $0x88] sm:$0xff] %vm3010, %v2853
  %3029 = vst.msk [vmem:[#allocation4 + $0x90] sm:$0xff] %vm3010, %v2855
  %3030 = vst.msk [vmem:[#allocation4 + $0x98] sm:$0xff] %vm3010, %v2857
  %3031 = vst.msk [vmem:[#allocation4 + $0xa0] sm:$0xff] %vm3010, %v2859
  %3032 = vst.msk [vmem:[#allocation4 + $0xa8] sm:$0xff] %vm3010, %v2861
  %3033 = vst.msk [vmem:[#allocation4 + $0xb0] sm:$0xff] %vm3010, %v2863
  %3034 = vst.msk [vmem:[#allocation4 + $0xb8] sm:$0xff] %vm3010, %v2865
  %3035 = vst.msk [vmem:[#allocation4 + $0xc0] sm:$0xff] %vm3010, %v2867
  %3036 = vst.msk [vmem:[#allocation4 + $0xc8] sm:$0xff] %vm3010, %v2869
  %3037 = vst.msk [vmem:[#allocation4 + $0xd0] sm:$0xff] %vm3010, %v2871
  %3038 = vst.msk [vmem:[#allocation4 + $0xd8] sm:$0xff] %vm3010, %v2873
  %3039 = vst.msk [vmem:[#allocation4 + $0xe0] sm:$0xff] %vm3010, %v2875
  %3040 = vst.msk [vmem:[#allocation4 + $0xe8] sm:$0xff] %vm3010, %v2877
  %3041 = vst.msk [vmem:[#allocation4 + $0xf0] sm:$0xff] %vm3010, %v2879
  %3042 = vst.msk [vmem:[#allocation4 + $0xf8] sm:$0xff] %vm3010, %v2881
  %3043 = vst.msk [vmem:[#allocation4 + $0x100] sm:$0xff] %vm3010, %v2883
  %3044 = vst.msk [vmem:[#allocation4 + $0x108] sm:$0xff] %vm3010, %v2885
  %3045 = vst.msk [vmem:[#allocation4 + $0x110] sm:$0xff] %vm3010, %v2887
  %3046 = vst.msk [vmem:[#allocation4 + $0x118] sm:$0xff] %vm3010, %v2889
  %3047 = vst.msk [vmem:[#allocation4 + $0x120] sm:$0xff] %vm3010, %v2891
  %3048 = vst.msk [vmem:[#allocation4 + $0x128] sm:$0xff] %vm3010, %v2893
  %3049 = vst.msk [vmem:[#allocation4 + $0x130] sm:$0xff] %vm3010, %v2895
  %3050 = vst.msk [vmem:[#allocation4 + $0x138] sm:$0xff] %vm3010, %v2897
  %3051 = vst.msk [vmem:[#allocation4 + $0x140] sm:$0xff] %vm3010, %v2899
  %3052 = vst.msk [vmem:[#allocation4 + $0x148] sm:$0xff] %vm3010, %v2901
  %3053 = vst.msk [vmem:[#allocation4 + $0x150] sm:$0xff] %vm3010, %v2903
  %3054 = vst.msk [vmem:[#allocation4 + $0x158] sm:$0xff] %vm3010, %v2905
  %3055 = vst.msk [vmem:[#allocation4 + $0x160] sm:$0xff] %vm3010, %v2907
  %3056 = vst.msk [vmem:[#allocation4 + $0x168] sm:$0xff] %vm3010, %v2909
  %3057 = vst.msk [vmem:[#allocation4 + $0x170] sm:$0xff] %vm3010, %v2911
  %3058 = vst.msk [vmem:[#allocation4 + $0x178] sm:$0xff] %vm3010, %v2913
  %3059 = vst.msk [vmem:[#allocation4 + $0x180] sm:$0xff] %vm3010, %v2915
  %3060 = vst.msk [vmem:[#allocation4 + $0x188] sm:$0xff] %vm3010, %v2917
  %3061 = vst.msk [vmem:[#allocation4 + $0x190] sm:$0xff] %vm3010, %v2919
  %3062 = vst.msk [vmem:[#allocation4 + $0x198] sm:$0xff] %vm3010, %v2921
  %3063 = vst.msk [vmem:[#allocation4 + $0x1a0] sm:$0xff] %vm3010, %v2923
  %3064 = vst.msk [vmem:[#allocation4 + $0x1a8] sm:$0xff] %vm3010, %v2925
  %3065 = vst.msk [vmem:[#allocation4 + $0x1b0] sm:$0xff] %vm3010, %v2927
  %3066 = vst.msk [vmem:[#allocation4 + $0x1b8] sm:$0xff] %vm3010, %v2929
  %3067 = vst.msk [vmem:[#allocation4 + $0x1c0] sm:$0xff] %vm3010, %v2931
  %3068 = vst.msk [vmem:[#allocation4 + $0x1c8] sm:$0xff] %vm3010, %v2933
  %3069 = vst.msk [vmem:[#allocation4 + $0x1d0] sm:$0xff] %vm3010, %v2935
  %3070 = vst.msk [vmem:[#allocation4 + $0x1d8] sm:$0xff] %vm3010, %v2937
  %3071 = vst.msk [vmem:[#allocation4 + $0x1e0] sm:$0xff] %vm3010, %v2939
  %3072 = vst.msk [vmem:[#allocation4 + $0x1e8] sm:$0xff] %vm3010, %v2941
  %3073 = vst.msk [vmem:[#allocation4 + $0x1f0] sm:$0xff] %vm3010, %v2943
  %3074 = vst.msk [vmem:[#allocation4 + $0x1f8] sm:$0xff] %vm3010, %v2945
  %v3075 = vld [vmem:[%s2304 + $0x2] sm:$0xff]
  %v3076 = vld [vmem:[%s2304 + $0xa] sm:$0xff]
  %v3077 = vld [vmem:[%s2304 + $0x1a] sm:$0xff]
  %v3078 = vld [vmem:[%s2304 + $0x22] sm:$0xff]
  %v3079 = vld [vmem:[%s2304 + $0x32] sm:$0xff]
  %v3080 = vld [vmem:[%s2304 + $0x3a] sm:$0xff]
  %v3081 = vld [vmem:[%s2304 + $0x4a] sm:$0xff]
  %v3082 = vld [vmem:[%s2304 + $0x52] sm:$0xff]
  %v3083 = vld [vmem:[%s2304 + $0x62] sm:$0xff]
  %v3084 = vld [vmem:[%s2304 + $0x6a] sm:$0xff]
  %v3085 = vld [vmem:[%s2304 + $0x7a] sm:$0xff]
  %v3086 = vld [vmem:[%s2304 + $0x82] sm:$0xff]
  %v3087 = vld [vmem:[%s2304 + $0x92] sm:$0xff]
  %v3088 = vld [vmem:[%s2304 + $0x9a] sm:$0xff]
  %v3089 = vld [vmem:[%s2304 + $0xaa] sm:$0xff]
  %v3090 = vld [vmem:[%s2304 + $0xb2] sm:$0xff]
  %v3091 = vld [vmem:[%s2304 + $0xc2] sm:$0xff]
  %v3092 = vld [vmem:[%s2304 + $0xca] sm:$0xff]
  %v3093 = vld [vmem:[%s2304 + $0xda] sm:$0xff]
  %v3094 = vld [vmem:[%s2304 + $0xe2] sm:$0xff]
  %v3095 = vld [vmem:[%s2304 + $0xf2] sm:$0xff]
  %v3096 = vld [vmem:[%s2304 + $0xfa] sm:$0xff]
  %v3097 = vld [vmem:[%s2304 + $0x10a] sm:$0xff]
  %v3098 = vld [vmem:[%s2304 + $0x112] sm:$0xff]
  %v3099 = vld [vmem:[%s2304 + $0x122] sm:$0xff]
  %v3100 = vld [vmem:[%s2304 + $0x12a] sm:$0xff]
  %v3101 = vld [vmem:[%s2304 + $0x13a] sm:$0xff]
  %v3102 = vld [vmem:[%s2304 + $0x142] sm:$0xff]
  %v3103 = vld [vmem:[%s2304 + $0x152] sm:$0xff]
  %v3104 = vld [vmem:[%s2304 + $0x15a] sm:$0xff]
  %v3105 = vld [vmem:[%s2304 + $0x16a] sm:$0xff]
  %v3106 = vld [vmem:[%s2304 + $0x172] sm:$0xff]
  %v3107 = vld [vmem:[%s2304 + $0x1b2] sm:$0xff]
  %v3108 = vld [vmem:[%s2304 + $0x1ba] sm:$0xff]
  %v3109 = vld [vmem:[%s2304 + $0x1ca] sm:$0xff]
  %v3110 = vld [vmem:[%s2304 + $0x1d2] sm:$0xff]
  %v3111 = vld [vmem:[%s2304 + $0x1e2] sm:$0xff]
  %v3112 = vld [vmem:[%s2304 + $0x1ea] sm:$0xff]
  %v3113 = vld [vmem:[%s2304 + $0x1fa] sm:$0xff]
  %v3114 = vld [vmem:[%s2304 + $0x202] sm:$0xff]
  %v3115 = vld [vmem:[%s2304 + $0x212] sm:$0xff]
  %v3116 = vld [vmem:[%s2304 + $0x21a] sm:$0xff]
  %v3117 = vld [vmem:[%s2304 + $0x22a] sm:$0xff]
  %v3118 = vld [vmem:[%s2304 + $0x232] sm:$0xff]
  %v3119 = vld [vmem:[%s2304 + $0x242] sm:$0xff]
  %v3120 = vld [vmem:[%s2304 + $0x24a] sm:$0xff]
  %v3121 = vld [vmem:[%s2304 + $0x25a] sm:$0xff]
  %v3122 = vld [vmem:[%s2304 + $0x262] sm:$0xff]
  %v3123 = vld [vmem:[%s2304 + $0x272] sm:$0xff]
  %v3124 = vld [vmem:[%s2304 + $0x27a] sm:$0xff]
  %v3125 = vld [vmem:[%s2304 + $0x28a] sm:$0xff]
  %v3126 = vld [vmem:[%s2304 + $0x292] sm:$0xff]
  %v3127 = vld [vmem:[%s2304 + $0x2a2] sm:$0xff]
  %v3128 = vld [vmem:[%s2304 + $0x2aa] sm:$0xff]
  %v3129 = vld [vmem:[%s2304 + $0x2ba] sm:$0xff]
  %v3130 = vld [vmem:[%s2304 + $0x2c2] sm:$0xff]
  %v3131 = vld [vmem:[%s2304 + $0x2d2] sm:$0xff]
  %v3132 = vld [vmem:[%s2304 + $0x2da] sm:$0xff]
  %v3133 = vld [vmem:[%s2304 + $0x2ea] sm:$0xff]
  %v3134 = vld [vmem:[%s2304 + $0x2f2] sm:$0xff]
  %v3135 = vld [vmem:[%s2304 + $0x302] sm:$0xff]
  %v3136 = vld [vmem:[%s2304 + $0x30a] sm:$0xff]
  %v3137 = vld [vmem:[%s2304 + $0x31a] sm:$0xff]
  %v3138 = vld [vmem:[%s2304 + $0x322] sm:$0xff]
  %3203 = vrot.lane.b32.xlu0 %v3075, 32
  %v3204 = vpop.permute.xlu0 %3203
  %3205 = vrot.lane.b32.xlu0 %v3076, 32
  %v3206 = vpop.permute.xlu0 %3205
  %3207 = vrot.lane.b32.xlu0 %v3077, 32
  %v3208 = vpop.permute.xlu0 %3207
  %3209 = vrot.lane.b32.xlu0 %v3078, 32
  %v3210 = vpop.permute.xlu0 %3209
  %3211 = vrot.lane.b32.xlu0 %v3079, 32
  %v3212 = vpop.permute.xlu0 %3211
  %3213 = vrot.lane.b32.xlu0 %v3080, 32
  %v3214 = vpop.permute.xlu0 %3213
  %3215 = vrot.lane.b32.xlu0 %v3081, 32
  %v3216 = vpop.permute.xlu0 %3215
  %3217 = vrot.lane.b32.xlu0 %v3082, 32
  %v3218 = vpop.permute.xlu0 %3217
  %3219 = vrot.lane.b32.xlu0 %v3083, 32
  %v3220 = vpop.permute.xlu0 %3219
  %3221 = vrot.lane.b32.xlu0 %v3084, 32
  %v3222 = vpop.permute.xlu0 %3221
  %3223 = vrot.lane.b32.xlu0 %v3085, 32
  %v3224 = vpop.permute.xlu0 %3223
  %3225 = vrot.lane.b32.xlu0 %v3086, 32
  %v3226 = vpop.permute.xlu0 %3225
  %3227 = vrot.lane.b32.xlu0 %v3087, 32
  %v3228 = vpop.permute.xlu0 %3227
  %3229 = vrot.lane.b32.xlu0 %v3088, 32
  %v3230 = vpop.permute.xlu0 %3229
  %3231 = vrot.lane.b32.xlu0 %v3089, 32
  %v3232 = vpop.permute.xlu0 %3231
  %3233 = vrot.lane.b32.xlu0 %v3090, 32
  %v3234 = vpop.permute.xlu0 %3233
  %3235 = vrot.lane.b32.xlu0 %v3091, 32
  %v3236 = vpop.permute.xlu0 %3235
  %3237 = vrot.lane.b32.xlu0 %v3092, 32
  %v3238 = vpop.permute.xlu0 %3237
  %3239 = vrot.lane.b32.xlu0 %v3093, 32
  %v3240 = vpop.permute.xlu0 %3239
  %3241 = vrot.lane.b32.xlu0 %v3094, 32
  %v3242 = vpop.permute.xlu0 %3241
  %3243 = vrot.lane.b32.xlu0 %v3095, 32
  %v3244 = vpop.permute.xlu0 %3243
  %3245 = vrot.lane.b32.xlu0 %v3096, 32
  %v3246 = vpop.permute.xlu0 %3245
  %3247 = vrot.lane.b32.xlu0 %v3097, 32
  %v3248 = vpop.permute.xlu0 %3247
  %3249 = vrot.lane.b32.xlu0 %v3098, 32
  %v3250 = vpop.permute.xlu0 %3249
  %3251 = vrot.lane.b32.xlu0 %v3099, 32
  %v3252 = vpop.permute.xlu0 %3251
  %3253 = vrot.lane.b32.xlu0 %v3100, 32
  %v3254 = vpop.permute.xlu0 %3253
  %3255 = vrot.lane.b32.xlu0 %v3101, 32
  %v3256 = vpop.permute.xlu0 %3255
  %3257 = vrot.lane.b32.xlu0 %v3102, 32
  %v3258 = vpop.permute.xlu0 %3257
  %3259 = vrot.lane.b32.xlu0 %v3103, 32
  %v3260 = vpop.permute.xlu0 %3259
  %3261 = vrot.lane.b32.xlu0 %v3104, 32
  %v3262 = vpop.permute.xlu0 %3261
  %3263 = vrot.lane.b32.xlu0 %v3105, 32
  %v3264 = vpop.permute.xlu0 %3263
  %3265 = vrot.lane.b32.xlu0 %v3106, 32
  %v3266 = vpop.permute.xlu0 %3265
  %3267 = vrot.lane.b32.xlu0 %v3107, 32
  %v3268 = vpop.permute.xlu0 %3267
  %3269 = vrot.lane.b32.xlu0 %v3108, 32
  %v3270 = vpop.permute.xlu0 %3269
  %3271 = vrot.lane.b32.xlu0 %v3109, 32
  %v3272 = vpop.permute.xlu0 %3271
  %3273 = vrot.lane.b32.xlu0 %v3110, 32
  %v3274 = vpop.permute.xlu0 %3273
  %3275 = vrot.lane.b32.xlu0 %v3111, 32
  %v3276 = vpop.permute.xlu0 %3275
  %3277 = vrot.lane.b32.xlu0 %v3112, 32
  %v3278 = vpop.permute.xlu0 %3277
  %3279 = vrot.lane.b32.xlu0 %v3113, 32
  %v3280 = vpop.permute.xlu0 %3279
  %3281 = vrot.lane.b32.xlu0 %v3114, 32
  %v3282 = vpop.permute.xlu0 %3281
  %3283 = vrot.lane.b32.xlu0 %v3115, 32
  %v3284 = vpop.permute.xlu0 %3283
  %3285 = vrot.lane.b32.xlu0 %v3116, 32
  %v3286 = vpop.permute.xlu0 %3285
  %3287 = vrot.lane.b32.xlu0 %v3117, 32
  %v3288 = vpop.permute.xlu0 %3287
  %3289 = vrot.lane.b32.xlu0 %v3118, 32
  %v3290 = vpop.permute.xlu0 %3289
  %3291 = vrot.lane.b32.xlu0 %v3119, 32
  %v3292 = vpop.permute.xlu0 %3291
  %3293 = vrot.lane.b32.xlu0 %v3120, 32
  %v3294 = vpop.permute.xlu0 %3293
  %3295 = vrot.lane.b32.xlu0 %v3121, 32
  %v3296 = vpop.permute.xlu0 %3295
  %3297 = vrot.lane.b32.xlu0 %v3122, 32
  %v3298 = vpop.permute.xlu0 %3297
  %3299 = vrot.lane.b32.xlu0 %v3123, 32
  %v3300 = vpop.permute.xlu0 %3299
  %3301 = vrot.lane.b32.xlu0 %v3124, 32
  %v3302 = vpop.permute.xlu0 %3301
  %3303 = vrot.lane.b32.xlu0 %v3125, 32
  %v3304 = vpop.permute.xlu0 %3303
  %3305 = vrot.lane.b32.xlu0 %v3126, 32
  %v3306 = vpop.permute.xlu0 %3305
  %3307 = vrot.lane.b32.xlu0 %v3127, 32
  %v3308 = vpop.permute.xlu0 %3307
  %3309 = vrot.lane.b32.xlu0 %v3128, 32
  %v3310 = vpop.permute.xlu0 %3309
  %3311 = vrot.lane.b32.xlu0 %v3129, 32
  %v3312 = vpop.permute.xlu0 %3311
  %3313 = vrot.lane.b32.xlu0 %v3130, 32
  %v3314 = vpop.permute.xlu0 %3313
  %3315 = vrot.lane.b32.xlu0 %v3131, 32
  %v3316 = vpop.permute.xlu0 %3315
  %3317 = vrot.lane.b32.xlu0 %v3132, 32
  %v3318 = vpop.permute.xlu0 %3317
  %3319 = vrot.lane.b32.xlu0 %v3133, 32
  %v3320 = vpop.permute.xlu0 %3319
  %3321 = vrot.lane.b32.xlu0 %v3134, 32
  %v3322 = vpop.permute.xlu0 %3321
  %3323 = vrot.lane.b32.xlu0 %v3135, 32
  %v3324 = vpop.permute.xlu0 %3323
  %3325 = vrot.lane.b32.xlu0 %v3136, 32
  %v3326 = vpop.permute.xlu0 %3325
  %3327 = vrot.lane.b32.xlu0 %v3137, 32
  %v3328 = vpop.permute.xlu0 %3327
  %3329 = vrot.lane.b32.xlu0 %v3138, 32
  %v3330 = vpop.permute.xlu0 %3329
  %vm3395 = vcmask 294144
  %3396 = vst.msk [vmem:[#allocation4] sm:$0xff] %vm3395, %v3204
  %3397 = vst.msk [vmem:[#allocation4 + $0x8] sm:$0xff] %vm3395, %v3206
  %3398 = vst.msk [vmem:[#allocation4 + $0x10] sm:$0xff] %vm3395, %v3208
  %3399 = vst.msk [vmem:[#allocation4 + $0x18] sm:$0xff] %vm3395, %v3210
  %3400 = vst.msk [vmem:[#allocation4 + $0x20] sm:$0xff] %vm3395, %v3212
  %3401 = vst.msk [vmem:[#allocation4 + $0x28] sm:$0xff] %vm3395, %v3214
  %3402 = vst.msk [vmem:[#allocation4 + $0x30] sm:$0xff] %vm3395, %v3216
  %3403 = vst.msk [vmem:[#allocation4 + $0x38] sm:$0xff] %vm3395, %v3218
  %3404 = vst.msk [vmem:[#allocation4 + $0x40] sm:$0xff] %vm3395, %v3220
  %3405 = vst.msk [vmem:[#allocation4 + $0x48] sm:$0xff] %vm3395, %v3222
  %3406 = vst.msk [vmem:[#allocation4 + $0x50] sm:$0xff] %vm3395, %v3224
  %3407 = vst.msk [vmem:[#allocation4 + $0x58] sm:$0xff] %vm3395, %v3226
  %3408 = vst.msk [vmem:[#allocation4 + $0x60] sm:$0xff] %vm3395, %v3228
  %3409 = vst.msk [vmem:[#allocation4 + $0x68] sm:$0xff] %vm3395, %v3230
  %3410 = vst.msk [vmem:[#allocation4 + $0x70] sm:$0xff] %vm3395, %v3232
  %3411 = vst.msk [vmem:[#allocation4 + $0x78] sm:$0xff] %vm3395, %v3234
  %3412 = vst.msk [vmem:[#allocation4 + $0x80] sm:$0xff] %vm3395, %v3236
  %3413 = vst.msk [vmem:[#allocation4 + $0x88] sm:$0xff] %vm3395, %v3238
  %3414 = vst.msk [vmem:[#allocation4 + $0x90] sm:$0xff] %vm3395, %v3240
  %3415 = vst.msk [vmem:[#allocation4 + $0x98] sm:$0xff] %vm3395, %v3242
  %3416 = vst.msk [vmem:[#allocation4 + $0xa0] sm:$0xff] %vm3395, %v3244
  %3417 = vst.msk [vmem:[#allocation4 + $0xa8] sm:$0xff] %vm3395, %v3246
  %3418 = vst.msk [vmem:[#allocation4 + $0xb0] sm:$0xff] %vm3395, %v3248
  %3419 = vst.msk [vmem:[#allocation4 + $0xb8] sm:$0xff] %vm3395, %v3250
  %3420 = vst.msk [vmem:[#allocation4 + $0xc0] sm:$0xff] %vm3395, %v3252
  %3421 = vst.msk [vmem:[#allocation4 + $0xc8] sm:$0xff] %vm3395, %v3254
  %3422 = vst.msk [vmem:[#allocation4 + $0xd0] sm:$0xff] %vm3395, %v3256
  %3423 = vst.msk [vmem:[#allocation4 + $0xd8] sm:$0xff] %vm3395, %v3258
  %3424 = vst.msk [vmem:[#allocation4 + $0xe0] sm:$0xff] %vm3395, %v3260
  %3425 = vst.msk [vmem:[#allocation4 + $0xe8] sm:$0xff] %vm3395, %v3262
  %3426 = vst.msk [vmem:[#allocation4 + $0xf0] sm:$0xff] %vm3395, %v3264
  %3427 = vst.msk [vmem:[#allocation4 + $0xf8] sm:$0xff] %vm3395, %v3266
  %3428 = vst.msk [vmem:[#allocation4 + $0x100] sm:$0xff] %vm3395, %v3268
  %3429 = vst.msk [vmem:[#allocation4 + $0x108] sm:$0xff] %vm3395, %v3270
  %3430 = vst.msk [vmem:[#allocation4 + $0x110] sm:$0xff] %vm3395, %v3272
  %3431 = vst.msk [vmem:[#allocation4 + $0x118] sm:$0xff] %vm3395, %v3274
  %3432 = vst.msk [vmem:[#allocation4 + $0x120] sm:$0xff] %vm3395, %v3276
  %3433 = vst.msk [vmem:[#allocation4 + $0x128] sm:$0xff] %vm3395, %v3278
  %3434 = vst.msk [vmem:[#allocation4 + $0x130] sm:$0xff] %vm3395, %v3280
  %3435 = vst.msk [vmem:[#allocation4 + $0x138] sm:$0xff] %vm3395, %v3282
  %3436 = vst.msk [vmem:[#allocation4 + $0x140] sm:$0xff] %vm3395, %v3284
  %3437 = vst.msk [vmem:[#allocation4 + $0x148] sm:$0xff] %vm3395, %v3286
  %3438 = vst.msk [vmem:[#allocation4 + $0x150] sm:$0xff] %vm3395, %v3288
  %3439 = vst.msk [vmem:[#allocation4 + $0x158] sm:$0xff] %vm3395, %v3290
  %3440 = vst.msk [vmem:[#allocation4 + $0x160] sm:$0xff] %vm3395, %v3292
  %3441 = vst.msk [vmem:[#allocation4 + $0x168] sm:$0xff] %vm3395, %v3294
  %3442 = vst.msk [vmem:[#allocation4 + $0x170] sm:$0xff] %vm3395, %v3296
  %3443 = vst.msk [vmem:[#allocation4 + $0x178] sm:$0xff] %vm3395, %v3298
  %3444 = vst.msk [vmem:[#allocation4 + $0x180] sm:$0xff] %vm3395, %v3300
  %3445 = vst.msk [vmem:[#allocation4 + $0x188] sm:$0xff] %vm3395, %v3302
  %3446 = vst.msk [vmem:[#allocation4 + $0x190] sm:$0xff] %vm3395, %v3304
  %3447 = vst.msk [vmem:[#allocation4 + $0x198] sm:$0xff] %vm3395, %v3306
  %3448 = vst.msk [vmem:[#allocation4 + $0x1a0] sm:$0xff] %vm3395, %v3308
  %3449 = vst.msk [vmem:[#allocation4 + $0x1a8] sm:$0xff] %vm3395, %v3310
  %3450 = vst.msk [vmem:[#allocation4 + $0x1b0] sm:$0xff] %vm3395, %v3312
  %3451 = vst.msk [vmem:[#allocation4 + $0x1b8] sm:$0xff] %vm3395, %v3314
  %3452 = vst.msk [vmem:[#allocation4 + $0x1c0] sm:$0xff] %vm3395, %v3316
  %3453 = vst.msk [vmem:[#allocation4 + $0x1c8] sm:$0xff] %vm3395, %v3318
  %3454 = vst.msk [vmem:[#allocation4 + $0x1d0] sm:$0xff] %vm3395, %v3320
  %3455 = vst.msk [vmem:[#allocation4 + $0x1d8] sm:$0xff] %vm3395, %v3322
  %3456 = vst.msk [vmem:[#allocation4 + $0x1e0] sm:$0xff] %vm3395, %v3324
  %3457 = vst.msk [vmem:[#allocation4 + $0x1e8] sm:$0xff] %vm3395, %v3326
  %3458 = vst.msk [vmem:[#allocation4 + $0x1f0] sm:$0xff] %vm3395, %v3328
  %3459 = vst.msk [vmem:[#allocation4 + $0x1f8] sm:$0xff] %vm3395, %v3330
  %v3460 = vld [vmem:[#allocation4] sm:$0xff]
  %v3461 = vld [vmem:[#allocation4 + $0x8] sm:$0xff]
  %v3462 = vld [vmem:[#allocation4 + $0x10] sm:$0xff]
  %v3463 = vld [vmem:[#allocation4 + $0x18] sm:$0xff]
  %v3464 = vld [vmem:[#allocation4 + $0x20] sm:$0xff]
  %v3465 = vld [vmem:[#allocation4 + $0x28] sm:$0xff]
  %v3466 = vld [vmem:[#allocation4 + $0x30] sm:$0xff]
  %v3467 = vld [vmem:[#allocation4 + $0x38] sm:$0xff]
  %v3468 = vld [vmem:[#allocation4 + $0x40] sm:$0xff]
  %v3469 = vld [vmem:[#allocation4 + $0x48] sm:$0xff]
  %v3470 = vld [vmem:[#allocation4 + $0x50] sm:$0xff]
  %v3471 = vld [vmem:[#allocation4 + $0x58] sm:$0xff]
  %v3472 = vld [vmem:[#allocation4 + $0x60] sm:$0xff]
  %v3473 = vld [vmem:[#allocation4 + $0x68] sm:$0xff]
  %v3474 = vld [vmem:[#allocation4 + $0x70] sm:$0xff]
  %v3475 = vld [vmem:[#allocation4 + $0x78] sm:$0xff]
  %v3476 = vld [vmem:[#allocation4 + $0x80] sm:$0xff]
  %v3477 = vld [vmem:[#allocation4 + $0x88] sm:$0xff]
  %v3478 = vld [vmem:[#allocation4 + $0x90] sm:$0xff]
  %v3479 = vld [vmem:[#allocation4 + $0x98] sm:$0xff]
  %v3480 = vld [vmem:[#allocation4 + $0xa0] sm:$0xff]
  %v3481 = vld [vmem:[#allocation4 + $0xa8] sm:$0xff]
  %v3482 = vld [vmem:[#allocation4 + $0xb0] sm:$0xff]
  %v3483 = vld [vmem:[#allocation4 + $0xb8] sm:$0xff]
  %v3484 = vld [vmem:[#allocation4 + $0xc0] sm:$0xff]
  %v3485 = vld [vmem:[#allocation4 + $0xc8] sm:$0xff]
  %v3486 = vld [vmem:[#allocation4 + $0xd0] sm:$0xff]
  %v3487 = vld [vmem:[#allocation4 + $0xd8] sm:$0xff]
  %v3488 = vld [vmem:[#allocation4 + $0xe0] sm:$0xff]
  %v3489 = vld [vmem:[#allocation4 + $0xe8] sm:$0xff]
  %v3490 = vld [vmem:[#allocation4 + $0xf0] sm:$0xff]
  %v3491 = vld [vmem:[#allocation4 + $0xf8] sm:$0xff]
  %v3492 = vld [vmem:[#allocation4 + $0x100] sm:$0xff]
  %v3493 = vld [vmem:[#allocation4 + $0x108] sm:$0xff]
  %v3494 = vld [vmem:[#allocation4 + $0x110] sm:$0xff]
  %v3495 = vld [vmem:[#allocation4 + $0x118] sm:$0xff]
  %v3496 = vld [vmem:[#allocation4 + $0x120] sm:$0xff]
  %v3497 = vld [vmem:[#allocation4 + $0x128] sm:$0xff]
  %v3498 = vld [vmem:[#allocation4 + $0x130] sm:$0xff]
  %v3499 = vld [vmem:[#allocation4 + $0x138] sm:$0xff]
  %v3500 = vld [vmem:[#allocation4 + $0x140] sm:$0xff]
  %v3501 = vld [vmem:[#allocation4 + $0x148] sm:$0xff]
  %v3502 = vld [vmem:[#allocation4 + $0x150] sm:$0xff]
  %v3503 = vld [vmem:[#allocation4 + $0x158] sm:$0xff]
  %v3504 = vld [vmem:[#allocation4 + $0x160] sm:$0xff]
  %v3505 = vld [vmem:[#allocation4 + $0x168] sm:$0xff]
  %v3506 = vld [vmem:[#allocation4 + $0x170] sm:$0xff]
  %v3507 = vld [vmem:[#allocation4 + $0x178] sm:$0xff]
  %v3508 = vld [vmem:[#allocation4 + $0x180] sm:$0xff]
  %v3509 = vld [vmem:[#allocation4 + $0x188] sm:$0xff]
  %v3510 = vld [vmem:[#allocation4 + $0x190] sm:$0xff]
  %v3511 = vld [vmem:[#allocation4 + $0x198] sm:$0xff]
  %v3512 = vld [vmem:[#allocation4 + $0x1a0] sm:$0xff]
  %v3513 = vld [vmem:[#allocation4 + $0x1a8] sm:$0xff]
  %v3514 = vld [vmem:[#allocation4 + $0x1b0] sm:$0xff]
  %v3515 = vld [vmem:[#allocation4 + $0x1b8] sm:$0xff]
  %v3516 = vld [vmem:[#allocation4 + $0x1c0] sm:$0xff]
  %v3517 = vld [vmem:[#allocation4 + $0x1c8] sm:$0xff]
  %v3518 = vld [vmem:[#allocation4 + $0x1d0] sm:$0xff]
  %v3519 = vld [vmem:[#allocation4 + $0x1d8] sm:$0xff]
  %v3520 = vld [vmem:[#allocation4 + $0x1e0] sm:$0xff]
  %v3521 = vld [vmem:[#allocation4 + $0x1e8] sm:$0xff]
  %v3522 = vld [vmem:[#allocation4 + $0x1f0] sm:$0xff]
  %v3523 = vld [vmem:[#allocation4 + $0x1f8] sm:$0xff]
  %v3524 = vld [vmem:[%s1] sm:$0xff]
  %v3525 = vld [vmem:[%s1 + $0x8] sm:$0xff]
  %v3526 = vld [vmem:[%s1 + $0x10] sm:$0xff]
  %v3527 = vld [vmem:[%s1 + $0x18] sm:$0xff]
  %v3528 = vld [vmem:[%s1 + $0x20] sm:$0xf]
  %vm3529 = vcmask 293888
  %v3531 = vsel %vm3529, %v3460, 0
  %v3534 = vsel %vm3529, %v3461, 0
  %v3537 = vsel %vm3529, %v3462, 0
  %v3540 = vsel %vm3529, %v3463, 0
  %v3543 = vsel %vm3529, %v3464, 0
  %v3546 = vsel %vm3529, %v3465, 0
  %v3549 = vsel %vm3529, %v3466, 0
  %v3552 = vsel %vm3529, %v3467, 0
  %v3555 = vsel %vm3529, %v3468, 0
  %v3558 = vsel %vm3529, %v3469, 0
  %v3561 = vsel %vm3529, %v3470, 0
  %v3564 = vsel %vm3529, %v3471, 0
  %v3567 = vsel %vm3529, %v3472, 0
  %v3570 = vsel %vm3529, %v3473, 0
  %v3573 = vsel %vm3529, %v3474, 0
  %v3576 = vsel %vm3529, %v3475, 0
  %v3579 = vsel %vm3529, %v3476, 0
  %v3582 = vsel %vm3529, %v3477, 0
  %v3585 = vsel %vm3529, %v3478, 0
  %v3588 = vsel %vm3529, %v3479, 0
  %v3591 = vsel %vm3529, %v3480, 0
  %v3594 = vsel %vm3529, %v3481, 0
  %v3597 = vsel %vm3529, %v3482, 0
  %v3600 = vsel %vm3529, %v3483, 0
  %v3603 = vsel %vm3529, %v3484, 0
  %v3606 = vsel %vm3529, %v3485, 0
  %v3609 = vsel %vm3529, %v3486, 0
  %v3612 = vsel %vm3529, %v3487, 0
  %v3615 = vsel %vm3529, %v3488, 0
  %v3618 = vsel %vm3529, %v3489, 0
  %v3621 = vsel %vm3529, %v3490, 0
  %v3624 = vsel %vm3529, %v3491, 0
  %v3627 = vsel %vm3529, %v3492, 0
  %v3630 = vsel %vm3529, %v3493, 0
  %v3633 = vsel %vm3529, %v3494, 0
  %v3636 = vsel %vm3529, %v3495, 0
  %v3639 = vsel %vm3529, %v3496, 0
  %v3642 = vsel %vm3529, %v3497, 0
  %v3645 = vsel %vm3529, %v3498, 0
  %v3648 = vsel %vm3529, %v3499, 0
  %v3651 = vsel %vm3529, %v3500, 0
  %v3654 = vsel %vm3529, %v3501, 0
  %v3657 = vsel %vm3529, %v3502, 0
  %v3660 = vsel %vm3529, %v3503, 0
  %v3663 = vsel %vm3529, %v3504, 0
  %v3666 = vsel %vm3529, %v3505, 0
  %v3669 = vsel %vm3529, %v3506, 0
  %v3672 = vsel %vm3529, %v3507, 0
  %v3675 = vsel %vm3529, %v3508, 0
  %v3678 = vsel %vm3529, %v3509, 0
  %v3681 = vsel %vm3529, %v3510, 0
  %v3684 = vsel %vm3529, %v3511, 0
  %v3687 = vsel %vm3529, %v3512, 0
  %v3690 = vsel %vm3529, %v3513, 0
  %v3693 = vsel %vm3529, %v3514, 0
  %v3696 = vsel %vm3529, %v3515, 0
  %v3699 = vsel %vm3529, %v3516, 0
  %v3702 = vsel %vm3529, %v3517, 0
  %v3705 = vsel %vm3529, %v3518, 0
  %v3708 = vsel %vm3529, %v3519, 0
  %v3711 = vsel %vm3529, %v3520, 0
  %v3714 = vsel %vm3529, %v3521, 0
  %v3717 = vsel %vm3529, %v3522, 0
  %v3720 = vsel %vm3529, %v3523, 0
  %vm3722 = vcmask 1043456
  %v3724 = vsel %vm3722, %v3528, 0
  %3726 = vmatprep.subr.mxu0 0.0
  %3727 = vmatpush1.msra.mxu0 0.0
  %3728 = vmatprep.subr.mxu0 0.0
  %3729 = vmatpush1.msra.mxu0 0.0
  %3730 = vmatprep.subr.mxu0 0.0
  %3731 = vmatpush1.msra.mxu0 0.0
  %3732 = vmatprep.subr.mxu0 0.0
  %3733 = vmatpush1.msra.mxu0 0.0
  %3734 = vmatprep.subr.mxu0 0.0
  %3735 = vmatpush1.msra.mxu0 0.0
  %3736 = vmatprep.subr.mxu0 0.0
  %3737 = vmatpush1.msra.mxu0 0.0
  %3738 = vmatprep.subr.mxu0 0.0
  %3739 = vmatpush1.msra.mxu0 0.0
  %3740 = vmatprep.subr.mxu0 0.0
  %3741 = vmatpush1.msra.mxu0 0.0
  %3742 = vmatprep.subr.mxu0 0.0
  %3743 = vmatpush1.msra.mxu0 0.0
  %3744 = vmatprep.subr.mxu0 0.0
  %3745 = vmatpush1.msra.mxu0 0.0
  %3746 = vmatprep.subr.mxu0 0.0
  %3747 = vmatpush1.msra.mxu0 0.0
  %3748 = vmatprep.subr.mxu0 0.0
  %3749 = vmatpush1.msra.mxu0 %v3724
  %3750 = vmatprep.subr.mxu0 0.0
  %3751 = vmatpush1.msra.mxu0 %v3527
  %3752 = vmatprep.subr.mxu0 0.0
  %3753 = vmatpush1.msra.mxu0 %v3526
  %3754 = vmatprep.subr.mxu0 0.0
  %3755 = vmatpush1.msra.mxu0 %v3525
  %3756 = vmatprep.subr.mxu0 0.0
  %3757 = vmatpush1.msra.mxu0 %v3524
  %3758 = vmatprep.subr.mxu0 0.0
  %3759 = vmatpush2.msra.mxu0 0.0
  %3760 = vmatprep.subr.mxu0 0.0
  %3761 = vmatpush2.msra.mxu0 0.0
  %3762 = vmatprep.subr.mxu0 0.0
  %3763 = vmatpush2.msra.mxu0 0.0
  %3764 = vmatprep.subr.mxu0 0.0
  %3765 = vmatpush2.msra.mxu0 0.0
  %3766 = vmatprep.subr.mxu0 0.0
  %3767 = vmatpush2.msra.mxu0 0.0
  %3768 = vmatprep.subr.mxu0 0.0
  %3769 = vmatpush2.msra.mxu0 0.0
  %3770 = vmatprep.subr.mxu0 0.0
  %3771 = vmatpush2.msra.mxu0 0.0
  %3772 = vmatprep.subr.mxu0 0.0
  %3773 = vmatpush2.msra.mxu0 0.0
  %3774 = vmatprep.subr.mxu0 0.0
  %3775 = vmatpush2.msra.mxu0 0.0
  %3776 = vmatprep.subr.mxu0 0.0
  %3777 = vmatpush2.msra.mxu0 0.0
  %3778 = vmatprep.subr.mxu0 0.0
  %3779 = vmatpush2.msra.mxu0 0.0
  %3780 = vmatprep.subr.mxu0 0.0
  %3781 = vmatpush2.msra.mxu0 0.0
  %3782 = vmatprep.subr.mxu0 0.0
  %3783 = vmatpush2.msra.mxu0 0.0
  %3784 = vmatprep.subr.mxu0 0.0
  %3785 = vmatpush2.msra.mxu0 0.0
  %3786 = vmatprep.subr.mxu0 0.0
  %3787 = vmatpush2.msra.mxu0 0.0
  %3788 = vmatprep.subr.mxu0 0.0
  %3789 = vmatpush2.msra.mxu0 0.0
  %3790 = vmatprep.mubr.f32.mxu0 0.0
  %3791 = vmatmul.mubr.f32.gmra.mxu0 %v3531
  %v3792 = vpop.f32.mrf.mxu0
  %v3793 = vadd.f32 0.0, %v3792
  %v3794 = vpop.f32.mrf.mxu0
  %3795 = vmatprep.mubr.f32.mxu0 0.0
  %3796 = vmatmul.mubr.f32.gmra.mxu0 %v3534
  %v3797 = vpop.f32.mrf.mxu0
  %v3798 = vadd.f32 0.0, %v3797
  %v3799 = vpop.f32.mrf.mxu0
  %3800 = vmatprep.mubr.f32.mxu0 0.0
  %3801 = vmatmul.mubr.f32.gmra.mxu0 %v3537
  %v3802 = vpop.f32.mrf.mxu0
  %v3803 = vadd.f32 0.0, %v3802
  %v3804 = vpop.f32.mrf.mxu0
  %3805 = vmatprep.mubr.f32.mxu0 0.0
  %3806 = vmatmul.mubr.f32.gmra.mxu0 %v3540
  %v3807 = vpop.f32.mrf.mxu0
  %v3808 = vadd.f32 0.0, %v3807
  %v3809 = vpop.f32.mrf.mxu0
  %3810 = vmatprep.mubr.f32.mxu0 0.0
  %3811 = vmatmul.mubr.f32.gmra.mxu0 %v3543
  %v3812 = vpop.f32.mrf.mxu0
  %v3813 = vadd.f32 0.0, %v3812
  %v3814 = vpop.f32.mrf.mxu0
  %3815 = vmatprep.mubr.f32.mxu0 0.0
  %3816 = vmatmul.mubr.f32.gmra.mxu0 %v3546
  %v3817 = vpop.f32.mrf.mxu0
  %v3818 = vadd.f32 0.0, %v3817
  %v3819 = vpop.f32.mrf.mxu0
  %3820 = vmatprep.mubr.f32.mxu0 0.0
  %3821 = vmatmul.mubr.f32.gmra.mxu0 %v3549
  %v3822 = vpop.f32.mrf.mxu0
  %v3823 = vadd.f32 0.0, %v3822
  %v3824 = vpop.f32.mrf.mxu0
  %3825 = vmatprep.mubr.f32.mxu0 0.0
  %3826 = vmatmul.mubr.f32.gmra.mxu0 %v3552
  %v3827 = vpop.f32.mrf.mxu0
  %v3828 = vadd.f32 0.0, %v3827
  %v3829 = vpop.f32.mrf.mxu0
  %3830 = vmatprep.mubr.f32.mxu0 0.0
  %3831 = vmatmul.mubr.f32.gmra.mxu0 %v3555
  %v3832 = vpop.f32.mrf.mxu0
  %v3833 = vadd.f32 0.0, %v3832
  %v3834 = vpop.f32.mrf.mxu0
  %3835 = vmatprep.mubr.f32.mxu0 0.0
  %3836 = vmatmul.mubr.f32.gmra.mxu0 %v3558
  %v3837 = vpop.f32.mrf.mxu0
  %v3838 = vadd.f32 0.0, %v3837
  %v3839 = vpop.f32.mrf.mxu0
  %3840 = vmatprep.mubr.f32.mxu0 0.0
  %3841 = vmatmul.mubr.f32.gmra.mxu0 %v3561
  %v3842 = vpop.f32.mrf.mxu0
  %v3843 = vadd.f32 0.0, %v3842
  %v3844 = vpop.f32.mrf.mxu0
  %3845 = vmatprep.mubr.f32.mxu0 0.0
  %3846 = vmatmul.mubr.f32.gmra.mxu0 %v3564
  %v3847 = vpop.f32.mrf.mxu0
  %v3848 = vadd.f32 0.0, %v3847
  %v3849 = vpop.f32.mrf.mxu0
  %3850 = vmatprep.mubr.f32.mxu0 0.0
  %3851 = vmatmul.mubr.f32.gmra.mxu0 %v3567
  %v3852 = vpop.f32.mrf.mxu0
  %v3853 = vadd.f32 0.0, %v3852
  %v3854 = vpop.f32.mrf.mxu0
  %3855 = vmatprep.mubr.f32.mxu0 0.0
  %3856 = vmatmul.mubr.f32.gmra.mxu0 %v3570
  %v3857 = vpop.f32.mrf.mxu0
  %v3858 = vadd.f32 0.0, %v3857
  %v3859 = vpop.f32.mrf.mxu0
  %3860 = vmatprep.mubr.f32.mxu0 0.0
  %3861 = vmatmul.mubr.f32.gmra.mxu0 %v3573
  %v3862 = vpop.f32.mrf.mxu0
  %v3863 = vadd.f32 0.0, %v3862
  %v3864 = vpop.f32.mrf.mxu0
  %3865 = vmatprep.mubr.f32.mxu0 0.0
  %3866 = vmatmul.mubr.f32.gmra.mxu0 %v3576
  %v3867 = vpop.f32.mrf.mxu0
  %v3868 = vadd.f32 0.0, %v3867
  %v3869 = vpop.f32.mrf.mxu0
  %3870 = vmatprep.mubr.f32.mxu0 0.0
  %3871 = vmatmul.mubr.f32.gmra.mxu0 %v3579
  %v3872 = vpop.f32.mrf.mxu0
  %v3873 = vadd.f32 0.0, %v3872
  %v3874 = vpop.f32.mrf.mxu0
  %3875 = vmatprep.mubr.f32.mxu0 0.0
  %3876 = vmatmul.mubr.f32.gmra.mxu0 %v3582
  %v3877 = vpop.f32.mrf.mxu0
  %v3878 = vadd.f32 0.0, %v3877
  %v3879 = vpop.f32.mrf.mxu0
  %3880 = vmatprep.mubr.f32.mxu0 0.0
  %3881 = vmatmul.mubr.f32.gmra.mxu0 %v3585
  %v3882 = vpop.f32.mrf.mxu0
  %v3883 = vadd.f32 0.0, %v3882
  %v3884 = vpop.f32.mrf.mxu0
  %3885 = vmatprep.mubr.f32.mxu0 0.0
  %3886 = vmatmul.mubr.f32.gmra.mxu0 %v3588
  %v3887 = vpop.f32.mrf.mxu0
  %v3888 = vadd.f32 0.0, %v3887
  %v3889 = vpop.f32.mrf.mxu0
  %3890 = vmatprep.mubr.f32.mxu0 0.0
  %3891 = vmatmul.mubr.f32.gmra.mxu0 %v3591
  %v3892 = vpop.f32.mrf.mxu0
  %v3893 = vadd.f32 0.0, %v3892
  %v3894 = vpop.f32.mrf.mxu0
  %3895 = vmatprep.mubr.f32.mxu0 0.0
  %3896 = vmatmul.mubr.f32.gmra.mxu0 %v3594
  %v3897 = vpop.f32.mrf.mxu0
  %v3898 = vadd.f32 0.0, %v3897
  %v3899 = vpop.f32.mrf.mxu0
  %3900 = vmatprep.mubr.f32.mxu0 0.0
  %3901 = vmatmul.mubr.f32.gmra.mxu0 %v3597
  %v3902 = vpop.f32.mrf.mxu0
  %v3903 = vadd.f32 0.0, %v3902
  %v3904 = vpop.f32.mrf.mxu0
  %3905 = vmatprep.mubr.f32.mxu0 0.0
  %3906 = vmatmul.mubr.f32.gmra.mxu0 %v3600
  %v3907 = vpop.f32.mrf.mxu0
  %v3908 = vadd.f32 0.0, %v3907
  %v3909 = vpop.f32.mrf.mxu0
  %3910 = vmatprep.mubr.f32.mxu0 0.0
  %3911 = vmatmul.mubr.f32.gmra.mxu0 %v3603
  %v3912 = vpop.f32.mrf.mxu0
  %v3913 = vadd.f32 0.0, %v3912
  %v3914 = vpop.f32.mrf.mxu0
  %3915 = vmatprep.mubr.f32.mxu0 0.0
  %3916 = vmatmul.mubr.f32.gmra.mxu0 %v3606
  %v3917 = vpop.f32.mrf.mxu0
  %v3918 = vadd.f32 0.0, %v3917
  %v3919 = vpop.f32.mrf.mxu0
  %3920 = vmatprep.mubr.f32.mxu0 0.0
  %3921 = vmatmul.mubr.f32.gmra.mxu0 %v3609
  %v3922 = vpop.f32.mrf.mxu0
  %v3923 = vadd.f32 0.0, %v3922
  %v3924 = vpop.f32.mrf.mxu0
  %3925 = vmatprep.mubr.f32.mxu0 0.0
  %3926 = vmatmul.mubr.f32.gmra.mxu0 %v3612
  %v3927 = vpop.f32.mrf.mxu0
  %v3928 = vadd.f32 0.0, %v3927
  %v3929 = vpop.f32.mrf.mxu0
  %3930 = vmatprep.mubr.f32.mxu0 0.0
  %3931 = vmatmul.mubr.f32.gmra.mxu0 %v3615
  %v3932 = vpop.f32.mrf.mxu0
  %v3933 = vadd.f32 0.0, %v3932
  %v3934 = vpop.f32.mrf.mxu0
  %3935 = vmatprep.mubr.f32.mxu0 0.0
  %3936 = vmatmul.mubr.f32.gmra.mxu0 %v3618
  %v3937 = vpop.f32.mrf.mxu0
  %v3938 = vadd.f32 0.0, %v3937
  %v3939 = vpop.f32.mrf.mxu0
  %3940 = vmatprep.mubr.f32.mxu0 0.0
  %3941 = vmatmul.mubr.f32.gmra.mxu0 %v3621
  %v3942 = vpop.f32.mrf.mxu0
  %v3943 = vadd.f32 0.0, %v3942
  %v3944 = vpop.f32.mrf.mxu0
  %3945 = vmatprep.mubr.f32.mxu0 0.0
  %3946 = vmatmul.mubr.f32.gmra.mxu0 %v3624
  %v3947 = vpop.f32.mrf.mxu0
  %v3948 = vadd.f32 0.0, %v3947
  %v3949 = vpop.f32.mrf.mxu0
  %3950 = vmatprep.mubr.f32.mxu0 0.0
  %3951 = vmatmul.mubr.f32.gmra.mxu0 %v3627
  %v3952 = vpop.f32.mrf.mxu0
  %v3953 = vadd.f32 0.0, %v3952
  %v3954 = vpop.f32.mrf.mxu0
  %3955 = vmatprep.mubr.f32.mxu0 0.0
  %3956 = vmatmul.mubr.f32.gmra.mxu0 %v3630
  %v3957 = vpop.f32.mrf.mxu0
  %v3958 = vadd.f32 0.0, %v3957
  %v3959 = vpop.f32.mrf.mxu0
  %3960 = vmatprep.mubr.f32.mxu0 0.0
  %3961 = vmatmul.mubr.f32.gmra.mxu0 %v3633
  %v3962 = vpop.f32.mrf.mxu0
  %v3963 = vadd.f32 0.0, %v3962
  %v3964 = vpop.f32.mrf.mxu0
  %3965 = vmatprep.mubr.f32.mxu0 0.0
  %3966 = vmatmul.mubr.f32.gmra.mxu0 %v3636
  %v3967 = vpop.f32.mrf.mxu0
  %v3968 = vadd.f32 0.0, %v3967
  %v3969 = vpop.f32.mrf.mxu0
  %3970 = vmatprep.mubr.f32.mxu0 0.0
  %3971 = vmatmul.mubr.f32.gmra.mxu0 %v3639
  %v3972 = vpop.f32.mrf.mxu0
  %v3973 = vadd.f32 0.0, %v3972
  %v3974 = vpop.f32.mrf.mxu0
  %3975 = vmatprep.mubr.f32.mxu0 0.0
  %3976 = vmatmul.mubr.f32.gmra.mxu0 %v3642
  %v3977 = vpop.f32.mrf.mxu0
  %v3978 = vadd.f32 0.0, %v3977
  %v3979 = vpop.f32.mrf.mxu0
  %3980 = vmatprep.mubr.f32.mxu0 0.0
  %3981 = vmatmul.mubr.f32.gmra.mxu0 %v3645
  %v3982 = vpop.f32.mrf.mxu0
  %v3983 = vadd.f32 0.0, %v3982
  %v3984 = vpop.f32.mrf.mxu0
  %3985 = vmatprep.mubr.f32.mxu0 0.0
  %3986 = vmatmul.mubr.f32.gmra.mxu0 %v3648
  %v3987 = vpop.f32.mrf.mxu0
  %v3988 = vadd.f32 0.0, %v3987
  %v3989 = vpop.f32.mrf.mxu0
  %3990 = vmatprep.mubr.f32.mxu0 0.0
  %3991 = vmatmul.mubr.f32.gmra.mxu0 %v3651
  %v3992 = vpop.f32.mrf.mxu0
  %v3993 = vadd.f32 0.0, %v3992
  %v3994 = vpop.f32.mrf.mxu0
  %3995 = vmatprep.mubr.f32.mxu0 0.0
  %3996 = vmatmul.mubr.f32.gmra.mxu0 %v3654
  %v3997 = vpop.f32.mrf.mxu0
  %v3998 = vadd.f32 0.0, %v3997
  %v3999 = vpop.f32.mrf.mxu0
  %4000 = vmatprep.mubr.f32.mxu0 0.0
  %4001 = vmatmul.mubr.f32.gmra.mxu0 %v3657
  %v4002 = vpop.f32.mrf.mxu0
  %v4003 = vadd.f32 0.0, %v4002
  %v4004 = vpop.f32.mrf.mxu0
  %4005 = vmatprep.mubr.f32.mxu0 0.0
  %4006 = vmatmul.mubr.f32.gmra.mxu0 %v3660
  %v4007 = vpop.f32.mrf.mxu0
  %v4008 = vadd.f32 0.0, %v4007
  %v4009 = vpop.f32.mrf.mxu0
  %4010 = vmatprep.mubr.f32.mxu0 0.0
  %4011 = vmatmul.mubr.f32.gmra.mxu0 %v3663
  %v4012 = vpop.f32.mrf.mxu0
  %v4013 = vadd.f32 0.0, %v4012
  %v4014 = vpop.f32.mrf.mxu0
  %4015 = vmatprep.mubr.f32.mxu0 0.0
  %4016 = vmatmul.mubr.f32.gmra.mxu0 %v3666
  %v4017 = vpop.f32.mrf.mxu0
  %v4018 = vadd.f32 0.0, %v4017
  %v4019 = vpop.f32.mrf.mxu0
  %4020 = vmatprep.mubr.f32.mxu0 0.0
  %4021 = vmatmul.mubr.f32.gmra.mxu0 %v3669
  %v4022 = vpop.f32.mrf.mxu0
  %v4023 = vadd.f32 0.0, %v4022
  %v4024 = vpop.f32.mrf.mxu0
  %4025 = vmatprep.mubr.f32.mxu0 0.0
  %4026 = vmatmul.mubr.f32.gmra.mxu0 %v3672
  %v4027 = vpop.f32.mrf.mxu0
  %v4028 = vadd.f32 0.0, %v4027
  %v4029 = vpop.f32.mrf.mxu0
  %4030 = vmatprep.mubr.f32.mxu0 0.0
  %4031 = vmatmul.mubr.f32.gmra.mxu0 %v3675
  %v4032 = vpop.f32.mrf.mxu0
  %v4033 = vadd.f32 0.0, %v4032
  %v4034 = vpop.f32.mrf.mxu0
  %4035 = vmatprep.mubr.f32.mxu0 0.0
  %4036 = vmatmul.mubr.f32.gmra.mxu0 %v3678
  %v4037 = vpop.f32.mrf.mxu0
  %v4038 = vadd.f32 0.0, %v4037
  %v4039 = vpop.f32.mrf.mxu0
  %4040 = vmatprep.mubr.f32.mxu0 0.0
  %4041 = vmatmul.mubr.f32.gmra.mxu0 %v3681
  %v4042 = vpop.f32.mrf.mxu0
  %v4043 = vadd.f32 0.0, %v4042
  %v4044 = vpop.f32.mrf.mxu0
  %4045 = vmatprep.mubr.f32.mxu0 0.0
  %4046 = vmatmul.mubr.f32.gmra.mxu0 %v3684
  %v4047 = vpop.f32.mrf.mxu0
  %v4048 = vadd.f32 0.0, %v4047
  %v4049 = vpop.f32.mrf.mxu0
  %4050 = vmatprep.mubr.f32.mxu0 0.0
  %4051 = vmatmul.mubr.f32.gmra.mxu0 %v3687
  %v4052 = vpop.f32.mrf.mxu0
  %v4053 = vadd.f32 0.0, %v4052
  %v4054 = vpop.f32.mrf.mxu0
  %4055 = vmatprep.mubr.f32.mxu0 0.0
  %4056 = vmatmul.mubr.f32.gmra.mxu0 %v3690
  %v4057 = vpop.f32.mrf.mxu0
  %v4058 = vadd.f32 0.0, %v4057
  %v4059 = vpop.f32.mrf.mxu0
  %4060 = vmatprep.mubr.f32.mxu0 0.0
  %4061 = vmatmul.mubr.f32.gmra.mxu0 %v3693
  %v4062 = vpop.f32.mrf.mxu0
  %v4063 = vadd.f32 0.0, %v4062
  %v4064 = vpop.f32.mrf.mxu0
  %4065 = vmatprep.mubr.f32.mxu0 0.0
  %4066 = vmatmul.mubr.f32.gmra.mxu0 %v3696
  %v4067 = vpop.f32.mrf.mxu0
  %v4068 = vadd.f32 0.0, %v4067
  %v4069 = vpop.f32.mrf.mxu0
  %4070 = vmatprep.mubr.f32.mxu0 0.0
  %4071 = vmatmul.mubr.f32.gmra.mxu0 %v3699
  %v4072 = vpop.f32.mrf.mxu0
  %v4073 = vadd.f32 0.0, %v4072
  %v4074 = vpop.f32.mrf.mxu0
  %4075 = vmatprep.mubr.f32.mxu0 0.0
  %4076 = vmatmul.mubr.f32.gmra.mxu0 %v3702
  %v4077 = vpop.f32.mrf.mxu0
  %v4078 = vadd.f32 0.0, %v4077
  %v4079 = vpop.f32.mrf.mxu0
  %4080 = vmatprep.mubr.f32.mxu0 0.0
  %4081 = vmatmul.mubr.f32.gmra.mxu0 %v3705
  %v4082 = vpop.f32.mrf.mxu0
  %v4083 = vadd.f32 0.0, %v4082
  %v4084 = vpop.f32.mrf.mxu0
  %4085 = vmatprep.mubr.f32.mxu0 0.0
  %4086 = vmatmul.mubr.f32.gmra.mxu0 %v3708
  %v4087 = vpop.f32.mrf.mxu0
  %v4088 = vadd.f32 0.0, %v4087
  %v4089 = vpop.f32.mrf.mxu0
  %4090 = vmatprep.mubr.f32.mxu0 0.0
  %4091 = vmatmul.mubr.f32.gmra.mxu0 %v3711
  %v4092 = vpop.f32.mrf.mxu0
  %v4093 = vadd.f32 0.0, %v4092
  %v4094 = vpop.f32.mrf.mxu0
  %4095 = vmatprep.mubr.f32.mxu0 0.0
  %4096 = vmatmul.mubr.f32.gmra.mxu0 %v3714
  %v4097 = vpop.f32.mrf.mxu0
  %v4098 = vadd.f32 0.0, %v4097
  %v4099 = vpop.f32.mrf.mxu0
  %4100 = vmatprep.mubr.f32.mxu0 0.0
  %4101 = vmatmul.mubr.f32.gmra.mxu0 %v3717
  %v4102 = vpop.f32.mrf.mxu0
  %v4103 = vadd.f32 0.0, %v4102
  %v4104 = vpop.f32.mrf.mxu0
  %4105 = vmatprep.mubr.f32.mxu0 0.0
  %4106 = vmatmul.mubr.f32.gmra.mxu0 %v3720
  %v4107 = vpop.f32.mrf.mxu0
  %v4108 = vadd.f32 0.0, %v4107
  %v4109 = vpop.f32.mrf.mxu0
  %4110 = vdwg.mxu0
  %vm4111 = vcmask 64512
  %v4112 = vsel %vm4111, %v3793, 0.0
  %v4113 = vsel %vm4111, %v3798, 0.0
  %v4114 = vadd.f32 %v4112, %v4113
  %v4115 = vsel %vm4111, %v3803, 0.0
  %v4116 = vadd.f32 %v4114, %v4115
  %v4117 = vsel %vm4111, %v3808, 0.0
  %v4118 = vadd.f32 %v4116, %v4117
  %v4119 = vsel %vm4111, %v3813, 0.0
  %v4120 = vadd.f32 %v4118, %v4119
  %v4121 = vsel %vm4111, %v3818, 0.0
  %v4122 = vadd.f32 %v4120, %v4121
  %v4123 = vsel %vm4111, %v3823, 0.0
  %v4124 = vadd.f32 %v4122, %v4123
  %v4125 = vsel %vm4111, %v3828, 0.0
  %v4126 = vadd.f32 %v4124, %v4125
  %v4127 = vsel %vm4111, %v3833, 0.0
  %v4128 = vadd.f32 %v4126, %v4127
  %v4129 = vsel %vm4111, %v3838, 0.0
  %v4130 = vadd.f32 %v4128, %v4129
  %v4131 = vsel %vm4111, %v3843, 0.0
  %v4132 = vadd.f32 %v4130, %v4131
  %v4133 = vsel %vm4111, %v3848, 0.0
  %v4134 = vadd.f32 %v4132, %v4133
  %v4135 = vsel %vm4111, %v3853, 0.0
  %v4136 = vadd.f32 %v4134, %v4135
  %v4137 = vsel %vm4111, %v3858, 0.0
  %v4138 = vadd.f32 %v4136, %v4137
  %v4139 = vsel %vm4111, %v3863, 0.0
  %v4140 = vadd.f32 %v4138, %v4139
  %v4141 = vsel %vm4111, %v3868, 0.0
  %v4142 = vadd.f32 %v4140, %v4141
  %v4143 = vsel %vm4111, %v3873, 0.0
  %v4144 = vadd.f32 %v4142, %v4143
  %v4145 = vsel %vm4111, %v3878, 0.0
  %v4146 = vadd.f32 %v4144, %v4145
  %v4147 = vsel %vm4111, %v3883, 0.0
  %v4148 = vadd.f32 %v4146, %v4147
  %v4149 = vsel %vm4111, %v3888, 0.0
  %v4150 = vadd.f32 %v4148, %v4149
  %v4151 = vsel %vm4111, %v3893, 0.0
  %v4152 = vadd.f32 %v4150, %v4151
  %v4153 = vsel %vm4111, %v3898, 0.0
  %v4154 = vadd.f32 %v4152, %v4153
  %v4155 = vsel %vm4111, %v3903, 0.0
  %v4156 = vadd.f32 %v4154, %v4155
  %v4157 = vsel %vm4111, %v3908, 0.0
  %v4158 = vadd.f32 %v4156, %v4157
  %v4159 = vsel %vm4111, %v3913, 0.0
  %v4160 = vadd.f32 %v4158, %v4159
  %v4161 = vsel %vm4111, %v3918, 0.0
  %v4162 = vadd.f32 %v4160, %v4161
  %v4163 = vsel %vm4111, %v3923, 0.0
  %v4164 = vadd.f32 %v4162, %v4163
  %v4165 = vsel %vm4111, %v3928, 0.0
  %v4166 = vadd.f32 %v4164, %v4165
  %v4167 = vsel %vm4111, %v3933, 0.0
  %v4168 = vadd.f32 %v4166, %v4167
  %v4169 = vsel %vm4111, %v3938, 0.0
  %v4170 = vadd.f32 %v4168, %v4169
  %v4171 = vsel %vm4111, %v3943, 0.0
  %v4172 = vadd.f32 %v4170, %v4171
  %v4173 = vsel %vm4111, %v3948, 0.0
  %v4174 = vadd.f32 %v4172, %v4173
  %v4175 = vsel %vm4111, %v3953, 0.0
  %v4176 = vadd.f32 %v4174, %v4175
  %v4177 = vsel %vm4111, %v3958, 0.0
  %v4178 = vadd.f32 %v4176, %v4177
  %v4179 = vsel %vm4111, %v3963, 0.0
  %v4180 = vadd.f32 %v4178, %v4179
  %v4181 = vsel %vm4111, %v3968, 0.0
  %v4182 = vadd.f32 %v4180, %v4181
  %v4183 = vsel %vm4111, %v3973, 0.0
  %v4184 = vadd.f32 %v4182, %v4183
  %v4185 = vsel %vm4111, %v3978, 0.0
  %v4186 = vadd.f32 %v4184, %v4185
  %v4187 = vsel %vm4111, %v3983, 0.0
  %v4188 = vadd.f32 %v4186, %v4187
  %v4189 = vsel %vm4111, %v3988, 0.0
  %v4190 = vadd.f32 %v4188, %v4189
  %v4191 = vsel %vm4111, %v3993, 0.0
  %v4192 = vadd.f32 %v4190, %v4191
  %v4193 = vsel %vm4111, %v3998, 0.0
  %v4194 = vadd.f32 %v4192, %v4193
  %v4195 = vsel %vm4111, %v4003, 0.0
  %v4196 = vadd.f32 %v4194, %v4195
  %v4197 = vsel %vm4111, %v4008, 0.0
  %v4198 = vadd.f32 %v4196, %v4197
  %v4199 = vsel %vm4111, %v4013, 0.0
  %v4200 = vadd.f32 %v4198, %v4199
  %v4201 = vsel %vm4111, %v4018, 0.0
  %v4202 = vadd.f32 %v4200, %v4201
  %v4203 = vsel %vm4111, %v4023, 0.0
  %v4204 = vadd.f32 %v4202, %v4203
  %v4205 = vsel %vm4111, %v4028, 0.0
  %v4206 = vadd.f32 %v4204, %v4205
  %v4207 = vsel %vm4111, %v4033, 0.0
  %v4208 = vadd.f32 %v4206, %v4207
  %v4209 = vsel %vm4111, %v4038, 0.0
  %v4210 = vadd.f32 %v4208, %v4209
  %v4211 = vsel %vm4111, %v4043, 0.0
  %v4212 = vadd.f32 %v4210, %v4211
  %v4213 = vsel %vm4111, %v4048, 0.0
  %v4214 = vadd.f32 %v4212, %v4213
  %v4215 = vsel %vm4111, %v4053, 0.0
  %v4216 = vadd.f32 %v4214, %v4215
  %v4217 = vsel %vm4111, %v4058, 0.0
  %v4218 = vadd.f32 %v4216, %v4217
  %v4219 = vsel %vm4111, %v4063, 0.0
  %v4220 = vadd.f32 %v4218, %v4219
  %v4221 = vsel %vm4111, %v4068, 0.0
  %v4222 = vadd.f32 %v4220, %v4221
  %v4223 = vsel %vm4111, %v4073, 0.0
  %v4224 = vadd.f32 %v4222, %v4223
  %v4225 = vsel %vm4111, %v4078, 0.0
  %v4226 = vadd.f32 %v4224, %v4225
  %v4227 = vsel %vm4111, %v4083, 0.0
  %v4228 = vadd.f32 %v4226, %v4227
  %v4229 = vsel %vm4111, %v4088, 0.0
  %v4230 = vadd.f32 %v4228, %v4229
  %v4231 = vsel %vm4111, %v4093, 0.0
  %v4232 = vadd.f32 %v4230, %v4231
  %v4233 = vsel %vm4111, %v4098, 0.0
  %v4234 = vadd.f32 %v4232, %v4233
  %v4235 = vsel %vm4111, %v4103, 0.0
  %v4236 = vadd.f32 %v4234, %v4235
  %v4237 = vsel %vm4111, %v4108, 0.0
  %v4238 = vadd.f32 %v4236, %v4237
  %v4239 = vrot.slane %v4238, 4
  %v4240 = vadd.f32 %v4238, %v4239
  %v4241 = vrot.slane %v4240, 2
  %v4242 = vadd.f32 %v4240, %v4241
  %v4243 = vrot.slane %v4242, 1
  %v4244 = vadd.f32 %v4242, %v4243
  %v4245 = vmul.f32 %v3793, %v3793
  %v4246 = vmul.f32 %v3798, %v3798
  %v4247 = vmul.f32 %v3803, %v3803
  %v4248 = vmul.f32 %v3808, %v3808
  %v4249 = vmul.f32 %v3813, %v3813
  %v4250 = vmul.f32 %v3818, %v3818
  %v4251 = vmul.f32 %v3823, %v3823
  %v4252 = vmul.f32 %v3828, %v3828
  %v4253 = vmul.f32 %v3833, %v3833
  %v4254 = vmul.f32 %v3838, %v3838
  %v4255 = vmul.f32 %v3843, %v3843
  %v4256 = vmul.f32 %v3848, %v3848
  %v4257 = vmul.f32 %v3853, %v3853
  %v4258 = vmul.f32 %v3858, %v3858
  %v4259 = vmul.f32 %v3863, %v3863
  %v4260 = vmul.f32 %v3868, %v3868
  %v4261 = vmul.f32 %v3873, %v3873
  %v4262 = vmul.f32 %v3878, %v3878
  %v4263 = vmul.f32 %v3883, %v3883
  %v4264 = vmul.f32 %v3888, %v3888
  %v4265 = vmul.f32 %v3893, %v3893
  %v4266 = vmul.f32 %v3898, %v3898
  %v4267 = vmul.f32 %v3903, %v3903
  %v4268 = vmul.f32 %v3908, %v3908
  %v4269 = vmul.f32 %v3913, %v3913
  %v4270 = vmul.f32 %v3918, %v3918
  %v4271 = vmul.f32 %v3923, %v3923
  %v4272 = vmul.f32 %v3928, %v3928
  %v4273 = vmul.f32 %v3933, %v3933
  %v4274 = vmul.f32 %v3938, %v3938
  %v4275 = vmul.f32 %v3943, %v3943
  %v4276 = vmul.f32 %v3948, %v3948
  %v4277 = vmul.f32 %v3953, %v3953
  %v4278 = vmul.f32 %v3958, %v3958
  %v4279 = vmul.f32 %v3963, %v3963
  %v4280 = vmul.f32 %v3968, %v3968
  %v4281 = vmul.f32 %v3973, %v3973
  %v4282 = vmul.f32 %v3978, %v3978
  %v4283 = vmul.f32 %v3983, %v3983
  %v4284 = vmul.f32 %v3988, %v3988
  %v4285 = vmul.f32 %v3993, %v3993
  %v4286 = vmul.f32 %v3998, %v3998
  %v4287 = vmul.f32 %v4003, %v4003
  %v4288 = vmul.f32 %v4008, %v4008
  %v4289 = vmul.f32 %v4013, %v4013
  %v4290 = vmul.f32 %v4018, %v4018
  %v4291 = vmul.f32 %v4023, %v4023
  %v4292 = vmul.f32 %v4028, %v4028
  %v4293 = vmul.f32 %v4033, %v4033
  %v4294 = vmul.f32 %v4038, %v4038
  %v4295 = vmul.f32 %v4043, %v4043
  %v4296 = vmul.f32 %v4048, %v4048
  %v4297 = vmul.f32 %v4053, %v4053
  %v4298 = vmul.f32 %v4058, %v4058
  %v4299 = vmul.f32 %v4063, %v4063
  %v4300 = vmul.f32 %v4068, %v4068
  %v4301 = vmul.f32 %v4073, %v4073
  %v4302 = vmul.f32 %v4078, %v4078
  %v4303 = vmul.f32 %v4083, %v4083
  %v4304 = vmul.f32 %v4088, %v4088
  %v4305 = vmul.f32 %v4093, %v4093
  %v4306 = vmul.f32 %v4098, %v4098
  %v4307 = vmul.f32 %v4103, %v4103
  %v4308 = vmul.f32 %v4108, %v4108
  %v4309 = vsel %vm4111, %v4245, 0.0
  %v4310 = vsel %vm4111, %v4246, 0.0
  %v4311 = vadd.f32 %v4309, %v4310
  %v4312 = vsel %vm4111, %v4247, 0.0
  %v4313 = vadd.f32 %v4311, %v4312
  %v4314 = vsel %vm4111, %v4248, 0.0
  %v4315 = vadd.f32 %v4313, %v4314
  %v4316 = vsel %vm4111, %v4249, 0.0
  %v4317 = vadd.f32 %v4315, %v4316
  %v4318 = vsel %vm4111, %v4250, 0.0
  %v4319 = vadd.f32 %v4317, %v4318
  %v4320 = vsel %vm4111, %v4251, 0.0
  %v4321 = vadd.f32 %v4319, %v4320
  %v4322 = vsel %vm4111, %v4252, 0.0
  %v4323 = vadd.f32 %v4321, %v4322
  %v4324 = vsel %vm4111, %v4253, 0.0
  %v4325 = vadd.f32 %v4323, %v4324
  %v4326 = vsel %vm4111, %v4254, 0.0
  %v4327 = vadd.f32 %v4325, %v4326
  %v4328 = vsel %vm4111, %v4255, 0.0
  %v4329 = vadd.f32 %v4327, %v4328
  %v4330 = vsel %vm4111, %v4256, 0.0
  %v4331 = vadd.f32 %v4329, %v4330
  %v4332 = vsel %vm4111, %v4257, 0.0
  %v4333 = vadd.f32 %v4331, %v4332
  %v4334 = vsel %vm4111, %v4258, 0.0
  %v4335 = vadd.f32 %v4333, %v4334
  %v4336 = vsel %vm4111, %v4259, 0.0
  %v4337 = vadd.f32 %v4335, %v4336
  %v4338 = vsel %vm4111, %v4260, 0.0
  %v4339 = vadd.f32 %v4337, %v4338
  %v4340 = vsel %vm4111, %v4261, 0.0
  %v4341 = vadd.f32 %v4339, %v4340
  %v4342 = vsel %vm4111, %v4262, 0.0
  %v4343 = vadd.f32 %v4341, %v4342
  %v4344 = vsel %vm4111, %v4263, 0.0
  %v4345 = vadd.f32 %v4343, %v4344
  %v4346 = vsel %vm4111, %v4264, 0.0
  %v4347 = vadd.f32 %v4345, %v4346
  %v4348 = vsel %vm4111, %v4265, 0.0
  %v4349 = vadd.f32 %v4347, %v4348
  %v4350 = vsel %vm4111, %v4266, 0.0
  %v4351 = vadd.f32 %v4349, %v4350
  %v4352 = vsel %vm4111, %v4267, 0.0
  %v4353 = vadd.f32 %v4351, %v4352
  %v4354 = vsel %vm4111, %v4268, 0.0
  %v4355 = vadd.f32 %v4353, %v4354
  %v4356 = vsel %vm4111, %v4269, 0.0
  %v4357 = vadd.f32 %v4355, %v4356
  %v4358 = vsel %vm4111, %v4270, 0.0
  %v4359 = vadd.f32 %v4357, %v4358
  %v4360 = vsel %vm4111, %v4271, 0.0
  %v4361 = vadd.f32 %v4359, %v4360
  %v4362 = vsel %vm4111, %v4272, 0.0
  %v4363 = vadd.f32 %v4361, %v4362
  %v4364 = vsel %vm4111, %v4273, 0.0
  %v4365 = vadd.f32 %v4363, %v4364
  %v4366 = vsel %vm4111, %v4274, 0.0
  %v4367 = vadd.f32 %v4365, %v4366
  %v4368 = vsel %vm4111, %v4275, 0.0
  %v4369 = vadd.f32 %v4367, %v4368
  %v4370 = vsel %vm4111, %v4276, 0.0
  %v4371 = vadd.f32 %v4369, %v4370
  %v4372 = vsel %vm4111, %v4277, 0.0
  %v4373 = vadd.f32 %v4371, %v4372
  %v4374 = vsel %vm4111, %v4278, 0.0
  %v4375 = vadd.f32 %v4373, %v4374
  %v4376 = vsel %vm4111, %v4279, 0.0
  %v4377 = vadd.f32 %v4375, %v4376
  %v4378 = vsel %vm4111, %v4280, 0.0
  %v4379 = vadd.f32 %v4377, %v4378
  %v4380 = vsel %vm4111, %v4281, 0.0
  %v4381 = vadd.f32 %v4379, %v4380
  %v4382 = vsel %vm4111, %v4282, 0.0
  %v4383 = vadd.f32 %v4381, %v4382
  %v4384 = vsel %vm4111, %v4283, 0.0
  %v4385 = vadd.f32 %v4383, %v4384
  %v4386 = vsel %vm4111, %v4284, 0.0
  %v4387 = vadd.f32 %v4385, %v4386
  %v4388 = vsel %vm4111, %v4285, 0.0
  %v4389 = vadd.f32 %v4387, %v4388
  %v4390 = vsel %vm4111, %v4286, 0.0
  %v4391 = vadd.f32 %v4389, %v4390
  %v4392 = vsel %vm4111, %v4287, 0.0
  %v4393 = vadd.f32 %v4391, %v4392
  %v4394 = vsel %vm4111, %v4288, 0.0
  %v4395 = vadd.f32 %v4393, %v4394
  %v4396 = vsel %vm4111, %v4289, 0.0
  %v4397 = vadd.f32 %v4395, %v4396
  %v4398 = vsel %vm4111, %v4290, 0.0
  %v4399 = vadd.f32 %v4397, %v4398
  %v4400 = vsel %vm4111, %v4291, 0.0
  %v4401 = vadd.f32 %v4399, %v4400
  %v4402 = vsel %vm4111, %v4292, 0.0
  %v4403 = vadd.f32 %v4401, %v4402
  %v4404 = vsel %vm4111, %v4293, 0.0
  %v4405 = vadd.f32 %v4403, %v4404
  %v4406 = vsel %vm4111, %v4294, 0.0
  %v4407 = vadd.f32 %v4405, %v4406
  %v4408 = vsel %vm4111, %v4295, 0.0
  %v4409 = vadd.f32 %v4407, %v4408
  %v4410 = vsel %vm4111, %v4296, 0.0
  %v4411 = vadd.f32 %v4409, %v4410
  %v4412 = vsel %vm4111, %v4297, 0.0
  %v4413 = vadd.f32 %v4411, %v4412
  %v4414 = vsel %vm4111, %v4298, 0.0
  %v4415 = vadd.f32 %v4413, %v4414
  %v4416 = vsel %vm4111, %v4299, 0.0
  %v4417 = vadd.f32 %v4415, %v4416
  %v4418 = vsel %vm4111, %v4300, 0.0
  %v4419 = vadd.f32 %v4417, %v4418
  %v4420 = vsel %vm4111, %v4301, 0.0
  %v4421 = vadd.f32 %v4419, %v4420
  %v4422 = vsel %vm4111, %v4302, 0.0
  %v4423 = vadd.f32 %v4421, %v4422
  %v4424 = vsel %vm4111, %v4303, 0.0
  %v4425 = vadd.f32 %v4423, %v4424
  %v4426 = vsel %vm4111, %v4304, 0.0
  %v4427 = vadd.f32 %v4425, %v4426
  %v4428 = vsel %vm4111, %v4305, 0.0
  %v4429 = vadd.f32 %v4427, %v4428
  %v4430 = vsel %vm4111, %v4306, 0.0
  %v4431 = vadd.f32 %v4429, %v4430
  %v4432 = vsel %vm4111, %v4307, 0.0
  %v4433 = vadd.f32 %v4431, %v4432
  %v4434 = vsel %vm4111, %v4308, 0.0
  %v4435 = vadd.f32 %v4433, %v4434
  %v4436 = vrot.slane %v4435, 4
  %v4437 = vadd.f32 %v4435, %v4436
  %v4438 = vrot.slane %v4437, 2
  %v4439 = vadd.f32 %v4437, %v4438
  %v4440 = vrot.slane %v4439, 1
  %v4441 = vadd.f32 %v4439, %v4440
  %v4442 = vmul.f32 %v4244, 0.001953125
  %v4443 = vmul.f32 %v4441, 0.001953125
  %v4444 = vmul.f32 %v4442, %v4442
  %v4445 = vsub.f32 %v4443, %v4444
  %v4446 = vld [vmem:[%s2] sm:$0x1]
  %v4447 = vadd.f32 %v4445, 1e-05
  %v4448 = vrsqrt.pop %v4447
  %v4449 = vmul.f32 %v4446, %v4448
  %v4450 = vld [vmem:[%s3] sm:$0x1]
  %v4451 = vmul.f32 %v4442, %v4449
  %v4452 = vsub.f32 %v4450, %v4451
  %v4454 = vlaneseq
  %v4455 = vshrl.u32 %v4454, 7
  %v4456 = vsub.s32 0, %v4455
  %v4457 = vrot.slane %v4449, %v4456
  %v4459 = vmul.f32 %v3793, %v4457
  %v4460 = vmul.f32 %v3798, %v4457
  %v4461 = vmul.f32 %v3803, %v4457
  %v4462 = vmul.f32 %v3808, %v4457
  %v4463 = vmul.f32 %v3813, %v4457
  %v4464 = vmul.f32 %v3818, %v4457
  %v4465 = vmul.f32 %v3823, %v4457
  %v4466 = vmul.f32 %v3828, %v4457
  %v4467 = vmul.f32 %v3833, %v4457
  %v4468 = vmul.f32 %v3838, %v4457
  %v4469 = vmul.f32 %v3843, %v4457
  %v4470 = vmul.f32 %v3848, %v4457
  %v4471 = vmul.f32 %v3853, %v4457
  %v4472 = vmul.f32 %v3858, %v4457
  %v4473 = vmul.f32 %v3863, %v4457
  %v4474 = vmul.f32 %v3868, %v4457
  %v4475 = vmul.f32 %v3873, %v4457
  %v4476 = vmul.f32 %v3878, %v4457
  %v4477 = vmul.f32 %v3883, %v4457
  %v4478 = vmul.f32 %v3888, %v4457
  %v4479 = vmul.f32 %v3893, %v4457
  %v4480 = vmul.f32 %v3898, %v4457
  %v4481 = vmul.f32 %v3903, %v4457
  %v4482 = vmul.f32 %v3908, %v4457
  %v4483 = vmul.f32 %v3913, %v4457
  %v4484 = vmul.f32 %v3918, %v4457
  %v4485 = vmul.f32 %v3923, %v4457
  %v4486 = vmul.f32 %v3928, %v4457
  %v4487 = vmul.f32 %v3933, %v4457
  %v4488 = vmul.f32 %v3938, %v4457
  %v4489 = vmul.f32 %v3943, %v4457
  %v4490 = vmul.f32 %v3948, %v4457
  %v4491 = vmul.f32 %v3953, %v4457
  %v4492 = vmul.f32 %v3958, %v4457
  %v4493 = vmul.f32 %v3963, %v4457
  %v4494 = vmul.f32 %v3968, %v4457
  %v4495 = vmul.f32 %v3973, %v4457
  %v4496 = vmul.f32 %v3978, %v4457
  %v4497 = vmul.f32 %v3983, %v4457
  %v4498 = vmul.f32 %v3988, %v4457
  %v4499 = vmul.f32 %v3993, %v4457
  %v4500 = vmul.f32 %v3998, %v4457
  %v4501 = vmul.f32 %v4003, %v4457
  %v4502 = vmul.f32 %v4008, %v4457
  %v4503 = vmul.f32 %v4013, %v4457
  %v4504 = vmul.f32 %v4018, %v4457
  %v4505 = vmul.f32 %v4023, %v4457
  %v4506 = vmul.f32 %v4028, %v4457
  %v4507 = vmul.f32 %v4033, %v4457
  %v4508 = vmul.f32 %v4038, %v4457
  %v4509 = vmul.f32 %v4043, %v4457
  %v4510 = vmul.f32 %v4048, %v4457
  %v4511 = vmul.f32 %v4053, %v4457
  %v4512 = vmul.f32 %v4058, %v4457
  %v4513 = vmul.f32 %v4063, %v4457
  %v4514 = vmul.f32 %v4068, %v4457
  %v4515 = vmul.f32 %v4073, %v4457
  %v4516 = vmul.f32 %v4078, %v4457
  %v4517 = vmul.f32 %v4083, %v4457
  %v4518 = vmul.f32 %v4088, %v4457
  %v4519 = vmul.f32 %v4093, %v4457
  %v4520 = vmul.f32 %v4098, %v4457
  %v4521 = vmul.f32 %v4103, %v4457
  %v4522 = vmul.f32 %v4108, %v4457
  %v4524 = vlaneseq
  %v4525 = vshrl.u32 %v4524, 7
  %v4526 = vsub.s32 0, %v4525
  %v4527 = vrot.slane %v4452, %v4526
  %v4529 = vadd.f32 %v4459, %v4527
  %v4530 = vadd.f32 %v4460, %v4527
  %v4531 = vadd.f32 %v4461, %v4527
  %v4532 = vadd.f32 %v4462, %v4527
  %v4533 = vadd.f32 %v4463, %v4527
  %v4534 = vadd.f32 %v4464, %v4527
  %v4535 = vadd.f32 %v4465, %v4527
  %v4536 = vadd.f32 %v4466, %v4527
  %v4537 = vadd.f32 %v4467, %v4527
  %v4538 = vadd.f32 %v4468, %v4527
  %v4539 = vadd.f32 %v4469, %v4527
  %v4540 = vadd.f32 %v4470, %v4527
  %v4541 = vadd.f32 %v4471, %v4527
  %v4542 = vadd.f32 %v4472, %v4527
  %v4543 = vadd.f32 %v4473, %v4527
  %v4544 = vadd.f32 %v4474, %v4527
  %v4545 = vadd.f32 %v4475, %v4527
  %v4546 = vadd.f32 %v4476, %v4527
  %v4547 = vadd.f32 %v4477, %v4527
  %v4548 = vadd.f32 %v4478, %v4527
  %v4549 = vadd.f32 %v4479, %v4527
  %v4550 = vadd.f32 %v4480, %v4527
  %v4551 = vadd.f32 %v4481, %v4527
  %v4552 = vadd.f32 %v4482, %v4527
  %v4553 = vadd.f32 %v4483, %v4527
  %v4554 = vadd.f32 %v4484, %v4527
  %v4555 = vadd.f32 %v4485, %v4527
  %v4556 = vadd.f32 %v4486, %v4527
  %v4557 = vadd.f32 %v4487, %v4527
  %v4558 = vadd.f32 %v4488, %v4527
  %v4559 = vadd.f32 %v4489, %v4527
  %v4560 = vadd.f32 %v4490, %v4527
  %v4561 = vadd.f32 %v4491, %v4527
  %v4562 = vadd.f32 %v4492, %v4527
  %v4563 = vadd.f32 %v4493, %v4527
  %v4564 = vadd.f32 %v4494, %v4527
  %v4565 = vadd.f32 %v4495, %v4527
  %v4566 = vadd.f32 %v4496, %v4527
  %v4567 = vadd.f32 %v4497, %v4527
  %v4568 = vadd.f32 %v4498, %v4527
  %v4569 = vadd.f32 %v4499, %v4527
  %v4570 = vadd.f32 %v4500, %v4527
  %v4571 = vadd.f32 %v4501, %v4527
  %v4572 = vadd.f32 %v4502, %v4527
  %v4573 = vadd.f32 %v4503, %v4527
  %v4574 = vadd.f32 %v4504, %v4527
  %v4575 = vadd.f32 %v4505, %v4527
  %v4576 = vadd.f32 %v4506, %v4527
  %v4577 = vadd.f32 %v4507, %v4527
  %v4578 = vadd.f32 %v4508, %v4527
  %v4579 = vadd.f32 %v4509, %v4527
  %v4580 = vadd.f32 %v4510, %v4527
  %v4581 = vadd.f32 %v4511, %v4527
  %v4582 = vadd.f32 %v4512, %v4527
  %v4583 = vadd.f32 %v4513, %v4527
  %v4584 = vadd.f32 %v4514, %v4527
  %v4585 = vadd.f32 %v4515, %v4527
  %v4586 = vadd.f32 %v4516, %v4527
  %v4587 = vadd.f32 %v4517, %v4527
  %v4588 = vadd.f32 %v4518, %v4527
  %v4589 = vadd.f32 %v4519, %v4527
  %v4590 = vadd.f32 %v4520, %v4527
  %v4591 = vadd.f32 %v4521, %v4527
  %v4592 = vadd.f32 %v4522, %v4527
  %v4593 = vmax.f32 %v4529, 0.0
  %v4594 = vmax.f32 %v4530, 0.0
  %v4595 = vmax.f32 %v4531, 0.0
  %v4596 = vmax.f32 %v4532, 0.0
  %v4597 = vmax.f32 %v4533, 0.0
  %v4598 = vmax.f32 %v4534, 0.0
  %v4599 = vmax.f32 %v4535, 0.0
  %v4600 = vmax.f32 %v4536, 0.0
  %v4601 = vmax.f32 %v4537, 0.0
  %v4602 = vmax.f32 %v4538, 0.0
  %v4603 = vmax.f32 %v4539, 0.0
  %v4604 = vmax.f32 %v4540, 0.0
  %v4605 = vmax.f32 %v4541, 0.0
  %v4606 = vmax.f32 %v4542, 0.0
  %v4607 = vmax.f32 %v4543, 0.0
  %v4608 = vmax.f32 %v4544, 0.0
  %v4609 = vmax.f32 %v4545, 0.0
  %v4610 = vmax.f32 %v4546, 0.0
  %v4611 = vmax.f32 %v4547, 0.0
  %v4612 = vmax.f32 %v4548, 0.0
  %v4613 = vmax.f32 %v4549, 0.0
  %v4614 = vmax.f32 %v4550, 0.0
  %v4615 = vmax.f32 %v4551, 0.0
  %v4616 = vmax.f32 %v4552, 0.0
  %v4617 = vmax.f32 %v4553, 0.0
  %v4618 = vmax.f32 %v4554, 0.0
  %v4619 = vmax.f32 %v4555, 0.0
  %v4620 = vmax.f32 %v4556, 0.0
  %v4621 = vmax.f32 %v4557, 0.0
  %v4622 = vmax.f32 %v4558, 0.0
  %v4623 = vmax.f32 %v4559, 0.0
  %v4624 = vmax.f32 %v4560, 0.0
  %v4625 = vmax.f32 %v4561, 0.0
  %v4626 = vmax.f32 %v4562, 0.0
  %v4627 = vmax.f32 %v4563, 0.0
  %v4628 = vmax.f32 %v4564, 0.0
  %v4629 = vmax.f32 %v4565, 0.0
  %v4630 = vmax.f32 %v4566, 0.0
  %v4631 = vmax.f32 %v4567, 0.0
  %v4632 = vmax.f32 %v4568, 0.0
  %v4633 = vmax.f32 %v4569, 0.0
  %v4634 = vmax.f32 %v4570, 0.0
  %v4635 = vmax.f32 %v4571, 0.0
  %v4636 = vmax.f32 %v4572, 0.0
  %v4637 = vmax.f32 %v4573, 0.0
  %v4638 = vmax.f32 %v4574, 0.0
  %v4639 = vmax.f32 %v4575, 0.0
  %v4640 = vmax.f32 %v4576, 0.0
  %v4641 = vmax.f32 %v4577, 0.0
  %v4642 = vmax.f32 %v4578, 0.0
  %v4643 = vmax.f32 %v4579, 0.0
  %v4644 = vmax.f32 %v4580, 0.0
  %v4645 = vmax.f32 %v4581, 0.0
  %v4646 = vmax.f32 %v4582, 0.0
  %v4647 = vmax.f32 %v4583, 0.0
  %v4648 = vmax.f32 %v4584, 0.0
  %v4649 = vmax.f32 %v4585, 0.0
  %v4650 = vmax.f32 %v4586, 0.0
  %v4651 = vmax.f32 %v4587, 0.0
  %v4652 = vmax.f32 %v4588, 0.0
  %v4653 = vmax.f32 %v4589, 0.0
  %v4654 = vmax.f32 %v4590, 0.0
  %v4655 = vmax.f32 %v4591, 0.0
  %v4656 = vmax.f32 %v4592, 0.0
  %s4657 = scalar_lea.vmem [#allocation3], 24
  %4658 = vst.msk [vmem:[%s4657 + $0x1] sm:$0xff] %vm4111, %v4593
  %4659 = vst.msk [vmem:[%s4657 + $0x9] sm:$0xff] %vm4111, %v4594
  %4660 = vst.msk [vmem:[%s4657 + $0x19] sm:$0xff] %vm4111, %v4595
  %4661 = vst.msk [vmem:[%s4657 + $0x21] sm:$0xff] %vm4111, %v4596
  %4662 = vst.msk [vmem:[%s4657 + $0x31] sm:$0xff] %vm4111, %v4597
  %4663 = vst.msk [vmem:[%s4657 + $0x39] sm:$0xff] %vm4111, %v4598
  %4664 = vst.msk [vmem:[%s4657 + $0x49] sm:$0xff] %vm4111, %v4599
  %4665 = vst.msk [vmem:[%s4657 + $0x51] sm:$0xff] %vm4111, %v4600
  %4666 = vst.msk [vmem:[%s4657 + $0x61] sm:$0xff] %vm4111, %v4601
  %4667 = vst.msk [vmem:[%s4657 + $0x69] sm:$0xff] %vm4111, %v4602
  %4668 = vst.msk [vmem:[%s4657 + $0x79] sm:$0xff] %vm4111, %v4603
  %4669 = vst.msk [vmem:[%s4657 + $0x81] sm:$0xff] %vm4111, %v4604
  %4670 = vst.msk [vmem:[%s4657 + $0x91] sm:$0xff] %vm4111, %v4605
  %4671 = vst.msk [vmem:[%s4657 + $0x99] sm:$0xff] %vm4111, %v4606
  %4672 = vst.msk [vmem:[%s4657 + $0xa9] sm:$0xff] %vm4111, %v4607
  %4673 = vst.msk [vmem:[%s4657 + $0xb1] sm:$0xff] %vm4111, %v4608
  %4674 = vst.msk [vmem:[%s4657 + $0xc1] sm:$0xff] %vm4111, %v4609
  %4675 = vst.msk [vmem:[%s4657 + $0xc9] sm:$0xff] %vm4111, %v4610
  %4676 = vst.msk [vmem:[%s4657 + $0xd9] sm:$0xff] %vm4111, %v4611
  %4677 = vst.msk [vmem:[%s4657 + $0xe1] sm:$0xff] %vm4111, %v4612
  %4678 = vst.msk [vmem:[%s4657 + $0xf1] sm:$0xff] %vm4111, %v4613
  %4679 = vst.msk [vmem:[%s4657 + $0xf9] sm:$0xff] %vm4111, %v4614
  %4680 = vst.msk [vmem:[%s4657 + $0x109] sm:$0xff] %vm4111, %v4615
  %4681 = vst.msk [vmem:[%s4657 + $0x111] sm:$0xff] %vm4111, %v4616
  %4682 = vst.msk [vmem:[%s4657 + $0x121] sm:$0xff] %vm4111, %v4617
  %4683 = vst.msk [vmem:[%s4657 + $0x129] sm:$0xff] %vm4111, %v4618
  %4684 = vst.msk [vmem:[%s4657 + $0x139] sm:$0xff] %vm4111, %v4619
  %4685 = vst.msk [vmem:[%s4657 + $0x141] sm:$0xff] %vm4111, %v4620
  %4686 = vst.msk [vmem:[%s4657 + $0x151] sm:$0xff] %vm4111, %v4621
  %4687 = vst.msk [vmem:[%s4657 + $0x159] sm:$0xff] %vm4111, %v4622
  %4688 = vst.msk [vmem:[%s4657 + $0x169] sm:$0xff] %vm4111, %v4623
  %4689 = vst.msk [vmem:[%s4657 + $0x171] sm:$0xff] %vm4111, %v4624
  %4690 = vst.msk [vmem:[%s4657 + $0x1b1] sm:$0xff] %vm4111, %v4625
  %4691 = vst.msk [vmem:[%s4657 + $0x1b9] sm:$0xff] %vm4111, %v4626
  %4692 = vst.msk [vmem:[%s4657 + $0x1c9] sm:$0xff] %vm4111, %v4627
  %4693 = vst.msk [vmem:[%s4657 + $0x1d1] sm:$0xff] %vm4111, %v4628
  %4694 = vst.msk [vmem:[%s4657 + $0x1e1] sm:$0xff] %vm4111, %v4629
  %4695 = vst.msk [vmem:[%s4657 + $0x1e9] sm:$0xff] %vm4111, %v4630
  %4696 = vst.msk [vmem:[%s4657 + $0x1f9] sm:$0xff] %vm4111, %v4631
  %4697 = vst.msk [vmem:[%s4657 + $0x201] sm:$0xff] %vm4111, %v4632
  %4698 = vst.msk [vmem:[%s4657 + $0x211] sm:$0xff] %vm4111, %v4633
  %4699 = vst.msk [vmem:[%s4657 + $0x219] sm:$0xff] %vm4111, %v4634
  %4700 = vst.msk [vmem:[%s4657 + $0x229] sm:$0xff] %vm4111, %v4635
  %4701 = vst.msk [vmem:[%s4657 + $0x231] sm:$0xff] %vm4111, %v4636
  %4702 = vst.msk [vmem:[%s4657 + $0x241] sm:$0xff] %vm4111, %v4637
  %4703 = vst.msk [vmem:[%s4657 + $0x249] sm:$0xff] %vm4111, %v4638
  %4704 = vst.msk [vmem:[%s4657 + $0x259] sm:$0xff] %vm4111, %v4639
  %4705 = vst.msk [vmem:[%s4657 + $0x261] sm:$0xff] %vm4111, %v4640
  %4706 = vst.msk [vmem:[%s4657 + $0x271] sm:$0xff] %vm4111, %v4641
  %4707 = vst.msk [vmem:[%s4657 + $0x279] sm:$0xff] %vm4111, %v4642
  %4708 = vst.msk [vmem:[%s4657 + $0x289] sm:$0xff] %vm4111, %v4643
  %4709 = vst.msk [vmem:[%s4657 + $0x291] sm:$0xff] %vm4111, %v4644
  %4710 = vst.msk [vmem:[%s4657 + $0x2a1] sm:$0xff] %vm4111, %v4645
  %4711 = vst.msk [vmem:[%s4657 + $0x2a9] sm:$0xff] %vm4111, %v4646
  %4712 = vst.msk [vmem:[%s4657 + $0x2b9] sm:$0xff] %vm4111, %v4647
  %4713 = vst.msk [vmem:[%s4657 + $0x2c1] sm:$0xff] %vm4111, %v4648
  %4714 = vst.msk [vmem:[%s4657 + $0x2d1] sm:$0xff] %vm4111, %v4649
  %4715 = vst.msk [vmem:[%s4657 + $0x2d9] sm:$0xff] %vm4111, %v4650
  %4716 = vst.msk [vmem:[%s4657 + $0x2e9] sm:$0xff] %vm4111, %v4651
  %4717 = vst.msk [vmem:[%s4657 + $0x2f1] sm:$0xff] %vm4111, %v4652
  %4718 = vst.msk [vmem:[%s4657 + $0x301] sm:$0xff] %vm4111, %v4653
  %4719 = vst.msk [vmem:[%s4657 + $0x309] sm:$0xff] %vm4111, %v4654
  %4720 = vst.msk [vmem:[%s4657 + $0x319] sm:$0xff] %vm4111, %v4655
  %4721 = vst.msk [vmem:[%s4657 + $0x321] sm:$0xff] %vm4111, %v4656
  %4722 = vst.msk [vmem:[#allocation3] sm:$0xff] %vm4111, 0.0
  %4723 = vst.msk [vmem:[#allocation3 + $0x8] sm:$0xff] %vm4111, 0.0
  %vm4724 = vcmask 58368
  %4725 = vst.msk [vmem:[#allocation3 + $0x10] sm:$0x3] %vm4724, 0.0
  %4726 = vst.msk [vmem:[#allocation3 + $0x1b0] sm:$0xff] %vm4111, 0.0
  %4727 = vst.msk [vmem:[#allocation3 + $0x1b8] sm:$0xff] %vm4111, 0.0
  %4728 = vst.msk [vmem:[#allocation3 + $0x1c0] sm:$0x3] %vm4724, 0.0
  %s4729 = scalar_lea.vmem [#allocation3], 408
  %4730 = vst.msk [vmem:[%s4729] sm:$0xff] %vm4111, 0.0
  %4731 = vst.msk [vmem:[%s4729 + $0x8] sm:$0xff] %vm4111, 0.0
  %4732 = vst.msk [vmem:[%s4729 + $0x10] sm:$0x3] %vm4724, 0.0
  %4733 = vst.msk [vmem:[%s4729 + $0x1b0] sm:$0xff] %vm4111, 0.0
  %4734 = vst.msk [vmem:[%s4729 + $0x1b8] sm:$0xff] %vm4111, 0.0
  %4735 = vst.msk [vmem:[%s4729 + $0x1c0] sm:$0x3] %vm4724, 0.0
  %vm4736 = vcmask 57344
  %4737 = vst.msk [vmem:[#allocation3] sm:$0x1] %vm4736, 0.0
  %4738 = vst.msk [vmem:[#allocation3 + $0x18] sm:$0x1] %vm4736, 0.0
  %4739 = vst.msk [vmem:[#allocation3 + $0x30] sm:$0x1] %vm4736, 0.0
  %4740 = vst.msk [vmem:[#allocation3 + $0x48] sm:$0x1] %vm4736, 0.0
  %4741 = vst.msk [vmem:[#allocation3 + $0x60] sm:$0x1] %vm4736, 0.0
  %4742 = vst.msk [vmem:[#allocation3 + $0x78] sm:$0x1] %vm4736, 0.0
  %4743 = vst.msk [vmem:[#allocation3 + $0x90] sm:$0x1] %vm4736, 0.0
  %4744 = vst.msk [vmem:[#allocation3 + $0xa8] sm:$0x1] %vm4736, 0.0
  %4745 = vst.msk [vmem:[#allocation3 + $0xc0] sm:$0x1] %vm4736, 0.0
  %4746 = vst.msk [vmem:[#allocation3 + $0xd8] sm:$0x1] %vm4736, 0.0
  %4747 = vst.msk [vmem:[#allocation3 + $0xf0] sm:$0x1] %vm4736, 0.0
  %4748 = vst.msk [vmem:[#allocation3 + $0x108] sm:$0x1] %vm4736, 0.0
  %4749 = vst.msk [vmem:[#allocation3 + $0x120] sm:$0x1] %vm4736, 0.0
  %4750 = vst.msk [vmem:[#allocation3 + $0x138] sm:$0x1] %vm4736, 0.0
  %4751 = vst.msk [vmem:[#allocation3 + $0x150] sm:$0x1] %vm4736, 0.0
  %4752 = vst.msk [vmem:[#allocation3 + $0x168] sm:$0x1] %vm4736, 0.0
  %4753 = vst.msk [vmem:[#allocation3 + $0x180] sm:$0x1] %vm4736, 0.0
  %4754 = vst.msk [vmem:[#allocation3 + $0x198] sm:$0x1] %vm4736, 0.0
  %4755 = vst.msk [vmem:[#allocation3 + $0x1b0] sm:$0x1] %vm4736, 0.0
  %4756 = vst.msk [vmem:[#allocation3 + $0x1c8] sm:$0x1] %vm4736, 0.0
  %4757 = vst.msk [vmem:[#allocation3 + $0x1e0] sm:$0x1] %vm4736, 0.0
  %4758 = vst.msk [vmem:[#allocation3 + $0x1f8] sm:$0x1] %vm4736, 0.0
  %4759 = vst.msk [vmem:[#allocation3 + $0x210] sm:$0x1] %vm4736, 0.0
  %4760 = vst.msk [vmem:[#allocation3 + $0x228] sm:$0x1] %vm4736, 0.0
  %4761 = vst.msk [vmem:[#allocation3 + $0x240] sm:$0x1] %vm4736, 0.0
  %4762 = vst.msk [vmem:[#allocation3 + $0x258] sm:$0x1] %vm4736, 0.0
  %4763 = vst.msk [vmem:[#allocation3 + $0x270] sm:$0x1] %vm4736, 0.0
  %4764 = vst.msk [vmem:[#allocation3 + $0x288] sm:$0x1] %vm4736, 0.0
  %4765 = vst.msk [vmem:[#allocation3 + $0x2a0] sm:$0x1] %vm4736, 0.0
  %4766 = vst.msk [vmem:[#allocation3 + $0x2b8] sm:$0x1] %vm4736, 0.0
  %4767 = vst.msk [vmem:[#allocation3 + $0x2d0] sm:$0x1] %vm4736, 0.0
  %4768 = vst.msk [vmem:[#allocation3 + $0x2e8] sm:$0x1] %vm4736, 0.0
  %4769 = vst.msk [vmem:[#allocation3 + $0x300] sm:$0x1] %vm4736, 0.0
  %4770 = vst.msk [vmem:[#allocation3 + $0x318] sm:$0x1] %vm4736, 0.0
  %4771 = vst.msk [vmem:[#allocation3 + $0x330] sm:$0x1] %vm4736, 0.0
  %4772 = vst.msk [vmem:[#allocation3 + $0x348] sm:$0x1] %vm4736, 0.0
  %4773 = vst.msk [vmem:[#allocation3 + $0x11] sm:$0x1] %vm4736, 0.0
  %4774 = vst.msk [vmem:[#allocation3 + $0x29] sm:$0x1] %vm4736, 0.0
  %4775 = vst.msk [vmem:[#allocation3 + $0x41] sm:$0x1] %vm4736, 0.0
  %4776 = vst.msk [vmem:[#allocation3 + $0x59] sm:$0x1] %vm4736, 0.0
  %4777 = vst.msk [vmem:[#allocation3 + $0x71] sm:$0x1] %vm4736, 0.0
  %4778 = vst.msk [vmem:[#allocation3 + $0x89] sm:$0x1] %vm4736, 0.0
  %4779 = vst.msk [vmem:[#allocation3 + $0xa1] sm:$0x1] %vm4736, 0.0
  %4780 = vst.msk [vmem:[#allocation3 + $0xb9] sm:$0x1] %vm4736, 0.0
  %4781 = vst.msk [vmem:[#allocation3 + $0xd1] sm:$0x1] %vm4736, 0.0
  %4782 = vst.msk [vmem:[#allocation3 + $0xe9] sm:$0x1] %vm4736, 0.0
  %4783 = vst.msk [vmem:[#allocation3 + $0x101] sm:$0x1] %vm4736, 0.0
  %4784 = vst.msk [vmem:[#allocation3 + $0x119] sm:$0x1] %vm4736, 0.0
  %4785 = vst.msk [vmem:[#allocation3 + $0x131] sm:$0x1] %vm4736, 0.0
  %4786 = vst.msk [vmem:[#allocation3 + $0x149] sm:$0x1] %vm4736, 0.0
  %4787 = vst.msk [vmem:[#allocation3 + $0x161] sm:$0x1] %vm4736, 0.0
  %4788 = vst.msk [vmem:[#allocation3 + $0x179] sm:$0x1] %vm4736, 0.0
  %4789 = vst.msk [vmem:[#allocation3 + $0x191] sm:$0x1] %vm4736, 0.0
  %4790 = vst.msk [vmem:[#allocation3 + $0x1a9] sm:$0x1] %vm4736, 0.0
  %4791 = vst.msk [vmem:[#allocation3 + $0x1c1] sm:$0x1] %vm4736, 0.0
  %4792 = vst.msk [vmem:[#allocation3 + $0x1d9] sm:$0x1] %vm4736, 0.0
  %4793 = vst.msk [vmem:[#allocation3 + $0x1f1] sm:$0x1] %vm4736, 0.0
  %4794 = vst.msk [vmem:[#allocation3 + $0x209] sm:$0x1] %vm4736, 0.0
  %4795 = vst.msk [vmem:[#allocation3 + $0x221] sm:$0x1] %vm4736, 0.0
  %4796 = vst.msk [vmem:[#allocation3 + $0x239] sm:$0x1] %vm4736, 0.0
  %4797 = vst.msk [vmem:[#allocation3 + $0x251] sm:$0x1] %vm4736, 0.0
  %4798 = vst.msk [vmem:[#allocation3 + $0x269] sm:$0x1] %vm4736, 0.0
  %4799 = vst.msk [vmem:[#allocation3 + $0x281] sm:$0x1] %vm4736, 0.0
  %4800 = vst.msk [vmem:[#allocation3 + $0x299] sm:$0x1] %vm4736, 0.0
  %4801 = vst.msk [vmem:[#allocation3 + $0x2b1] sm:$0x1] %vm4736, 0.0
  %4802 = vst.msk [vmem:[#allocation3 + $0x2c9] sm:$0x1] %vm4736, 0.0
  %4803 = vst.msk [vmem:[#allocation3 + $0x2e1] sm:$0x1] %vm4736, 0.0
  %4804 = vst.msk [vmem:[#allocation3 + $0x2f9] sm:$0x1] %vm4736, 0.0
  %4805 = vst.msk [vmem:[#allocation3 + $0x311] sm:$0x1] %vm4736, 0.0
  %4806 = vst.msk [vmem:[#allocation3 + $0x329] sm:$0x1] %vm4736, 0.0
  %4807 = vst.msk [vmem:[#allocation3 + $0x341] sm:$0x1] %vm4736, 0.0
  %4808 = vst.msk [vmem:[#allocation3 + $0x359] sm:$0x1] %vm4736, 0.0
  %v4809 = vld [vmem:[#allocation3] sm:$0xff]
  %v4810 = vld [vmem:[#allocation3 + $0x8] sm:$0xff]
  %v4811 = vld [vmem:[#allocation3 + $0x18] sm:$0xff]
  %v4812 = vld [vmem:[#allocation3 + $0x20] sm:$0xff]
  %v4813 = vld [vmem:[#allocation3 + $0x30] sm:$0xff]
  %v4814 = vld [vmem:[#allocation3 + $0x38] sm:$0xff]
  %v4815 = vld [vmem:[#allocation3 + $0x48] sm:$0xff]
  %v4816 = vld [vmem:[#allocation3 + $0x50] sm:$0xff]
  %v4817 = vld [vmem:[#allocation3 + $0x60] sm:$0xff]
  %v4818 = vld [vmem:[#allocation3 + $0x68] sm:$0xff]
  %v4819 = vld [vmem:[#allocation3 + $0x78] sm:$0xff]
  %v4820 = vld [vmem:[#allocation3 + $0x80] sm:$0xff]
  %v4821 = vld [vmem:[#allocation3 + $0x90] sm:$0xff]
  %v4822 = vld [vmem:[#allocation3 + $0x98] sm:$0xff]
  %v4823 = vld [vmem:[#allocation3 + $0xa8] sm:$0xff]
  %v4824 = vld [vmem:[#allocation3 + $0xb0] sm:$0xff]
  %v4825 = vld [vmem:[#allocation3 + $0xc0] sm:$0xff]
  %v4826 = vld [vmem:[#allocation3 + $0xc8] sm:$0xff]
  %v4827 = vld [vmem:[#allocation3 + $0xd8] sm:$0xff]
  %v4828 = vld [vmem:[#allocation3 + $0xe0] sm:$0xff]
  %v4829 = vld [vmem:[#allocation3 + $0xf0] sm:$0xff]
  %v4830 = vld [vmem:[#allocation3 + $0xf8] sm:$0xff]
  %v4831 = vld [vmem:[#allocation3 + $0x108] sm:$0xff]
  %v4832 = vld [vmem:[#allocation3 + $0x110] sm:$0xff]
  %v4833 = vld [vmem:[#allocation3 + $0x120] sm:$0xff]
  %v4834 = vld [vmem:[#allocation3 + $0x128] sm:$0xff]
  %v4835 = vld [vmem:[#allocation3 + $0x138] sm:$0xff]
  %v4836 = vld [vmem:[#allocation3 + $0x140] sm:$0xff]
  %v4837 = vld [vmem:[#allocation3 + $0x150] sm:$0xff]
  %v4838 = vld [vmem:[#allocation3 + $0x158] sm:$0xff]
  %v4839 = vld [vmem:[#allocation3 + $0x168] sm:$0xff]
  %v4840 = vld [vmem:[#allocation3 + $0x170] sm:$0xff]
  %v4841 = vld [vmem:[#allocation3 + $0x1b0] sm:$0xff]
  %v4842 = vld [vmem:[#allocation3 + $0x1b8] sm:$0xff]
  %v4843 = vld [vmem:[#allocation3 + $0x1c8] sm:$0xff]
  %v4844 = vld [vmem:[#allocation3 + $0x1d0] sm:$0xff]
  %v4845 = vld [vmem:[#allocation3 + $0x1e0] sm:$0xff]
  %v4846 = vld [vmem:[#allocation3 + $0x1e8] sm:$0xff]
  %v4847 = vld [vmem:[#allocation3 + $0x1f8] sm:$0xff]
  %v4848 = vld [vmem:[#allocation3 + $0x200] sm:$0xff]
  %v4849 = vld [vmem:[#allocation3 + $0x210] sm:$0xff]
  %v4850 = vld [vmem:[#allocation3 + $0x218] sm:$0xff]
  %v4851 = vld [vmem:[#allocation3 + $0x228] sm:$0xff]
  %v4852 = vld [vmem:[#allocation3 + $0x230] sm:$0xff]
  %v4853 = vld [vmem:[#allocation3 + $0x240] sm:$0xff]
  %v4854 = vld [vmem:[#allocation3 + $0x248] sm:$0xff]
  %v4855 = vld [vmem:[#allocation3 + $0x258] sm:$0xff]
  %v4856 = vld [vmem:[#allocation3 + $0x260] sm:$0xff]
  %v4857 = vld [vmem:[#allocation3 + $0x270] sm:$0xff]
  %v4858 = vld [vmem:[#allocation3 + $0x278] sm:$0xff]
  %v4859 = vld [vmem:[#allocation3 + $0x288] sm:$0xff]
  %v4860 = vld [vmem:[#allocation3 + $0x290] sm:$0xff]
  %v4861 = vld [vmem:[#allocation3 + $0x2a0] sm:$0xff]
  %v4862 = vld [vmem:[#allocation3 + $0x2a8] sm:$0xff]
  %v4863 = vld [vmem:[#allocation3 + $0x2b8] sm:$0xff]
  %v4864 = vld [vmem:[#allocation3 + $0x2c0] sm:$0xff]
  %v4865 = vld [vmem:[#allocation3 + $0x2d0] sm:$0xff]
  %v4866 = vld [vmem:[#allocation3 + $0x2d8] sm:$0xff]
  %v4867 = vld [vmem:[#allocation3 + $0x2e8] sm:$0xff]
  %v4868 = vld [vmem:[#allocation3 + $0x2f0] sm:$0xff]
  %v4869 = vld [vmem:[#allocation3 + $0x300] sm:$0xff]
  %v4870 = vld [vmem:[#allocation3 + $0x308] sm:$0xff]
  %v4871 = vld [vmem:[#allocation3 + $0x318] sm:$0xff]
  %v4872 = vld [vmem:[#allocation3 + $0x320] sm:$0xff]
  %4873 = vst.msk [vmem:[#allocation5] sm:$0xff] %vm4111, %v4809
  %4874 = vst.msk [vmem:[#allocation5 + $0x8] sm:$0xff] %vm4111, %v4810
  %4875 = vst.msk [vmem:[#allocation5 + $0x10] sm:$0xff] %vm4111, %v4811
  %4876 = vst.msk [vmem:[#allocation5 + $0x18] sm:$0xff] %vm4111, %v4812
  %4877 = vst.msk [vmem:[#allocation5 + $0x20] sm:$0xff] %vm4111, %v4813
  %4878 = vst.msk [vmem:[#allocation5 + $0x28] sm:$0xff] %vm4111, %v4814
  %4879 = vst.msk [vmem:[#allocation5 + $0x30] sm:$0xff] %vm4111, %v4815
  %4880 = vst.msk [vmem:[#allocation5 + $0x38] sm:$0xff] %vm4111, %v4816
  %4881 = vst.msk [vmem:[#allocation5 + $0x40] sm:$0xff] %vm4111, %v4817
  %4882 = vst.msk [vmem:[#allocation5 + $0x48] sm:$0xff] %vm4111, %v4818
  %4883 = vst.msk [vmem:[#allocation5 + $0x50] sm:$0xff] %vm4111, %v4819
  %4884 = vst.msk [vmem:[#allocation5 + $0x58] sm:$0xff] %vm4111, %v4820
  %4885 = vst.msk [vmem:[#allocation5 + $0x60] sm:$0xff] %vm4111, %v4821
  %4886 = vst.msk [vmem:[#allocation5 + $0x68] sm:$0xff] %vm4111, %v4822
  %4887 = vst.msk [vmem:[#allocation5 + $0x70] sm:$0xff] %vm4111, %v4823
  %4888 = vst.msk [vmem:[#allocation5 + $0x78] sm:$0xff] %vm4111, %v4824
  %4889 = vst.msk [vmem:[#allocation5 + $0x80] sm:$0xff] %vm4111, %v4825
  %4890 = vst.msk [vmem:[#allocation5 + $0x88] sm:$0xff] %vm4111, %v4826
  %4891 = vst.msk [vmem:[#allocation5 + $0x90] sm:$0xff] %vm4111, %v4827
  %4892 = vst.msk [vmem:[#allocation5 + $0x98] sm:$0xff] %vm4111, %v4828
  %4893 = vst.msk [vmem:[#allocation5 + $0xa0] sm:$0xff] %vm4111, %v4829
  %4894 = vst.msk [vmem:[#allocation5 + $0xa8] sm:$0xff] %vm4111, %v4830
  %4895 = vst.msk [vmem:[#allocation5 + $0xb0] sm:$0xff] %vm4111, %v4831
  %4896 = vst.msk [vmem:[#allocation5 + $0xb8] sm:$0xff] %vm4111, %v4832
  %4897 = vst.msk [vmem:[#allocation5 + $0xc0] sm:$0xff] %vm4111, %v4833
  %4898 = vst.msk [vmem:[#allocation5 + $0xc8] sm:$0xff] %vm4111, %v4834
  %4899 = vst.msk [vmem:[#allocation5 + $0xd0] sm:$0xff] %vm4111, %v4835
  %4900 = vst.msk [vmem:[#allocation5 + $0xd8] sm:$0xff] %vm4111, %v4836
  %4901 = vst.msk [vmem:[#allocation5 + $0xe0] sm:$0xff] %vm4111, %v4837
  %4902 = vst.msk [vmem:[#allocation5 + $0xe8] sm:$0xff] %vm4111, %v4838
  %4903 = vst.msk [vmem:[#allocation5 + $0xf0] sm:$0xff] %vm4111, %v4839
  %4904 = vst.msk [vmem:[#allocation5 + $0xf8] sm:$0xff] %vm4111, %v4840
  %4905 = vst.msk [vmem:[#allocation5 + $0x100] sm:$0xff] %vm4111, %v4841
  %4906 = vst.msk [vmem:[#allocation5 + $0x108] sm:$0xff] %vm4111, %v4842
  %4907 = vst.msk [vmem:[#allocation5 + $0x110] sm:$0xff] %vm4111, %v4843
  %4908 = vst.msk [vmem:[#allocation5 + $0x118] sm:$0xff] %vm4111, %v4844
  %4909 = vst.msk [vmem:[#allocation5 + $0x120] sm:$0xff] %vm4111, %v4845
  %4910 = vst.msk [vmem:[#allocation5 + $0x128] sm:$0xff] %vm4111, %v4846
  %4911 = vst.msk [vmem:[#allocation5 + $0x130] sm:$0xff] %vm4111, %v4847
  %4912 = vst.msk [vmem:[#allocation5 + $0x138] sm:$0xff] %vm4111, %v4848
  %4913 = vst.msk [vmem:[#allocation5 + $0x140] sm:$0xff] %vm4111, %v4849
  %4914 = vst.msk [vmem:[#allocation5 + $0x148] sm:$0xff] %vm4111, %v4850
  %4915 = vst.msk [vmem:[#allocation5 + $0x150] sm:$0xff] %vm4111, %v4851
  %4916 = vst.msk [vmem:[#allocation5 + $0x158] sm:$0xff] %vm4111, %v4852
  %4917 = vst.msk [vmem:[#allocation5 + $0x160] sm:$0xff] %vm4111, %v4853
  %4918 = vst.msk [vmem:[#allocation5 + $0x168] sm:$0xff] %vm4111, %v4854
  %4919 = vst.msk [vmem:[#allocation5 + $0x170] sm:$0xff] %vm4111, %v4855
  %4920 = vst.msk [vmem:[#allocation5 + $0x178] sm:$0xff] %vm4111, %v4856
  %4921 = vst.msk [vmem:[#allocation5 + $0x180] sm:$0xff] %vm4111, %v4857
  %4922 = vst.msk [vmem:[#allocation5 + $0x188] sm:$0xff] %vm4111, %v4858
  %4923 = vst.msk [vmem:[#allocation5 + $0x190] sm:$0xff] %vm4111, %v4859
  %4924 = vst.msk [vmem:[#allocation5 + $0x198] sm:$0xff] %vm4111, %v4860
  %4925 = vst.msk [vmem:[#allocation5 + $0x1a0] sm:$0xff] %vm4111, %v4861
  %4926 = vst.msk [vmem:[#allocation5 + $0x1a8] sm:$0xff] %vm4111, %v4862
  %4927 = vst.msk [vmem:[#allocation5 + $0x1b0] sm:$0xff] %vm4111, %v4863
  %4928 = vst.msk [vmem:[#allocation5 + $0x1b8] sm:$0xff] %vm4111, %v4864
  %4929 = vst.msk [vmem:[#allocation5 + $0x1c0] sm:$0xff] %vm4111, %v4865
  %4930 = vst.msk [vmem:[#allocation5 + $0x1c8] sm:$0xff] %vm4111, %v4866
  %4931 = vst.msk [vmem:[#allocation5 + $0x1d0] sm:$0xff] %vm4111, %v4867
  %4932 = vst.msk [vmem:[#allocation5 + $0x1d8] sm:$0xff] %vm4111, %v4868
  %4933 = vst.msk [vmem:[#allocation5 + $0x1e0] sm:$0xff] %vm4111, %v4869
  %4934 = vst.msk [vmem:[#allocation5 + $0x1e8] sm:$0xff] %vm4111, %v4870
  %4935 = vst.msk [vmem:[#allocation5 + $0x1f0] sm:$0xff] %vm4111, %v4871
  %4936 = vst.msk [vmem:[#allocation5 + $0x1f8] sm:$0xff] %vm4111, %v4872
  %v4937 = vld [vmem:[#allocation3 + $0x1] sm:$0xff]
  %v4938 = vld [vmem:[#allocation3 + $0x9] sm:$0xff]
  %v4939 = vld [vmem:[#allocation3 + $0x19] sm:$0xff]
  %v4940 = vld [vmem:[#allocation3 + $0x21] sm:$0xff]
  %v4941 = vld [vmem:[#allocation3 + $0x31] sm:$0xff]
  %v4942 = vld [vmem:[#allocation3 + $0x39] sm:$0xff]
  %v4943 = vld [vmem:[#allocation3 + $0x49] sm:$0xff]
  %v4944 = vld [vmem:[#allocation3 + $0x51] sm:$0xff]
  %v4945 = vld [vmem:[#allocation3 + $0x61] sm:$0xff]
  %v4946 = vld [vmem:[#allocation3 + $0x69] sm:$0xff]
  %v4947 = vld [vmem:[#allocation3 + $0x79] sm:$0xff]
  %v4948 = vld [vmem:[#allocation3 + $0x81] sm:$0xff]
  %v4949 = vld [vmem:[#allocation3 + $0x91] sm:$0xff]
  %v4950 = vld [vmem:[#allocation3 + $0x99] sm:$0xff]
  %v4951 = vld [vmem:[#allocation3 + $0xa9] sm:$0xff]
  %v4952 = vld [vmem:[#allocation3 + $0xb1] sm:$0xff]
  %v4953 = vld [vmem:[#allocation3 + $0xc1] sm:$0xff]
  %v4954 = vld [vmem:[#allocation3 + $0xc9] sm:$0xff]
  %v4955 = vld [vmem:[#allocation3 + $0xd9] sm:$0xff]
  %v4956 = vld [vmem:[#allocation3 + $0xe1] sm:$0xff]
  %v4957 = vld [vmem:[#allocation3 + $0xf1] sm:$0xff]
  %v4958 = vld [vmem:[#allocation3 + $0xf9] sm:$0xff]
  %v4959 = vld [vmem:[#allocation3 + $0x109] sm:$0xff]
  %v4960 = vld [vmem:[#allocation3 + $0x111] sm:$0xff]
  %v4961 = vld [vmem:[#allocation3 + $0x121] sm:$0xff]
  %v4962 = vld [vmem:[#allocation3 + $0x129] sm:$0xff]
  %v4963 = vld [vmem:[#allocation3 + $0x139] sm:$0xff]
  %v4964 = vld [vmem:[#allocation3 + $0x141] sm:$0xff]
  %v4965 = vld [vmem:[#allocation3 + $0x151] sm:$0xff]
  %v4966 = vld [vmem:[#allocation3 + $0x159] sm:$0xff]
  %v4967 = vld [vmem:[#allocation3 + $0x169] sm:$0xff]
  %v4968 = vld [vmem:[#allocation3 + $0x171] sm:$0xff]
  %v4969 = vld [vmem:[#allocation3 + $0x1b1] sm:$0xff]
  %v4970 = vld [vmem:[#allocation3 + $0x1b9] sm:$0xff]
  %v4971 = vld [vmem:[#allocation3 + $0x1c9] sm:$0xff]
  %v4972 = vld [vmem:[#allocation3 + $0x1d1] sm:$0xff]
  %v4973 = vld [vmem:[#allocation3 + $0x1e1] sm:$0xff]
  %v4974 = vld [vmem:[#allocation3 + $0x1e9] sm:$0xff]
  %v4975 = vld [vmem:[#allocation3 + $0x1f9] sm:$0xff]
  %v4976 = vld [vmem:[#allocation3 + $0x201] sm:$0xff]
  %v4977 = vld [vmem:[#allocation3 + $0x211] sm:$0xff]
  %v4978 = vld [vmem:[#allocation3 + $0x219] sm:$0xff]
  %v4979 = vld [vmem:[#allocation3 + $0x229] sm:$0xff]
  %v4980 = vld [vmem:[#allocation3 + $0x231] sm:$0xff]
  %v4981 = vld [vmem:[#allocation3 + $0x241] sm:$0xff]
  %v4982 = vld [vmem:[#allocation3 + $0x249] sm:$0xff]
  %v4983 = vld [vmem:[#allocation3 + $0x259] sm:$0xff]
  %v4984 = vld [vmem:[#allocation3 + $0x261] sm:$0xff]
  %v4985 = vld [vmem:[#allocation3 + $0x271] sm:$0xff]
  %v4986 = vld [vmem:[#allocation3 + $0x279] sm:$0xff]
  %v4987 = vld [vmem:[#allocation3 + $0x289] sm:$0xff]
  %v4988 = vld [vmem:[#allocation3 + $0x291] sm:$0xff]
  %v4989 = vld [vmem:[#allocation3 + $0x2a1] sm:$0xff]
  %v4990 = vld [vmem:[#allocation3 + $0x2a9] sm:$0xff]
  %v4991 = vld [vmem:[#allocation3 + $0x2b9] sm:$0xff]
  %v4992 = vld [vmem:[#allocation3 + $0x2c1] sm:$0xff]
  %v4993 = vld [vmem:[#allocation3 + $0x2d1] sm:$0xff]
  %v4994 = vld [vmem:[#allocation3 + $0x2d9] sm:$0xff]
  %v4995 = vld [vmem:[#allocation3 + $0x2e9] sm:$0xff]
  %v4996 = vld [vmem:[#allocation3 + $0x2f1] sm:$0xff]
  %v4997 = vld [vmem:[#allocation3 + $0x301] sm:$0xff]
  %v4998 = vld [vmem:[#allocation3 + $0x309] sm:$0xff]
  %v4999 = vld [vmem:[#allocation3 + $0x319] sm:$0xff]
  %v5000 = vld [vmem:[#allocation3 + $0x321] sm:$0xff]
  %5065 = vrot.lane.b32.xlu0 %v4937, 8
  %v5066 = vpop.permute.xlu0 %5065
  %5067 = vrot.lane.b32.xlu0 %v4938, 8
  %v5068 = vpop.permute.xlu0 %5067
  %5069 = vrot.lane.b32.xlu0 %v4939, 8
  %v5070 = vpop.permute.xlu0 %5069
  %5071 = vrot.lane.b32.xlu0 %v4940, 8
  %v5072 = vpop.permute.xlu0 %5071
  %5073 = vrot.lane.b32.xlu0 %v4941, 8
  %v5074 = vpop.permute.xlu0 %5073
  %5075 = vrot.lane.b32.xlu0 %v4942, 8
  %v5076 = vpop.permute.xlu0 %5075
  %5077 = vrot.lane.b32.xlu0 %v4943, 8
  %v5078 = vpop.permute.xlu0 %5077
  %5079 = vrot.lane.b32.xlu0 %v4944, 8
  %v5080 = vpop.permute.xlu0 %5079
  %5081 = vrot.lane.b32.xlu0 %v4945, 8
  %v5082 = vpop.permute.xlu0 %5081
  %5083 = vrot.lane.b32.xlu0 %v4946, 8
  %v5084 = vpop.permute.xlu0 %5083
  %5085 = vrot.lane.b32.xlu0 %v4947, 8
  %v5086 = vpop.permute.xlu0 %5085
  %5087 = vrot.lane.b32.xlu0 %v4948, 8
  %v5088 = vpop.permute.xlu0 %5087
  %5089 = vrot.lane.b32.xlu0 %v4949, 8
  %v5090 = vpop.permute.xlu0 %5089
  %5091 = vrot.lane.b32.xlu0 %v4950, 8
  %v5092 = vpop.permute.xlu0 %5091
  %5093 = vrot.lane.b32.xlu0 %v4951, 8
  %v5094 = vpop.permute.xlu0 %5093
  %5095 = vrot.lane.b32.xlu0 %v4952, 8
  %v5096 = vpop.permute.xlu0 %5095
  %5097 = vrot.lane.b32.xlu0 %v4953, 8
  %v5098 = vpop.permute.xlu0 %5097
  %5099 = vrot.lane.b32.xlu0 %v4954, 8
  %v5100 = vpop.permute.xlu0 %5099
  %5101 = vrot.lane.b32.xlu0 %v4955, 8
  %v5102 = vpop.permute.xlu0 %5101
  %5103 = vrot.lane.b32.xlu0 %v4956, 8
  %v5104 = vpop.permute.xlu0 %5103
  %5105 = vrot.lane.b32.xlu0 %v4957, 8
  %v5106 = vpop.permute.xlu0 %5105
  %5107 = vrot.lane.b32.xlu0 %v4958, 8
  %v5108 = vpop.permute.xlu0 %5107
  %5109 = vrot.lane.b32.xlu0 %v4959, 8
  %v5110 = vpop.permute.xlu0 %5109
  %5111 = vrot.lane.b32.xlu0 %v4960, 8
  %v5112 = vpop.permute.xlu0 %5111
  %5113 = vrot.lane.b32.xlu0 %v4961, 8
  %v5114 = vpop.permute.xlu0 %5113
  %5115 = vrot.lane.b32.xlu0 %v4962, 8
  %v5116 = vpop.permute.xlu0 %5115
  %5117 = vrot.lane.b32.xlu0 %v4963, 8
  %v5118 = vpop.permute.xlu0 %5117
  %5119 = vrot.lane.b32.xlu0 %v4964, 8
  %v5120 = vpop.permute.xlu0 %5119
  %5121 = vrot.lane.b32.xlu0 %v4965, 8
  %v5122 = vpop.permute.xlu0 %5121
  %5123 = vrot.lane.b32.xlu0 %v4966, 8
  %v5124 = vpop.permute.xlu0 %5123
  %5125 = vrot.lane.b32.xlu0 %v4967, 8
  %v5126 = vpop.permute.xlu0 %5125
  %5127 = vrot.lane.b32.xlu0 %v4968, 8
  %v5128 = vpop.permute.xlu0 %5127
  %5129 = vrot.lane.b32.xlu0 %v4969, 8
  %v5130 = vpop.permute.xlu0 %5129
  %5131 = vrot.lane.b32.xlu0 %v4970, 8
  %v5132 = vpop.permute.xlu0 %5131
  %5133 = vrot.lane.b32.xlu0 %v4971, 8
  %v5134 = vpop.permute.xlu0 %5133
  %5135 = vrot.lane.b32.xlu0 %v4972, 8
  %v5136 = vpop.permute.xlu0 %5135
  %5137 = vrot.lane.b32.xlu0 %v4973, 8
  %v5138 = vpop.permute.xlu0 %5137
  %5139 = vrot.lane.b32.xlu0 %v4974, 8
  %v5140 = vpop.permute.xlu0 %5139
  %5141 = vrot.lane.b32.xlu0 %v4975, 8
  %v5142 = vpop.permute.xlu0 %5141
  %5143 = vrot.lane.b32.xlu0 %v4976, 8
  %v5144 = vpop.permute.xlu0 %5143
  %5145 = vrot.lane.b32.xlu0 %v4977, 8
  %v5146 = vpop.permute.xlu0 %5145
  %5147 = vrot.lane.b32.xlu0 %v4978, 8
  %v5148 = vpop.permute.xlu0 %5147
  %5149 = vrot.lane.b32.xlu0 %v4979, 8
  %v5150 = vpop.permute.xlu0 %5149
  %5151 = vrot.lane.b32.xlu0 %v4980, 8
  %v5152 = vpop.permute.xlu0 %5151
  %5153 = vrot.lane.b32.xlu0 %v4981, 8
  %v5154 = vpop.permute.xlu0 %5153
  %5155 = vrot.lane.b32.xlu0 %v4982, 8
  %v5156 = vpop.permute.xlu0 %5155
  %5157 = vrot.lane.b32.xlu0 %v4983, 8
  %v5158 = vpop.permute.xlu0 %5157
  %5159 = vrot.lane.b32.xlu0 %v4984, 8
  %v5160 = vpop.permute.xlu0 %5159
  %5161 = vrot.lane.b32.xlu0 %v4985, 8
  %v5162 = vpop.permute.xlu0 %5161
  %5163 = vrot.lane.b32.xlu0 %v4986, 8
  %v5164 = vpop.permute.xlu0 %5163
  %5165 = vrot.lane.b32.xlu0 %v4987, 8
  %v5166 = vpop.permute.xlu0 %5165
  %5167 = vrot.lane.b32.xlu0 %v4988, 8
  %v5168 = vpop.permute.xlu0 %5167
  %5169 = vrot.lane.b32.xlu0 %v4989, 8
  %v5170 = vpop.permute.xlu0 %5169
  %5171 = vrot.lane.b32.xlu0 %v4990, 8
  %v5172 = vpop.permute.xlu0 %5171
  %5173 = vrot.lane.b32.xlu0 %v4991, 8
  %v5174 = vpop.permute.xlu0 %5173
  %5175 = vrot.lane.b32.xlu0 %v4992, 8
  %v5176 = vpop.permute.xlu0 %5175
  %5177 = vrot.lane.b32.xlu0 %v4993, 8
  %v5178 = vpop.permute.xlu0 %5177
  %5179 = vrot.lane.b32.xlu0 %v4994, 8
  %v5180 = vpop.permute.xlu0 %5179
  %5181 = vrot.lane.b32.xlu0 %v4995, 8
  %v5182 = vpop.permute.xlu0 %5181
  %5183 = vrot.lane.b32.xlu0 %v4996, 8
  %v5184 = vpop.permute.xlu0 %5183
  %5185 = vrot.lane.b32.xlu0 %v4997, 8
  %v5186 = vpop.permute.xlu0 %5185
  %5187 = vrot.lane.b32.xlu0 %v4998, 8
  %v5188 = vpop.permute.xlu0 %5187
  %5189 = vrot.lane.b32.xlu0 %v4999, 8
  %v5190 = vpop.permute.xlu0 %5189
  %5191 = vrot.lane.b32.xlu0 %v5000, 8
  %v5192 = vpop.permute.xlu0 %5191
  %vm5257 = vcmask 130112
  %5258 = vst.msk [vmem:[#allocation5] sm:$0xff] %vm5257, %v5066
  %5259 = vst.msk [vmem:[#allocation5 + $0x8] sm:$0xff] %vm5257, %v5068
  %5260 = vst.msk [vmem:[#allocation5 + $0x10] sm:$0xff] %vm5257, %v5070
  %5261 = vst.msk [vmem:[#allocation5 + $0x18] sm:$0xff] %vm5257, %v5072
  %5262 = vst.msk [vmem:[#allocation5 + $0x20] sm:$0xff] %vm5257, %v5074
  %5263 = vst.msk [vmem:[#allocation5 + $0x28] sm:$0xff] %vm5257, %v5076
  %5264 = vst.msk [vmem:[#allocation5 + $0x30] sm:$0xff] %vm5257, %v5078
  %5265 = vst.msk [vmem:[#allocation5 + $0x38] sm:$0xff] %vm5257, %v5080
  %5266 = vst.msk [vmem:[#allocation5 + $0x40] sm:$0xff] %vm5257, %v5082
  %5267 = vst.msk [vmem:[#allocation5 + $0x48] sm:$0xff] %vm5257, %v5084
  %5268 = vst.msk [vmem:[#allocation5 + $0x50] sm:$0xff] %vm5257, %v5086
  %5269 = vst.msk [vmem:[#allocation5 + $0x58] sm:$0xff] %vm5257, %v5088
  %5270 = vst.msk [vmem:[#allocation5 + $0x60] sm:$0xff] %vm5257, %v5090
  %5271 = vst.msk [vmem:[#allocation5 + $0x68] sm:$0xff] %vm5257, %v5092
  %5272 = vst.msk [vmem:[#allocation5 + $0x70] sm:$0xff] %vm5257, %v5094
  %5273 = vst.msk [vmem:[#allocation5 + $0x78] sm:$0xff] %vm5257, %v5096
  %5274 = vst.msk [vmem:[#allocation5 + $0x80] sm:$0xff] %vm5257, %v5098
  %5275 = vst.msk [vmem:[#allocation5 + $0x88] sm:$0xff] %vm5257, %v5100
  %5276 = vst.msk [vmem:[#allocation5 + $0x90] sm:$0xff] %vm5257, %v5102
  %5277 = vst.msk [vmem:[#allocation5 + $0x98] sm:$0xff] %vm5257, %v5104
  %5278 = vst.msk [vmem:[#allocation5 + $0xa0] sm:$0xff] %vm5257, %v5106
  %5279 = vst.msk [vmem:[#allocation5 + $0xa8] sm:$0xff] %vm5257, %v5108
  %5280 = vst.msk [vmem:[#allocation5 + $0xb0] sm:$0xff] %vm5257, %v5110
  %5281 = vst.msk [vmem:[#allocation5 + $0xb8] sm:$0xff] %vm5257, %v5112
  %5282 = vst.msk [vmem:[#allocation5 + $0xc0] sm:$0xff] %vm5257, %v5114
  %5283 = vst.msk [vmem:[#allocation5 + $0xc8] sm:$0xff] %vm5257, %v5116
  %5284 = vst.msk [vmem:[#allocation5 + $0xd0] sm:$0xff] %vm5257, %v5118
  %5285 = vst.msk [vmem:[#allocation5 + $0xd8] sm:$0xff] %vm5257, %v5120
  %5286 = vst.msk [vmem:[#allocation5 + $0xe0] sm:$0xff] %vm5257, %v5122
  %5287 = vst.msk [vmem:[#allocation5 + $0xe8] sm:$0xff] %vm5257, %v5124
  %5288 = vst.msk [vmem:[#allocation5 + $0xf0] sm:$0xff] %vm5257, %v5126
  %5289 = vst.msk [vmem:[#allocation5 + $0xf8] sm:$0xff] %vm5257, %v5128
  %5290 = vst.msk [vmem:[#allocation5 + $0x100] sm:$0xff] %vm5257, %v5130
  %5291 = vst.msk [vmem:[#allocation5 + $0x108] sm:$0xff] %vm5257, %v5132
  %5292 = vst.msk [vmem:[#allocation5 + $0x110] sm:$0xff] %vm5257, %v5134
  %5293 = vst.msk [vmem:[#allocation5 + $0x118] sm:$0xff] %vm5257, %v5136
  %5294 = vst.msk [vmem:[#allocation5 + $0x120] sm:$0xff] %vm5257, %v5138
  %5295 = vst.msk [vmem:[#allocation5 + $0x128] sm:$0xff] %vm5257, %v5140
  %5296 = vst.msk [vmem:[#allocation5 + $0x130] sm:$0xff] %vm5257, %v5142
  %5297 = vst.msk [vmem:[#allocation5 + $0x138] sm:$0xff] %vm5257, %v5144
  %5298 = vst.msk [vmem:[#allocation5 + $0x140] sm:$0xff] %vm5257, %v5146
  %5299 = vst.msk [vmem:[#allocation5 + $0x148] sm:$0xff] %vm5257, %v5148
  %5300 = vst.msk [vmem:[#allocation5 + $0x150] sm:$0xff] %vm5257, %v5150
  %5301 = vst.msk [vmem:[#allocation5 + $0x158] sm:$0xff] %vm5257, %v5152
  %5302 = vst.msk [vmem:[#allocation5 + $0x160] sm:$0xff] %vm5257, %v5154
  %5303 = vst.msk [vmem:[#allocation5 + $0x168] sm:$0xff] %vm5257, %v5156
  %5304 = vst.msk [vmem:[#allocation5 + $0x170] sm:$0xff] %vm5257, %v5158
  %5305 = vst.msk [vmem:[#allocation5 + $0x178] sm:$0xff] %vm5257, %v5160
  %5306 = vst.msk [vmem:[#allocation5 + $0x180] sm:$0xff] %vm5257, %v5162
  %5307 = vst.msk [vmem:[#allocation5 + $0x188] sm:$0xff] %vm5257, %v5164
  %5308 = vst.msk [vmem:[#allocation5 + $0x190] sm:$0xff] %vm5257, %v5166
  %5309 = vst.msk [vmem:[#allocation5 + $0x198] sm:$0xff] %vm5257, %v5168
  %5310 = vst.msk [vmem:[#allocation5 + $0x1a0] sm:$0xff] %vm5257, %v5170
  %5311 = vst.msk [vmem:[#allocation5 + $0x1a8] sm:$0xff] %vm5257, %v5172
  %5312 = vst.msk [vmem:[#allocation5 + $0x1b0] sm:$0xff] %vm5257, %v5174
  %5313 = vst.msk [vmem:[#allocation5 + $0x1b8] sm:$0xff] %vm5257, %v5176
  %5314 = vst.msk [vmem:[#allocation5 + $0x1c0] sm:$0xff] %vm5257, %v5178
  %5315 = vst.msk [vmem:[#allocation5 + $0x1c8] sm:$0xff] %vm5257, %v5180
  %5316 = vst.msk [vmem:[#allocation5 + $0x1d0] sm:$0xff] %vm5257, %v5182
  %5317 = vst.msk [vmem:[#allocation5 + $0x1d8] sm:$0xff] %vm5257, %v5184
  %5318 = vst.msk [vmem:[#allocation5 + $0x1e0] sm:$0xff] %vm5257, %v5186
  %5319 = vst.msk [vmem:[#allocation5 + $0x1e8] sm:$0xff] %vm5257, %v5188
  %5320 = vst.msk [vmem:[#allocation5 + $0x1f0] sm:$0xff] %vm5257, %v5190
  %5321 = vst.msk [vmem:[#allocation5 + $0x1f8] sm:$0xff] %vm5257, %v5192
  %v5322 = vld [vmem:[#allocation3 + $0x2] sm:$0xff]
  %v5323 = vld [vmem:[#allocation3 + $0xa] sm:$0xff]
  %v5324 = vld [vmem:[#allocation3 + $0x1a] sm:$0xff]
  %v5325 = vld [vmem:[#allocation3 + $0x22] sm:$0xff]
  %v5326 = vld [vmem:[#allocation3 + $0x32] sm:$0xff]
  %v5327 = vld [vmem:[#allocation3 + $0x3a] sm:$0xff]
  %v5328 = vld [vmem:[#allocation3 + $0x4a] sm:$0xff]
  %v5329 = vld [vmem:[#allocation3 + $0x52] sm:$0xff]
  %v5330 = vld [vmem:[#allocation3 + $0x62] sm:$0xff]
  %v5331 = vld [vmem:[#allocation3 + $0x6a] sm:$0xff]
  %v5332 = vld [vmem:[#allocation3 + $0x7a] sm:$0xff]
  %v5333 = vld [vmem:[#allocation3 + $0x82] sm:$0xff]
  %v5334 = vld [vmem:[#allocation3 + $0x92] sm:$0xff]
  %v5335 = vld [vmem:[#allocation3 + $0x9a] sm:$0xff]
  %v5336 = vld [vmem:[#allocation3 + $0xaa] sm:$0xff]
  %v5337 = vld [vmem:[#allocation3 + $0xb2] sm:$0xff]
  %v5338 = vld [vmem:[#allocation3 + $0xc2] sm:$0xff]
  %v5339 = vld [vmem:[#allocation3 + $0xca] sm:$0xff]
  %v5340 = vld [vmem:[#allocation3 + $0xda] sm:$0xff]
  %v5341 = vld [vmem:[#allocation3 + $0xe2] sm:$0xff]
  %v5342 = vld [vmem:[#allocation3 + $0xf2] sm:$0xff]
  %v5343 = vld [vmem:[#allocation3 + $0xfa] sm:$0xff]
  %v5344 = vld [vmem:[#allocation3 + $0x10a] sm:$0xff]
  %v5345 = vld [vmem:[#allocation3 + $0x112] sm:$0xff]
  %v5346 = vld [vmem:[#allocation3 + $0x122] sm:$0xff]
  %v5347 = vld [vmem:[#allocation3 + $0x12a] sm:$0xff]
  %v5348 = vld [vmem:[#allocation3 + $0x13a] sm:$0xff]
  %v5349 = vld [vmem:[#allocation3 + $0x142] sm:$0xff]
  %v5350 = vld [vmem:[#allocation3 + $0x152] sm:$0xff]
  %v5351 = vld [vmem:[#allocation3 + $0x15a] sm:$0xff]
  %v5352 = vld [vmem:[#allocation3 + $0x16a] sm:$0xff]
  %v5353 = vld [vmem:[#allocation3 + $0x172] sm:$0xff]
  %v5354 = vld [vmem:[#allocation3 + $0x1b2] sm:$0xff]
  %v5355 = vld [vmem:[#allocation3 + $0x1ba] sm:$0xff]
  %v5356 = vld [vmem:[#allocation3 + $0x1ca] sm:$0xff]
  %v5357 = vld [vmem:[#allocation3 + $0x1d2] sm:$0xff]
  %v5358 = vld [vmem:[#allocation3 + $0x1e2] sm:$0xff]
  %v5359 = vld [vmem:[#allocation3 + $0x1ea] sm:$0xff]
  %v5360 = vld [vmem:[#allocation3 + $0x1fa] sm:$0xff]
  %v5361 = vld [vmem:[#allocation3 + $0x202] sm:$0xff]
  %v5362 = vld [vmem:[#allocation3 + $0x212] sm:$0xff]
  %v5363 = vld [vmem:[#allocation3 + $0x21a] sm:$0xff]
  %v5364 = vld [vmem:[#allocation3 + $0x22a] sm:$0xff]
  %v5365 = vld [vmem:[#allocation3 + $0x232] sm:$0xff]
  %v5366 = vld [vmem:[#allocation3 + $0x242] sm:$0xff]
  %v5367 = vld [vmem:[#allocation3 + $0x24a] sm:$0xff]
  %v5368 = vld [vmem:[#allocation3 + $0x25a] sm:$0xff]
  %v5369 = vld [vmem:[#allocation3 + $0x262] sm:$0xff]
  %v5370 = vld [vmem:[#allocation3 + $0x272] sm:$0xff]
  %v5371 = vld [vmem:[#allocation3 + $0x27a] sm:$0xff]
  %v5372 = vld [vmem:[#allocation3 + $0x28a] sm:$0xff]
  %v5373 = vld [vmem:[#allocation3 + $0x292] sm:$0xff]
  %v5374 = vld [vmem:[#allocation3 + $0x2a2] sm:$0xff]
  %v5375 = vld [vmem:[#allocation3 + $0x2aa] sm:$0xff]
  %v5376 = vld [vmem:[#allocation3 + $0x2ba] sm:$0xff]
  %v5377 = vld [vmem:[#allocation3 + $0x2c2] sm:$0xff]
  %v5378 = vld [vmem:[#allocation3 + $0x2d2] sm:$0xff]
  %v5379 = vld [vmem:[#allocation3 + $0x2da] sm:$0xff]
  %v5380 = vld [vmem:[#allocation3 + $0x2ea] sm:$0xff]
  %v5381 = vld [vmem:[#allocation3 + $0x2f2] sm:$0xff]
  %v5382 = vld [vmem:[#allocation3 + $0x302] sm:$0xff]
  %v5383 = vld [vmem:[#allocation3 + $0x30a] sm:$0xff]
  %v5384 = vld [vmem:[#allocation3 + $0x31a] sm:$0xff]
  %v5385 = vld [vmem:[#allocation3 + $0x322] sm:$0xff]
  %5450 = vrot.lane.b32.xlu0 %v5322, 16
  %v5451 = vpop.permute.xlu0 %5450
  %5452 = vrot.lane.b32.xlu0 %v5323, 16
  %v5453 = vpop.permute.xlu0 %5452
  %5454 = vrot.lane.b32.xlu0 %v5324, 16
  %v5455 = vpop.permute.xlu0 %5454
  %5456 = vrot.lane.b32.xlu0 %v5325, 16
  %v5457 = vpop.permute.xlu0 %5456
  %5458 = vrot.lane.b32.xlu0 %v5326, 16
  %v5459 = vpop.permute.xlu0 %5458
  %5460 = vrot.lane.b32.xlu0 %v5327, 16
  %v5461 = vpop.permute.xlu0 %5460
  %5462 = vrot.lane.b32.xlu0 %v5328, 16
  %v5463 = vpop.permute.xlu0 %5462
  %5464 = vrot.lane.b32.xlu0 %v5329, 16
  %v5465 = vpop.permute.xlu0 %5464
  %5466 = vrot.lane.b32.xlu0 %v5330, 16
  %v5467 = vpop.permute.xlu0 %5466
  %5468 = vrot.lane.b32.xlu0 %v5331, 16
  %v5469 = vpop.permute.xlu0 %5468
  %5470 = vrot.lane.b32.xlu0 %v5332, 16
  %v5471 = vpop.permute.xlu0 %5470
  %5472 = vrot.lane.b32.xlu0 %v5333, 16
  %v5473 = vpop.permute.xlu0 %5472
  %5474 = vrot.lane.b32.xlu0 %v5334, 16
  %v5475 = vpop.permute.xlu0 %5474
  %5476 = vrot.lane.b32.xlu0 %v5335, 16
  %v5477 = vpop.permute.xlu0 %5476
  %5478 = vrot.lane.b32.xlu0 %v5336, 16
  %v5479 = vpop.permute.xlu0 %5478
  %5480 = vrot.lane.b32.xlu0 %v5337, 16
  %v5481 = vpop.permute.xlu0 %5480
  %5482 = vrot.lane.b32.xlu0 %v5338, 16
  %v5483 = vpop.permute.xlu0 %5482
  %5484 = vrot.lane.b32.xlu0 %v5339, 16
  %v5485 = vpop.permute.xlu0 %5484
  %5486 = vrot.lane.b32.xlu0 %v5340, 16
  %v5487 = vpop.permute.xlu0 %5486
  %5488 = vrot.lane.b32.xlu0 %v5341, 16
  %v5489 = vpop.permute.xlu0 %5488
  %5490 = vrot.lane.b32.xlu0 %v5342, 16
  %v5491 = vpop.permute.xlu0 %5490
  %5492 = vrot.lane.b32.xlu0 %v5343, 16
  %v5493 = vpop.permute.xlu0 %5492
  %5494 = vrot.lane.b32.xlu0 %v5344, 16
  %v5495 = vpop.permute.xlu0 %5494
  %5496 = vrot.lane.b32.xlu0 %v5345, 16
  %v5497 = vpop.permute.xlu0 %5496
  %5498 = vrot.lane.b32.xlu0 %v5346, 16
  %v5499 = vpop.permute.xlu0 %5498
  %5500 = vrot.lane.b32.xlu0 %v5347, 16
  %v5501 = vpop.permute.xlu0 %5500
  %5502 = vrot.lane.b32.xlu0 %v5348, 16
  %v5503 = vpop.permute.xlu0 %5502
  %5504 = vrot.lane.b32.xlu0 %v5349, 16
  %v5505 = vpop.permute.xlu0 %5504
  %5506 = vrot.lane.b32.xlu0 %v5350, 16
  %v5507 = vpop.permute.xlu0 %5506
  %5508 = vrot.lane.b32.xlu0 %v5351, 16
  %v5509 = vpop.permute.xlu0 %5508
  %5510 = vrot.lane.b32.xlu0 %v5352, 16
  %v5511 = vpop.permute.xlu0 %5510
  %5512 = vrot.lane.b32.xlu0 %v5353, 16
  %v5513 = vpop.permute.xlu0 %5512
  %5514 = vrot.lane.b32.xlu0 %v5354, 16
  %v5515 = vpop.permute.xlu0 %5514
  %5516 = vrot.lane.b32.xlu0 %v5355, 16
  %v5517 = vpop.permute.xlu0 %5516
  %5518 = vrot.lane.b32.xlu0 %v5356, 16
  %v5519 = vpop.permute.xlu0 %5518
  %5520 = vrot.lane.b32.xlu0 %v5357, 16
  %v5521 = vpop.permute.xlu0 %5520
  %5522 = vrot.lane.b32.xlu0 %v5358, 16
  %v5523 = vpop.permute.xlu0 %5522
  %5524 = vrot.lane.b32.xlu0 %v5359, 16
  %v5525 = vpop.permute.xlu0 %5524
  %5526 = vrot.lane.b32.xlu0 %v5360, 16
  %v5527 = vpop.permute.xlu0 %5526
  %5528 = vrot.lane.b32.xlu0 %v5361, 16
  %v5529 = vpop.permute.xlu0 %5528
  %5530 = vrot.lane.b32.xlu0 %v5362, 16
  %v5531 = vpop.permute.xlu0 %5530
  %5532 = vrot.lane.b32.xlu0 %v5363, 16
  %v5533 = vpop.permute.xlu0 %5532
  %5534 = vrot.lane.b32.xlu0 %v5364, 16
  %v5535 = vpop.permute.xlu0 %5534
  %5536 = vrot.lane.b32.xlu0 %v5365, 16
  %v5537 = vpop.permute.xlu0 %5536
  %5538 = vrot.lane.b32.xlu0 %v5366, 16
  %v5539 = vpop.permute.xlu0 %5538
  %5540 = vrot.lane.b32.xlu0 %v5367, 16
  %v5541 = vpop.permute.xlu0 %5540
  %5542 = vrot.lane.b32.xlu0 %v5368, 16
  %v5543 = vpop.permute.xlu0 %5542
  %5544 = vrot.lane.b32.xlu0 %v5369, 16
  %v5545 = vpop.permute.xlu0 %5544
  %5546 = vrot.lane.b32.xlu0 %v5370, 16
  %v5547 = vpop.permute.xlu0 %5546
  %5548 = vrot.lane.b32.xlu0 %v5371, 16
  %v5549 = vpop.permute.xlu0 %5548
  %5550 = vrot.lane.b32.xlu0 %v5372, 16
  %v5551 = vpop.permute.xlu0 %5550
  %5552 = vrot.lane.b32.xlu0 %v5373, 16
  %v5553 = vpop.permute.xlu0 %5552
  %5554 = vrot.lane.b32.xlu0 %v5374, 16
  %v5555 = vpop.permute.xlu0 %5554
  %5556 = vrot.lane.b32.xlu0 %v5375, 16
  %v5557 = vpop.permute.xlu0 %5556
  %5558 = vrot.lane.b32.xlu0 %v5376, 16
  %v5559 = vpop.permute.xlu0 %5558
  %5560 = vrot.lane.b32.xlu0 %v5377, 16
  %v5561 = vpop.permute.xlu0 %5560
  %5562 = vrot.lane.b32.xlu0 %v5378, 16
  %v5563 = vpop.permute.xlu0 %5562
  %5564 = vrot.lane.b32.xlu0 %v5379, 16
  %v5565 = vpop.permute.xlu0 %5564
  %5566 = vrot.lane.b32.xlu0 %v5380, 16
  %v5567 = vpop.permute.xlu0 %5566
  %5568 = vrot.lane.b32.xlu0 %v5381, 16
  %v5569 = vpop.permute.xlu0 %5568
  %5570 = vrot.lane.b32.xlu0 %v5382, 16
  %v5571 = vpop.permute.xlu0 %5570
  %5572 = vrot.lane.b32.xlu0 %v5383, 16
  %v5573 = vpop.permute.xlu0 %5572
  %5574 = vrot.lane.b32.xlu0 %v5384, 16
  %v5575 = vpop.permute.xlu0 %5574
  %5576 = vrot.lane.b32.xlu0 %v5385, 16
  %v5577 = vpop.permute.xlu0 %5576
  %vm5642 = vcmask 195712
  %5643 = vst.msk [vmem:[#allocation5] sm:$0xff] %vm5642, %v5451
  %5644 = vst.msk [vmem:[#allocation5 + $0x8] sm:$0xff] %vm5642, %v5453
  %5645 = vst.msk [vmem:[#allocation5 + $0x10] sm:$0xff] %vm5642, %v5455
  %5646 = vst.msk [vmem:[#allocation5 + $0x18] sm:$0xff] %vm5642, %v5457
  %5647 = vst.msk [vmem:[#allocation5 + $0x20] sm:$0xff] %vm5642, %v5459
  %5648 = vst.msk [vmem:[#allocation5 + $0x28] sm:$0xff] %vm5642, %v5461
  %5649 = vst.msk [vmem:[#allocation5 + $0x30] sm:$0xff] %vm5642, %v5463
  %5650 = vst.msk [vmem:[#allocation5 + $0x38] sm:$0xff] %vm5642, %v5465
  %5651 = vst.msk [vmem:[#allocation5 + $0x40] sm:$0xff] %vm5642, %v5467
  %5652 = vst.msk [vmem:[#allocation5 + $0x48] sm:$0xff] %vm5642, %v5469
  %5653 = vst.msk [vmem:[#allocation5 + $0x50] sm:$0xff] %vm5642, %v5471
  %5654 = vst.msk [vmem:[#allocation5 + $0x58] sm:$0xff] %vm5642, %v5473
  %5655 = vst.msk [vmem:[#allocation5 + $0x60] sm:$0xff] %vm5642, %v5475
  %5656 = vst.msk [vmem:[#allocation5 + $0x68] sm:$0xff] %vm5642, %v5477
  %5657 = vst.msk [vmem:[#allocation5 + $0x70] sm:$0xff] %vm5642, %v5479
  %5658 = vst.msk [vmem:[#allocation5 + $0x78] sm:$0xff] %vm5642, %v5481
  %5659 = vst.msk [vmem:[#allocation5 + $0x80] sm:$0xff] %vm5642, %v5483
  %5660 = vst.msk [vmem:[#allocation5 + $0x88] sm:$0xff] %vm5642, %v5485
  %5661 = vst.msk [vmem:[#allocation5 + $0x90] sm:$0xff] %vm5642, %v5487
  %5662 = vst.msk [vmem:[#allocation5 + $0x98] sm:$0xff] %vm5642, %v5489
  %5663 = vst.msk [vmem:[#allocation5 + $0xa0] sm:$0xff] %vm5642, %v5491
  %5664 = vst.msk [vmem:[#allocation5 + $0xa8] sm:$0xff] %vm5642, %v5493
  %5665 = vst.msk [vmem:[#allocation5 + $0xb0] sm:$0xff] %vm5642, %v5495
  %5666 = vst.msk [vmem:[#allocation5 + $0xb8] sm:$0xff] %vm5642, %v5497
  %5667 = vst.msk [vmem:[#allocation5 + $0xc0] sm:$0xff] %vm5642, %v5499
  %5668 = vst.msk [vmem:[#allocation5 + $0xc8] sm:$0xff] %vm5642, %v5501
  %5669 = vst.msk [vmem:[#allocation5 + $0xd0] sm:$0xff] %vm5642, %v5503
  %5670 = vst.msk [vmem:[#allocation5 + $0xd8] sm:$0xff] %vm5642, %v5505
  %5671 = vst.msk [vmem:[#allocation5 + $0xe0] sm:$0xff] %vm5642, %v5507
  %5672 = vst.msk [vmem:[#allocation5 + $0xe8] sm:$0xff] %vm5642, %v5509
  %5673 = vst.msk [vmem:[#allocation5 + $0xf0] sm:$0xff] %vm5642, %v5511
  %5674 = vst.msk [vmem:[#allocation5 + $0xf8] sm:$0xff] %vm5642, %v5513
  %5675 = vst.msk [vmem:[#allocation5 + $0x100] sm:$0xff] %vm5642, %v5515
  %5676 = vst.msk [vmem:[#allocation5 + $0x108] sm:$0xff] %vm5642, %v5517
  %5677 = vst.msk [vmem:[#allocation5 + $0x110] sm:$0xff] %vm5642, %v5519
  %5678 = vst.msk [vmem:[#allocation5 + $0x118] sm:$0xff] %vm5642, %v5521
  %5679 = vst.msk [vmem:[#allocation5 + $0x120] sm:$0xff] %vm5642, %v5523
  %5680 = vst.msk [vmem:[#allocation5 + $0x128] sm:$0xff] %vm5642, %v5525
  %5681 = vst.msk [vmem:[#allocation5 + $0x130] sm:$0xff] %vm5642, %v5527
  %5682 = vst.msk [vmem:[#allocation5 + $0x138] sm:$0xff] %vm5642, %v5529
  %5683 = vst.msk [vmem:[#allocation5 + $0x140] sm:$0xff] %vm5642, %v5531
  %5684 = vst.msk [vmem:[#allocation5 + $0x148] sm:$0xff] %vm5642, %v5533
  %5685 = vst.msk [vmem:[#allocation5 + $0x150] sm:$0xff] %vm5642, %v5535
  %5686 = vst.msk [vmem:[#allocation5 + $0x158] sm:$0xff] %vm5642, %v5537
  %5687 = vst.msk [vmem:[#allocation5 + $0x160] sm:$0xff] %vm5642, %v5539
  %5688 = vst.msk [vmem:[#allocation5 + $0x168] sm:$0xff] %vm5642, %v5541
  %5689 = vst.msk [vmem:[#allocation5 + $0x170] sm:$0xff] %vm5642, %v5543
  %5690 = vst.msk [vmem:[#allocation5 + $0x178] sm:$0xff] %vm5642, %v5545
  %5691 = vst.msk [vmem:[#allocation5 + $0x180] sm:$0xff] %vm5642, %v5547
  %5692 = vst.msk [vmem:[#allocation5 + $0x188] sm:$0xff] %vm5642, %v5549
  %5693 = vst.msk [vmem:[#allocation5 + $0x190] sm:$0xff] %vm5642, %v5551
  %5694 = vst.msk [vmem:[#allocation5 + $0x198] sm:$0xff] %vm5642, %v5553
  %5695 = vst.msk [vmem:[#allocation5 + $0x1a0] sm:$0xff] %vm5642, %v5555
  %5696 = vst.msk [vmem:[#allocation5 + $0x1a8] sm:$0xff] %vm5642, %v5557
  %5697 = vst.msk [vmem:[#allocation5 + $0x1b0] sm:$0xff] %vm5642, %v5559
  %5698 = vst.msk [vmem:[#allocation5 + $0x1b8] sm:$0xff] %vm5642, %v5561
  %5699 = vst.msk [vmem:[#allocation5 + $0x1c0] sm:$0xff] %vm5642, %v5563
  %5700 = vst.msk [vmem:[#allocation5 + $0x1c8] sm:$0xff] %vm5642, %v5565
  %5701 = vst.msk [vmem:[#allocation5 + $0x1d0] sm:$0xff] %vm5642, %v5567
  %5702 = vst.msk [vmem:[#allocation5 + $0x1d8] sm:$0xff] %vm5642, %v5569
  %5703 = vst.msk [vmem:[#allocation5 + $0x1e0] sm:$0xff] %vm5642, %v5571
  %5704 = vst.msk [vmem:[#allocation5 + $0x1e8] sm:$0xff] %vm5642, %v5573
  %5705 = vst.msk [vmem:[#allocation5 + $0x1f0] sm:$0xff] %vm5642, %v5575
  %5706 = vst.msk [vmem:[#allocation5 + $0x1f8] sm:$0xff] %vm5642, %v5577
  %v5707 = vld [vmem:[%s4657] sm:$0xff]
  %v5708 = vld [vmem:[%s4657 + $0x8] sm:$0xff]
  %v5709 = vld [vmem:[%s4657 + $0x18] sm:$0xff]
  %v5710 = vld [vmem:[%s4657 + $0x20] sm:$0xff]
  %v5711 = vld [vmem:[%s4657 + $0x30] sm:$0xff]
  %v5712 = vld [vmem:[%s4657 + $0x38] sm:$0xff]
  %v5713 = vld [vmem:[%s4657 + $0x48] sm:$0xff]
  %v5714 = vld [vmem:[%s4657 + $0x50] sm:$0xff]
  %v5715 = vld [vmem:[%s4657 + $0x60] sm:$0xff]
  %v5716 = vld [vmem:[%s4657 + $0x68] sm:$0xff]
  %v5717 = vld [vmem:[%s4657 + $0x78] sm:$0xff]
  %v5718 = vld [vmem:[%s4657 + $0x80] sm:$0xff]
  %v5719 = vld [vmem:[%s4657 + $0x90] sm:$0xff]
  %v5720 = vld [vmem:[%s4657 + $0x98] sm:$0xff]
  %v5721 = vld [vmem:[%s4657 + $0xa8] sm:$0xff]
  %v5722 = vld [vmem:[%s4657 + $0xb0] sm:$0xff]
  %v5723 = vld [vmem:[%s4657 + $0xc0] sm:$0xff]
  %v5724 = vld [vmem:[%s4657 + $0xc8] sm:$0xff]
  %v5725 = vld [vmem:[%s4657 + $0xd8] sm:$0xff]
  %v5726 = vld [vmem:[%s4657 + $0xe0] sm:$0xff]
  %v5727 = vld [vmem:[%s4657 + $0xf0] sm:$0xff]
  %v5728 = vld [vmem:[%s4657 + $0xf8] sm:$0xff]
  %v5729 = vld [vmem:[%s4657 + $0x108] sm:$0xff]
  %v5730 = vld [vmem:[%s4657 + $0x110] sm:$0xff]
  %v5731 = vld [vmem:[%s4657 + $0x120] sm:$0xff]
  %v5732 = vld [vmem:[%s4657 + $0x128] sm:$0xff]
  %v5733 = vld [vmem:[%s4657 + $0x138] sm:$0xff]
  %v5734 = vld [vmem:[%s4657 + $0x140] sm:$0xff]
  %v5735 = vld [vmem:[%s4657 + $0x150] sm:$0xff]
  %v5736 = vld [vmem:[%s4657 + $0x158] sm:$0xff]
  %v5737 = vld [vmem:[%s4657 + $0x168] sm:$0xff]
  %v5738 = vld [vmem:[%s4657 + $0x170] sm:$0xff]
  %v5739 = vld [vmem:[%s4657 + $0x1b0] sm:$0xff]
  %v5740 = vld [vmem:[%s4657 + $0x1b8] sm:$0xff]
  %v5741 = vld [vmem:[%s4657 + $0x1c8] sm:$0xff]
  %v5742 = vld [vmem:[%s4657 + $0x1d0] sm:$0xff]
  %v5743 = vld [vmem:[%s4657 + $0x1e0] sm:$0xff]
  %v5744 = vld [vmem:[%s4657 + $0x1e8] sm:$0xff]
  %v5745 = vld [vmem:[%s4657 + $0x1f8] sm:$0xff]
  %v5746 = vld [vmem:[%s4657 + $0x200] sm:$0xff]
  %v5747 = vld [vmem:[%s4657 + $0x210] sm:$0xff]
  %v5748 = vld [vmem:[%s4657 + $0x218] sm:$0xff]
  %v5749 = vld [vmem:[%s4657 + $0x228] sm:$0xff]
  %v5750 = vld [vmem:[%s4657 + $0x230] sm:$0xff]
  %v5751 = vld [vmem:[%s4657 + $0x240] sm:$0xff]
  %v5752 = vld [vmem:[%s4657 + $0x248] sm:$0xff]
  %v5753 = vld [vmem:[%s4657 + $0x258] sm:$0xff]
  %v5754 = vld [vmem:[%s4657 + $0x260] sm:$0xff]
  %v5755 = vld [vmem:[%s4657 + $0x270] sm:$0xff]
  %v5756 = vld [vmem:[%s4657 + $0x278] sm:$0xff]
  %v5757 = vld [vmem:[%s4657 + $0x288] sm:$0xff]
  %v5758 = vld [vmem:[%s4657 + $0x290] sm:$0xff]
  %v5759 = vld [vmem:[%s4657 + $0x2a0] sm:$0xff]
  %v5760 = vld [vmem:[%s4657 + $0x2a8] sm:$0xff]
  %v5761 = vld [vmem:[%s4657 + $0x2b8] sm:$0xff]
  %v5762 = vld [vmem:[%s4657 + $0x2c0] sm:$0xff]
  %v5763 = vld [vmem:[%s4657 + $0x2d0] sm:$0xff]
  %v5764 = vld [vmem:[%s4657 + $0x2d8] sm:$0xff]
  %v5765 = vld [vmem:[%s4657 + $0x2e8] sm:$0xff]
  %v5766 = vld [vmem:[%s4657 + $0x2f0] sm:$0xff]
  %v5767 = vld [vmem:[%s4657 + $0x300] sm:$0xff]
  %v5768 = vld [vmem:[%s4657 + $0x308] sm:$0xff]
  %v5769 = vld [vmem:[%s4657 + $0x318] sm:$0xff]
  %v5770 = vld [vmem:[%s4657 + $0x320] sm:$0xff]
  %5835 = vrot.lane.b32.xlu0 %v5707, 24
  %v5836 = vpop.permute.xlu0 %5835
  %5837 = vrot.lane.b32.xlu0 %v5708, 24
  %v5838 = vpop.permute.xlu0 %5837
  %5839 = vrot.lane.b32.xlu0 %v5709, 24
  %v5840 = vpop.permute.xlu0 %5839
  %5841 = vrot.lane.b32.xlu0 %v5710, 24
  %v5842 = vpop.permute.xlu0 %5841
  %5843 = vrot.lane.b32.xlu0 %v5711, 24
  %v5844 = vpop.permute.xlu0 %5843
  %5845 = vrot.lane.b32.xlu0 %v5712, 24
  %v5846 = vpop.permute.xlu0 %5845
  %5847 = vrot.lane.b32.xlu0 %v5713, 24
  %v5848 = vpop.permute.xlu0 %5847
  %5849 = vrot.lane.b32.xlu0 %v5714, 24
  %v5850 = vpop.permute.xlu0 %5849
  %5851 = vrot.lane.b32.xlu0 %v5715, 24
  %v5852 = vpop.permute.xlu0 %5851
  %5853 = vrot.lane.b32.xlu0 %v5716, 24
  %v5854 = vpop.permute.xlu0 %5853
  %5855 = vrot.lane.b32.xlu0 %v5717, 24
  %v5856 = vpop.permute.xlu0 %5855
  %5857 = vrot.lane.b32.xlu0 %v5718, 24
  %v5858 = vpop.permute.xlu0 %5857
  %5859 = vrot.lane.b32.xlu0 %v5719, 24
  %v5860 = vpop.permute.xlu0 %5859
  %5861 = vrot.lane.b32.xlu0 %v5720, 24
  %v5862 = vpop.permute.xlu0 %5861
  %5863 = vrot.lane.b32.xlu0 %v5721, 24
  %v5864 = vpop.permute.xlu0 %5863
  %5865 = vrot.lane.b32.xlu0 %v5722, 24
  %v5866 = vpop.permute.xlu0 %5865
  %5867 = vrot.lane.b32.xlu0 %v5723, 24
  %v5868 = vpop.permute.xlu0 %5867
  %5869 = vrot.lane.b32.xlu0 %v5724, 24
  %v5870 = vpop.permute.xlu0 %5869
  %5871 = vrot.lane.b32.xlu0 %v5725, 24
  %v5872 = vpop.permute.xlu0 %5871
  %5873 = vrot.lane.b32.xlu0 %v5726, 24
  %v5874 = vpop.permute.xlu0 %5873
  %5875 = vrot.lane.b32.xlu0 %v5727, 24
  %v5876 = vpop.permute.xlu0 %5875
  %5877 = vrot.lane.b32.xlu0 %v5728, 24
  %v5878 = vpop.permute.xlu0 %5877
  %5879 = vrot.lane.b32.xlu0 %v5729, 24
  %v5880 = vpop.permute.xlu0 %5879
  %5881 = vrot.lane.b32.xlu0 %v5730, 24
  %v5882 = vpop.permute.xlu0 %5881
  %5883 = vrot.lane.b32.xlu0 %v5731, 24
  %v5884 = vpop.permute.xlu0 %5883
  %5885 = vrot.lane.b32.xlu0 %v5732, 24
  %v5886 = vpop.permute.xlu0 %5885
  %5887 = vrot.lane.b32.xlu0 %v5733, 24
  %v5888 = vpop.permute.xlu0 %5887
  %5889 = vrot.lane.b32.xlu0 %v5734, 24
  %v5890 = vpop.permute.xlu0 %5889
  %5891 = vrot.lane.b32.xlu0 %v5735, 24
  %v5892 = vpop.permute.xlu0 %5891
  %5893 = vrot.lane.b32.xlu0 %v5736, 24
  %v5894 = vpop.permute.xlu0 %5893
  %5895 = vrot.lane.b32.xlu0 %v5737, 24
  %v5896 = vpop.permute.xlu0 %5895
  %5897 = vrot.lane.b32.xlu0 %v5738, 24
  %v5898 = vpop.permute.xlu0 %5897
  %5899 = vrot.lane.b32.xlu0 %v5739, 24
  %v5900 = vpop.permute.xlu0 %5899
  %5901 = vrot.lane.b32.xlu0 %v5740, 24
  %v5902 = vpop.permute.xlu0 %5901
  %5903 = vrot.lane.b32.xlu0 %v5741, 24
  %v5904 = vpop.permute.xlu0 %5903
  %5905 = vrot.lane.b32.xlu0 %v5742, 24
  %v5906 = vpop.permute.xlu0 %5905
  %5907 = vrot.lane.b32.xlu0 %v5743, 24
  %v5908 = vpop.permute.xlu0 %5907
  %5909 = vrot.lane.b32.xlu0 %v5744, 24
  %v5910 = vpop.permute.xlu0 %5909
  %5911 = vrot.lane.b32.xlu0 %v5745, 24
  %v5912 = vpop.permute.xlu0 %5911
  %5913 = vrot.lane.b32.xlu0 %v5746, 24
  %v5914 = vpop.permute.xlu0 %5913
  %5915 = vrot.lane.b32.xlu0 %v5747, 24
  %v5916 = vpop.permute.xlu0 %5915
  %5917 = vrot.lane.b32.xlu0 %v5748, 24
  %v5918 = vpop.permute.xlu0 %5917
  %5919 = vrot.lane.b32.xlu0 %v5749, 24
  %v5920 = vpop.permute.xlu0 %5919
  %5921 = vrot.lane.b32.xlu0 %v5750, 24
  %v5922 = vpop.permute.xlu0 %5921
  %5923 = vrot.lane.b32.xlu0 %v5751, 24
  %v5924 = vpop.permute.xlu0 %5923
  %5925 = vrot.lane.b32.xlu0 %v5752, 24
  %v5926 = vpop.permute.xlu0 %5925
  %5927 = vrot.lane.b32.xlu0 %v5753, 24
  %v5928 = vpop.permute.xlu0 %5927
  %5929 = vrot.lane.b32.xlu0 %v5754, 24
  %v5930 = vpop.permute.xlu0 %5929
  %5931 = vrot.lane.b32.xlu0 %v5755, 24
  %v5932 = vpop.permute.xlu0 %5931
  %5933 = vrot.lane.b32.xlu0 %v5756, 24
  %v5934 = vpop.permute.xlu0 %5933
  %5935 = vrot.lane.b32.xlu0 %v5757, 24
  %v5936 = vpop.permute.xlu0 %5935
  %5937 = vrot.lane.b32.xlu0 %v5758, 24
  %v5938 = vpop.permute.xlu0 %5937
  %5939 = vrot.lane.b32.xlu0 %v5759, 24
  %v5940 = vpop.permute.xlu0 %5939
  %5941 = vrot.lane.b32.xlu0 %v5760, 24
  %v5942 = vpop.permute.xlu0 %5941
  %5943 = vrot.lane.b32.xlu0 %v5761, 24
  %v5944 = vpop.permute.xlu0 %5943
  %5945 = vrot.lane.b32.xlu0 %v5762, 24
  %v5946 = vpop.permute.xlu0 %5945
  %5947 = vrot.lane.b32.xlu0 %v5763, 24
  %v5948 = vpop.permute.xlu0 %5947
  %5949 = vrot.lane.b32.xlu0 %v5764, 24
  %v5950 = vpop.permute.xlu0 %5949
  %5951 = vrot.lane.b32.xlu0 %v5765, 24
  %v5952 = vpop.permute.xlu0 %5951
  %5953 = vrot.lane.b32.xlu0 %v5766, 24
  %v5954 = vpop.permute.xlu0 %5953
  %5955 = vrot.lane.b32.xlu0 %v5767, 24
  %v5956 = vpop.permute.xlu0 %5955
  %5957 = vrot.lane.b32.xlu0 %v5768, 24
  %v5958 = vpop.permute.xlu0 %5957
  %5959 = vrot.lane.b32.xlu0 %v5769, 24
  %v5960 = vpop.permute.xlu0 %5959
  %5961 = vrot.lane.b32.xlu0 %v5770, 24
  %v5962 = vpop.permute.xlu0 %5961
  %vm6027 = vcmask 261312
  %6028 = vst.msk [vmem:[#allocation5] sm:$0xff] %vm6027, %v5836
  %6029 = vst.msk [vmem:[#allocation5 + $0x8] sm:$0xff] %vm6027, %v5838
  %6030 = vst.msk [vmem:[#allocation5 + $0x10] sm:$0xff] %vm6027, %v5840
  %6031 = vst.msk [vmem:[#allocation5 + $0x18] sm:$0xff] %vm6027, %v5842
  %6032 = vst.msk [vmem:[#allocation5 + $0x20] sm:$0xff] %vm6027, %v5844
  %6033 = vst.msk [vmem:[#allocation5 + $0x28] sm:$0xff] %vm6027, %v5846
  %6034 = vst.msk [vmem:[#allocation5 + $0x30] sm:$0xff] %vm6027, %v5848
  %6035 = vst.msk [vmem:[#allocation5 + $0x38] sm:$0xff] %vm6027, %v5850
  %6036 = vst.msk [vmem:[#allocation5 + $0x40] sm:$0xff] %vm6027, %v5852
  %6037 = vst.msk [vmem:[#allocation5 + $0x48] sm:$0xff] %vm6027, %v5854
  %6038 = vst.msk [vmem:[#allocation5 + $0x50] sm:$0xff] %vm6027, %v5856
  %6039 = vst.msk [vmem:[#allocation5 + $0x58] sm:$0xff] %vm6027, %v5858
  %6040 = vst.msk [vmem:[#allocation5 + $0x60] sm:$0xff] %vm6027, %v5860
  %6041 = vst.msk [vmem:[#allocation5 + $0x68] sm:$0xff] %vm6027, %v5862
  %6042 = vst.msk [vmem:[#allocation5 + $0x70] sm:$0xff] %vm6027, %v5864
  %6043 = vst.msk [vmem:[#allocation5 + $0x78] sm:$0xff] %vm6027, %v5866
  %6044 = vst.msk [vmem:[#allocation5 + $0x80] sm:$0xff] %vm6027, %v5868
  %6045 = vst.msk [vmem:[#allocation5 + $0x88] sm:$0xff] %vm6027, %v5870
  %6046 = vst.msk [vmem:[#allocation5 + $0x90] sm:$0xff] %vm6027, %v5872
  %6047 = vst.msk [vmem:[#allocation5 + $0x98] sm:$0xff] %vm6027, %v5874
  %6048 = vst.msk [vmem:[#allocation5 + $0xa0] sm:$0xff] %vm6027, %v5876
  %6049 = vst.msk [vmem:[#allocation5 + $0xa8] sm:$0xff] %vm6027, %v5878
  %6050 = vst.msk [vmem:[#allocation5 + $0xb0] sm:$0xff] %vm6027, %v5880
  %6051 = vst.msk [vmem:[#allocation5 + $0xb8] sm:$0xff] %vm6027, %v5882
  %6052 = vst.msk [vmem:[#allocation5 + $0xc0] sm:$0xff] %vm6027, %v5884
  %6053 = vst.msk [vmem:[#allocation5 + $0xc8] sm:$0xff] %vm6027, %v5886
  %6054 = vst.msk [vmem:[#allocation5 + $0xd0] sm:$0xff] %vm6027, %v5888
  %6055 = vst.msk [vmem:[#allocation5 + $0xd8] sm:$0xff] %vm6027, %v5890
  %6056 = vst.msk [vmem:[#allocation5 + $0xe0] sm:$0xff] %vm6027, %v5892
  %6057 = vst.msk [vmem:[#allocation5 + $0xe8] sm:$0xff] %vm6027, %v5894
  %6058 = vst.msk [vmem:[#allocation5 + $0xf0] sm:$0xff] %vm6027, %v5896
  %6059 = vst.msk [vmem:[#allocation5 + $0xf8] sm:$0xff] %vm6027, %v5898
  %6060 = vst.msk [vmem:[#allocation5 + $0x100] sm:$0xff] %vm6027, %v5900
  %6061 = vst.msk [vmem:[#allocation5 + $0x108] sm:$0xff] %vm6027, %v5902
  %6062 = vst.msk [vmem:[#allocation5 + $0x110] sm:$0xff] %vm6027, %v5904
  %6063 = vst.msk [vmem:[#allocation5 + $0x118] sm:$0xff] %vm6027, %v5906
  %6064 = vst.msk [vmem:[#allocation5 + $0x120] sm:$0xff] %vm6027, %v5908
  %6065 = vst.msk [vmem:[#allocation5 + $0x128] sm:$0xff] %vm6027, %v5910
  %6066 = vst.msk [vmem:[#allocation5 + $0x130] sm:$0xff] %vm6027, %v5912
  %6067 = vst.msk [vmem:[#allocation5 + $0x138] sm:$0xff] %vm6027, %v5914
  %6068 = vst.msk [vmem:[#allocation5 + $0x140] sm:$0xff] %vm6027, %v5916
  %6069 = vst.msk [vmem:[#allocation5 + $0x148] sm:$0xff] %vm6027, %v5918
  %6070 = vst.msk [vmem:[#allocation5 + $0x150] sm:$0xff] %vm6027, %v5920
  %6071 = vst.msk [vmem:[#allocation5 + $0x158] sm:$0xff] %vm6027, %v5922
  %6072 = vst.msk [vmem:[#allocation5 + $0x160] sm:$0xff] %vm6027, %v5924
  %6073 = vst.msk [vmem:[#allocation5 + $0x168] sm:$0xff] %vm6027, %v5926
  %6074 = vst.msk [vmem:[#allocation5 + $0x170] sm:$0xff] %vm6027, %v5928
  %6075 = vst.msk [vmem:[#allocation5 + $0x178] sm:$0xff] %vm6027, %v5930
  %6076 = vst.msk [vmem:[#allocation5 + $0x180] sm:$0xff] %vm6027, %v5932
  %6077 = vst.msk [vmem:[#allocation5 + $0x188] sm:$0xff] %vm6027, %v5934
  %6078 = vst.msk [vmem:[#allocation5 + $0x190] sm:$0xff] %vm6027, %v5936
  %6079 = vst.msk [vmem:[#allocation5 + $0x198] sm:$0xff] %vm6027, %v5938
  %6080 = vst.msk [vmem:[#allocation5 + $0x1a0] sm:$0xff] %vm6027, %v5940
  %6081 = vst.msk [vmem:[#allocation5 + $0x1a8] sm:$0xff] %vm6027, %v5942
  %6082 = vst.msk [vmem:[#allocation5 + $0x1b0] sm:$0xff] %vm6027, %v5944
  %6083 = vst.msk [vmem:[#allocation5 + $0x1b8] sm:$0xff] %vm6027, %v5946
  %6084 = vst.msk [vmem:[#allocation5 + $0x1c0] sm:$0xff] %vm6027, %v5948
  %6085 = vst.msk [vmem:[#allocation5 + $0x1c8] sm:$0xff] %vm6027, %v5950
  %6086 = vst.msk [vmem:[#allocation5 + $0x1d0] sm:$0xff] %vm6027, %v5952
  %6087 = vst.msk [vmem:[#allocation5 + $0x1d8] sm:$0xff] %vm6027, %v5954
  %6088 = vst.msk [vmem:[#allocation5 + $0x1e0] sm:$0xff] %vm6027, %v5956
  %6089 = vst.msk [vmem:[#allocation5 + $0x1e8] sm:$0xff] %vm6027, %v5958
  %6090 = vst.msk [vmem:[#allocation5 + $0x1f0] sm:$0xff] %vm6027, %v5960
  %6091 = vst.msk [vmem:[#allocation5 + $0x1f8] sm:$0xff] %vm6027, %v5962
  %v6092 = vld [vmem:[%s4657 + $0x1] sm:$0xff]
  %v6093 = vld [vmem:[%s4657 + $0x9] sm:$0xff]
  %v6094 = vld [vmem:[%s4657 + $0x19] sm:$0xff]
  %v6095 = vld [vmem:[%s4657 + $0x21] sm:$0xff]
  %v6096 = vld [vmem:[%s4657 + $0x31] sm:$0xff]
  %v6097 = vld [vmem:[%s4657 + $0x39] sm:$0xff]
  %v6098 = vld [vmem:[%s4657 + $0x49] sm:$0xff]
  %v6099 = vld [vmem:[%s4657 + $0x51] sm:$0xff]
  %v6100 = vld [vmem:[%s4657 + $0x61] sm:$0xff]
  %v6101 = vld [vmem:[%s4657 + $0x69] sm:$0xff]
  %v6102 = vld [vmem:[%s4657 + $0x79] sm:$0xff]
  %v6103 = vld [vmem:[%s4657 + $0x81] sm:$0xff]
  %v6104 = vld [vmem:[%s4657 + $0x91] sm:$0xff]
  %v6105 = vld [vmem:[%s4657 + $0x99] sm:$0xff]
  %v6106 = vld [vmem:[%s4657 + $0xa9] sm:$0xff]
  %v6107 = vld [vmem:[%s4657 + $0xb1] sm:$0xff]
  %v6108 = vld [vmem:[%s4657 + $0xc1] sm:$0xff]
  %v6109 = vld [vmem:[%s4657 + $0xc9] sm:$0xff]
  %v6110 = vld [vmem:[%s4657 + $0xd9] sm:$0xff]
  %v6111 = vld [vmem:[%s4657 + $0xe1] sm:$0xff]
  %v6112 = vld [vmem:[%s4657 + $0xf1] sm:$0xff]
  %v6113 = vld [vmem:[%s4657 + $0xf9] sm:$0xff]
  %v6114 = vld [vmem:[%s4657 + $0x109] sm:$0xff]
  %v6115 = vld [vmem:[%s4657 + $0x111] sm:$0xff]
  %v6116 = vld [vmem:[%s4657 + $0x121] sm:$0xff]
  %v6117 = vld [vmem:[%s4657 + $0x129] sm:$0xff]
  %v6118 = vld [vmem:[%s4657 + $0x139] sm:$0xff]
  %v6119 = vld [vmem:[%s4657 + $0x141] sm:$0xff]
  %v6120 = vld [vmem:[%s4657 + $0x151] sm:$0xff]
  %v6121 = vld [vmem:[%s4657 + $0x159] sm:$0xff]
  %v6122 = vld [vmem:[%s4657 + $0x169] sm:$0xff]
  %v6123 = vld [vmem:[%s4657 + $0x171] sm:$0xff]
  %v6124 = vld [vmem:[%s4657 + $0x1b1] sm:$0xff]
  %v6125 = vld [vmem:[%s4657 + $0x1b9] sm:$0xff]
  %v6126 = vld [vmem:[%s4657 + $0x1c9] sm:$0xff]
  %v6127 = vld [vmem:[%s4657 + $0x1d1] sm:$0xff]
  %v6128 = vld [vmem:[%s4657 + $0x1e1] sm:$0xff]
  %v6129 = vld [vmem:[%s4657 + $0x1e9] sm:$0xff]
  %v6130 = vld [vmem:[%s4657 + $0x1f9] sm:$0xff]
  %v6131 = vld [vmem:[%s4657 + $0x201] sm:$0xff]
  %v6132 = vld [vmem:[%s4657 + $0x211] sm:$0xff]
  %v6133 = vld [vmem:[%s4657 + $0x219] sm:$0xff]
  %v6134 = vld [vmem:[%s4657 + $0x229] sm:$0xff]
  %v6135 = vld [vmem:[%s4657 + $0x231] sm:$0xff]
  %v6136 = vld [vmem:[%s4657 + $0x241] sm:$0xff]
  %v6137 = vld [vmem:[%s4657 + $0x249] sm:$0xff]
  %v6138 = vld [vmem:[%s4657 + $0x259] sm:$0xff]
  %v6139 = vld [vmem:[%s4657 + $0x261] sm:$0xff]
  %v6140 = vld [vmem:[%s4657 + $0x271] sm:$0xff]
  %v6141 = vld [vmem:[%s4657 + $0x279] sm:$0xff]
  %v6142 = vld [vmem:[%s4657 + $0x289] sm:$0xff]
  %v6143 = vld [vmem:[%s4657 + $0x291] sm:$0xff]
  %v6144 = vld [vmem:[%s4657 + $0x2a1] sm:$0xff]
  %v6145 = vld [vmem:[%s4657 + $0x2a9] sm:$0xff]
  %v6146 = vld [vmem:[%s4657 + $0x2b9] sm:$0xff]
  %v6147 = vld [vmem:[%s4657 + $0x2c1] sm:$0xff]
  %v6148 = vld [vmem:[%s4657 + $0x2d1] sm:$0xff]
  %v6149 = vld [vmem:[%s4657 + $0x2d9] sm:$0xff]
  %v6150 = vld [vmem:[%s4657 + $0x2e9] sm:$0xff]
  %v6151 = vld [vmem:[%s4657 + $0x2f1] sm:$0xff]
  %v6152 = vld [vmem:[%s4657 + $0x301] sm:$0xff]
  %v6153 = vld [vmem:[%s4657 + $0x309] sm:$0xff]
  %v6154 = vld [vmem:[%s4657 + $0x319] sm:$0xff]
  %v6155 = vld [vmem:[%s4657 + $0x321] sm:$0xff]
  %6220 = vrot.lane.b32.xlu0 %v6092, 32
  %v6221 = vpop.permute.xlu0 %6220
  %6222 = vrot.lane.b32.xlu0 %v6093, 32
  %v6223 = vpop.permute.xlu0 %6222
  %6224 = vrot.lane.b32.xlu0 %v6094, 32
  %v6225 = vpop.permute.xlu0 %6224
  %6226 = vrot.lane.b32.xlu0 %v6095, 32
  %v6227 = vpop.permute.xlu0 %6226
  %6228 = vrot.lane.b32.xlu0 %v6096, 32
  %v6229 = vpop.permute.xlu0 %6228
  %6230 = vrot.lane.b32.xlu0 %v6097, 32
  %v6231 = vpop.permute.xlu0 %6230
  %6232 = vrot.lane.b32.xlu0 %v6098, 32
  %v6233 = vpop.permute.xlu0 %6232
  %6234 = vrot.lane.b32.xlu0 %v6099, 32
  %v6235 = vpop.permute.xlu0 %6234
  %6236 = vrot.lane.b32.xlu0 %v6100, 32
  %v6237 = vpop.permute.xlu0 %6236
  %6238 = vrot.lane.b32.xlu0 %v6101, 32
  %v6239 = vpop.permute.xlu0 %6238
  %6240 = vrot.lane.b32.xlu0 %v6102, 32
  %v6241 = vpop.permute.xlu0 %6240
  %6242 = vrot.lane.b32.xlu0 %v6103, 32
  %v6243 = vpop.permute.xlu0 %6242
  %6244 = vrot.lane.b32.xlu0 %v6104, 32
  %v6245 = vpop.permute.xlu0 %6244
  %6246 = vrot.lane.b32.xlu0 %v6105, 32
  %v6247 = vpop.permute.xlu0 %6246
  %6248 = vrot.lane.b32.xlu0 %v6106, 32
  %v6249 = vpop.permute.xlu0 %6248
  %6250 = vrot.lane.b32.xlu0 %v6107, 32
  %v6251 = vpop.permute.xlu0 %6250
  %6252 = vrot.lane.b32.xlu0 %v6108, 32
  %v6253 = vpop.permute.xlu0 %6252
  %6254 = vrot.lane.b32.xlu0 %v6109, 32
  %v6255 = vpop.permute.xlu0 %6254
  %6256 = vrot.lane.b32.xlu0 %v6110, 32
  %v6257 = vpop.permute.xlu0 %6256
  %6258 = vrot.lane.b32.xlu0 %v6111, 32
  %v6259 = vpop.permute.xlu0 %6258
  %6260 = vrot.lane.b32.xlu0 %v6112, 32
  %v6261 = vpop.permute.xlu0 %6260
  %6262 = vrot.lane.b32.xlu0 %v6113, 32
  %v6263 = vpop.permute.xlu0 %6262
  %6264 = vrot.lane.b32.xlu0 %v6114, 32
  %v6265 = vpop.permute.xlu0 %6264
  %6266 = vrot.lane.b32.xlu0 %v6115, 32
  %v6267 = vpop.permute.xlu0 %6266
  %6268 = vrot.lane.b32.xlu0 %v6116, 32
  %v6269 = vpop.permute.xlu0 %6268
  %6270 = vrot.lane.b32.xlu0 %v6117, 32
  %v6271 = vpop.permute.xlu0 %6270
  %6272 = vrot.lane.b32.xlu0 %v6118, 32
  %v6273 = vpop.permute.xlu0 %6272
  %6274 = vrot.lane.b32.xlu0 %v6119, 32
  %v6275 = vpop.permute.xlu0 %6274
  %6276 = vrot.lane.b32.xlu0 %v6120, 32
  %v6277 = vpop.permute.xlu0 %6276
  %6278 = vrot.lane.b32.xlu0 %v6121, 32
  %v6279 = vpop.permute.xlu0 %6278
  %6280 = vrot.lane.b32.xlu0 %v6122, 32
  %v6281 = vpop.permute.xlu0 %6280
  %6282 = vrot.lane.b32.xlu0 %v6123, 32
  %v6283 = vpop.permute.xlu0 %6282
  %6284 = vrot.lane.b32.xlu0 %v6124, 32
  %v6285 = vpop.permute.xlu0 %6284
  %6286 = vrot.lane.b32.xlu0 %v6125, 32
  %v6287 = vpop.permute.xlu0 %6286
  %6288 = vrot.lane.b32.xlu0 %v6126, 32
  %v6289 = vpop.permute.xlu0 %6288
  %6290 = vrot.lane.b32.xlu0 %v6127, 32
  %v6291 = vpop.permute.xlu0 %6290
  %6292 = vrot.lane.b32.xlu0 %v6128, 32
  %v6293 = vpop.permute.xlu0 %6292
  %6294 = vrot.lane.b32.xlu0 %v6129, 32
  %v6295 = vpop.permute.xlu0 %6294
  %6296 = vrot.lane.b32.xlu0 %v6130, 32
  %v6297 = vpop.permute.xlu0 %6296
  %6298 = vrot.lane.b32.xlu0 %v6131, 32
  %v6299 = vpop.permute.xlu0 %6298
  %6300 = vrot.lane.b32.xlu0 %v6132, 32
  %v6301 = vpop.permute.xlu0 %6300
  %6302 = vrot.lane.b32.xlu0 %v6133, 32
  %v6303 = vpop.permute.xlu0 %6302
  %6304 = vrot.lane.b32.xlu0 %v6134, 32
  %v6305 = vpop.permute.xlu0 %6304
  %6306 = vrot.lane.b32.xlu0 %v6135, 32
  %v6307 = vpop.permute.xlu0 %6306
  %6308 = vrot.lane.b32.xlu0 %v6136, 32
  %v6309 = vpop.permute.xlu0 %6308
  %6310 = vrot.lane.b32.xlu0 %v6137, 32
  %v6311 = vpop.permute.xlu0 %6310
  %6312 = vrot.lane.b32.xlu0 %v6138, 32
  %v6313 = vpop.permute.xlu0 %6312
  %6314 = vrot.lane.b32.xlu0 %v6139, 32
  %v6315 = vpop.permute.xlu0 %6314
  %6316 = vrot.lane.b32.xlu0 %v6140, 32
  %v6317 = vpop.permute.xlu0 %6316
  %6318 = vrot.lane.b32.xlu0 %v6141, 32
  %v6319 = vpop.permute.xlu0 %6318
  %6320 = vrot.lane.b32.xlu0 %v6142, 32
  %v6321 = vpop.permute.xlu0 %6320
  %6322 = vrot.lane.b32.xlu0 %v6143, 32
  %v6323 = vpop.permute.xlu0 %6322
  %6324 = vrot.lane.b32.xlu0 %v6144, 32
  %v6325 = vpop.permute.xlu0 %6324
  %6326 = vrot.lane.b32.xlu0 %v6145, 32
  %v6327 = vpop.permute.xlu0 %6326
  %6328 = vrot.lane.b32.xlu0 %v6146, 32
  %v6329 = vpop.permute.xlu0 %6328
  %6330 = vrot.lane.b32.xlu0 %v6147, 32
  %v6331 = vpop.permute.xlu0 %6330
  %6332 = vrot.lane.b32.xlu0 %v6148, 32
  %v6333 = vpop.permute.xlu0 %6332
  %6334 = vrot.lane.b32.xlu0 %v6149, 32
  %v6335 = vpop.permute.xlu0 %6334
  %6336 = vrot.lane.b32.xlu0 %v6150, 32
  %v6337 = vpop.permute.xlu0 %6336
  %6338 = vrot.lane.b32.xlu0 %v6151, 32
  %v6339 = vpop.permute.xlu0 %6338
  %6340 = vrot.lane.b32.xlu0 %v6152, 32
  %v6341 = vpop.permute.xlu0 %6340
  %6342 = vrot.lane.b32.xlu0 %v6153, 32
  %v6343 = vpop.permute.xlu0 %6342
  %6344 = vrot.lane.b32.xlu0 %v6154, 32
  %v6345 = vpop.permute.xlu0 %6344
  %6346 = vrot.lane.b32.xlu0 %v6155, 32
  %v6347 = vpop.permute.xlu0 %6346
  %vm6412 = vcmask 326912
  %6413 = vst.msk [vmem:[#allocation5] sm:$0xff] %vm6412, %v6221
  %6414 = vst.msk [vmem:[#allocation5 + $0x8] sm:$0xff] %vm6412, %v6223
  %6415 = vst.msk [vmem:[#allocation5 + $0x10] sm:$0xff] %vm6412, %v6225
  %6416 = vst.msk [vmem:[#allocation5 + $0x18] sm:$0xff] %vm6412, %v6227
  %6417 = vst.msk [vmem:[#allocation5 + $0x20] sm:$0xff] %vm6412, %v6229
  %6418 = vst.msk [vmem:[#allocation5 + $0x28] sm:$0xff] %vm6412, %v6231
  %6419 = vst.msk [vmem:[#allocation5 + $0x30] sm:$0xff] %vm6412, %v6233
  %6420 = vst.msk [vmem:[#allocation5 + $0x38] sm:$0xff] %vm6412, %v6235
  %6421 = vst.msk [vmem:[#allocation5 + $0x40] sm:$0xff] %vm6412, %v6237
  %6422 = vst.msk [vmem:[#allocation5 + $0x48] sm:$0xff] %vm6412, %v6239
  %6423 = vst.msk [vmem:[#allocation5 + $0x50] sm:$0xff] %vm6412, %v6241
  %6424 = vst.msk [vmem:[#allocation5 + $0x58] sm:$0xff] %vm6412, %v6243
  %6425 = vst.msk [vmem:[#allocation5 + $0x60] sm:$0xff] %vm6412, %v6245
  %6426 = vst.msk [vmem:[#allocation5 + $0x68] sm:$0xff] %vm6412, %v6247
  %6427 = vst.msk [vmem:[#allocation5 + $0x70] sm:$0xff] %vm6412, %v6249
  %6428 = vst.msk [vmem:[#allocation5 + $0x78] sm:$0xff] %vm6412, %v6251
  %6429 = vst.msk [vmem:[#allocation5 + $0x80] sm:$0xff] %vm6412, %v6253
  %6430 = vst.msk [vmem:[#allocation5 + $0x88] sm:$0xff] %vm6412, %v6255
  %6431 = vst.msk [vmem:[#allocation5 + $0x90] sm:$0xff] %vm6412, %v6257
  %6432 = vst.msk [vmem:[#allocation5 + $0x98] sm:$0xff] %vm6412, %v6259
  %6433 = vst.msk [vmem:[#allocation5 + $0xa0] sm:$0xff] %vm6412, %v6261
  %6434 = vst.msk [vmem:[#allocation5 + $0xa8] sm:$0xff] %vm6412, %v6263
  %6435 = vst.msk [vmem:[#allocation5 + $0xb0] sm:$0xff] %vm6412, %v6265
  %6436 = vst.msk [vmem:[#allocation5 + $0xb8] sm:$0xff] %vm6412, %v6267
  %6437 = vst.msk [vmem:[#allocation5 + $0xc0] sm:$0xff] %vm6412, %v6269
  %6438 = vst.msk [vmem:[#allocation5 + $0xc8] sm:$0xff] %vm6412, %v6271
  %6439 = vst.msk [vmem:[#allocation5 + $0xd0] sm:$0xff] %vm6412, %v6273
  %6440 = vst.msk [vmem:[#allocation5 + $0xd8] sm:$0xff] %vm6412, %v6275
  %6441 = vst.msk [vmem:[#allocation5 + $0xe0] sm:$0xff] %vm6412, %v6277
  %6442 = vst.msk [vmem:[#allocation5 + $0xe8] sm:$0xff] %vm6412, %v6279
  %6443 = vst.msk [vmem:[#allocation5 + $0xf0] sm:$0xff] %vm6412, %v6281
  %6444 = vst.msk [vmem:[#allocation5 + $0xf8] sm:$0xff] %vm6412, %v6283
  %6445 = vst.msk [vmem:[#allocation5 + $0x100] sm:$0xff] %vm6412, %v6285
  %6446 = vst.msk [vmem:[#allocation5 + $0x108] sm:$0xff] %vm6412, %v6287
  %6447 = vst.msk [vmem:[#allocation5 + $0x110] sm:$0xff] %vm6412, %v6289
  %6448 = vst.msk [vmem:[#allocation5 + $0x118] sm:$0xff] %vm6412, %v6291
  %6449 = vst.msk [vmem:[#allocation5 + $0x120] sm:$0xff] %vm6412, %v6293
  %6450 = vst.msk [vmem:[#allocation5 + $0x128] sm:$0xff] %vm6412, %v6295
  %6451 = vst.msk [vmem:[#allocation5 + $0x130] sm:$0xff] %vm6412, %v6297
  %6452 = vst.msk [vmem:[#allocation5 + $0x138] sm:$0xff] %vm6412, %v6299
  %6453 = vst.msk [vmem:[#allocation5 + $0x140] sm:$0xff] %vm6412, %v6301
  %6454 = vst.msk [vmem:[#allocation5 + $0x148] sm:$0xff] %vm6412, %v6303
  %6455 = vst.msk [vmem:[#allocation5 + $0x150] sm:$0xff] %vm6412, %v6305
  %6456 = vst.msk [vmem:[#allocation5 + $0x158] sm:$0xff] %vm6412, %v6307
  %6457 = vst.msk [vmem:[#allocation5 + $0x160] sm:$0xff] %vm6412, %v6309
  %6458 = vst.msk [vmem:[#allocation5 + $0x168] sm:$0xff] %vm6412, %v6311
  %6459 = vst.msk [vmem:[#allocation5 + $0x170] sm:$0xff] %vm6412, %v6313
  %6460 = vst.msk [vmem:[#allocation5 + $0x178] sm:$0xff] %vm6412, %v6315
  %6461 = vst.msk [vmem:[#allocation5 + $0x180] sm:$0xff] %vm6412, %v6317
  %6462 = vst.msk [vmem:[#allocation5 + $0x188] sm:$0xff] %vm6412, %v6319
  %6463 = vst.msk [vmem:[#allocation5 + $0x190] sm:$0xff] %vm6412, %v6321
  %6464 = vst.msk [vmem:[#allocation5 + $0x198] sm:$0xff] %vm6412, %v6323
  %6465 = vst.msk [vmem:[#allocation5 + $0x1a0] sm:$0xff] %vm6412, %v6325
  %6466 = vst.msk [vmem:[#allocation5 + $0x1a8] sm:$0xff] %vm6412, %v6327
  %6467 = vst.msk [vmem:[#allocation5 + $0x1b0] sm:$0xff] %vm6412, %v6329
  %6468 = vst.msk [vmem:[#allocation5 + $0x1b8] sm:$0xff] %vm6412, %v6331
  %6469 = vst.msk [vmem:[#allocation5 + $0x1c0] sm:$0xff] %vm6412, %v6333
  %6470 = vst.msk [vmem:[#allocation5 + $0x1c8] sm:$0xff] %vm6412, %v6335
  %6471 = vst.msk [vmem:[#allocation5 + $0x1d0] sm:$0xff] %vm6412, %v6337
  %6472 = vst.msk [vmem:[#allocation5 + $0x1d8] sm:$0xff] %vm6412, %v6339
  %6473 = vst.msk [vmem:[#allocation5 + $0x1e0] sm:$0xff] %vm6412, %v6341
  %6474 = vst.msk [vmem:[#allocation5 + $0x1e8] sm:$0xff] %vm6412, %v6343
  %6475 = vst.msk [vmem:[#allocation5 + $0x1f0] sm:$0xff] %vm6412, %v6345
  %6476 = vst.msk [vmem:[#allocation5 + $0x1f8] sm:$0xff] %vm6412, %v6347
  %v6477 = vld [vmem:[%s4657 + $0x2] sm:$0xff]
  %v6478 = vld [vmem:[%s4657 + $0xa] sm:$0xff]
  %v6479 = vld [vmem:[%s4657 + $0x1a] sm:$0xff]
  %v6480 = vld [vmem:[%s4657 + $0x22] sm:$0xff]
  %v6481 = vld [vmem:[%s4657 + $0x32] sm:$0xff]
  %v6482 = vld [vmem:[%s4657 + $0x3a] sm:$0xff]
  %v6483 = vld [vmem:[%s4657 + $0x4a] sm:$0xff]
  %v6484 = vld [vmem:[%s4657 + $0x52] sm:$0xff]
  %v6485 = vld [vmem:[%s4657 + $0x62] sm:$0xff]
  %v6486 = vld [vmem:[%s4657 + $0x6a] sm:$0xff]
  %v6487 = vld [vmem:[%s4657 + $0x7a] sm:$0xff]
  %v6488 = vld [vmem:[%s4657 + $0x82] sm:$0xff]
  %v6489 = vld [vmem:[%s4657 + $0x92] sm:$0xff]
  %v6490 = vld [vmem:[%s4657 + $0x9a] sm:$0xff]
  %v6491 = vld [vmem:[%s4657 + $0xaa] sm:$0xff]
  %v6492 = vld [vmem:[%s4657 + $0xb2] sm:$0xff]
  %v6493 = vld [vmem:[%s4657 + $0xc2] sm:$0xff]
  %v6494 = vld [vmem:[%s4657 + $0xca] sm:$0xff]
  %v6495 = vld [vmem:[%s4657 + $0xda] sm:$0xff]
  %v6496 = vld [vmem:[%s4657 + $0xe2] sm:$0xff]
  %v6497 = vld [vmem:[%s4657 + $0xf2] sm:$0xff]
  %v6498 = vld [vmem:[%s4657 + $0xfa] sm:$0xff]
  %v6499 = vld [vmem:[%s4657 + $0x10a] sm:$0xff]
  %v6500 = vld [vmem:[%s4657 + $0x112] sm:$0xff]
  %v6501 = vld [vmem:[%s4657 + $0x122] sm:$0xff]
  %v6502 = vld [vmem:[%s4657 + $0x12a] sm:$0xff]
  %v6503 = vld [vmem:[%s4657 + $0x13a] sm:$0xff]
  %v6504 = vld [vmem:[%s4657 + $0x142] sm:$0xff]
  %v6505 = vld [vmem:[%s4657 + $0x152] sm:$0xff]
  %v6506 = vld [vmem:[%s4657 + $0x15a] sm:$0xff]
  %v6507 = vld [vmem:[%s4657 + $0x16a] sm:$0xff]
  %v6508 = vld [vmem:[%s4657 + $0x172] sm:$0xff]
  %v6509 = vld [vmem:[%s4657 + $0x1b2] sm:$0xff]
  %v6510 = vld [vmem:[%s4657 + $0x1ba] sm:$0xff]
  %v6511 = vld [vmem:[%s4657 + $0x1ca] sm:$0xff]
  %v6512 = vld [vmem:[%s4657 + $0x1d2] sm:$0xff]
  %v6513 = vld [vmem:[%s4657 + $0x1e2] sm:$0xff]
  %v6514 = vld [vmem:[%s4657 + $0x1ea] sm:$0xff]
  %v6515 = vld [vmem:[%s4657 + $0x1fa] sm:$0xff]
  %v6516 = vld [vmem:[%s4657 + $0x202] sm:$0xff]
  %v6517 = vld [vmem:[%s4657 + $0x212] sm:$0xff]
  %v6518 = vld [vmem:[%s4657 + $0x21a] sm:$0xff]
  %v6519 = vld [vmem:[%s4657 + $0x22a] sm:$0xff]
  %v6520 = vld [vmem:[%s4657 + $0x232] sm:$0xff]
  %v6521 = vld [vmem:[%s4657 + $0x242] sm:$0xff]
  %v6522 = vld [vmem:[%s4657 + $0x24a] sm:$0xff]
  %v6523 = vld [vmem:[%s4657 + $0x25a] sm:$0xff]
  %v6524 = vld [vmem:[%s4657 + $0x262] sm:$0xff]
  %v6525 = vld [vmem:[%s4657 + $0x272] sm:$0xff]
  %v6526 = vld [vmem:[%s4657 + $0x27a] sm:$0xff]
  %v6527 = vld [vmem:[%s4657 + $0x28a] sm:$0xff]
  %v6528 = vld [vmem:[%s4657 + $0x292] sm:$0xff]
  %v6529 = vld [vmem:[%s4657 + $0x2a2] sm:$0xff]
  %v6530 = vld [vmem:[%s4657 + $0x2aa] sm:$0xff]
  %v6531 = vld [vmem:[%s4657 + $0x2ba] sm:$0xff]
  %v6532 = vld [vmem:[%s4657 + $0x2c2] sm:$0xff]
  %v6533 = vld [vmem:[%s4657 + $0x2d2] sm:$0xff]
  %v6534 = vld [vmem:[%s4657 + $0x2da] sm:$0xff]
  %v6535 = vld [vmem:[%s4657 + $0x2ea] sm:$0xff]
  %v6536 = vld [vmem:[%s4657 + $0x2f2] sm:$0xff]
  %v6537 = vld [vmem:[%s4657 + $0x302] sm:$0xff]
  %v6538 = vld [vmem:[%s4657 + $0x30a] sm:$0xff]
  %v6539 = vld [vmem:[%s4657 + $0x31a] sm:$0xff]
  %v6540 = vld [vmem:[%s4657 + $0x322] sm:$0xff]
  %6605 = vrot.lane.b32.xlu0 %v6477, 40
  %v6606 = vpop.permute.xlu0 %6605
  %6607 = vrot.lane.b32.xlu0 %v6478, 40
  %v6608 = vpop.permute.xlu0 %6607
  %6609 = vrot.lane.b32.xlu0 %v6479, 40
  %v6610 = vpop.permute.xlu0 %6609
  %6611 = vrot.lane.b32.xlu0 %v6480, 40
  %v6612 = vpop.permute.xlu0 %6611
  %6613 = vrot.lane.b32.xlu0 %v6481, 40
  %v6614 = vpop.permute.xlu0 %6613
  %6615 = vrot.lane.b32.xlu0 %v6482, 40
  %v6616 = vpop.permute.xlu0 %6615
  %6617 = vrot.lane.b32.xlu0 %v6483, 40
  %v6618 = vpop.permute.xlu0 %6617
  %6619 = vrot.lane.b32.xlu0 %v6484, 40
  %v6620 = vpop.permute.xlu0 %6619
  %6621 = vrot.lane.b32.xlu0 %v6485, 40
  %v6622 = vpop.permute.xlu0 %6621
  %6623 = vrot.lane.b32.xlu0 %v6486, 40
  %v6624 = vpop.permute.xlu0 %6623
  %6625 = vrot.lane.b32.xlu0 %v6487, 40
  %v6626 = vpop.permute.xlu0 %6625
  %6627 = vrot.lane.b32.xlu0 %v6488, 40
  %v6628 = vpop.permute.xlu0 %6627
  %6629 = vrot.lane.b32.xlu0 %v6489, 40
  %v6630 = vpop.permute.xlu0 %6629
  %6631 = vrot.lane.b32.xlu0 %v6490, 40
  %v6632 = vpop.permute.xlu0 %6631
  %6633 = vrot.lane.b32.xlu0 %v6491, 40
  %v6634 = vpop.permute.xlu0 %6633
  %6635 = vrot.lane.b32.xlu0 %v6492, 40
  %v6636 = vpop.permute.xlu0 %6635
  %6637 = vrot.lane.b32.xlu0 %v6493, 40
  %v6638 = vpop.permute.xlu0 %6637
  %6639 = vrot.lane.b32.xlu0 %v6494, 40
  %v6640 = vpop.permute.xlu0 %6639
  %6641 = vrot.lane.b32.xlu0 %v6495, 40
  %v6642 = vpop.permute.xlu0 %6641
  %6643 = vrot.lane.b32.xlu0 %v6496, 40
  %v6644 = vpop.permute.xlu0 %6643
  %6645 = vrot.lane.b32.xlu0 %v6497, 40
  %v6646 = vpop.permute.xlu0 %6645
  %6647 = vrot.lane.b32.xlu0 %v6498, 40
  %v6648 = vpop.permute.xlu0 %6647
  %6649 = vrot.lane.b32.xlu0 %v6499, 40
  %v6650 = vpop.permute.xlu0 %6649
  %6651 = vrot.lane.b32.xlu0 %v6500, 40
  %v6652 = vpop.permute.xlu0 %6651
  %6653 = vrot.lane.b32.xlu0 %v6501, 40
  %v6654 = vpop.permute.xlu0 %6653
  %6655 = vrot.lane.b32.xlu0 %v6502, 40
  %v6656 = vpop.permute.xlu0 %6655
  %6657 = vrot.lane.b32.xlu0 %v6503, 40
  %v6658 = vpop.permute.xlu0 %6657
  %6659 = vrot.lane.b32.xlu0 %v6504, 40
  %v6660 = vpop.permute.xlu0 %6659
  %6661 = vrot.lane.b32.xlu0 %v6505, 40
  %v6662 = vpop.permute.xlu0 %6661
  %6663 = vrot.lane.b32.xlu0 %v6506, 40
  %v6664 = vpop.permute.xlu0 %6663
  %6665 = vrot.lane.b32.xlu0 %v6507, 40
  %v6666 = vpop.permute.xlu0 %6665
  %6667 = vrot.lane.b32.xlu0 %v6508, 40
  %v6668 = vpop.permute.xlu0 %6667
  %6669 = vrot.lane.b32.xlu0 %v6509, 40
  %v6670 = vpop.permute.xlu0 %6669
  %6671 = vrot.lane.b32.xlu0 %v6510, 40
  %v6672 = vpop.permute.xlu0 %6671
  %6673 = vrot.lane.b32.xlu0 %v6511, 40
  %v6674 = vpop.permute.xlu0 %6673
  %6675 = vrot.lane.b32.xlu0 %v6512, 40
  %v6676 = vpop.permute.xlu0 %6675
  %6677 = vrot.lane.b32.xlu0 %v6513, 40
  %v6678 = vpop.permute.xlu0 %6677
  %6679 = vrot.lane.b32.xlu0 %v6514, 40
  %v6680 = vpop.permute.xlu0 %6679
  %6681 = vrot.lane.b32.xlu0 %v6515, 40
  %v6682 = vpop.permute.xlu0 %6681
  %6683 = vrot.lane.b32.xlu0 %v6516, 40
  %v6684 = vpop.permute.xlu0 %6683
  %6685 = vrot.lane.b32.xlu0 %v6517, 40
  %v6686 = vpop.permute.xlu0 %6685
  %6687 = vrot.lane.b32.xlu0 %v6518, 40
  %v6688 = vpop.permute.xlu0 %6687
  %6689 = vrot.lane.b32.xlu0 %v6519, 40
  %v6690 = vpop.permute.xlu0 %6689
  %6691 = vrot.lane.b32.xlu0 %v6520, 40
  %v6692 = vpop.permute.xlu0 %6691
  %6693 = vrot.lane.b32.xlu0 %v6521, 40
  %v6694 = vpop.permute.xlu0 %6693
  %6695 = vrot.lane.b32.xlu0 %v6522, 40
  %v6696 = vpop.permute.xlu0 %6695
  %6697 = vrot.lane.b32.xlu0 %v6523, 40
  %v6698 = vpop.permute.xlu0 %6697
  %6699 = vrot.lane.b32.xlu0 %v6524, 40
  %v6700 = vpop.permute.xlu0 %6699
  %6701 = vrot.lane.b32.xlu0 %v6525, 40
  %v6702 = vpop.permute.xlu0 %6701
  %6703 = vrot.lane.b32.xlu0 %v6526, 40
  %v6704 = vpop.permute.xlu0 %6703
  %6705 = vrot.lane.b32.xlu0 %v6527, 40
  %v6706 = vpop.permute.xlu0 %6705
  %6707 = vrot.lane.b32.xlu0 %v6528, 40
  %v6708 = vpop.permute.xlu0 %6707
  %6709 = vrot.lane.b32.xlu0 %v6529, 40
  %v6710 = vpop.permute.xlu0 %6709
  %6711 = vrot.lane.b32.xlu0 %v6530, 40
  %v6712 = vpop.permute.xlu0 %6711
  %6713 = vrot.lane.b32.xlu0 %v6531, 40
  %v6714 = vpop.permute.xlu0 %6713
  %6715 = vrot.lane.b32.xlu0 %v6532, 40
  %v6716 = vpop.permute.xlu0 %6715
  %6717 = vrot.lane.b32.xlu0 %v6533, 40
  %v6718 = vpop.permute.xlu0 %6717
  %6719 = vrot.lane.b32.xlu0 %v6534, 40
  %v6720 = vpop.permute.xlu0 %6719
  %6721 = vrot.lane.b32.xlu0 %v6535, 40
  %v6722 = vpop.permute.xlu0 %6721
  %6723 = vrot.lane.b32.xlu0 %v6536, 40
  %v6724 = vpop.permute.xlu0 %6723
  %6725 = vrot.lane.b32.xlu0 %v6537, 40
  %v6726 = vpop.permute.xlu0 %6725
  %6727 = vrot.lane.b32.xlu0 %v6538, 40
  %v6728 = vpop.permute.xlu0 %6727
  %6729 = vrot.lane.b32.xlu0 %v6539, 40
  %v6730 = vpop.permute.xlu0 %6729
  %6731 = vrot.lane.b32.xlu0 %v6540, 40
  %v6732 = vpop.permute.xlu0 %6731
  %vm6797 = vcmask 392512
  %6798 = vst.msk [vmem:[#allocation5] sm:$0xff] %vm6797, %v6606
  %6799 = vst.msk [vmem:[#allocation5 + $0x8] sm:$0xff] %vm6797, %v6608
  %6800 = vst.msk [vmem:[#allocation5 + $0x10] sm:$0xff] %vm6797, %v6610
  %6801 = vst.msk [vmem:[#allocation5 + $0x18] sm:$0xff] %vm6797, %v6612
  %6802 = vst.msk [vmem:[#allocation5 + $0x20] sm:$0xff] %vm6797, %v6614
  %6803 = vst.msk [vmem:[#allocation5 + $0x28] sm:$0xff] %vm6797, %v6616
  %6804 = vst.msk [vmem:[#allocation5 + $0x30] sm:$0xff] %vm6797, %v6618
  %6805 = vst.msk [vmem:[#allocation5 + $0x38] sm:$0xff] %vm6797, %v6620
  %6806 = vst.msk [vmem:[#allocation5 + $0x40] sm:$0xff] %vm6797, %v6622
  %6807 = vst.msk [vmem:[#allocation5 + $0x48] sm:$0xff] %vm6797, %v6624
  %6808 = vst.msk [vmem:[#allocation5 + $0x50] sm:$0xff] %vm6797, %v6626
  %6809 = vst.msk [vmem:[#allocation5 + $0x58] sm:$0xff] %vm6797, %v6628
  %6810 = vst.msk [vmem:[#allocation5 + $0x60] sm:$0xff] %vm6797, %v6630
  %6811 = vst.msk [vmem:[#allocation5 + $0x68] sm:$0xff] %vm6797, %v6632
  %6812 = vst.msk [vmem:[#allocation5 + $0x70] sm:$0xff] %vm6797, %v6634
  %6813 = vst.msk [vmem:[#allocation5 + $0x78] sm:$0xff] %vm6797, %v6636
  %6814 = vst.msk [vmem:[#allocation5 + $0x80] sm:$0xff] %vm6797, %v6638
  %6815 = vst.msk [vmem:[#allocation5 + $0x88] sm:$0xff] %vm6797, %v6640
  %6816 = vst.msk [vmem:[#allocation5 + $0x90] sm:$0xff] %vm6797, %v6642
  %6817 = vst.msk [vmem:[#allocation5 + $0x98] sm:$0xff] %vm6797, %v6644
  %6818 = vst.msk [vmem:[#allocation5 + $0xa0] sm:$0xff] %vm6797, %v6646
  %6819 = vst.msk [vmem:[#allocation5 + $0xa8] sm:$0xff] %vm6797, %v6648
  %6820 = vst.msk [vmem:[#allocation5 + $0xb0] sm:$0xff] %vm6797, %v6650
  %6821 = vst.msk [vmem:[#allocation5 + $0xb8] sm:$0xff] %vm6797, %v6652
  %6822 = vst.msk [vmem:[#allocation5 + $0xc0] sm:$0xff] %vm6797, %v6654
  %6823 = vst.msk [vmem:[#allocation5 + $0xc8] sm:$0xff] %vm6797, %v6656
  %6824 = vst.msk [vmem:[#allocation5 + $0xd0] sm:$0xff] %vm6797, %v6658
  %6825 = vst.msk [vmem:[#allocation5 + $0xd8] sm:$0xff] %vm6797, %v6660
  %6826 = vst.msk [vmem:[#allocation5 + $0xe0] sm:$0xff] %vm6797, %v6662
  %6827 = vst.msk [vmem:[#allocation5 + $0xe8] sm:$0xff] %vm6797, %v6664
  %6828 = vst.msk [vmem:[#allocation5 + $0xf0] sm:$0xff] %vm6797, %v6666
  %6829 = vst.msk [vmem:[#allocation5 + $0xf8] sm:$0xff] %vm6797, %v6668
  %6830 = vst.msk [vmem:[#allocation5 + $0x100] sm:$0xff] %vm6797, %v6670
  %6831 = vst.msk [vmem:[#allocation5 + $0x108] sm:$0xff] %vm6797, %v6672
  %6832 = vst.msk [vmem:[#allocation5 + $0x110] sm:$0xff] %vm6797, %v6674
  %6833 = vst.msk [vmem:[#allocation5 + $0x118] sm:$0xff] %vm6797, %v6676
  %6834 = vst.msk [vmem:[#allocation5 + $0x120] sm:$0xff] %vm6797, %v6678
  %6835 = vst.msk [vmem:[#allocation5 + $0x128] sm:$0xff] %vm6797, %v6680
  %6836 = vst.msk [vmem:[#allocation5 + $0x130] sm:$0xff] %vm6797, %v6682
  %6837 = vst.msk [vmem:[#allocation5 + $0x138] sm:$0xff] %vm6797, %v6684
  %6838 = vst.msk [vmem:[#allocation5 + $0x140] sm:$0xff] %vm6797, %v6686
  %6839 = vst.msk [vmem:[#allocation5 + $0x148] sm:$0xff] %vm6797, %v6688
  %6840 = vst.msk [vmem:[#allocation5 + $0x150] sm:$0xff] %vm6797, %v6690
  %6841 = vst.msk [vmem:[#allocation5 + $0x158] sm:$0xff] %vm6797, %v6692
  %6842 = vst.msk [vmem:[#allocation5 + $0x160] sm:$0xff] %vm6797, %v6694
  %6843 = vst.msk [vmem:[#allocation5 + $0x168] sm:$0xff] %vm6797, %v6696
  %6844 = vst.msk [vmem:[#allocation5 + $0x170] sm:$0xff] %vm6797, %v6698
  %6845 = vst.msk [vmem:[#allocation5 + $0x178] sm:$0xff] %vm6797, %v6700
  %6846 = vst.msk [vmem:[#allocation5 + $0x180] sm:$0xff] %vm6797, %v6702
  %6847 = vst.msk [vmem:[#allocation5 + $0x188] sm:$0xff] %vm6797, %v6704
  %6848 = vst.msk [vmem:[#allocation5 + $0x190] sm:$0xff] %vm6797, %v6706
  %6849 = vst.msk [vmem:[#allocation5 + $0x198] sm:$0xff] %vm6797, %v6708
  %6850 = vst.msk [vmem:[#allocation5 + $0x1a0] sm:$0xff] %vm6797, %v6710
  %6851 = vst.msk [vmem:[#allocation5 + $0x1a8] sm:$0xff] %vm6797, %v6712
  %6852 = vst.msk [vmem:[#allocation5 + $0x1b0] sm:$0xff] %vm6797, %v6714
  %6853 = vst.msk [vmem:[#allocation5 + $0x1b8] sm:$0xff] %vm6797, %v6716
  %6854 = vst.msk [vmem:[#allocation5 + $0x1c0] sm:$0xff] %vm6797, %v6718
  %6855 = vst.msk [vmem:[#allocation5 + $0x1c8] sm:$0xff] %vm6797, %v6720
  %6856 = vst.msk [vmem:[#allocation5 + $0x1d0] sm:$0xff] %vm6797, %v6722
  %6857 = vst.msk [vmem:[#allocation5 + $0x1d8] sm:$0xff] %vm6797, %v6724
  %6858 = vst.msk [vmem:[#allocation5 + $0x1e0] sm:$0xff] %vm6797, %v6726
  %6859 = vst.msk [vmem:[#allocation5 + $0x1e8] sm:$0xff] %vm6797, %v6728
  %6860 = vst.msk [vmem:[#allocation5 + $0x1f0] sm:$0xff] %vm6797, %v6730
  %6861 = vst.msk [vmem:[#allocation5 + $0x1f8] sm:$0xff] %vm6797, %v6732
  %s6862 = scalar_lea.vmem [#allocation3], 48
  %v6863 = vld [vmem:[%s6862] sm:$0xff]
  %v6864 = vld [vmem:[%s6862 + $0x8] sm:$0xff]
  %v6865 = vld [vmem:[%s6862 + $0x18] sm:$0xff]
  %v6866 = vld [vmem:[%s6862 + $0x20] sm:$0xff]
  %v6867 = vld [vmem:[%s6862 + $0x30] sm:$0xff]
  %v6868 = vld [vmem:[%s6862 + $0x38] sm:$0xff]
  %v6869 = vld [vmem:[%s6862 + $0x48] sm:$0xff]
  %v6870 = vld [vmem:[%s6862 + $0x50] sm:$0xff]
  %v6871 = vld [vmem:[%s6862 + $0x60] sm:$0xff]
  %v6872 = vld [vmem:[%s6862 + $0x68] sm:$0xff]
  %v6873 = vld [vmem:[%s6862 + $0x78] sm:$0xff]
  %v6874 = vld [vmem:[%s6862 + $0x80] sm:$0xff]
  %v6875 = vld [vmem:[%s6862 + $0x90] sm:$0xff]
  %v6876 = vld [vmem:[%s6862 + $0x98] sm:$0xff]
  %v6877 = vld [vmem:[%s6862 + $0xa8] sm:$0xff]
  %v6878 = vld [vmem:[%s6862 + $0xb0] sm:$0xff]
  %v6879 = vld [vmem:[%s6862 + $0xc0] sm:$0xff]
  %v6880 = vld [vmem:[%s6862 + $0xc8] sm:$0xff]
  %v6881 = vld [vmem:[%s6862 + $0xd8] sm:$0xff]
  %v6882 = vld [vmem:[%s6862 + $0xe0] sm:$0xff]
  %v6883 = vld [vmem:[%s6862 + $0xf0] sm:$0xff]
  %v6884 = vld [vmem:[%s6862 + $0xf8] sm:$0xff]
  %v6885 = vld [vmem:[%s6862 + $0x108] sm:$0xff]
  %v6886 = vld [vmem:[%s6862 + $0x110] sm:$0xff]
  %v6887 = vld [vmem:[%s6862 + $0x120] sm:$0xff]
  %v6888 = vld [vmem:[%s6862 + $0x128] sm:$0xff]
  %v6889 = vld [vmem:[%s6862 + $0x138] sm:$0xff]
  %v6890 = vld [vmem:[%s6862 + $0x140] sm:$0xff]
  %v6891 = vld [vmem:[%s6862 + $0x150] sm:$0xff]
  %v6892 = vld [vmem:[%s6862 + $0x158] sm:$0xff]
  %v6893 = vld [vmem:[%s6862 + $0x168] sm:$0xff]
  %v6894 = vld [vmem:[%s6862 + $0x170] sm:$0xff]
  %v6895 = vld [vmem:[%s6862 + $0x1b0] sm:$0xff]
  %v6896 = vld [vmem:[%s6862 + $0x1b8] sm:$0xff]
  %v6897 = vld [vmem:[%s6862 + $0x1c8] sm:$0xff]
  %v6898 = vld [vmem:[%s6862 + $0x1d0] sm:$0xff]
  %v6899 = vld [vmem:[%s6862 + $0x1e0] sm:$0xff]
  %v6900 = vld [vmem:[%s6862 + $0x1e8] sm:$0xff]
  %v6901 = vld [vmem:[%s6862 + $0x1f8] sm:$0xff]
  %v6902 = vld [vmem:[%s6862 + $0x200] sm:$0xff]
  %v6903 = vld [vmem:[%s6862 + $0x210] sm:$0xff]
  %v6904 = vld [vmem:[%s6862 + $0x218] sm:$0xff]
  %v6905 = vld [vmem:[%s6862 + $0x228] sm:$0xff]
  %v6906 = vld [vmem:[%s6862 + $0x230] sm:$0xff]
  %v6907 = vld [vmem:[%s6862 + $0x240] sm:$0xff]
  %v6908 = vld [vmem:[%s6862 + $0x248] sm:$0xff]
  %v6909 = vld [vmem:[%s6862 + $0x258] sm:$0xff]
  %v6910 = vld [vmem:[%s6862 + $0x260] sm:$0xff]
  %v6911 = vld [vmem:[%s6862 + $0x270] sm:$0xff]
  %v6912 = vld [vmem:[%s6862 + $0x278] sm:$0xff]
  %v6913 = vld [vmem:[%s6862 + $0x288] sm:$0xff]
  %v6914 = vld [vmem:[%s6862 + $0x290] sm:$0xff]
  %v6915 = vld [vmem:[%s6862 + $0x2a0] sm:$0xff]
  %v6916 = vld [vmem:[%s6862 + $0x2a8] sm:$0xff]
  %v6917 = vld [vmem:[%s6862 + $0x2b8] sm:$0xff]
  %v6918 = vld [vmem:[%s6862 + $0x2c0] sm:$0xff]
  %v6919 = vld [vmem:[%s6862 + $0x2d0] sm:$0xff]
  %v6920 = vld [vmem:[%s6862 + $0x2d8] sm:$0xff]
  %v6921 = vld [vmem:[%s6862 + $0x2e8] sm:$0xff]
  %v6922 = vld [vmem:[%s6862 + $0x2f0] sm:$0xff]
  %v6923 = vld [vmem:[%s6862 + $0x300] sm:$0xff]
  %v6924 = vld [vmem:[%s6862 + $0x308] sm:$0xff]
  %v6925 = vld [vmem:[%s6862 + $0x318] sm:$0xff]
  %v6926 = vld [vmem:[%s6862 + $0x320] sm:$0xff]
  %6991 = vrot.lane.b32.xlu0 %v6863, 48
  %v6992 = vpop.permute.xlu0 %6991
  %6993 = vrot.lane.b32.xlu0 %v6864, 48
  %v6994 = vpop.permute.xlu0 %6993
  %6995 = vrot.lane.b32.xlu0 %v6865, 48
  %v6996 = vpop.permute.xlu0 %6995
  %6997 = vrot.lane.b32.xlu0 %v6866, 48
  %v6998 = vpop.permute.xlu0 %6997
  %6999 = vrot.lane.b32.xlu0 %v6867, 48
  %v7000 = vpop.permute.xlu0 %6999
  %7001 = vrot.lane.b32.xlu0 %v6868, 48
  %v7002 = vpop.permute.xlu0 %7001
  %7003 = vrot.lane.b32.xlu0 %v6869, 48
  %v7004 = vpop.permute.xlu0 %7003
  %7005 = vrot.lane.b32.xlu0 %v6870, 48
  %v7006 = vpop.permute.xlu0 %7005
  %7007 = vrot.lane.b32.xlu0 %v6871, 48
  %v7008 = vpop.permute.xlu0 %7007
  %7009 = vrot.lane.b32.xlu0 %v6872, 48
  %v7010 = vpop.permute.xlu0 %7009
  %7011 = vrot.lane.b32.xlu0 %v6873, 48
  %v7012 = vpop.permute.xlu0 %7011
  %7013 = vrot.lane.b32.xlu0 %v6874, 48
  %v7014 = vpop.permute.xlu0 %7013
  %7015 = vrot.lane.b32.xlu0 %v6875, 48
  %v7016 = vpop.permute.xlu0 %7015
  %7017 = vrot.lane.b32.xlu0 %v6876, 48
  %v7018 = vpop.permute.xlu0 %7017
  %7019 = vrot.lane.b32.xlu0 %v6877, 48
  %v7020 = vpop.permute.xlu0 %7019
  %7021 = vrot.lane.b32.xlu0 %v6878, 48
  %v7022 = vpop.permute.xlu0 %7021
  %7023 = vrot.lane.b32.xlu0 %v6879, 48
  %v7024 = vpop.permute.xlu0 %7023
  %7025 = vrot.lane.b32.xlu0 %v6880, 48
  %v7026 = vpop.permute.xlu0 %7025
  %7027 = vrot.lane.b32.xlu0 %v6881, 48
  %v7028 = vpop.permute.xlu0 %7027
  %7029 = vrot.lane.b32.xlu0 %v6882, 48
  %v7030 = vpop.permute.xlu0 %7029
  %7031 = vrot.lane.b32.xlu0 %v6883, 48
  %v7032 = vpop.permute.xlu0 %7031
  %7033 = vrot.lane.b32.xlu0 %v6884, 48
  %v7034 = vpop.permute.xlu0 %7033
  %7035 = vrot.lane.b32.xlu0 %v6885, 48
  %v7036 = vpop.permute.xlu0 %7035
  %7037 = vrot.lane.b32.xlu0 %v6886, 48
  %v7038 = vpop.permute.xlu0 %7037
  %7039 = vrot.lane.b32.xlu0 %v6887, 48
  %v7040 = vpop.permute.xlu0 %7039
  %7041 = vrot.lane.b32.xlu0 %v6888, 48
  %v7042 = vpop.permute.xlu0 %7041
  %7043 = vrot.lane.b32.xlu0 %v6889, 48
  %v7044 = vpop.permute.xlu0 %7043
  %7045 = vrot.lane.b32.xlu0 %v6890, 48
  %v7046 = vpop.permute.xlu0 %7045
  %7047 = vrot.lane.b32.xlu0 %v6891, 48
  %v7048 = vpop.permute.xlu0 %7047
  %7049 = vrot.lane.b32.xlu0 %v6892, 48
  %v7050 = vpop.permute.xlu0 %7049
  %7051 = vrot.lane.b32.xlu0 %v6893, 48
  %v7052 = vpop.permute.xlu0 %7051
  %7053 = vrot.lane.b32.xlu0 %v6894, 48
  %v7054 = vpop.permute.xlu0 %7053
  %7055 = vrot.lane.b32.xlu0 %v6895, 48
  %v7056 = vpop.permute.xlu0 %7055
  %7057 = vrot.lane.b32.xlu0 %v6896, 48
  %v7058 = vpop.permute.xlu0 %7057
  %7059 = vrot.lane.b32.xlu0 %v6897, 48
  %v7060 = vpop.permute.xlu0 %7059
  %7061 = vrot.lane.b32.xlu0 %v6898, 48
  %v7062 = vpop.permute.xlu0 %7061
  %7063 = vrot.lane.b32.xlu0 %v6899, 48
  %v7064 = vpop.permute.xlu0 %7063
  %7065 = vrot.lane.b32.xlu0 %v6900, 48
  %v7066 = vpop.permute.xlu0 %7065
  %7067 = vrot.lane.b32.xlu0 %v6901, 48
  %v7068 = vpop.permute.xlu0 %7067
  %7069 = vrot.lane.b32.xlu0 %v6902, 48
  %v7070 = vpop.permute.xlu0 %7069
  %7071 = vrot.lane.b32.xlu0 %v6903, 48
  %v7072 = vpop.permute.xlu0 %7071
  %7073 = vrot.lane.b32.xlu0 %v6904, 48
  %v7074 = vpop.permute.xlu0 %7073
  %7075 = vrot.lane.b32.xlu0 %v6905, 48
  %v7076 = vpop.permute.xlu0 %7075
  %7077 = vrot.lane.b32.xlu0 %v6906, 48
  %v7078 = vpop.permute.xlu0 %7077
  %7079 = vrot.lane.b32.xlu0 %v6907, 48
  %v7080 = vpop.permute.xlu0 %7079
  %7081 = vrot.lane.b32.xlu0 %v6908, 48
  %v7082 = vpop.permute.xlu0 %7081
  %7083 = vrot.lane.b32.xlu0 %v6909, 48
  %v7084 = vpop.permute.xlu0 %7083
  %7085 = vrot.lane.b32.xlu0 %v6910, 48
  %v7086 = vpop.permute.xlu0 %7085
  %7087 = vrot.lane.b32.xlu0 %v6911, 48
  %v7088 = vpop.permute.xlu0 %7087
  %7089 = vrot.lane.b32.xlu0 %v6912, 48
  %v7090 = vpop.permute.xlu0 %7089
  %7091 = vrot.lane.b32.xlu0 %v6913, 48
  %v7092 = vpop.permute.xlu0 %7091
  %7093 = vrot.lane.b32.xlu0 %v6914, 48
  %v7094 = vpop.permute.xlu0 %7093
  %7095 = vrot.lane.b32.xlu0 %v6915, 48
  %v7096 = vpop.permute.xlu0 %7095
  %7097 = vrot.lane.b32.xlu0 %v6916, 48
  %v7098 = vpop.permute.xlu0 %7097
  %7099 = vrot.lane.b32.xlu0 %v6917, 48
  %v7100 = vpop.permute.xlu0 %7099
  %7101 = vrot.lane.b32.xlu0 %v6918, 48
  %v7102 = vpop.permute.xlu0 %7101
  %7103 = vrot.lane.b32.xlu0 %v6919, 48
  %v7104 = vpop.permute.xlu0 %7103
  %7105 = vrot.lane.b32.xlu0 %v6920, 48
  %v7106 = vpop.permute.xlu0 %7105
  %7107 = vrot.lane.b32.xlu0 %v6921, 48
  %v7108 = vpop.permute.xlu0 %7107
  %7109 = vrot.lane.b32.xlu0 %v6922, 48
  %v7110 = vpop.permute.xlu0 %7109
  %7111 = vrot.lane.b32.xlu0 %v6923, 48
  %v7112 = vpop.permute.xlu0 %7111
  %7113 = vrot.lane.b32.xlu0 %v6924, 48
  %v7114 = vpop.permute.xlu0 %7113
  %7115 = vrot.lane.b32.xlu0 %v6925, 48
  %v7116 = vpop.permute.xlu0 %7115
  %7117 = vrot.lane.b32.xlu0 %v6926, 48
  %v7118 = vpop.permute.xlu0 %7117
  %vm7183 = vcmask 458112
  %7184 = vst.msk [vmem:[#allocation5] sm:$0xff] %vm7183, %v6992
  %7185 = vst.msk [vmem:[#allocation5 + $0x8] sm:$0xff] %vm7183, %v6994
  %7186 = vst.msk [vmem:[#allocation5 + $0x10] sm:$0xff] %vm7183, %v6996
  %7187 = vst.msk [vmem:[#allocation5 + $0x18] sm:$0xff] %vm7183, %v6998
  %7188 = vst.msk [vmem:[#allocation5 + $0x20] sm:$0xff] %vm7183, %v7000
  %7189 = vst.msk [vmem:[#allocation5 + $0x28] sm:$0xff] %vm7183, %v7002
  %7190 = vst.msk [vmem:[#allocation5 + $0x30] sm:$0xff] %vm7183, %v7004
  %7191 = vst.msk [vmem:[#allocation5 + $0x38] sm:$0xff] %vm7183, %v7006
  %7192 = vst.msk [vmem:[#allocation5 + $0x40] sm:$0xff] %vm7183, %v7008
  %7193 = vst.msk [vmem:[#allocation5 + $0x48] sm:$0xff] %vm7183, %v7010
  %7194 = vst.msk [vmem:[#allocation5 + $0x50] sm:$0xff] %vm7183, %v7012
  %7195 = vst.msk [vmem:[#allocation5 + $0x58] sm:$0xff] %vm7183, %v7014
  %7196 = vst.msk [vmem:[#allocation5 + $0x60] sm:$0xff] %vm7183, %v7016
  %7197 = vst.msk [vmem:[#allocation5 + $0x68] sm:$0xff] %vm7183, %v7018
  %7198 = vst.msk [vmem:[#allocation5 + $0x70] sm:$0xff] %vm7183, %v7020
  %7199 = vst.msk [vmem:[#allocation5 + $0x78] sm:$0xff] %vm7183, %v7022
  %7200 = vst.msk [vmem:[#allocation5 + $0x80] sm:$0xff] %vm7183, %v7024
  %7201 = vst.msk [vmem:[#allocation5 + $0x88] sm:$0xff] %vm7183, %v7026
  %7202 = vst.msk [vmem:[#allocation5 + $0x90] sm:$0xff] %vm7183, %v7028
  %7203 = vst.msk [vmem:[#allocation5 + $0x98] sm:$0xff] %vm7183, %v7030
  %7204 = vst.msk [vmem:[#allocation5 + $0xa0] sm:$0xff] %vm7183, %v7032
  %7205 = vst.msk [vmem:[#allocation5 + $0xa8] sm:$0xff] %vm7183, %v7034
  %7206 = vst.msk [vmem:[#allocation5 + $0xb0] sm:$0xff] %vm7183, %v7036
  %7207 = vst.msk [vmem:[#allocation5 + $0xb8] sm:$0xff] %vm7183, %v7038
  %7208 = vst.msk [vmem:[#allocation5 + $0xc0] sm:$0xff] %vm7183, %v7040
  %7209 = vst.msk [vmem:[#allocation5 + $0xc8] sm:$0xff] %vm7183, %v7042
  %7210 = vst.msk [vmem:[#allocation5 + $0xd0] sm:$0xff] %vm7183, %v7044
  %7211 = vst.msk [vmem:[#allocation5 + $0xd8] sm:$0xff] %vm7183, %v7046
  %7212 = vst.msk [vmem:[#allocation5 + $0xe0] sm:$0xff] %vm7183, %v7048
  %7213 = vst.msk [vmem:[#allocation5 + $0xe8] sm:$0xff] %vm7183, %v7050
  %7214 = vst.msk [vmem:[#allocation5 + $0xf0] sm:$0xff] %vm7183, %v7052
  %7215 = vst.msk [vmem:[#allocation5 + $0xf8] sm:$0xff] %vm7183, %v7054
  %7216 = vst.msk [vmem:[#allocation5 + $0x100] sm:$0xff] %vm7183, %v7056
  %7217 = vst.msk [vmem:[#allocation5 + $0x108] sm:$0xff] %vm7183, %v7058
  %7218 = vst.msk [vmem:[#allocation5 + $0x110] sm:$0xff] %vm7183, %v7060
  %7219 = vst.msk [vmem:[#allocation5 + $0x118] sm:$0xff] %vm7183, %v7062
  %7220 = vst.msk [vmem:[#allocation5 + $0x120] sm:$0xff] %vm7183, %v7064
  %7221 = vst.msk [vmem:[#allocation5 + $0x128] sm:$0xff] %vm7183, %v7066
  %7222 = vst.msk [vmem:[#allocation5 + $0x130] sm:$0xff] %vm7183, %v7068
  %7223 = vst.msk [vmem:[#allocation5 + $0x138] sm:$0xff] %vm7183, %v7070
  %7224 = vst.msk [vmem:[#allocation5 + $0x140] sm:$0xff] %vm7183, %v7072
  %7225 = vst.msk [vmem:[#allocation5 + $0x148] sm:$0xff] %vm7183, %v7074
  %7226 = vst.msk [vmem:[#allocation5 + $0x150] sm:$0xff] %vm7183, %v7076
  %7227 = vst.msk [vmem:[#allocation5 + $0x158] sm:$0xff] %vm7183, %v7078
  %7228 = vst.msk [vmem:[#allocation5 + $0x160] sm:$0xff] %vm7183, %v7080
  %7229 = vst.msk [vmem:[#allocation5 + $0x168] sm:$0xff] %vm7183, %v7082
  %7230 = vst.msk [vmem:[#allocation5 + $0x170] sm:$0xff] %vm7183, %v7084
  %7231 = vst.msk [vmem:[#allocation5 + $0x178] sm:$0xff] %vm7183, %v7086
  %7232 = vst.msk [vmem:[#allocation5 + $0x180] sm:$0xff] %vm7183, %v7088
  %7233 = vst.msk [vmem:[#allocation5 + $0x188] sm:$0xff] %vm7183, %v7090
  %7234 = vst.msk [vmem:[#allocation5 + $0x190] sm:$0xff] %vm7183, %v7092
  %7235 = vst.msk [vmem:[#allocation5 + $0x198] sm:$0xff] %vm7183, %v7094
  %7236 = vst.msk [vmem:[#allocation5 + $0x1a0] sm:$0xff] %vm7183, %v7096
  %7237 = vst.msk [vmem:[#allocation5 + $0x1a8] sm:$0xff] %vm7183, %v7098
  %7238 = vst.msk [vmem:[#allocation5 + $0x1b0] sm:$0xff] %vm7183, %v7100
  %7239 = vst.msk [vmem:[#allocation5 + $0x1b8] sm:$0xff] %vm7183, %v7102
  %7240 = vst.msk [vmem:[#allocation5 + $0x1c0] sm:$0xff] %vm7183, %v7104
  %7241 = vst.msk [vmem:[#allocation5 + $0x1c8] sm:$0xff] %vm7183, %v7106
  %7242 = vst.msk [vmem:[#allocation5 + $0x1d0] sm:$0xff] %vm7183, %v7108
  %7243 = vst.msk [vmem:[#allocation5 + $0x1d8] sm:$0xff] %vm7183, %v7110
  %7244 = vst.msk [vmem:[#allocation5 + $0x1e0] sm:$0xff] %vm7183, %v7112
  %7245 = vst.msk [vmem:[#allocation5 + $0x1e8] sm:$0xff] %vm7183, %v7114
  %7246 = vst.msk [vmem:[#allocation5 + $0x1f0] sm:$0xff] %vm7183, %v7116
  %7247 = vst.msk [vmem:[#allocation5 + $0x1f8] sm:$0xff] %vm7183, %v7118
  %v7248 = vld [vmem:[%s6862 + $0x1] sm:$0xff]
  %v7249 = vld [vmem:[%s6862 + $0x9] sm:$0xff]
  %v7250 = vld [vmem:[%s6862 + $0x19] sm:$0xff]
  %v7251 = vld [vmem:[%s6862 + $0x21] sm:$0xff]
  %v7252 = vld [vmem:[%s6862 + $0x31] sm:$0xff]
  %v7253 = vld [vmem:[%s6862 + $0x39] sm:$0xff]
  %v7254 = vld [vmem:[%s6862 + $0x49] sm:$0xff]
  %v7255 = vld [vmem:[%s6862 + $0x51] sm:$0xff]
  %v7256 = vld [vmem:[%s6862 + $0x61] sm:$0xff]
  %v7257 = vld [vmem:[%s6862 + $0x69] sm:$0xff]
  %v7258 = vld [vmem:[%s6862 + $0x79] sm:$0xff]
  %v7259 = vld [vmem:[%s6862 + $0x81] sm:$0xff]
  %v7260 = vld [vmem:[%s6862 + $0x91] sm:$0xff]
  %v7261 = vld [vmem:[%s6862 + $0x99] sm:$0xff]
  %v7262 = vld [vmem:[%s6862 + $0xa9] sm:$0xff]
  %v7263 = vld [vmem:[%s6862 + $0xb1] sm:$0xff]
  %v7264 = vld [vmem:[%s6862 + $0xc1] sm:$0xff]
  %v7265 = vld [vmem:[%s6862 + $0xc9] sm:$0xff]
  %v7266 = vld [vmem:[%s6862 + $0xd9] sm:$0xff]
  %v7267 = vld [vmem:[%s6862 + $0xe1] sm:$0xff]
  %v7268 = vld [vmem:[%s6862 + $0xf1] sm:$0xff]
  %v7269 = vld [vmem:[%s6862 + $0xf9] sm:$0xff]
  %v7270 = vld [vmem:[%s6862 + $0x109] sm:$0xff]
  %v7271 = vld [vmem:[%s6862 + $0x111] sm:$0xff]
  %v7272 = vld [vmem:[%s6862 + $0x121] sm:$0xff]
  %v7273 = vld [vmem:[%s6862 + $0x129] sm:$0xff]
  %v7274 = vld [vmem:[%s6862 + $0x139] sm:$0xff]
  %v7275 = vld [vmem:[%s6862 + $0x141] sm:$0xff]
  %v7276 = vld [vmem:[%s6862 + $0x151] sm:$0xff]
  %v7277 = vld [vmem:[%s6862 + $0x159] sm:$0xff]
  %v7278 = vld [vmem:[%s6862 + $0x169] sm:$0xff]
  %v7279 = vld [vmem:[%s6862 + $0x171] sm:$0xff]
  %v7280 = vld [vmem:[%s6862 + $0x1b1] sm:$0xff]
  %v7281 = vld [vmem:[%s6862 + $0x1b9] sm:$0xff]
  %v7282 = vld [vmem:[%s6862 + $0x1c9] sm:$0xff]
  %v7283 = vld [vmem:[%s6862 + $0x1d1] sm:$0xff]
  %v7284 = vld [vmem:[%s6862 + $0x1e1] sm:$0xff]
  %v7285 = vld [vmem:[%s6862 + $0x1e9] sm:$0xff]
  %v7286 = vld [vmem:[%s6862 + $0x1f9] sm:$0xff]
  %v7287 = vld [vmem:[%s6862 + $0x201] sm:$0xff]
  %v7288 = vld [vmem:[%s6862 + $0x211] sm:$0xff]
  %v7289 = vld [vmem:[%s6862 + $0x219] sm:$0xff]
  %v7290 = vld [vmem:[%s6862 + $0x229] sm:$0xff]
  %v7291 = vld [vmem:[%s6862 + $0x231] sm:$0xff]
  %v7292 = vld [vmem:[%s6862 + $0x241] sm:$0xff]
  %v7293 = vld [vmem:[%s6862 + $0x249] sm:$0xff]
  %v7294 = vld [vmem:[%s6862 + $0x259] sm:$0xff]
  %v7295 = vld [vmem:[%s6862 + $0x261] sm:$0xff]
  %v7296 = vld [vmem:[%s6862 + $0x271] sm:$0xff]
  %v7297 = vld [vmem:[%s6862 + $0x279] sm:$0xff]
  %v7298 = vld [vmem:[%s6862 + $0x289] sm:$0xff]
  %v7299 = vld [vmem:[%s6862 + $0x291] sm:$0xff]
  %v7300 = vld [vmem:[%s6862 + $0x2a1] sm:$0xff]
  %v7301 = vld [vmem:[%s6862 + $0x2a9] sm:$0xff]
  %v7302 = vld [vmem:[%s6862 + $0x2b9] sm:$0xff]
  %v7303 = vld [vmem:[%s6862 + $0x2c1] sm:$0xff]
  %v7304 = vld [vmem:[%s6862 + $0x2d1] sm:$0xff]
  %v7305 = vld [vmem:[%s6862 + $0x2d9] sm:$0xff]
  %v7306 = vld [vmem:[%s6862 + $0x2e9] sm:$0xff]
  %v7307 = vld [vmem:[%s6862 + $0x2f1] sm:$0xff]
  %v7308 = vld [vmem:[%s6862 + $0x301] sm:$0xff]
  %v7309 = vld [vmem:[%s6862 + $0x309] sm:$0xff]
  %v7310 = vld [vmem:[%s6862 + $0x319] sm:$0xff]
  %v7311 = vld [vmem:[%s6862 + $0x321] sm:$0xff]
  %7376 = vrot.lane.b32.xlu0 %v7248, 56
  %v7377 = vpop.permute.xlu0 %7376
  %7378 = vrot.lane.b32.xlu0 %v7249, 56
  %v7379 = vpop.permute.xlu0 %7378
  %7380 = vrot.lane.b32.xlu0 %v7250, 56
  %v7381 = vpop.permute.xlu0 %7380
  %7382 = vrot.lane.b32.xlu0 %v7251, 56
  %v7383 = vpop.permute.xlu0 %7382
  %7384 = vrot.lane.b32.xlu0 %v7252, 56
  %v7385 = vpop.permute.xlu0 %7384
  %7386 = vrot.lane.b32.xlu0 %v7253, 56
  %v7387 = vpop.permute.xlu0 %7386
  %7388 = vrot.lane.b32.xlu0 %v7254, 56
  %v7389 = vpop.permute.xlu0 %7388
  %7390 = vrot.lane.b32.xlu0 %v7255, 56
  %v7391 = vpop.permute.xlu0 %7390
  %7392 = vrot.lane.b32.xlu0 %v7256, 56
  %v7393 = vpop.permute.xlu0 %7392
  %7394 = vrot.lane.b32.xlu0 %v7257, 56
  %v7395 = vpop.permute.xlu0 %7394
  %7396 = vrot.lane.b32.xlu0 %v7258, 56
  %v7397 = vpop.permute.xlu0 %7396
  %7398 = vrot.lane.b32.xlu0 %v7259, 56
  %v7399 = vpop.permute.xlu0 %7398
  %7400 = vrot.lane.b32.xlu0 %v7260, 56
  %v7401 = vpop.permute.xlu0 %7400
  %7402 = vrot.lane.b32.xlu0 %v7261, 56
  %v7403 = vpop.permute.xlu0 %7402
  %7404 = vrot.lane.b32.xlu0 %v7262, 56
  %v7405 = vpop.permute.xlu0 %7404
  %7406 = vrot.lane.b32.xlu0 %v7263, 56
  %v7407 = vpop.permute.xlu0 %7406
  %7408 = vrot.lane.b32.xlu0 %v7264, 56
  %v7409 = vpop.permute.xlu0 %7408
  %7410 = vrot.lane.b32.xlu0 %v7265, 56
  %v7411 = vpop.permute.xlu0 %7410
  %7412 = vrot.lane.b32.xlu0 %v7266, 56
  %v7413 = vpop.permute.xlu0 %7412
  %7414 = vrot.lane.b32.xlu0 %v7267, 56
  %v7415 = vpop.permute.xlu0 %7414
  %7416 = vrot.lane.b32.xlu0 %v7268, 56
  %v7417 = vpop.permute.xlu0 %7416
  %7418 = vrot.lane.b32.xlu0 %v7269, 56
  %v7419 = vpop.permute.xlu0 %7418
  %7420 = vrot.lane.b32.xlu0 %v7270, 56
  %v7421 = vpop.permute.xlu0 %7420
  %7422 = vrot.lane.b32.xlu0 %v7271, 56
  %v7423 = vpop.permute.xlu0 %7422
  %7424 = vrot.lane.b32.xlu0 %v7272, 56
  %v7425 = vpop.permute.xlu0 %7424
  %7426 = vrot.lane.b32.xlu0 %v7273, 56
  %v7427 = vpop.permute.xlu0 %7426
  %7428 = vrot.lane.b32.xlu0 %v7274, 56
  %v7429 = vpop.permute.xlu0 %7428
  %7430 = vrot.lane.b32.xlu0 %v7275, 56
  %v7431 = vpop.permute.xlu0 %7430
  %7432 = vrot.lane.b32.xlu0 %v7276, 56
  %v7433 = vpop.permute.xlu0 %7432
  %7434 = vrot.lane.b32.xlu0 %v7277, 56
  %v7435 = vpop.permute.xlu0 %7434
  %7436 = vrot.lane.b32.xlu0 %v7278, 56
  %v7437 = vpop.permute.xlu0 %7436
  %7438 = vrot.lane.b32.xlu0 %v7279, 56
  %v7439 = vpop.permute.xlu0 %7438
  %7440 = vrot.lane.b32.xlu0 %v7280, 56
  %v7441 = vpop.permute.xlu0 %7440
  %7442 = vrot.lane.b32.xlu0 %v7281, 56
  %v7443 = vpop.permute.xlu0 %7442
  %7444 = vrot.lane.b32.xlu0 %v7282, 56
  %v7445 = vpop.permute.xlu0 %7444
  %7446 = vrot.lane.b32.xlu0 %v7283, 56
  %v7447 = vpop.permute.xlu0 %7446
  %7448 = vrot.lane.b32.xlu0 %v7284, 56
  %v7449 = vpop.permute.xlu0 %7448
  %7450 = vrot.lane.b32.xlu0 %v7285, 56
  %v7451 = vpop.permute.xlu0 %7450
  %7452 = vrot.lane.b32.xlu0 %v7286, 56
  %v7453 = vpop.permute.xlu0 %7452
  %7454 = vrot.lane.b32.xlu0 %v7287, 56
  %v7455 = vpop.permute.xlu0 %7454
  %7456 = vrot.lane.b32.xlu0 %v7288, 56
  %v7457 = vpop.permute.xlu0 %7456
  %7458 = vrot.lane.b32.xlu0 %v7289, 56
  %v7459 = vpop.permute.xlu0 %7458
  %7460 = vrot.lane.b32.xlu0 %v7290, 56
  %v7461 = vpop.permute.xlu0 %7460
  %7462 = vrot.lane.b32.xlu0 %v7291, 56
  %v7463 = vpop.permute.xlu0 %7462
  %7464 = vrot.lane.b32.xlu0 %v7292, 56
  %v7465 = vpop.permute.xlu0 %7464
  %7466 = vrot.lane.b32.xlu0 %v7293, 56
  %v7467 = vpop.permute.xlu0 %7466
  %7468 = vrot.lane.b32.xlu0 %v7294, 56
  %v7469 = vpop.permute.xlu0 %7468
  %7470 = vrot.lane.b32.xlu0 %v7295, 56
  %v7471 = vpop.permute.xlu0 %7470
  %7472 = vrot.lane.b32.xlu0 %v7296, 56
  %v7473 = vpop.permute.xlu0 %7472
  %7474 = vrot.lane.b32.xlu0 %v7297, 56
  %v7475 = vpop.permute.xlu0 %7474
  %7476 = vrot.lane.b32.xlu0 %v7298, 56
  %v7477 = vpop.permute.xlu0 %7476
  %7478 = vrot.lane.b32.xlu0 %v7299, 56
  %v7479 = vpop.permute.xlu0 %7478
  %7480 = vrot.lane.b32.xlu0 %v7300, 56
  %v7481 = vpop.permute.xlu0 %7480
  %7482 = vrot.lane.b32.xlu0 %v7301, 56
  %v7483 = vpop.permute.xlu0 %7482
  %7484 = vrot.lane.b32.xlu0 %v7302, 56
  %v7485 = vpop.permute.xlu0 %7484
  %7486 = vrot.lane.b32.xlu0 %v7303, 56
  %v7487 = vpop.permute.xlu0 %7486
  %7488 = vrot.lane.b32.xlu0 %v7304, 56
  %v7489 = vpop.permute.xlu0 %7488
  %7490 = vrot.lane.b32.xlu0 %v7305, 56
  %v7491 = vpop.permute.xlu0 %7490
  %7492 = vrot.lane.b32.xlu0 %v7306, 56
  %v7493 = vpop.permute.xlu0 %7492
  %7494 = vrot.lane.b32.xlu0 %v7307, 56
  %v7495 = vpop.permute.xlu0 %7494
  %7496 = vrot.lane.b32.xlu0 %v7308, 56
  %v7497 = vpop.permute.xlu0 %7496
  %7498 = vrot.lane.b32.xlu0 %v7309, 56
  %v7499 = vpop.permute.xlu0 %7498
  %7500 = vrot.lane.b32.xlu0 %v7310, 56
  %v7501 = vpop.permute.xlu0 %7500
  %7502 = vrot.lane.b32.xlu0 %v7311, 56
  %v7503 = vpop.permute.xlu0 %7502
  %vm7568 = vcmask 523712
  %7569 = vst.msk [vmem:[#allocation5] sm:$0xff] %vm7568, %v7377
  %7570 = vst.msk [vmem:[#allocation5 + $0x8] sm:$0xff] %vm7568, %v7379
  %7571 = vst.msk [vmem:[#allocation5 + $0x10] sm:$0xff] %vm7568, %v7381
  %7572 = vst.msk [vmem:[#allocation5 + $0x18] sm:$0xff] %vm7568, %v7383
  %7573 = vst.msk [vmem:[#allocation5 + $0x20] sm:$0xff] %vm7568, %v7385
  %7574 = vst.msk [vmem:[#allocation5 + $0x28] sm:$0xff] %vm7568, %v7387
  %7575 = vst.msk [vmem:[#allocation5 + $0x30] sm:$0xff] %vm7568, %v7389
  %7576 = vst.msk [vmem:[#allocation5 + $0x38] sm:$0xff] %vm7568, %v7391
  %7577 = vst.msk [vmem:[#allocation5 + $0x40] sm:$0xff] %vm7568, %v7393
  %7578 = vst.msk [vmem:[#allocation5 + $0x48] sm:$0xff] %vm7568, %v7395
  %7579 = vst.msk [vmem:[#allocation5 + $0x50] sm:$0xff] %vm7568, %v7397
  %7580 = vst.msk [vmem:[#allocation5 + $0x58] sm:$0xff] %vm7568, %v7399
  %7581 = vst.msk [vmem:[#allocation5 + $0x60] sm:$0xff] %vm7568, %v7401
  %7582 = vst.msk [vmem:[#allocation5 + $0x68] sm:$0xff] %vm7568, %v7403
  %7583 = vst.msk [vmem:[#allocation5 + $0x70] sm:$0xff] %vm7568, %v7405
  %7584 = vst.msk [vmem:[#allocation5 + $0x78] sm:$0xff] %vm7568, %v7407
  %7585 = vst.msk [vmem:[#allocation5 + $0x80] sm:$0xff] %vm7568, %v7409
  %7586 = vst.msk [vmem:[#allocation5 + $0x88] sm:$0xff] %vm7568, %v7411
  %7587 = vst.msk [vmem:[#allocation5 + $0x90] sm:$0xff] %vm7568, %v7413
  %7588 = vst.msk [vmem:[#allocation5 + $0x98] sm:$0xff] %vm7568, %v7415
  %7589 = vst.msk [vmem:[#allocation5 + $0xa0] sm:$0xff] %vm7568, %v7417
  %7590 = vst.msk [vmem:[#allocation5 + $0xa8] sm:$0xff] %vm7568, %v7419
  %7591 = vst.msk [vmem:[#allocation5 + $0xb0] sm:$0xff] %vm7568, %v7421
  %7592 = vst.msk [vmem:[#allocation5 + $0xb8] sm:$0xff] %vm7568, %v7423
  %7593 = vst.msk [vmem:[#allocation5 + $0xc0] sm:$0xff] %vm7568, %v7425
  %7594 = vst.msk [vmem:[#allocation5 + $0xc8] sm:$0xff] %vm7568, %v7427
  %7595 = vst.msk [vmem:[#allocation5 + $0xd0] sm:$0xff] %vm7568, %v7429
  %7596 = vst.msk [vmem:[#allocation5 + $0xd8] sm:$0xff] %vm7568, %v7431
  %7597 = vst.msk [vmem:[#allocation5 + $0xe0] sm:$0xff] %vm7568, %v7433
  %7598 = vst.msk [vmem:[#allocation5 + $0xe8] sm:$0xff] %vm7568, %v7435
  %7599 = vst.msk [vmem:[#allocation5 + $0xf0] sm:$0xff] %vm7568, %v7437
  %7600 = vst.msk [vmem:[#allocation5 + $0xf8] sm:$0xff] %vm7568, %v7439
  %7601 = vst.msk [vmem:[#allocation5 + $0x100] sm:$0xff] %vm7568, %v7441
  %7602 = vst.msk [vmem:[#allocation5 + $0x108] sm:$0xff] %vm7568, %v7443
  %7603 = vst.msk [vmem:[#allocation5 + $0x110] sm:$0xff] %vm7568, %v7445
  %7604 = vst.msk [vmem:[#allocation5 + $0x118] sm:$0xff] %vm7568, %v7447
  %7605 = vst.msk [vmem:[#allocation5 + $0x120] sm:$0xff] %vm7568, %v7449
  %7606 = vst.msk [vmem:[#allocation5 + $0x128] sm:$0xff] %vm7568, %v7451
  %7607 = vst.msk [vmem:[#allocation5 + $0x130] sm:$0xff] %vm7568, %v7453
  %7608 = vst.msk [vmem:[#allocation5 + $0x138] sm:$0xff] %vm7568, %v7455
  %7609 = vst.msk [vmem:[#allocation5 + $0x140] sm:$0xff] %vm7568, %v7457
  %7610 = vst.msk [vmem:[#allocation5 + $0x148] sm:$0xff] %vm7568, %v7459
  %7611 = vst.msk [vmem:[#allocation5 + $0x150] sm:$0xff] %vm7568, %v7461
  %7612 = vst.msk [vmem:[#allocation5 + $0x158] sm:$0xff] %vm7568, %v7463
  %7613 = vst.msk [vmem:[#allocation5 + $0x160] sm:$0xff] %vm7568, %v7465
  %7614 = vst.msk [vmem:[#allocation5 + $0x168] sm:$0xff] %vm7568, %v7467
  %7615 = vst.msk [vmem:[#allocation5 + $0x170] sm:$0xff] %vm7568, %v7469
  %7616 = vst.msk [vmem:[#allocation5 + $0x178] sm:$0xff] %vm7568, %v7471
  %7617 = vst.msk [vmem:[#allocation5 + $0x180] sm:$0xff] %vm7568, %v7473
  %7618 = vst.msk [vmem:[#allocation5 + $0x188] sm:$0xff] %vm7568, %v7475
  %7619 = vst.msk [vmem:[#allocation5 + $0x190] sm:$0xff] %vm7568, %v7477
  %7620 = vst.msk [vmem:[#allocation5 + $0x198] sm:$0xff] %vm7568, %v7479
  %7621 = vst.msk [vmem:[#allocation5 + $0x1a0] sm:$0xff] %vm7568, %v7481
  %7622 = vst.msk [vmem:[#allocation5 + $0x1a8] sm:$0xff] %vm7568, %v7483
  %7623 = vst.msk [vmem:[#allocation5 + $0x1b0] sm:$0xff] %vm7568, %v7485
  %7624 = vst.msk [vmem:[#allocation5 + $0x1b8] sm:$0xff] %vm7568, %v7487
  %7625 = vst.msk [vmem:[#allocation5 + $0x1c0] sm:$0xff] %vm7568, %v7489
  %7626 = vst.msk [vmem:[#allocation5 + $0x1c8] sm:$0xff] %vm7568, %v7491
  %7627 = vst.msk [vmem:[#allocation5 + $0x1d0] sm:$0xff] %vm7568, %v7493
  %7628 = vst.msk [vmem:[#allocation5 + $0x1d8] sm:$0xff] %vm7568, %v7495
  %7629 = vst.msk [vmem:[#allocation5 + $0x1e0] sm:$0xff] %vm7568, %v7497
  %7630 = vst.msk [vmem:[#allocation5 + $0x1e8] sm:$0xff] %vm7568, %v7499
  %7631 = vst.msk [vmem:[#allocation5 + $0x1f0] sm:$0xff] %vm7568, %v7501
  %7632 = vst.msk [vmem:[#allocation5 + $0x1f8] sm:$0xff] %vm7568, %v7503
  %v7633 = vld [vmem:[%s6862 + $0x2] sm:$0xff]
  %v7634 = vld [vmem:[%s6862 + $0xa] sm:$0xff]
  %v7635 = vld [vmem:[%s6862 + $0x1a] sm:$0xff]
  %v7636 = vld [vmem:[%s6862 + $0x22] sm:$0xff]
  %v7637 = vld [vmem:[%s6862 + $0x32] sm:$0xff]
  %v7638 = vld [vmem:[%s6862 + $0x3a] sm:$0xff]
  %v7639 = vld [vmem:[%s6862 + $0x4a] sm:$0xff]
  %v7640 = vld [vmem:[%s6862 + $0x52] sm:$0xff]
  %v7641 = vld [vmem:[%s6862 + $0x62] sm:$0xff]
  %v7642 = vld [vmem:[%s6862 + $0x6a] sm:$0xff]
  %v7643 = vld [vmem:[%s6862 + $0x7a] sm:$0xff]
  %v7644 = vld [vmem:[%s6862 + $0x82] sm:$0xff]
  %v7645 = vld [vmem:[%s6862 + $0x92] sm:$0xff]
  %v7646 = vld [vmem:[%s6862 + $0x9a] sm:$0xff]
  %v7647 = vld [vmem:[%s6862 + $0xaa] sm:$0xff]
  %v7648 = vld [vmem:[%s6862 + $0xb2] sm:$0xff]
  %v7649 = vld [vmem:[%s6862 + $0xc2] sm:$0xff]
  %v7650 = vld [vmem:[%s6862 + $0xca] sm:$0xff]
  %v7651 = vld [vmem:[%s6862 + $0xda] sm:$0xff]
  %v7652 = vld [vmem:[%s6862 + $0xe2] sm:$0xff]
  %v7653 = vld [vmem:[%s6862 + $0xf2] sm:$0xff]
  %v7654 = vld [vmem:[%s6862 + $0xfa] sm:$0xff]
  %v7655 = vld [vmem:[%s6862 + $0x10a] sm:$0xff]
  %v7656 = vld [vmem:[%s6862 + $0x112] sm:$0xff]
  %v7657 = vld [vmem:[%s6862 + $0x122] sm:$0xff]
  %v7658 = vld [vmem:[%s6862 + $0x12a] sm:$0xff]
  %v7659 = vld [vmem:[%s6862 + $0x13a] sm:$0xff]
  %v7660 = vld [vmem:[%s6862 + $0x142] sm:$0xff]
  %v7661 = vld [vmem:[%s6862 + $0x152] sm:$0xff]
  %v7662 = vld [vmem:[%s6862 + $0x15a] sm:$0xff]
  %v7663 = vld [vmem:[%s6862 + $0x16a] sm:$0xff]
  %v7664 = vld [vmem:[%s6862 + $0x172] sm:$0xff]
  %v7665 = vld [vmem:[%s6862 + $0x1b2] sm:$0xff]
  %v7666 = vld [vmem:[%s6862 + $0x1ba] sm:$0xff]
  %v7667 = vld [vmem:[%s6862 + $0x1ca] sm:$0xff]
  %v7668 = vld [vmem:[%s6862 + $0x1d2] sm:$0xff]
  %v7669 = vld [vmem:[%s6862 + $0x1e2] sm:$0xff]
  %v7670 = vld [vmem:[%s6862 + $0x1ea] sm:$0xff]
  %v7671 = vld [vmem:[%s6862 + $0x1fa] sm:$0xff]
  %v7672 = vld [vmem:[%s6862 + $0x202] sm:$0xff]
  %v7673 = vld [vmem:[%s6862 + $0x212] sm:$0xff]
  %v7674 = vld [vmem:[%s6862 + $0x21a] sm:$0xff]
  %v7675 = vld [vmem:[%s6862 + $0x22a] sm:$0xff]
  %v7676 = vld [vmem:[%s6862 + $0x232] sm:$0xff]
  %v7677 = vld [vmem:[%s6862 + $0x242] sm:$0xff]
  %v7678 = vld [vmem:[%s6862 + $0x24a] sm:$0xff]
  %v7679 = vld [vmem:[%s6862 + $0x25a] sm:$0xff]
  %v7680 = vld [vmem:[%s6862 + $0x262] sm:$0xff]
  %v7681 = vld [vmem:[%s6862 + $0x272] sm:$0xff]
  %v7682 = vld [vmem:[%s6862 + $0x27a] sm:$0xff]
  %v7683 = vld [vmem:[%s6862 + $0x28a] sm:$0xff]
  %v7684 = vld [vmem:[%s6862 + $0x292] sm:$0xff]
  %v7685 = vld [vmem:[%s6862 + $0x2a2] sm:$0xff]
  %v7686 = vld [vmem:[%s6862 + $0x2aa] sm:$0xff]
  %v7687 = vld [vmem:[%s6862 + $0x2ba] sm:$0xff]
  %v7688 = vld [vmem:[%s6862 + $0x2c2] sm:$0xff]
  %v7689 = vld [vmem:[%s6862 + $0x2d2] sm:$0xff]
  %v7690 = vld [vmem:[%s6862 + $0x2da] sm:$0xff]
  %v7691 = vld [vmem:[%s6862 + $0x2ea] sm:$0xff]
  %v7692 = vld [vmem:[%s6862 + $0x2f2] sm:$0xff]
  %v7693 = vld [vmem:[%s6862 + $0x302] sm:$0xff]
  %v7694 = vld [vmem:[%s6862 + $0x30a] sm:$0xff]
  %v7695 = vld [vmem:[%s6862 + $0x31a] sm:$0xff]
  %v7696 = vld [vmem:[%s6862 + $0x322] sm:$0xff]
  %7761 = vrot.lane.b32.xlu0 %v7633, 64
  %v7762 = vpop.permute.xlu0 %7761
  %7763 = vrot.lane.b32.xlu0 %v7634, 64
  %v7764 = vpop.permute.xlu0 %7763
  %7765 = vrot.lane.b32.xlu0 %v7635, 64
  %v7766 = vpop.permute.xlu0 %7765
  %7767 = vrot.lane.b32.xlu0 %v7636, 64
  %v7768 = vpop.permute.xlu0 %7767
  %7769 = vrot.lane.b32.xlu0 %v7637, 64
  %v7770 = vpop.permute.xlu0 %7769
  %7771 = vrot.lane.b32.xlu0 %v7638, 64
  %v7772 = vpop.permute.xlu0 %7771
  %7773 = vrot.lane.b32.xlu0 %v7639, 64
  %v7774 = vpop.permute.xlu0 %7773
  %7775 = vrot.lane.b32.xlu0 %v7640, 64
  %v7776 = vpop.permute.xlu0 %7775
  %7777 = vrot.lane.b32.xlu0 %v7641, 64
  %v7778 = vpop.permute.xlu0 %7777
  %7779 = vrot.lane.b32.xlu0 %v7642, 64
  %v7780 = vpop.permute.xlu0 %7779
  %7781 = vrot.lane.b32.xlu0 %v7643, 64
  %v7782 = vpop.permute.xlu0 %7781
  %7783 = vrot.lane.b32.xlu0 %v7644, 64
  %v7784 = vpop.permute.xlu0 %7783
  %7785 = vrot.lane.b32.xlu0 %v7645, 64
  %v7786 = vpop.permute.xlu0 %7785
  %7787 = vrot.lane.b32.xlu0 %v7646, 64
  %v7788 = vpop.permute.xlu0 %7787
  %7789 = vrot.lane.b32.xlu0 %v7647, 64
  %v7790 = vpop.permute.xlu0 %7789
  %7791 = vrot.lane.b32.xlu0 %v7648, 64
  %v7792 = vpop.permute.xlu0 %7791
  %7793 = vrot.lane.b32.xlu0 %v7649, 64
  %v7794 = vpop.permute.xlu0 %7793
  %7795 = vrot.lane.b32.xlu0 %v7650, 64
  %v7796 = vpop.permute.xlu0 %7795
  %7797 = vrot.lane.b32.xlu0 %v7651, 64
  %v7798 = vpop.permute.xlu0 %7797
  %7799 = vrot.lane.b32.xlu0 %v7652, 64
  %v7800 = vpop.permute.xlu0 %7799
  %7801 = vrot.lane.b32.xlu0 %v7653, 64
  %v7802 = vpop.permute.xlu0 %7801
  %7803 = vrot.lane.b32.xlu0 %v7654, 64
  %v7804 = vpop.permute.xlu0 %7803
  %7805 = vrot.lane.b32.xlu0 %v7655, 64
  %v7806 = vpop.permute.xlu0 %7805
  %7807 = vrot.lane.b32.xlu0 %v7656, 64
  %v7808 = vpop.permute.xlu0 %7807
  %7809 = vrot.lane.b32.xlu0 %v7657, 64
  %v7810 = vpop.permute.xlu0 %7809
  %7811 = vrot.lane.b32.xlu0 %v7658, 64
  %v7812 = vpop.permute.xlu0 %7811
  %7813 = vrot.lane.b32.xlu0 %v7659, 64
  %v7814 = vpop.permute.xlu0 %7813
  %7815 = vrot.lane.b32.xlu0 %v7660, 64
  %v7816 = vpop.permute.xlu0 %7815
  %7817 = vrot.lane.b32.xlu0 %v7661, 64
  %v7818 = vpop.permute.xlu0 %7817
  %7819 = vrot.lane.b32.xlu0 %v7662, 64
  %v7820 = vpop.permute.xlu0 %7819
  %7821 = vrot.lane.b32.xlu0 %v7663, 64
  %v7822 = vpop.permute.xlu0 %7821
  %7823 = vrot.lane.b32.xlu0 %v7664, 64
  %v7824 = vpop.permute.xlu0 %7823
  %7825 = vrot.lane.b32.xlu0 %v7665, 64
  %v7826 = vpop.permute.xlu0 %7825
  %7827 = vrot.lane.b32.xlu0 %v7666, 64
  %v7828 = vpop.permute.xlu0 %7827
  %7829 = vrot.lane.b32.xlu0 %v7667, 64
  %v7830 = vpop.permute.xlu0 %7829
  %7831 = vrot.lane.b32.xlu0 %v7668, 64
  %v7832 = vpop.permute.xlu0 %7831
  %7833 = vrot.lane.b32.xlu0 %v7669, 64
  %v7834 = vpop.permute.xlu0 %7833
  %7835 = vrot.lane.b32.xlu0 %v7670, 64
  %v7836 = vpop.permute.xlu0 %7835
  %7837 = vrot.lane.b32.xlu0 %v7671, 64
  %v7838 = vpop.permute.xlu0 %7837
  %7839 = vrot.lane.b32.xlu0 %v7672, 64
  %v7840 = vpop.permute.xlu0 %7839
  %7841 = vrot.lane.b32.xlu0 %v7673, 64
  %v7842 = vpop.permute.xlu0 %7841
  %7843 = vrot.lane.b32.xlu0 %v7674, 64
  %v7844 = vpop.permute.xlu0 %7843
  %7845 = vrot.lane.b32.xlu0 %v7675, 64
  %v7846 = vpop.permute.xlu0 %7845
  %7847 = vrot.lane.b32.xlu0 %v7676, 64
  %v7848 = vpop.permute.xlu0 %7847
  %7849 = vrot.lane.b32.xlu0 %v7677, 64
  %v7850 = vpop.permute.xlu0 %7849
  %7851 = vrot.lane.b32.xlu0 %v7678, 64
  %v7852 = vpop.permute.xlu0 %7851
  %7853 = vrot.lane.b32.xlu0 %v7679, 64
  %v7854 = vpop.permute.xlu0 %7853
  %7855 = vrot.lane.b32.xlu0 %v7680, 64
  %v7856 = vpop.permute.xlu0 %7855
  %7857 = vrot.lane.b32.xlu0 %v7681, 64
  %v7858 = vpop.permute.xlu0 %7857
  %7859 = vrot.lane.b32.xlu0 %v7682, 64
  %v7860 = vpop.permute.xlu0 %7859
  %7861 = vrot.lane.b32.xlu0 %v7683, 64
  %v7862 = vpop.permute.xlu0 %7861
  %7863 = vrot.lane.b32.xlu0 %v7684, 64
  %v7864 = vpop.permute.xlu0 %7863
  %7865 = vrot.lane.b32.xlu0 %v7685, 64
  %v7866 = vpop.permute.xlu0 %7865
  %7867 = vrot.lane.b32.xlu0 %v7686, 64
  %v7868 = vpop.permute.xlu0 %7867
  %7869 = vrot.lane.b32.xlu0 %v7687, 64
  %v7870 = vpop.permute.xlu0 %7869
  %7871 = vrot.lane.b32.xlu0 %v7688, 64
  %v7872 = vpop.permute.xlu0 %7871
  %7873 = vrot.lane.b32.xlu0 %v7689, 64
  %v7874 = vpop.permute.xlu0 %7873
  %7875 = vrot.lane.b32.xlu0 %v7690, 64
  %v7876 = vpop.permute.xlu0 %7875
  %7877 = vrot.lane.b32.xlu0 %v7691, 64
  %v7878 = vpop.permute.xlu0 %7877
  %7879 = vrot.lane.b32.xlu0 %v7692, 64
  %v7880 = vpop.permute.xlu0 %7879
  %7881 = vrot.lane.b32.xlu0 %v7693, 64
  %v7882 = vpop.permute.xlu0 %7881
  %7883 = vrot.lane.b32.xlu0 %v7694, 64
  %v7884 = vpop.permute.xlu0 %7883
  %7885 = vrot.lane.b32.xlu0 %v7695, 64
  %v7886 = vpop.permute.xlu0 %7885
  %7887 = vrot.lane.b32.xlu0 %v7696, 64
  %v7888 = vpop.permute.xlu0 %7887
  %vm7953 = vcmask 589312
  %7954 = vst.msk [vmem:[#allocation5] sm:$0xff] %vm7953, %v7762
  %7955 = vst.msk [vmem:[#allocation5 + $0x8] sm:$0xff] %vm7953, %v7764
  %7956 = vst.msk [vmem:[#allocation5 + $0x10] sm:$0xff] %vm7953, %v7766
  %7957 = vst.msk [vmem:[#allocation5 + $0x18] sm:$0xff] %vm7953, %v7768
  %7958 = vst.msk [vmem:[#allocation5 + $0x20] sm:$0xff] %vm7953, %v7770
  %7959 = vst.msk [vmem:[#allocation5 + $0x28] sm:$0xff] %vm7953, %v7772
  %7960 = vst.msk [vmem:[#allocation5 + $0x30] sm:$0xff] %vm7953, %v7774
  %7961 = vst.msk [vmem:[#allocation5 + $0x38] sm:$0xff] %vm7953, %v7776
  %7962 = vst.msk [vmem:[#allocation5 + $0x40] sm:$0xff] %vm7953, %v7778
  %7963 = vst.msk [vmem:[#allocation5 + $0x48] sm:$0xff] %vm7953, %v7780
  %7964 = vst.msk [vmem:[#allocation5 + $0x50] sm:$0xff] %vm7953, %v7782
  %7965 = vst.msk [vmem:[#allocation5 + $0x58] sm:$0xff] %vm7953, %v7784
  %7966 = vst.msk [vmem:[#allocation5 + $0x60] sm:$0xff] %vm7953, %v7786
  %7967 = vst.msk [vmem:[#allocation5 + $0x68] sm:$0xff] %vm7953, %v7788
  %7968 = vst.msk [vmem:[#allocation5 + $0x70] sm:$0xff] %vm7953, %v7790
  %7969 = vst.msk [vmem:[#allocation5 + $0x78] sm:$0xff] %vm7953, %v7792
  %7970 = vst.msk [vmem:[#allocation5 + $0x80] sm:$0xff] %vm7953, %v7794
  %7971 = vst.msk [vmem:[#allocation5 + $0x88] sm:$0xff] %vm7953, %v7796
  %7972 = vst.msk [vmem:[#allocation5 + $0x90] sm:$0xff] %vm7953, %v7798
  %7973 = vst.msk [vmem:[#allocation5 + $0x98] sm:$0xff] %vm7953, %v7800
  %7974 = vst.msk [vmem:[#allocation5 + $0xa0] sm:$0xff] %vm7953, %v7802
  %7975 = vst.msk [vmem:[#allocation5 + $0xa8] sm:$0xff] %vm7953, %v7804
  %7976 = vst.msk [vmem:[#allocation5 + $0xb0] sm:$0xff] %vm7953, %v7806
  %7977 = vst.msk [vmem:[#allocation5 + $0xb8] sm:$0xff] %vm7953, %v7808
  %7978 = vst.msk [vmem:[#allocation5 + $0xc0] sm:$0xff] %vm7953, %v7810
  %7979 = vst.msk [vmem:[#allocation5 + $0xc8] sm:$0xff] %vm7953, %v7812
  %7980 = vst.msk [vmem:[#allocation5 + $0xd0] sm:$0xff] %vm7953, %v7814
  %7981 = vst.msk [vmem:[#allocation5 + $0xd8] sm:$0xff] %vm7953, %v7816
  %7982 = vst.msk [vmem:[#allocation5 + $0xe0] sm:$0xff] %vm7953, %v7818
  %7983 = vst.msk [vmem:[#allocation5 + $0xe8] sm:$0xff] %vm7953, %v7820
  %7984 = vst.msk [vmem:[#allocation5 + $0xf0] sm:$0xff] %vm7953, %v7822
  %7985 = vst.msk [vmem:[#allocation5 + $0xf8] sm:$0xff] %vm7953, %v7824
  %7986 = vst.msk [vmem:[#allocation5 + $0x100] sm:$0xff] %vm7953, %v7826
  %7987 = vst.msk [vmem:[#allocation5 + $0x108] sm:$0xff] %vm7953, %v7828
  %7988 = vst.msk [vmem:[#allocation5 + $0x110] sm:$0xff] %vm7953, %v7830
  %7989 = vst.msk [vmem:[#allocation5 + $0x118] sm:$0xff] %vm7953, %v7832
  %7990 = vst.msk [vmem:[#allocation5 + $0x120] sm:$0xff] %vm7953, %v7834
  %7991 = vst.msk [vmem:[#allocation5 + $0x128] sm:$0xff] %vm7953, %v7836
  %7992 = vst.msk [vmem:[#allocation5 + $0x130] sm:$0xff] %vm7953, %v7838
  %7993 = vst.msk [vmem:[#allocation5 + $0x138] sm:$0xff] %vm7953, %v7840
  %7994 = vst.msk [vmem:[#allocation5 + $0x140] sm:$0xff] %vm7953, %v7842
  %7995 = vst.msk [vmem:[#allocation5 + $0x148] sm:$0xff] %vm7953, %v7844
  %7996 = vst.msk [vmem:[#allocation5 + $0x150] sm:$0xff] %vm7953, %v7846
  %7997 = vst.msk [vmem:[#allocation5 + $0x158] sm:$0xff] %vm7953, %v7848
  %7998 = vst.msk [vmem:[#allocation5 + $0x160] sm:$0xff] %vm7953, %v7850
  %7999 = vst.msk [vmem:[#allocation5 + $0x168] sm:$0xff] %vm7953, %v7852
  %8000 = vst.msk [vmem:[#allocation5 + $0x170] sm:$0xff] %vm7953, %v7854
  %8001 = vst.msk [vmem:[#allocation5 + $0x178] sm:$0xff] %vm7953, %v7856
  %8002 = vst.msk [vmem:[#allocation5 + $0x180] sm:$0xff] %vm7953, %v7858
  %8003 = vst.msk [vmem:[#allocation5 + $0x188] sm:$0xff] %vm7953, %v7860
  %8004 = vst.msk [vmem:[#allocation5 + $0x190] sm:$0xff] %vm7953, %v7862
  %8005 = vst.msk [vmem:[#allocation5 + $0x198] sm:$0xff] %vm7953, %v7864
  %8006 = vst.msk [vmem:[#allocation5 + $0x1a0] sm:$0xff] %vm7953, %v7866
  %8007 = vst.msk [vmem:[#allocation5 + $0x1a8] sm:$0xff] %vm7953, %v7868
  %8008 = vst.msk [vmem:[#allocation5 + $0x1b0] sm:$0xff] %vm7953, %v7870
  %8009 = vst.msk [vmem:[#allocation5 + $0x1b8] sm:$0xff] %vm7953, %v7872
  %8010 = vst.msk [vmem:[#allocation5 + $0x1c0] sm:$0xff] %vm7953, %v7874
  %8011 = vst.msk [vmem:[#allocation5 + $0x1c8] sm:$0xff] %vm7953, %v7876
  %8012 = vst.msk [vmem:[#allocation5 + $0x1d0] sm:$0xff] %vm7953, %v7878
  %8013 = vst.msk [vmem:[#allocation5 + $0x1d8] sm:$0xff] %vm7953, %v7880
  %8014 = vst.msk [vmem:[#allocation5 + $0x1e0] sm:$0xff] %vm7953, %v7882
  %8015 = vst.msk [vmem:[#allocation5 + $0x1e8] sm:$0xff] %vm7953, %v7884
  %8016 = vst.msk [vmem:[#allocation5 + $0x1f0] sm:$0xff] %vm7953, %v7886
  %8017 = vst.msk [vmem:[#allocation5 + $0x1f8] sm:$0xff] %vm7953, %v7888
  %v8018 = vld [vmem:[#allocation5] sm:$0xff]
  %v8019 = vld [vmem:[#allocation5 + $0x8] sm:$0xff]
  %v8020 = vld [vmem:[#allocation5 + $0x10] sm:$0xff]
  %v8021 = vld [vmem:[#allocation5 + $0x18] sm:$0xff]
  %v8022 = vld [vmem:[#allocation5 + $0x20] sm:$0xff]
  %v8023 = vld [vmem:[#allocation5 + $0x28] sm:$0xff]
  %v8024 = vld [vmem:[#allocation5 + $0x30] sm:$0xff]
  %v8025 = vld [vmem:[#allocation5 + $0x38] sm:$0xff]
  %v8026 = vld [vmem:[#allocation5 + $0x40] sm:$0xff]
  %v8027 = vld [vmem:[#allocation5 + $0x48] sm:$0xff]
  %v8028 = vld [vmem:[#allocation5 + $0x50] sm:$0xff]
  %v8029 = vld [vmem:[#allocation5 + $0x58] sm:$0xff]
  %v8030 = vld [vmem:[#allocation5 + $0x60] sm:$0xff]
  %v8031 = vld [vmem:[#allocation5 + $0x68] sm:$0xff]
  %v8032 = vld [vmem:[#allocation5 + $0x70] sm:$0xff]
  %v8033 = vld [vmem:[#allocation5 + $0x78] sm:$0xff]
  %v8034 = vld [vmem:[#allocation5 + $0x80] sm:$0xff]
  %v8035 = vld [vmem:[#allocation5 + $0x88] sm:$0xff]
  %v8036 = vld [vmem:[#allocation5 + $0x90] sm:$0xff]
  %v8037 = vld [vmem:[#allocation5 + $0x98] sm:$0xff]
  %v8038 = vld [vmem:[#allocation5 + $0xa0] sm:$0xff]
  %v8039 = vld [vmem:[#allocation5 + $0xa8] sm:$0xff]
  %v8040 = vld [vmem:[#allocation5 + $0xb0] sm:$0xff]
  %v8041 = vld [vmem:[#allocation5 + $0xb8] sm:$0xff]
  %v8042 = vld [vmem:[#allocation5 + $0xc0] sm:$0xff]
  %v8043 = vld [vmem:[#allocation5 + $0xc8] sm:$0xff]
  %v8044 = vld [vmem:[#allocation5 + $0xd0] sm:$0xff]
  %v8045 = vld [vmem:[#allocation5 + $0xd8] sm:$0xff]
  %v8046 = vld [vmem:[#allocation5 + $0xe0] sm:$0xff]
  %v8047 = vld [vmem:[#allocation5 + $0xe8] sm:$0xff]
  %v8048 = vld [vmem:[#allocation5 + $0xf0] sm:$0xff]
  %v8049 = vld [vmem:[#allocation5 + $0xf8] sm:$0xff]
  %v8050 = vld [vmem:[#allocation5 + $0x100] sm:$0xff]
  %v8051 = vld [vmem:[#allocation5 + $0x108] sm:$0xff]
  %v8052 = vld [vmem:[#allocation5 + $0x110] sm:$0xff]
  %v8053 = vld [vmem:[#allocation5 + $0x118] sm:$0xff]
  %v8054 = vld [vmem:[#allocation5 + $0x120] sm:$0xff]
  %v8055 = vld [vmem:[#allocation5 + $0x128] sm:$0xff]
  %v8056 = vld [vmem:[#allocation5 + $0x130] sm:$0xff]
  %v8057 = vld [vmem:[#allocation5 + $0x138] sm:$0xff]
  %v8058 = vld [vmem:[#allocation5 + $0x140] sm:$0xff]
  %v8059 = vld [vmem:[#allocation5 + $0x148] sm:$0xff]
  %v8060 = vld [vmem:[#allocation5 + $0x150] sm:$0xff]
  %v8061 = vld [vmem:[#allocation5 + $0x158] sm:$0xff]
  %v8062 = vld [vmem:[#allocation5 + $0x160] sm:$0xff]
  %v8063 = vld [vmem:[#allocation5 + $0x168] sm:$0xff]
  %v8064 = vld [vmem:[#allocation5 + $0x170] sm:$0xff]
  %v8065 = vld [vmem:[#allocation5 + $0x178] sm:$0xff]
  %v8066 = vld [vmem:[#allocation5 + $0x180] sm:$0xff]
  %v8067 = vld [vmem:[#allocation5 + $0x188] sm:$0xff]
  %v8068 = vld [vmem:[#allocation5 + $0x190] sm:$0xff]
  %v8069 = vld [vmem:[#allocation5 + $0x198] sm:$0xff]
  %v8070 = vld [vmem:[#allocation5 + $0x1a0] sm:$0xff]
  %v8071 = vld [vmem:[#allocation5 + $0x1a8] sm:$0xff]
  %v8072 = vld [vmem:[#allocation5 + $0x1b0] sm:$0xff]
  %v8073 = vld [vmem:[#allocation5 + $0x1b8] sm:$0xff]
  %v8074 = vld [vmem:[#allocation5 + $0x1c0] sm:$0xff]
  %v8075 = vld [vmem:[#allocation5 + $0x1c8] sm:$0xff]
  %v8076 = vld [vmem:[#allocation5 + $0x1d0] sm:$0xff]
  %v8077 = vld [vmem:[#allocation5 + $0x1d8] sm:$0xff]
  %v8078 = vld [vmem:[#allocation5 + $0x1e0] sm:$0xff]
  %v8079 = vld [vmem:[#allocation5 + $0x1e8] sm:$0xff]
  %v8080 = vld [vmem:[#allocation5 + $0x1f0] sm:$0xff]
  %v8081 = vld [vmem:[#allocation5 + $0x1f8] sm:$0xff]
  %v8082 = vld [vmem:[%s4] sm:$0xff]
  %v8083 = vld [vmem:[%s4 + $0x8] sm:$0xff]
  %v8084 = vld [vmem:[%s4 + $0x10] sm:$0xff]
  %v8085 = vld [vmem:[%s4 + $0x18] sm:$0xff]
  %v8086 = vld [vmem:[%s4 + $0x20] sm:$0xff]
  %v8087 = vld [vmem:[%s4 + $0x28] sm:$0xff]
  %v8088 = vld [vmem:[%s4 + $0x30] sm:$0xff]
  %v8089 = vld [vmem:[%s4 + $0x38] sm:$0xff]
  %v8090 = vld [vmem:[%s4 + $0x40] sm:$0xff]
  %vm8091 = vcmask 588800
  %v8093 = vsel %vm8091, %v8018, 0
  %v8096 = vsel %vm8091, %v8019, 0
  %v8099 = vsel %vm8091, %v8020, 0
  %v8102 = vsel %vm8091, %v8021, 0
  %v8105 = vsel %vm8091, %v8022, 0
  %v8108 = vsel %vm8091, %v8023, 0
  %v8111 = vsel %vm8091, %v8024, 0
  %v8114 = vsel %vm8091, %v8025, 0
  %v8117 = vsel %vm8091, %v8026, 0
  %v8120 = vsel %vm8091, %v8027, 0
  %v8123 = vsel %vm8091, %v8028, 0
  %v8126 = vsel %vm8091, %v8029, 0
  %v8129 = vsel %vm8091, %v8030, 0
  %v8132 = vsel %vm8091, %v8031, 0
  %v8135 = vsel %vm8091, %v8032, 0
  %v8138 = vsel %vm8091, %v8033, 0
  %v8141 = vsel %vm8091, %v8034, 0
  %v8144 = vsel %vm8091, %v8035, 0
  %v8147 = vsel %vm8091, %v8036, 0
  %v8150 = vsel %vm8091, %v8037, 0
  %v8153 = vsel %vm8091, %v8038, 0
  %v8156 = vsel %vm8091, %v8039, 0
  %v8159 = vsel %vm8091, %v8040, 0
  %v8162 = vsel %vm8091, %v8041, 0
  %v8165 = vsel %vm8091, %v8042, 0
  %v8168 = vsel %vm8091, %v8043, 0
  %v8171 = vsel %vm8091, %v8044, 0
  %v8174 = vsel %vm8091, %v8045, 0
  %v8177 = vsel %vm8091, %v8046, 0
  %v8180 = vsel %vm8091, %v8047, 0
  %v8183 = vsel %vm8091, %v8048, 0
  %v8186 = vsel %vm8091, %v8049, 0
  %v8189 = vsel %vm8091, %v8050, 0
  %v8192 = vsel %vm8091, %v8051, 0
  %v8195 = vsel %vm8091, %v8052, 0
  %v8198 = vsel %vm8091, %v8053, 0
  %v8201 = vsel %vm8091, %v8054, 0
  %v8204 = vsel %vm8091, %v8055, 0
  %v8207 = vsel %vm8091, %v8056, 0
  %v8210 = vsel %vm8091, %v8057, 0
  %v8213 = vsel %vm8091, %v8058, 0
  %v8216 = vsel %vm8091, %v8059, 0
  %v8219 = vsel %vm8091, %v8060, 0
  %v8222 = vsel %vm8091, %v8061, 0
  %v8225 = vsel %vm8091, %v8062, 0
  %v8228 = vsel %vm8091, %v8063, 0
  %v8231 = vsel %vm8091, %v8064, 0
  %v8234 = vsel %vm8091, %v8065, 0
  %v8237 = vsel %vm8091, %v8066, 0
  %v8240 = vsel %vm8091, %v8067, 0
  %v8243 = vsel %vm8091, %v8068, 0
  %v8246 = vsel %vm8091, %v8069, 0
  %v8249 = vsel %vm8091, %v8070, 0
  %v8252 = vsel %vm8091, %v8071, 0
  %v8255 = vsel %vm8091, %v8072, 0
  %v8258 = vsel %vm8091, %v8073, 0
  %v8261 = vsel %vm8091, %v8074, 0
  %v8264 = vsel %vm8091, %v8075, 0
  %v8267 = vsel %vm8091, %v8076, 0
  %v8270 = vsel %vm8091, %v8077, 0
  %v8273 = vsel %vm8091, %v8078, 0
  %v8276 = vsel %vm8091, %v8079, 0
  %v8279 = vsel %vm8091, %v8080, 0
  %v8282 = vsel %vm8091, %v8081, 0
  %8284 = vmatprep.subr.mxu0 0.0
  %8285 = vmatpush1.msra.mxu0 0.0
  %8286 = vmatprep.subr.mxu0 0.0
  %8287 = vmatpush1.msra.mxu0 0.0
  %8288 = vmatprep.subr.mxu0 0.0
  %8289 = vmatpush1.msra.mxu0 0.0
  %8290 = vmatprep.subr.mxu0 0.0
  %8291 = vmatpush1.msra.mxu0 0.0
  %8292 = vmatprep.subr.mxu0 0.0
  %8293 = vmatpush1.msra.mxu0 0.0
  %8294 = vmatprep.subr.mxu0 0.0
  %8295 = vmatpush1.msra.mxu0 0.0
  %8296 = vmatprep.subr.mxu0 0.0
  %8297 = vmatpush1.msra.mxu0 0.0
  %8298 = vmatprep.subr.mxu0 0.0
  %8299 = vmatpush1.msra.mxu0 %v8090
  %8300 = vmatprep.subr.mxu0 0.0
  %8301 = vmatpush1.msra.mxu0 %v8089
  %8302 = vmatprep.subr.mxu0 0.0
  %8303 = vmatpush1.msra.mxu0 %v8088
  %8304 = vmatprep.subr.mxu0 0.0
  %8305 = vmatpush1.msra.mxu0 %v8087
  %8306 = vmatprep.subr.mxu0 0.0
  %8307 = vmatpush1.msra.mxu0 %v8086
  %8308 = vmatprep.subr.mxu0 0.0
  %8309 = vmatpush1.msra.mxu0 %v8085
  %8310 = vmatprep.subr.mxu0 0.0
  %8311 = vmatpush1.msra.mxu0 %v8084
  %8312 = vmatprep.subr.mxu0 0.0
  %8313 = vmatpush1.msra.mxu0 %v8083
  %8314 = vmatprep.subr.mxu0 0.0
  %8315 = vmatpush1.msra.mxu0 %v8082
  %8316 = vmatprep.subr.mxu0 0.0
  %8317 = vmatpush2.msra.mxu0 0.0
  %8318 = vmatprep.subr.mxu0 0.0
  %8319 = vmatpush2.msra.mxu0 0.0
  %8320 = vmatprep.subr.mxu0 0.0
  %8321 = vmatpush2.msra.mxu0 0.0
  %8322 = vmatprep.subr.mxu0 0.0
  %8323 = vmatpush2.msra.mxu0 0.0
  %8324 = vmatprep.subr.mxu0 0.0
  %8325 = vmatpush2.msra.mxu0 0.0
  %8326 = vmatprep.subr.mxu0 0.0
  %8327 = vmatpush2.msra.mxu0 0.0
  %8328 = vmatprep.subr.mxu0 0.0
  %8329 = vmatpush2.msra.mxu0 0.0
  %8330 = vmatprep.subr.mxu0 0.0
  %8331 = vmatpush2.msra.mxu0 0.0
  %8332 = vmatprep.subr.mxu0 0.0
  %8333 = vmatpush2.msra.mxu0 0.0
  %8334 = vmatprep.subr.mxu0 0.0
  %8335 = vmatpush2.msra.mxu0 0.0
  %8336 = vmatprep.subr.mxu0 0.0
  %8337 = vmatpush2.msra.mxu0 0.0
  %8338 = vmatprep.subr.mxu0 0.0
  %8339 = vmatpush2.msra.mxu0 0.0
  %8340 = vmatprep.subr.mxu0 0.0
  %8341 = vmatpush2.msra.mxu0 0.0
  %8342 = vmatprep.subr.mxu0 0.0
  %8343 = vmatpush2.msra.mxu0 0.0
  %8344 = vmatprep.subr.mxu0 0.0
  %8345 = vmatpush2.msra.mxu0 0.0
  %8346 = vmatprep.subr.mxu0 0.0
  %8347 = vmatpush2.msra.mxu0 0.0
  %8348 = vmatprep.mubr.f32.mxu0 0.0
  %8349 = vmatmul.mubr.f32.gmra.mxu0 %v8093
  %v8350 = vpop.f32.mrf.mxu0
  %v8351 = vadd.f32 0.0, %v8350
  %v8352 = vpop.f32.mrf.mxu0
  %8353 = vmatprep.mubr.f32.mxu0 0.0
  %8354 = vmatmul.mubr.f32.gmra.mxu0 %v8096
  %v8355 = vpop.f32.mrf.mxu0
  %v8356 = vadd.f32 0.0, %v8355
  %v8357 = vpop.f32.mrf.mxu0
  %8358 = vmatprep.mubr.f32.mxu0 0.0
  %8359 = vmatmul.mubr.f32.gmra.mxu0 %v8099
  %v8360 = vpop.f32.mrf.mxu0
  %v8361 = vadd.f32 0.0, %v8360
  %v8362 = vpop.f32.mrf.mxu0
  %8363 = vmatprep.mubr.f32.mxu0 0.0
  %8364 = vmatmul.mubr.f32.gmra.mxu0 %v8102
  %v8365 = vpop.f32.mrf.mxu0
  %v8366 = vadd.f32 0.0, %v8365
  %v8367 = vpop.f32.mrf.mxu0
  %8368 = vmatprep.mubr.f32.mxu0 0.0
  %8369 = vmatmul.mubr.f32.gmra.mxu0 %v8105
  %v8370 = vpop.f32.mrf.mxu0
  %v8371 = vadd.f32 0.0, %v8370
  %v8372 = vpop.f32.mrf.mxu0
  %8373 = vmatprep.mubr.f32.mxu0 0.0
  %8374 = vmatmul.mubr.f32.gmra.mxu0 %v8108
  %v8375 = vpop.f32.mrf.mxu0
  %v8376 = vadd.f32 0.0, %v8375
  %v8377 = vpop.f32.mrf.mxu0
  %8378 = vmatprep.mubr.f32.mxu0 0.0
  %8379 = vmatmul.mubr.f32.gmra.mxu0 %v8111
  %v8380 = vpop.f32.mrf.mxu0
  %v8381 = vadd.f32 0.0, %v8380
  %v8382 = vpop.f32.mrf.mxu0
  %8383 = vmatprep.mubr.f32.mxu0 0.0
  %8384 = vmatmul.mubr.f32.gmra.mxu0 %v8114
  %v8385 = vpop.f32.mrf.mxu0
  %v8386 = vadd.f32 0.0, %v8385
  %v8387 = vpop.f32.mrf.mxu0
  %8388 = vmatprep.mubr.f32.mxu0 0.0
  %8389 = vmatmul.mubr.f32.gmra.mxu0 %v8117
  %v8390 = vpop.f32.mrf.mxu0
  %v8391 = vadd.f32 0.0, %v8390
  %v8392 = vpop.f32.mrf.mxu0
  %8393 = vmatprep.mubr.f32.mxu0 0.0
  %8394 = vmatmul.mubr.f32.gmra.mxu0 %v8120
  %v8395 = vpop.f32.mrf.mxu0
  %v8396 = vadd.f32 0.0, %v8395
  %v8397 = vpop.f32.mrf.mxu0
  %8398 = vmatprep.mubr.f32.mxu0 0.0
  %8399 = vmatmul.mubr.f32.gmra.mxu0 %v8123
  %v8400 = vpop.f32.mrf.mxu0
  %v8401 = vadd.f32 0.0, %v8400
  %v8402 = vpop.f32.mrf.mxu0
  %8403 = vmatprep.mubr.f32.mxu0 0.0
  %8404 = vmatmul.mubr.f32.gmra.mxu0 %v8126
  %v8405 = vpop.f32.mrf.mxu0
  %v8406 = vadd.f32 0.0, %v8405
  %v8407 = vpop.f32.mrf.mxu0
  %8408 = vmatprep.mubr.f32.mxu0 0.0
  %8409 = vmatmul.mubr.f32.gmra.mxu0 %v8129
  %v8410 = vpop.f32.mrf.mxu0
  %v8411 = vadd.f32 0.0, %v8410
  %v8412 = vpop.f32.mrf.mxu0
  %8413 = vmatprep.mubr.f32.mxu0 0.0
  %8414 = vmatmul.mubr.f32.gmra.mxu0 %v8132
  %v8415 = vpop.f32.mrf.mxu0
  %v8416 = vadd.f32 0.0, %v8415
  %v8417 = vpop.f32.mrf.mxu0
  %8418 = vmatprep.mubr.f32.mxu0 0.0
  %8419 = vmatmul.mubr.f32.gmra.mxu0 %v8135
  %v8420 = vpop.f32.mrf.mxu0
  %v8421 = vadd.f32 0.0, %v8420
  %v8422 = vpop.f32.mrf.mxu0
  %8423 = vmatprep.mubr.f32.mxu0 0.0
  %8424 = vmatmul.mubr.f32.gmra.mxu0 %v8138
  %v8425 = vpop.f32.mrf.mxu0
  %v8426 = vadd.f32 0.0, %v8425
  %v8427 = vpop.f32.mrf.mxu0
  %8428 = vmatprep.mubr.f32.mxu0 0.0
  %8429 = vmatmul.mubr.f32.gmra.mxu0 %v8141
  %v8430 = vpop.f32.mrf.mxu0
  %v8431 = vadd.f32 0.0, %v8430
  %v8432 = vpop.f32.mrf.mxu0
  %8433 = vmatprep.mubr.f32.mxu0 0.0
  %8434 = vmatmul.mubr.f32.gmra.mxu0 %v8144
  %v8435 = vpop.f32.mrf.mxu0
  %v8436 = vadd.f32 0.0, %v8435
  %v8437 = vpop.f32.mrf.mxu0
  %8438 = vmatprep.mubr.f32.mxu0 0.0
  %8439 = vmatmul.mubr.f32.gmra.mxu0 %v8147
  %v8440 = vpop.f32.mrf.mxu0
  %v8441 = vadd.f32 0.0, %v8440
  %v8442 = vpop.f32.mrf.mxu0
  %8443 = vmatprep.mubr.f32.mxu0 0.0
  %8444 = vmatmul.mubr.f32.gmra.mxu0 %v8150
  %v8445 = vpop.f32.mrf.mxu0
  %v8446 = vadd.f32 0.0, %v8445
  %v8447 = vpop.f32.mrf.mxu0
  %8448 = vmatprep.mubr.f32.mxu0 0.0
  %8449 = vmatmul.mubr.f32.gmra.mxu0 %v8153
  %v8450 = vpop.f32.mrf.mxu0
  %v8451 = vadd.f32 0.0, %v8450
  %v8452 = vpop.f32.mrf.mxu0
  %8453 = vmatprep.mubr.f32.mxu0 0.0
  %8454 = vmatmul.mubr.f32.gmra.mxu0 %v8156
  %v8455 = vpop.f32.mrf.mxu0
  %v8456 = vadd.f32 0.0, %v8455
  %v8457 = vpop.f32.mrf.mxu0
  %8458 = vmatprep.mubr.f32.mxu0 0.0
  %8459 = vmatmul.mubr.f32.gmra.mxu0 %v8159
  %v8460 = vpop.f32.mrf.mxu0
  %v8461 = vadd.f32 0.0, %v8460
  %v8462 = vpop.f32.mrf.mxu0
  %8463 = vmatprep.mubr.f32.mxu0 0.0
  %8464 = vmatmul.mubr.f32.gmra.mxu0 %v8162
  %v8465 = vpop.f32.mrf.mxu0
  %v8466 = vadd.f32 0.0, %v8465
  %v8467 = vpop.f32.mrf.mxu0
  %8468 = vmatprep.mubr.f32.mxu0 0.0
  %8469 = vmatmul.mubr.f32.gmra.mxu0 %v8165
  %v8470 = vpop.f32.mrf.mxu0
  %v8471 = vadd.f32 0.0, %v8470
  %v8472 = vpop.f32.mrf.mxu0
  %8473 = vmatprep.mubr.f32.mxu0 0.0
  %8474 = vmatmul.mubr.f32.gmra.mxu0 %v8168
  %v8475 = vpop.f32.mrf.mxu0
  %v8476 = vadd.f32 0.0, %v8475
  %v8477 = vpop.f32.mrf.mxu0
  %8478 = vmatprep.mubr.f32.mxu0 0.0
  %8479 = vmatmul.mubr.f32.gmra.mxu0 %v8171
  %v8480 = vpop.f32.mrf.mxu0
  %v8481 = vadd.f32 0.0, %v8480
  %v8482 = vpop.f32.mrf.mxu0
  %8483 = vmatprep.mubr.f32.mxu0 0.0
  %8484 = vmatmul.mubr.f32.gmra.mxu0 %v8174
  %v8485 = vpop.f32.mrf.mxu0
  %v8486 = vadd.f32 0.0, %v8485
  %v8487 = vpop.f32.mrf.mxu0
  %8488 = vmatprep.mubr.f32.mxu0 0.0
  %8489 = vmatmul.mubr.f32.gmra.mxu0 %v8177
  %v8490 = vpop.f32.mrf.mxu0
  %v8491 = vadd.f32 0.0, %v8490
  %v8492 = vpop.f32.mrf.mxu0
  %8493 = vmatprep.mubr.f32.mxu0 0.0
  %8494 = vmatmul.mubr.f32.gmra.mxu0 %v8180
  %v8495 = vpop.f32.mrf.mxu0
  %v8496 = vadd.f32 0.0, %v8495
  %v8497 = vpop.f32.mrf.mxu0
  %8498 = vmatprep.mubr.f32.mxu0 0.0
  %8499 = vmatmul.mubr.f32.gmra.mxu0 %v8183
  %v8500 = vpop.f32.mrf.mxu0
  %v8501 = vadd.f32 0.0, %v8500
  %v8502 = vpop.f32.mrf.mxu0
  %8503 = vmatprep.mubr.f32.mxu0 0.0
  %8504 = vmatmul.mubr.f32.gmra.mxu0 %v8186
  %v8505 = vpop.f32.mrf.mxu0
  %v8506 = vadd.f32 0.0, %v8505
  %v8507 = vpop.f32.mrf.mxu0
  %8508 = vmatprep.mubr.f32.mxu0 0.0
  %8509 = vmatmul.mubr.f32.gmra.mxu0 %v8189
  %v8510 = vpop.f32.mrf.mxu0
  %v8511 = vadd.f32 0.0, %v8510
  %v8512 = vpop.f32.mrf.mxu0
  %8513 = vmatprep.mubr.f32.mxu0 0.0
  %8514 = vmatmul.mubr.f32.gmra.mxu0 %v8192
  %v8515 = vpop.f32.mrf.mxu0
  %v8516 = vadd.f32 0.0, %v8515
  %v8517 = vpop.f32.mrf.mxu0
  %8518 = vmatprep.mubr.f32.mxu0 0.0
  %8519 = vmatmul.mubr.f32.gmra.mxu0 %v8195
  %v8520 = vpop.f32.mrf.mxu0
  %v8521 = vadd.f32 0.0, %v8520
  %v8522 = vpop.f32.mrf.mxu0
  %8523 = vmatprep.mubr.f32.mxu0 0.0
  %8524 = vmatmul.mubr.f32.gmra.mxu0 %v8198
  %v8525 = vpop.f32.mrf.mxu0
  %v8526 = vadd.f32 0.0, %v8525
  %v8527 = vpop.f32.mrf.mxu0
  %8528 = vmatprep.mubr.f32.mxu0 0.0
  %8529 = vmatmul.mubr.f32.gmra.mxu0 %v8201
  %v8530 = vpop.f32.mrf.mxu0
  %v8531 = vadd.f32 0.0, %v8530
  %v8532 = vpop.f32.mrf.mxu0
  %8533 = vmatprep.mubr.f32.mxu0 0.0
  %8534 = vmatmul.mubr.f32.gmra.mxu0 %v8204
  %v8535 = vpop.f32.mrf.mxu0
  %v8536 = vadd.f32 0.0, %v8535
  %v8537 = vpop.f32.mrf.mxu0
  %8538 = vmatprep.mubr.f32.mxu0 0.0
  %8539 = vmatmul.mubr.f32.gmra.mxu0 %v8207
  %v8540 = vpop.f32.mrf.mxu0
  %v8541 = vadd.f32 0.0, %v8540
  %v8542 = vpop.f32.mrf.mxu0
  %8543 = vmatprep.mubr.f32.mxu0 0.0
  %8544 = vmatmul.mubr.f32.gmra.mxu0 %v8210
  %v8545 = vpop.f32.mrf.mxu0
  %v8546 = vadd.f32 0.0, %v8545
  %v8547 = vpop.f32.mrf.mxu0
  %8548 = vmatprep.mubr.f32.mxu0 0.0
  %8549 = vmatmul.mubr.f32.gmra.mxu0 %v8213
  %v8550 = vpop.f32.mrf.mxu0
  %v8551 = vadd.f32 0.0, %v8550
  %v8552 = vpop.f32.mrf.mxu0
  %8553 = vmatprep.mubr.f32.mxu0 0.0
  %8554 = vmatmul.mubr.f32.gmra.mxu0 %v8216
  %v8555 = vpop.f32.mrf.mxu0
  %v8556 = vadd.f32 0.0, %v8555
  %v8557 = vpop.f32.mrf.mxu0
  %8558 = vmatprep.mubr.f32.mxu0 0.0
  %8559 = vmatmul.mubr.f32.gmra.mxu0 %v8219
  %v8560 = vpop.f32.mrf.mxu0
  %v8561 = vadd.f32 0.0, %v8560
  %v8562 = vpop.f32.mrf.mxu0
  %8563 = vmatprep.mubr.f32.mxu0 0.0
  %8564 = vmatmul.mubr.f32.gmra.mxu0 %v8222
  %v8565 = vpop.f32.mrf.mxu0
  %v8566 = vadd.f32 0.0, %v8565
  %v8567 = vpop.f32.mrf.mxu0
  %8568 = vmatprep.mubr.f32.mxu0 0.0
  %8569 = vmatmul.mubr.f32.gmra.mxu0 %v8225
  %v8570 = vpop.f32.mrf.mxu0
  %v8571 = vadd.f32 0.0, %v8570
  %v8572 = vpop.f32.mrf.mxu0
  %8573 = vmatprep.mubr.f32.mxu0 0.0
  %8574 = vmatmul.mubr.f32.gmra.mxu0 %v8228
  %v8575 = vpop.f32.mrf.mxu0
  %v8576 = vadd.f32 0.0, %v8575
  %v8577 = vpop.f32.mrf.mxu0
  %8578 = vmatprep.mubr.f32.mxu0 0.0
  %8579 = vmatmul.mubr.f32.gmra.mxu0 %v8231
  %v8580 = vpop.f32.mrf.mxu0
  %v8581 = vadd.f32 0.0, %v8580
  %v8582 = vpop.f32.mrf.mxu0
  %8583 = vmatprep.mubr.f32.mxu0 0.0
  %8584 = vmatmul.mubr.f32.gmra.mxu0 %v8234
  %v8585 = vpop.f32.mrf.mxu0
  %v8586 = vadd.f32 0.0, %v8585
  %v8587 = vpop.f32.mrf.mxu0
  %8588 = vmatprep.mubr.f32.mxu0 0.0
  %8589 = vmatmul.mubr.f32.gmra.mxu0 %v8237
  %v8590 = vpop.f32.mrf.mxu0
  %v8591 = vadd.f32 0.0, %v8590
  %v8592 = vpop.f32.mrf.mxu0
  %8593 = vmatprep.mubr.f32.mxu0 0.0
  %8594 = vmatmul.mubr.f32.gmra.mxu0 %v8240
  %v8595 = vpop.f32.mrf.mxu0
  %v8596 = vadd.f32 0.0, %v8595
  %v8597 = vpop.f32.mrf.mxu0
  %8598 = vmatprep.mubr.f32.mxu0 0.0
  %8599 = vmatmul.mubr.f32.gmra.mxu0 %v8243
  %v8600 = vpop.f32.mrf.mxu0
  %v8601 = vadd.f32 0.0, %v8600
  %v8602 = vpop.f32.mrf.mxu0
  %8603 = vmatprep.mubr.f32.mxu0 0.0
  %8604 = vmatmul.mubr.f32.gmra.mxu0 %v8246
  %v8605 = vpop.f32.mrf.mxu0
  %v8606 = vadd.f32 0.0, %v8605
  %v8607 = vpop.f32.mrf.mxu0
  %8608 = vmatprep.mubr.f32.mxu0 0.0
  %8609 = vmatmul.mubr.f32.gmra.mxu0 %v8249
  %v8610 = vpop.f32.mrf.mxu0
  %v8611 = vadd.f32 0.0, %v8610
  %v8612 = vpop.f32.mrf.mxu0
  %8613 = vmatprep.mubr.f32.mxu0 0.0
  %8614 = vmatmul.mubr.f32.gmra.mxu0 %v8252
  %v8615 = vpop.f32.mrf.mxu0
  %v8616 = vadd.f32 0.0, %v8615
  %v8617 = vpop.f32.mrf.mxu0
  %8618 = vmatprep.mubr.f32.mxu0 0.0
  %8619 = vmatmul.mubr.f32.gmra.mxu0 %v8255
  %v8620 = vpop.f32.mrf.mxu0
  %v8621 = vadd.f32 0.0, %v8620
  %v8622 = vpop.f32.mrf.mxu0
  %8623 = vmatprep.mubr.f32.mxu0 0.0
  %8624 = vmatmul.mubr.f32.gmra.mxu0 %v8258
  %v8625 = vpop.f32.mrf.mxu0
  %v8626 = vadd.f32 0.0, %v8625
  %v8627 = vpop.f32.mrf.mxu0
  %8628 = vmatprep.mubr.f32.mxu0 0.0
  %8629 = vmatmul.mubr.f32.gmra.mxu0 %v8261
  %v8630 = vpop.f32.mrf.mxu0
  %v8631 = vadd.f32 0.0, %v8630
  %v8632 = vpop.f32.mrf.mxu0
  %8633 = vmatprep.mubr.f32.mxu0 0.0
  %8634 = vmatmul.mubr.f32.gmra.mxu0 %v8264
  %v8635 = vpop.f32.mrf.mxu0
  %v8636 = vadd.f32 0.0, %v8635
  %v8637 = vpop.f32.mrf.mxu0
  %8638 = vmatprep.mubr.f32.mxu0 0.0
  %8639 = vmatmul.mubr.f32.gmra.mxu0 %v8267
  %v8640 = vpop.f32.mrf.mxu0
  %v8641 = vadd.f32 0.0, %v8640
  %v8642 = vpop.f32.mrf.mxu0
  %8643 = vmatprep.mubr.f32.mxu0 0.0
  %8644 = vmatmul.mubr.f32.gmra.mxu0 %v8270
  %v8645 = vpop.f32.mrf.mxu0
  %v8646 = vadd.f32 0.0, %v8645
  %v8647 = vpop.f32.mrf.mxu0
  %8648 = vmatprep.mubr.f32.mxu0 0.0
  %8649 = vmatmul.mubr.f32.gmra.mxu0 %v8273
  %v8650 = vpop.f32.mrf.mxu0
  %v8651 = vadd.f32 0.0, %v8650
  %v8652 = vpop.f32.mrf.mxu0
  %8653 = vmatprep.mubr.f32.mxu0 0.0
  %8654 = vmatmul.mubr.f32.gmra.mxu0 %v8276
  %v8655 = vpop.f32.mrf.mxu0
  %v8656 = vadd.f32 0.0, %v8655
  %v8657 = vpop.f32.mrf.mxu0
  %8658 = vmatprep.mubr.f32.mxu0 0.0
  %8659 = vmatmul.mubr.f32.gmra.mxu0 %v8279
  %v8660 = vpop.f32.mrf.mxu0
  %v8661 = vadd.f32 0.0, %v8660
  %v8662 = vpop.f32.mrf.mxu0
  %8663 = vmatprep.mubr.f32.mxu0 0.0
  %8664 = vmatmul.mubr.f32.gmra.mxu0 %v8282
  %v8665 = vpop.f32.mrf.mxu0
  %v8666 = vadd.f32 0.0, %v8665
  %v8667 = vpop.f32.mrf.mxu0
  %8668 = vdwg.mxu0
  %v8669 = vsel %vm4111, %v8351, 0.0
  %v8670 = vsel %vm4111, %v8356, 0.0
  %v8671 = vadd.f32 %v8669, %v8670
  %v8672 = vsel %vm4111, %v8361, 0.0
  %v8673 = vadd.f32 %v8671, %v8672
  %v8674 = vsel %vm4111, %v8366, 0.0
  %v8675 = vadd.f32 %v8673, %v8674
  %v8676 = vsel %vm4111, %v8371, 0.0
  %v8677 = vadd.f32 %v8675, %v8676
  %v8678 = vsel %vm4111, %v8376, 0.0
  %v8679 = vadd.f32 %v8677, %v8678
  %v8680 = vsel %vm4111, %v8381, 0.0
  %v8681 = vadd.f32 %v8679, %v8680
  %v8682 = vsel %vm4111, %v8386, 0.0
  %v8683 = vadd.f32 %v8681, %v8682
  %v8684 = vsel %vm4111, %v8391, 0.0
  %v8685 = vadd.f32 %v8683, %v8684
  %v8686 = vsel %vm4111, %v8396, 0.0
  %v8687 = vadd.f32 %v8685, %v8686
  %v8688 = vsel %vm4111, %v8401, 0.0
  %v8689 = vadd.f32 %v8687, %v8688
  %v8690 = vsel %vm4111, %v8406, 0.0
  %v8691 = vadd.f32 %v8689, %v8690
  %v8692 = vsel %vm4111, %v8411, 0.0
  %v8693 = vadd.f32 %v8691, %v8692
  %v8694 = vsel %vm4111, %v8416, 0.0
  %v8695 = vadd.f32 %v8693, %v8694
  %v8696 = vsel %vm4111, %v8421, 0.0
  %v8697 = vadd.f32 %v8695, %v8696
  %v8698 = vsel %vm4111, %v8426, 0.0
  %v8699 = vadd.f32 %v8697, %v8698
  %v8700 = vsel %vm4111, %v8431, 0.0
  %v8701 = vadd.f32 %v8699, %v8700
  %v8702 = vsel %vm4111, %v8436, 0.0
  %v8703 = vadd.f32 %v8701, %v8702
  %v8704 = vsel %vm4111, %v8441, 0.0
  %v8705 = vadd.f32 %v8703, %v8704
  %v8706 = vsel %vm4111, %v8446, 0.0
  %v8707 = vadd.f32 %v8705, %v8706
  %v8708 = vsel %vm4111, %v8451, 0.0
  %v8709 = vadd.f32 %v8707, %v8708
  %v8710 = vsel %vm4111, %v8456, 0.0
  %v8711 = vadd.f32 %v8709, %v8710
  %v8712 = vsel %vm4111, %v8461, 0.0
  %v8713 = vadd.f32 %v8711, %v8712
  %v8714 = vsel %vm4111, %v8466, 0.0
  %v8715 = vadd.f32 %v8713, %v8714
  %v8716 = vsel %vm4111, %v8471, 0.0
  %v8717 = vadd.f32 %v8715, %v8716
  %v8718 = vsel %vm4111, %v8476, 0.0
  %v8719 = vadd.f32 %v8717, %v8718
  %v8720 = vsel %vm4111, %v8481, 0.0
  %v8721 = vadd.f32 %v8719, %v8720
  %v8722 = vsel %vm4111, %v8486, 0.0
  %v8723 = vadd.f32 %v8721, %v8722
  %v8724 = vsel %vm4111, %v8491, 0.0
  %v8725 = vadd.f32 %v8723, %v8724
  %v8726 = vsel %vm4111, %v8496, 0.0
  %v8727 = vadd.f32 %v8725, %v8726
  %v8728 = vsel %vm4111, %v8501, 0.0
  %v8729 = vadd.f32 %v8727, %v8728
  %v8730 = vsel %vm4111, %v8506, 0.0
  %v8731 = vadd.f32 %v8729, %v8730
  %v8732 = vsel %vm4111, %v8511, 0.0
  %v8733 = vadd.f32 %v8731, %v8732
  %v8734 = vsel %vm4111, %v8516, 0.0
  %v8735 = vadd.f32 %v8733, %v8734
  %v8736 = vsel %vm4111, %v8521, 0.0
  %v8737 = vadd.f32 %v8735, %v8736
  %v8738 = vsel %vm4111, %v8526, 0.0
  %v8739 = vadd.f32 %v8737, %v8738
  %v8740 = vsel %vm4111, %v8531, 0.0
  %v8741 = vadd.f32 %v8739, %v8740
  %v8742 = vsel %vm4111, %v8536, 0.0
  %v8743 = vadd.f32 %v8741, %v8742
  %v8744 = vsel %vm4111, %v8541, 0.0
  %v8745 = vadd.f32 %v8743, %v8744
  %v8746 = vsel %vm4111, %v8546, 0.0
  %v8747 = vadd.f32 %v8745, %v8746
  %v8748 = vsel %vm4111, %v8551, 0.0
  %v8749 = vadd.f32 %v8747, %v8748
  %v8750 = vsel %vm4111, %v8556, 0.0
  %v8751 = vadd.f32 %v8749, %v8750
  %v8752 = vsel %vm4111, %v8561, 0.0
  %v8753 = vadd.f32 %v8751, %v8752
  %v8754 = vsel %vm4111, %v8566, 0.0
  %v8755 = vadd.f32 %v8753, %v8754
  %v8756 = vsel %vm4111, %v8571, 0.0
  %v8757 = vadd.f32 %v8755, %v8756
  %v8758 = vsel %vm4111, %v8576, 0.0
  %v8759 = vadd.f32 %v8757, %v8758
  %v8760 = vsel %vm4111, %v8581, 0.0
  %v8761 = vadd.f32 %v8759, %v8760
  %v8762 = vsel %vm4111, %v8586, 0.0
  %v8763 = vadd.f32 %v8761, %v8762
  %v8764 = vsel %vm4111, %v8591, 0.0
  %v8765 = vadd.f32 %v8763, %v8764
  %v8766 = vsel %vm4111, %v8596, 0.0
  %v8767 = vadd.f32 %v8765, %v8766
  %v8768 = vsel %vm4111, %v8601, 0.0
  %v8769 = vadd.f32 %v8767, %v8768
  %v8770 = vsel %vm4111, %v8606, 0.0
  %v8771 = vadd.f32 %v8769, %v8770
  %v8772 = vsel %vm4111, %v8611, 0.0
  %v8773 = vadd.f32 %v8771, %v8772
  %v8774 = vsel %vm4111, %v8616, 0.0
  %v8775 = vadd.f32 %v8773, %v8774
  %v8776 = vsel %vm4111, %v8621, 0.0
  %v8777 = vadd.f32 %v8775, %v8776
  %v8778 = vsel %vm4111, %v8626, 0.0
  %v8779 = vadd.f32 %v8777, %v8778
  %v8780 = vsel %vm4111, %v8631, 0.0
  %v8781 = vadd.f32 %v8779, %v8780
  %v8782 = vsel %vm4111, %v8636, 0.0
  %v8783 = vadd.f32 %v8781, %v8782
  %v8784 = vsel %vm4111, %v8641, 0.0
  %v8785 = vadd.f32 %v8783, %v8784
  %v8786 = vsel %vm4111, %v8646, 0.0
  %v8787 = vadd.f32 %v8785, %v8786
  %v8788 = vsel %vm4111, %v8651, 0.0
  %v8789 = vadd.f32 %v8787, %v8788
  %v8790 = vsel %vm4111, %v8656, 0.0
  %v8791 = vadd.f32 %v8789, %v8790
  %v8792 = vsel %vm4111, %v8661, 0.0
  %v8793 = vadd.f32 %v8791, %v8792
  %v8794 = vsel %vm4111, %v8666, 0.0
  %v8795 = vadd.f32 %v8793, %v8794
  %v8796 = vrot.slane %v8795, 4
  %v8797 = vadd.f32 %v8795, %v8796
  %v8798 = vrot.slane %v8797, 2
  %v8799 = vadd.f32 %v8797, %v8798
  %v8800 = vrot.slane %v8799, 1
  %v8801 = vadd.f32 %v8799, %v8800
  %v8802 = vmul.f32 %v8351, %v8351
  %v8803 = vmul.f32 %v8356, %v8356
  %v8804 = vmul.f32 %v8361, %v8361
  %v8805 = vmul.f32 %v8366, %v8366
  %v8806 = vmul.f32 %v8371, %v8371
  %v8807 = vmul.f32 %v8376, %v8376
  %v8808 = vmul.f32 %v8381, %v8381
  %v8809 = vmul.f32 %v8386, %v8386
  %v8810 = vmul.f32 %v8391, %v8391
  %v8811 = vmul.f32 %v8396, %v8396
  %v8812 = vmul.f32 %v8401, %v8401
  %v8813 = vmul.f32 %v8406, %v8406
  %v8814 = vmul.f32 %v8411, %v8411
  %v8815 = vmul.f32 %v8416, %v8416
  %v8816 = vmul.f32 %v8421, %v8421
  %v8817 = vmul.f32 %v8426, %v8426
  %v8818 = vmul.f32 %v8431, %v8431
  %v8819 = vmul.f32 %v8436, %v8436
  %v8820 = vmul.f32 %v8441, %v8441
  %v8821 = vmul.f32 %v8446, %v8446
  %v8822 = vmul.f32 %v8451, %v8451
  %v8823 = vmul.f32 %v8456, %v8456
  %v8824 = vmul.f32 %v8461, %v8461
  %v8825 = vmul.f32 %v8466, %v8466
  %v8826 = vmul.f32 %v8471, %v8471
  %v8827 = vmul.f32 %v8476, %v8476
  %v8828 = vmul.f32 %v8481, %v8481
  %v8829 = vmul.f32 %v8486, %v8486
  %v8830 = vmul.f32 %v8491, %v8491
  %v8831 = vmul.f32 %v8496, %v8496
  %v8832 = vmul.f32 %v8501, %v8501
  %v8833 = vmul.f32 %v8506, %v8506
  %v8834 = vmul.f32 %v8511, %v8511
  %v8835 = vmul.f32 %v8516, %v8516
  %v8836 = vmul.f32 %v8521, %v8521
  %v8837 = vmul.f32 %v8526, %v8526
  %v8838 = vmul.f32 %v8531, %v8531
  %v8839 = vmul.f32 %v8536, %v8536
  %v8840 = vmul.f32 %v8541, %v8541
  %v8841 = vmul.f32 %v8546, %v8546
  %v8842 = vmul.f32 %v8551, %v8551
  %v8843 = vmul.f32 %v8556, %v8556
  %v8844 = vmul.f32 %v8561, %v8561
  %v8845 = vmul.f32 %v8566, %v8566
  %v8846 = vmul.f32 %v8571, %v8571
  %v8847 = vmul.f32 %v8576, %v8576
  %v8848 = vmul.f32 %v8581, %v8581
  %v8849 = vmul.f32 %v8586, %v8586
  %v8850 = vmul.f32 %v8591, %v8591
  %v8851 = vmul.f32 %v8596, %v8596
  %v8852 = vmul.f32 %v8601, %v8601
  %v8853 = vmul.f32 %v8606, %v8606
  %v8854 = vmul.f32 %v8611, %v8611
  %v8855 = vmul.f32 %v8616, %v8616
  %v8856 = vmul.f32 %v8621, %v8621
  %v8857 = vmul.f32 %v8626, %v8626
  %v8858 = vmul.f32 %v8631, %v8631
  %v8859 = vmul.f32 %v8636, %v8636
  %v8860 = vmul.f32 %v8641, %v8641
  %v8861 = vmul.f32 %v8646, %v8646
  %v8862 = vmul.f32 %v8651, %v8651
  %v8863 = vmul.f32 %v8656, %v8656
  %v8864 = vmul.f32 %v8661, %v8661
  %v8865 = vmul.f32 %v8666, %v8666
  %v8866 = vsel %vm4111, %v8802, 0.0
  %v8867 = vsel %vm4111, %v8803, 0.0
  %v8868 = vadd.f32 %v8866, %v8867
  %v8869 = vsel %vm4111, %v8804, 0.0
  %v8870 = vadd.f32 %v8868, %v8869
  %v8871 = vsel %vm4111, %v8805, 0.0
  %v8872 = vadd.f32 %v8870, %v8871
  %v8873 = vsel %vm4111, %v8806, 0.0
  %v8874 = vadd.f32 %v8872, %v8873
  %v8875 = vsel %vm4111, %v8807, 0.0
  %v8876 = vadd.f32 %v8874, %v8875
  %v8877 = vsel %vm4111, %v8808, 0.0
  %v8878 = vadd.f32 %v8876, %v8877
  %v8879 = vsel %vm4111, %v8809, 0.0
  %v8880 = vadd.f32 %v8878, %v8879
  %v8881 = vsel %vm4111, %v8810, 0.0
  %v8882 = vadd.f32 %v8880, %v8881
  %v8883 = vsel %vm4111, %v8811, 0.0
  %v8884 = vadd.f32 %v8882, %v8883
  %v8885 = vsel %vm4111, %v8812, 0.0
  %v8886 = vadd.f32 %v8884, %v8885
  %v8887 = vsel %vm4111, %v8813, 0.0
  %v8888 = vadd.f32 %v8886, %v8887
  %v8889 = vsel %vm4111, %v8814, 0.0
  %v8890 = vadd.f32 %v8888, %v8889
  %v8891 = vsel %vm4111, %v8815, 0.0
  %v8892 = vadd.f32 %v8890, %v8891
  %v8893 = vsel %vm4111, %v8816, 0.0
  %v8894 = vadd.f32 %v8892, %v8893
  %v8895 = vsel %vm4111, %v8817, 0.0
  %v8896 = vadd.f32 %v8894, %v8895
  %v8897 = vsel %vm4111, %v8818, 0.0
  %v8898 = vadd.f32 %v8896, %v8897
  %v8899 = vsel %vm4111, %v8819, 0.0
  %v8900 = vadd.f32 %v8898, %v8899
  %v8901 = vsel %vm4111, %v8820, 0.0
  %v8902 = vadd.f32 %v8900, %v8901
  %v8903 = vsel %vm4111, %v8821, 0.0
  %v8904 = vadd.f32 %v8902, %v8903
  %v8905 = vsel %vm4111, %v8822, 0.0
  %v8906 = vadd.f32 %v8904, %v8905
  %v8907 = vsel %vm4111, %v8823, 0.0
  %v8908 = vadd.f32 %v8906, %v8907
  %v8909 = vsel %vm4111, %v8824, 0.0
  %v8910 = vadd.f32 %v8908, %v8909
  %v8911 = vsel %vm4111, %v8825, 0.0
  %v8912 = vadd.f32 %v8910, %v8911
  %v8913 = vsel %vm4111, %v8826, 0.0
  %v8914 = vadd.f32 %v8912, %v8913
  %v8915 = vsel %vm4111, %v8827, 0.0
  %v8916 = vadd.f32 %v8914, %v8915
  %v8917 = vsel %vm4111, %v8828, 0.0
  %v8918 = vadd.f32 %v8916, %v8917
  %v8919 = vsel %vm4111, %v8829, 0.0
  %v8920 = vadd.f32 %v8918, %v8919
  %v8921 = vsel %vm4111, %v8830, 0.0
  %v8922 = vadd.f32 %v8920, %v8921
  %v8923 = vsel %vm4111, %v8831, 0.0
  %v8924 = vadd.f32 %v8922, %v8923
  %v8925 = vsel %vm4111, %v8832, 0.0
  %v8926 = vadd.f32 %v8924, %v8925
  %v8927 = vsel %vm4111, %v8833, 0.0
  %v8928 = vadd.f32 %v8926, %v8927
  %v8929 = vsel %vm4111, %v8834, 0.0
  %v8930 = vadd.f32 %v8928, %v8929
  %v8931 = vsel %vm4111, %v8835, 0.0
  %v8932 = vadd.f32 %v8930, %v8931
  %v8933 = vsel %vm4111, %v8836, 0.0
  %v8934 = vadd.f32 %v8932, %v8933
  %v8935 = vsel %vm4111, %v8837, 0.0
  %v8936 = vadd.f32 %v8934, %v8935
  %v8937 = vsel %vm4111, %v8838, 0.0
  %v8938 = vadd.f32 %v8936, %v8937
  %v8939 = vsel %vm4111, %v8839, 0.0
  %v8940 = vadd.f32 %v8938, %v8939
  %v8941 = vsel %vm4111, %v8840, 0.0
  %v8942 = vadd.f32 %v8940, %v8941
  %v8943 = vsel %vm4111, %v8841, 0.0
  %v8944 = vadd.f32 %v8942, %v8943
  %v8945 = vsel %vm4111, %v8842, 0.0
  %v8946 = vadd.f32 %v8944, %v8945
  %v8947 = vsel %vm4111, %v8843, 0.0
  %v8948 = vadd.f32 %v8946, %v8947
  %v8949 = vsel %vm4111, %v8844, 0.0
  %v8950 = vadd.f32 %v8948, %v8949
  %v8951 = vsel %vm4111, %v8845, 0.0
  %v8952 = vadd.f32 %v8950, %v8951
  %v8953 = vsel %vm4111, %v8846, 0.0
  %v8954 = vadd.f32 %v8952, %v8953
  %v8955 = vsel %vm4111, %v8847, 0.0
  %v8956 = vadd.f32 %v8954, %v8955
  %v8957 = vsel %vm4111, %v8848, 0.0
  %v8958 = vadd.f32 %v8956, %v8957
  %v8959 = vsel %vm4111, %v8849, 0.0
  %v8960 = vadd.f32 %v8958, %v8959
  %v8961 = vsel %vm4111, %v8850, 0.0
  %v8962 = vadd.f32 %v8960, %v8961
  %v8963 = vsel %vm4111, %v8851, 0.0
  %v8964 = vadd.f32 %v8962, %v8963
  %v8965 = vsel %vm4111, %v8852, 0.0
  %v8966 = vadd.f32 %v8964, %v8965
  %v8967 = vsel %vm4111, %v8853, 0.0
  %v8968 = vadd.f32 %v8966, %v8967
  %v8969 = vsel %vm4111, %v8854, 0.0
  %v8970 = vadd.f32 %v8968, %v8969
  %v8971 = vsel %vm4111, %v8855, 0.0
  %v8972 = vadd.f32 %v8970, %v8971
  %v8973 = vsel %vm4111, %v8856, 0.0
  %v8974 = vadd.f32 %v8972, %v8973
  %v8975 = vsel %vm4111, %v8857, 0.0
  %v8976 = vadd.f32 %v8974, %v8975
  %v8977 = vsel %vm4111, %v8858, 0.0
  %v8978 = vadd.f32 %v8976, %v8977
  %v8979 = vsel %vm4111, %v8859, 0.0
  %v8980 = vadd.f32 %v8978, %v8979
  %v8981 = vsel %vm4111, %v8860, 0.0
  %v8982 = vadd.f32 %v8980, %v8981
  %v8983 = vsel %vm4111, %v8861, 0.0
  %v8984 = vadd.f32 %v8982, %v8983
  %v8985 = vsel %vm4111, %v8862, 0.0
  %v8986 = vadd.f32 %v8984, %v8985
  %v8987 = vsel %vm4111, %v8863, 0.0
  %v8988 = vadd.f32 %v8986, %v8987
  %v8989 = vsel %vm4111, %v8864, 0.0
  %v8990 = vadd.f32 %v8988, %v8989
  %v8991 = vsel %vm4111, %v8865, 0.0
  %v8992 = vadd.f32 %v8990, %v8991
  %v8993 = vrot.slane %v8992, 4
  %v8994 = vadd.f32 %v8992, %v8993
  %v8995 = vrot.slane %v8994, 2
  %v8996 = vadd.f32 %v8994, %v8995
  %v8997 = vrot.slane %v8996, 1
  %v8998 = vadd.f32 %v8996, %v8997
  %v8999 = vmul.f32 %v8801, 0.001953125
  %v9000 = vmul.f32 %v8998, 0.001953125
  %v9001 = vmul.f32 %v8999, %v8999
  %v9002 = vsub.f32 %v9000, %v9001
  %v9003 = vld [vmem:[%s5] sm:$0x1]
  %v9004 = vadd.f32 %v9002, 1e-05
  %v9005 = vrsqrt.pop %v9004
  %v9006 = vmul.f32 %v9003, %v9005
  %v9007 = vld [vmem:[%s6] sm:$0x1]
  %v9008 = vmul.f32 %v8999, %v9006
  %v9009 = vsub.f32 %v9007, %v9008
  %v9011 = vlaneseq
  %v9012 = vshrl.u32 %v9011, 7
  %v9013 = vsub.s32 0, %v9012
  %v9014 = vrot.slane %v9006, %v9013
  %v9016 = vmul.f32 %v8351, %v9014
  %v9017 = vmul.f32 %v8356, %v9014
  %v9018 = vmul.f32 %v8361, %v9014
  %v9019 = vmul.f32 %v8366, %v9014
  %v9020 = vmul.f32 %v8371, %v9014
  %v9021 = vmul.f32 %v8376, %v9014
  %v9022 = vmul.f32 %v8381, %v9014
  %v9023 = vmul.f32 %v8386, %v9014
  %v9024 = vmul.f32 %v8391, %v9014
  %v9025 = vmul.f32 %v8396, %v9014
  %v9026 = vmul.f32 %v8401, %v9014
  %v9027 = vmul.f32 %v8406, %v9014
  %v9028 = vmul.f32 %v8411, %v9014
  %v9029 = vmul.f32 %v8416, %v9014
  %v9030 = vmul.f32 %v8421, %v9014
  %v9031 = vmul.f32 %v8426, %v9014
  %v9032 = vmul.f32 %v8431, %v9014
  %v9033 = vmul.f32 %v8436, %v9014
  %v9034 = vmul.f32 %v8441, %v9014
  %v9035 = vmul.f32 %v8446, %v9014
  %v9036 = vmul.f32 %v8451, %v9014
  %v9037 = vmul.f32 %v8456, %v9014
  %v9038 = vmul.f32 %v8461, %v9014
  %v9039 = vmul.f32 %v8466, %v9014
  %v9040 = vmul.f32 %v8471, %v9014
  %v9041 = vmul.f32 %v8476, %v9014
  %v9042 = vmul.f32 %v8481, %v9014
  %v9043 = vmul.f32 %v8486, %v9014
  %v9044 = vmul.f32 %v8491, %v9014
  %v9045 = vmul.f32 %v8496, %v9014
  %v9046 = vmul.f32 %v8501, %v9014
  %v9047 = vmul.f32 %v8506, %v9014
  %v9048 = vmul.f32 %v8511, %v9014
  %v9049 = vmul.f32 %v8516, %v9014
  %v9050 = vmul.f32 %v8521, %v9014
  %v9051 = vmul.f32 %v8526, %v9014
  %v9052 = vmul.f32 %v8531, %v9014
  %v9053 = vmul.f32 %v8536, %v9014
  %v9054 = vmul.f32 %v8541, %v9014
  %v9055 = vmul.f32 %v8546, %v9014
  %v9056 = vmul.f32 %v8551, %v9014
  %v9057 = vmul.f32 %v8556, %v9014
  %v9058 = vmul.f32 %v8561, %v9014
  %v9059 = vmul.f32 %v8566, %v9014
  %v9060 = vmul.f32 %v8571, %v9014
  %v9061 = vmul.f32 %v8576, %v9014
  %v9062 = vmul.f32 %v8581, %v9014
  %v9063 = vmul.f32 %v8586, %v9014
  %v9064 = vmul.f32 %v8591, %v9014
  %v9065 = vmul.f32 %v8596, %v9014
  %v9066 = vmul.f32 %v8601, %v9014
  %v9067 = vmul.f32 %v8606, %v9014
  %v9068 = vmul.f32 %v8611, %v9014
  %v9069 = vmul.f32 %v8616, %v9014
  %v9070 = vmul.f32 %v8621, %v9014
  %v9071 = vmul.f32 %v8626, %v9014
  %v9072 = vmul.f32 %v8631, %v9014
  %v9073 = vmul.f32 %v8636, %v9014
  %v9074 = vmul.f32 %v8641, %v9014
  %v9075 = vmul.f32 %v8646, %v9014
  %v9076 = vmul.f32 %v8651, %v9014
  %v9077 = vmul.f32 %v8656, %v9014
  %v9078 = vmul.f32 %v8661, %v9014
  %v9079 = vmul.f32 %v8666, %v9014
  %v9081 = vlaneseq
  %v9082 = vshrl.u32 %v9081, 7
  %v9083 = vsub.s32 0, %v9082
  %v9084 = vrot.slane %v9009, %v9083
  %v9086 = vadd.f32 %v9016, %v9084
  %v9087 = vadd.f32 %v9017, %v9084
  %v9088 = vadd.f32 %v9018, %v9084
  %v9089 = vadd.f32 %v9019, %v9084
  %v9090 = vadd.f32 %v9020, %v9084
  %v9091 = vadd.f32 %v9021, %v9084
  %v9092 = vadd.f32 %v9022, %v9084
  %v9093 = vadd.f32 %v9023, %v9084
  %v9094 = vadd.f32 %v9024, %v9084
  %v9095 = vadd.f32 %v9025, %v9084
  %v9096 = vadd.f32 %v9026, %v9084
  %v9097 = vadd.f32 %v9027, %v9084
  %v9098 = vadd.f32 %v9028, %v9084
  %v9099 = vadd.f32 %v9029, %v9084
  %v9100 = vadd.f32 %v9030, %v9084
  %v9101 = vadd.f32 %v9031, %v9084
  %v9102 = vadd.f32 %v9032, %v9084
  %v9103 = vadd.f32 %v9033, %v9084
  %v9104 = vadd.f32 %v9034, %v9084
  %v9105 = vadd.f32 %v9035, %v9084
  %v9106 = vadd.f32 %v9036, %v9084
  %v9107 = vadd.f32 %v9037, %v9084
  %v9108 = vadd.f32 %v9038, %v9084
  %v9109 = vadd.f32 %v9039, %v9084
  %v9110 = vadd.f32 %v9040, %v9084
  %v9111 = vadd.f32 %v9041, %v9084
  %v9112 = vadd.f32 %v9042, %v9084
  %v9113 = vadd.f32 %v9043, %v9084
  %v9114 = vadd.f32 %v9044, %v9084
  %v9115 = vadd.f32 %v9045, %v9084
  %v9116 = vadd.f32 %v9046, %v9084
  %v9117 = vadd.f32 %v9047, %v9084
  %v9118 = vadd.f32 %v9048, %v9084
  %v9119 = vadd.f32 %v9049, %v9084
  %v9120 = vadd.f32 %v9050, %v9084
  %v9121 = vadd.f32 %v9051, %v9084
  %v9122 = vadd.f32 %v9052, %v9084
  %v9123 = vadd.f32 %v9053, %v9084
  %v9124 = vadd.f32 %v9054, %v9084
  %v9125 = vadd.f32 %v9055, %v9084
  %v9126 = vadd.f32 %v9056, %v9084
  %v9127 = vadd.f32 %v9057, %v9084
  %v9128 = vadd.f32 %v9058, %v9084
  %v9129 = vadd.f32 %v9059, %v9084
  %v9130 = vadd.f32 %v9060, %v9084
  %v9131 = vadd.f32 %v9061, %v9084
  %v9132 = vadd.f32 %v9062, %v9084
  %v9133 = vadd.f32 %v9063, %v9084
  %v9134 = vadd.f32 %v9064, %v9084
  %v9135 = vadd.f32 %v9065, %v9084
  %v9136 = vadd.f32 %v9066, %v9084
  %v9137 = vadd.f32 %v9067, %v9084
  %v9138 = vadd.f32 %v9068, %v9084
  %v9139 = vadd.f32 %v9069, %v9084
  %v9140 = vadd.f32 %v9070, %v9084
  %v9141 = vadd.f32 %v9071, %v9084
  %v9142 = vadd.f32 %v9072, %v9084
  %v9143 = vadd.f32 %v9073, %v9084
  %v9144 = vadd.f32 %v9074, %v9084
  %v9145 = vadd.f32 %v9075, %v9084
  %v9146 = vadd.f32 %v9076, %v9084
  %v9147 = vadd.f32 %v9077, %v9084
  %v9148 = vadd.f32 %v9078, %v9084
  %v9149 = vadd.f32 %v9079, %v9084
  %v9150 = vmax.f32 %v9086, 0.0
  %v9151 = vmax.f32 %v9087, 0.0
  %v9152 = vmax.f32 %v9088, 0.0
  %v9153 = vmax.f32 %v9089, 0.0
  %v9154 = vmax.f32 %v9090, 0.0
  %v9155 = vmax.f32 %v9091, 0.0
  %v9156 = vmax.f32 %v9092, 0.0
  %v9157 = vmax.f32 %v9093, 0.0
  %v9158 = vmax.f32 %v9094, 0.0
  %v9159 = vmax.f32 %v9095, 0.0
  %v9160 = vmax.f32 %v9096, 0.0
  %v9161 = vmax.f32 %v9097, 0.0
  %v9162 = vmax.f32 %v9098, 0.0
  %v9163 = vmax.f32 %v9099, 0.0
  %v9164 = vmax.f32 %v9100, 0.0
  %v9165 = vmax.f32 %v9101, 0.0
  %v9166 = vmax.f32 %v9102, 0.0
  %v9167 = vmax.f32 %v9103, 0.0
  %v9168 = vmax.f32 %v9104, 0.0
  %v9169 = vmax.f32 %v9105, 0.0
  %v9170 = vmax.f32 %v9106, 0.0
  %v9171 = vmax.f32 %v9107, 0.0
  %v9172 = vmax.f32 %v9108, 0.0
  %v9173 = vmax.f32 %v9109, 0.0
  %v9174 = vmax.f32 %v9110, 0.0
  %v9175 = vmax.f32 %v9111, 0.0
  %v9176 = vmax.f32 %v9112, 0.0
  %v9177 = vmax.f32 %v9113, 0.0
  %v9178 = vmax.f32 %v9114, 0.0
  %v9179 = vmax.f32 %v9115, 0.0
  %v9180 = vmax.f32 %v9116, 0.0
  %v9181 = vmax.f32 %v9117, 0.0
  %v9182 = vmax.f32 %v9118, 0.0
  %v9183 = vmax.f32 %v9119, 0.0
  %v9184 = vmax.f32 %v9120, 0.0
  %v9185 = vmax.f32 %v9121, 0.0
  %v9186 = vmax.f32 %v9122, 0.0
  %v9187 = vmax.f32 %v9123, 0.0
  %v9188 = vmax.f32 %v9124, 0.0
  %v9189 = vmax.f32 %v9125, 0.0
  %v9190 = vmax.f32 %v9126, 0.0
  %v9191 = vmax.f32 %v9127, 0.0
  %v9192 = vmax.f32 %v9128, 0.0
  %v9193 = vmax.f32 %v9129, 0.0
  %v9194 = vmax.f32 %v9130, 0.0
  %v9195 = vmax.f32 %v9131, 0.0
  %v9196 = vmax.f32 %v9132, 0.0
  %v9197 = vmax.f32 %v9133, 0.0
  %v9198 = vmax.f32 %v9134, 0.0
  %v9199 = vmax.f32 %v9135, 0.0
  %v9200 = vmax.f32 %v9136, 0.0
  %v9201 = vmax.f32 %v9137, 0.0
  %v9202 = vmax.f32 %v9138, 0.0
  %v9203 = vmax.f32 %v9139, 0.0
  %v9204 = vmax.f32 %v9140, 0.0
  %v9205 = vmax.f32 %v9141, 0.0
  %v9206 = vmax.f32 %v9142, 0.0
  %v9207 = vmax.f32 %v9143, 0.0
  %v9208 = vmax.f32 %v9144, 0.0
  %v9209 = vmax.f32 %v9145, 0.0
  %v9210 = vmax.f32 %v9146, 0.0
  %v9211 = vmax.f32 %v9147, 0.0
  %v9212 = vmax.f32 %v9148, 0.0
  %v9213 = vmax.f32 %v9149, 0.0
  %v9214 = vld [vmem:[%s7] sm:$0xf]
  %v9215 = vld [vmem:[%s8] sm:$0x1]
  %v9217 = vlaneseq
  %v9218 = vshrl.u32 %v9217, 7
  %v9219 = vsub.s32 0, %v9218
  %v9220 = vrot.slane %v9215, %v9219
  %v9223 = vsel %vm99, %v34, 0
  %v9226 = vsel %vm99, %v35, 0
  %v9229 = vsel %vm99, %v36, 0
  %v9232 = vsel %vm99, %v37, 0
  %v9235 = vsel %vm99, %v38, 0
  %v9238 = vsel %vm99, %v39, 0
  %v9241 = vsel %vm99, %v40, 0
  %v9244 = vsel %vm99, %v41, 0
  %v9247 = vsel %vm99, %v42, 0
  %v9250 = vsel %vm99, %v43, 0
  %v9253 = vsel %vm99, %v44, 0
  %v9256 = vsel %vm99, %v45, 0
  %v9259 = vsel %vm99, %v46, 0
  %v9262 = vsel %vm99, %v47, 0
  %v9265 = vsel %vm99, %v48, 0
  %v9268 = vsel %vm99, %v49, 0
  %v9271 = vsel %vm99, %v50, 0
  %v9274 = vsel %vm99, %v51, 0
  %v9277 = vsel %vm99, %v52, 0
  %v9280 = vsel %vm99, %v53, 0
  %v9283 = vsel %vm99, %v54, 0
  %v9286 = vsel %vm99, %v55, 0
  %v9289 = vsel %vm99, %v56, 0
  %v9292 = vsel %vm99, %v57, 0
  %v9295 = vsel %vm99, %v58, 0
  %v9298 = vsel %vm99, %v59, 0
  %v9301 = vsel %vm99, %v60, 0
  %v9304 = vsel %vm99, %v61, 0
  %v9307 = vsel %vm99, %v62, 0
  %v9310 = vsel %vm99, %v63, 0
  %v9313 = vsel %vm99, %v64, 0
  %v9316 = vsel %vm99, %v65, 0
  %v9319 = vsel %vm99, %v66, 0
  %v9322 = vsel %vm99, %v67, 0
  %v9325 = vsel %vm99, %v68, 0
  %v9328 = vsel %vm99, %v69, 0
  %v9331 = vsel %vm99, %v70, 0
  %v9334 = vsel %vm99, %v71, 0
  %v9337 = vsel %vm99, %v72, 0
  %v9340 = vsel %vm99, %v73, 0
  %v9343 = vsel %vm99, %v74, 0
  %v9346 = vsel %vm99, %v75, 0
  %v9349 = vsel %vm99, %v76, 0
  %v9352 = vsel %vm99, %v77, 0
  %v9355 = vsel %vm99, %v78, 0
  %v9358 = vsel %vm99, %v79, 0
  %v9361 = vsel %vm99, %v80, 0
  %v9364 = vsel %vm99, %v81, 0
  %v9367 = vsel %vm99, %v82, 0
  %v9370 = vsel %vm99, %v83, 0
  %v9373 = vsel %vm99, %v84, 0
  %v9376 = vsel %vm99, %v85, 0
  %v9379 = vsel %vm99, %v86, 0
  %v9382 = vsel %vm99, %v87, 0
  %v9385 = vsel %vm99, %v88, 0
  %v9388 = vsel %vm99, %v89, 0
  %v9391 = vsel %vm99, %v90, 0
  %v9394 = vsel %vm99, %v91, 0
  %v9397 = vsel %vm99, %v92, 0
  %v9400 = vsel %vm99, %v93, 0
  %v9403 = vsel %vm99, %v94, 0
  %v9406 = vsel %vm99, %v95, 0
  %v9409 = vsel %vm99, %v96, 0
  %v9412 = vsel %vm99, %v97, 0
  %v9415 = vsel %vm3722, %v9214, 0
  %9417 = vmatprep.subr.mxu0 0.0
  %9418 = vmatpush1.msra.mxu0 0.0
  %9419 = vmatprep.subr.mxu0 0.0
  %9420 = vmatpush1.msra.mxu0 0.0
  %9421 = vmatprep.subr.mxu0 0.0
  %9422 = vmatpush1.msra.mxu0 0.0
  %9423 = vmatprep.subr.mxu0 0.0
  %9424 = vmatpush1.msra.mxu0 0.0
  %9425 = vmatprep.subr.mxu0 0.0
  %9426 = vmatpush1.msra.mxu0 0.0
  %9427 = vmatprep.subr.mxu0 0.0
  %9428 = vmatpush1.msra.mxu0 0.0
  %9429 = vmatprep.subr.mxu0 0.0
  %9430 = vmatpush1.msra.mxu0 0.0
  %9431 = vmatprep.subr.mxu0 0.0
  %9432 = vmatpush1.msra.mxu0 0.0
  %9433 = vmatprep.subr.mxu0 0.0
  %9434 = vmatpush1.msra.mxu0 0.0
  %9435 = vmatprep.subr.mxu0 0.0
  %9436 = vmatpush1.msra.mxu0 0.0
  %9437 = vmatprep.subr.mxu0 0.0
  %9438 = vmatpush1.msra.mxu0 0.0
  %9439 = vmatprep.subr.mxu0 0.0
  %9440 = vmatpush1.msra.mxu0 0.0
  %9441 = vmatprep.subr.mxu0 0.0
  %9442 = vmatpush1.msra.mxu0 0.0
  %9443 = vmatprep.subr.mxu0 0.0
  %9444 = vmatpush1.msra.mxu0 0.0
  %9445 = vmatprep.subr.mxu0 0.0
  %9446 = vmatpush1.msra.mxu0 0.0
  %9447 = vmatprep.subr.mxu0 0.0
  %9448 = vmatpush1.msra.mxu0 %v9415
  %9449 = vmatprep.subr.mxu0 0.0
  %9450 = vmatpush2.msra.mxu0 0.0
  %9451 = vmatprep.subr.mxu0 0.0
  %9452 = vmatpush2.msra.mxu0 0.0
  %9453 = vmatprep.subr.mxu0 0.0
  %9454 = vmatpush2.msra.mxu0 0.0
  %9455 = vmatprep.subr.mxu0 0.0
  %9456 = vmatpush2.msra.mxu0 0.0
  %9457 = vmatprep.subr.mxu0 0.0
  %9458 = vmatpush2.msra.mxu0 0.0
  %9459 = vmatprep.subr.mxu0 0.0
  %9460 = vmatpush2.msra.mxu0 0.0
  %9461 = vmatprep.subr.mxu0 0.0
  %9462 = vmatpush2.msra.mxu0 0.0
  %9463 = vmatprep.subr.mxu0 0.0
  %9464 = vmatpush2.msra.mxu0 0.0
  %9465 = vmatprep.subr.mxu0 0.0
  %9466 = vmatpush2.msra.mxu0 0.0
  %9467 = vmatprep.subr.mxu0 0.0
  %9468 = vmatpush2.msra.mxu0 0.0
  %9469 = vmatprep.subr.mxu0 0.0
  %9470 = vmatpush2.msra.mxu0 0.0
  %9471 = vmatprep.subr.mxu0 0.0
  %9472 = vmatpush2.msra.mxu0 0.0
  %9473 = vmatprep.subr.mxu0 0.0
  %9474 = vmatpush2.msra.mxu0 0.0
  %9475 = vmatprep.subr.mxu0 0.0
  %9476 = vmatpush2.msra.mxu0 0.0
  %9477 = vmatprep.subr.mxu0 0.0
  %9478 = vmatpush2.msra.mxu0 0.0
  %9479 = vmatprep.subr.mxu0 0.0
  %9480 = vmatpush2.msra.mxu0 0.0
  %9481 = vmatprep.mubr.f32.mxu0 0.0
  %9482 = vmatmul.mubr.f32.gmra.mxu0 %v9223
  %v9483 = vpop.f32.mrf.mxu0
  %v9484 = vadd.f32 %v9220, %v9483
  %v9485 = vpop.f32.mrf.mxu0
  %9486 = vmatprep.mubr.f32.mxu0 0.0
  %9487 = vmatmul.mubr.f32.gmra.mxu0 %v9226
  %v9488 = vpop.f32.mrf.mxu0
  %v9489 = vadd.f32 %v9220, %v9488
  %v9490 = vpop.f32.mrf.mxu0
  %9491 = vmatprep.mubr.f32.mxu0 0.0
  %9492 = vmatmul.mubr.f32.gmra.mxu0 %v9229
  %v9493 = vpop.f32.mrf.mxu0
  %v9494 = vadd.f32 %v9220, %v9493
  %v9495 = vpop.f32.mrf.mxu0
  %9496 = vmatprep.mubr.f32.mxu0 0.0
  %9497 = vmatmul.mubr.f32.gmra.mxu0 %v9232
  %v9498 = vpop.f32.mrf.mxu0
  %v9499 = vadd.f32 %v9220, %v9498
  %v9500 = vpop.f32.mrf.mxu0
  %9501 = vmatprep.mubr.f32.mxu0 0.0
  %9502 = vmatmul.mubr.f32.gmra.mxu0 %v9235
  %v9503 = vpop.f32.mrf.mxu0
  %v9504 = vadd.f32 %v9220, %v9503
  %v9505 = vpop.f32.mrf.mxu0
  %9506 = vmatprep.mubr.f32.mxu0 0.0
  %9507 = vmatmul.mubr.f32.gmra.mxu0 %v9238
  %v9508 = vpop.f32.mrf.mxu0
  %v9509 = vadd.f32 %v9220, %v9508
  %v9510 = vpop.f32.mrf.mxu0
  %9511 = vmatprep.mubr.f32.mxu0 0.0
  %9512 = vmatmul.mubr.f32.gmra.mxu0 %v9241
  %v9513 = vpop.f32.mrf.mxu0
  %v9514 = vadd.f32 %v9220, %v9513
  %v9515 = vpop.f32.mrf.mxu0
  %9516 = vmatprep.mubr.f32.mxu0 0.0
  %9517 = vmatmul.mubr.f32.gmra.mxu0 %v9244
  %v9518 = vpop.f32.mrf.mxu0
  %v9519 = vadd.f32 %v9220, %v9518
  %v9520 = vpop.f32.mrf.mxu0
  %9521 = vmatprep.mubr.f32.mxu0 0.0
  %9522 = vmatmul.mubr.f32.gmra.mxu0 %v9247
  %v9523 = vpop.f32.mrf.mxu0
  %v9524 = vadd.f32 %v9220, %v9523
  %v9525 = vpop.f32.mrf.mxu0
  %9526 = vmatprep.mubr.f32.mxu0 0.0
  %9527 = vmatmul.mubr.f32.gmra.mxu0 %v9250
  %v9528 = vpop.f32.mrf.mxu0
  %v9529 = vadd.f32 %v9220, %v9528
  %v9530 = vpop.f32.mrf.mxu0
  %9531 = vmatprep.mubr.f32.mxu0 0.0
  %9532 = vmatmul.mubr.f32.gmra.mxu0 %v9253
  %v9533 = vpop.f32.mrf.mxu0
  %v9534 = vadd.f32 %v9220, %v9533
  %v9535 = vpop.f32.mrf.mxu0
  %9536 = vmatprep.mubr.f32.mxu0 0.0
  %9537 = vmatmul.mubr.f32.gmra.mxu0 %v9256
  %v9538 = vpop.f32.mrf.mxu0
  %v9539 = vadd.f32 %v9220, %v9538
  %v9540 = vpop.f32.mrf.mxu0
  %9541 = vmatprep.mubr.f32.mxu0 0.0
  %9542 = vmatmul.mubr.f32.gmra.mxu0 %v9259
  %v9543 = vpop.f32.mrf.mxu0
  %v9544 = vadd.f32 %v9220, %v9543
  %v9545 = vpop.f32.mrf.mxu0
  %9546 = vmatprep.mubr.f32.mxu0 0.0
  %9547 = vmatmul.mubr.f32.gmra.mxu0 %v9262
  %v9548 = vpop.f32.mrf.mxu0
  %v9549 = vadd.f32 %v9220, %v9548
  %v9550 = vpop.f32.mrf.mxu0
  %9551 = vmatprep.mubr.f32.mxu0 0.0
  %9552 = vmatmul.mubr.f32.gmra.mxu0 %v9265
  %v9553 = vpop.f32.mrf.mxu0
  %v9554 = vadd.f32 %v9220, %v9553
  %v9555 = vpop.f32.mrf.mxu0
  %9556 = vmatprep.mubr.f32.mxu0 0.0
  %9557 = vmatmul.mubr.f32.gmra.mxu0 %v9268
  %v9558 = vpop.f32.mrf.mxu0
  %v9559 = vadd.f32 %v9220, %v9558
  %v9560 = vpop.f32.mrf.mxu0
  %9561 = vmatprep.mubr.f32.mxu0 0.0
  %9562 = vmatmul.mubr.f32.gmra.mxu0 %v9271
  %v9563 = vpop.f32.mrf.mxu0
  %v9564 = vadd.f32 %v9220, %v9563
  %v9565 = vpop.f32.mrf.mxu0
  %9566 = vmatprep.mubr.f32.mxu0 0.0
  %9567 = vmatmul.mubr.f32.gmra.mxu0 %v9274
  %v9568 = vpop.f32.mrf.mxu0
  %v9569 = vadd.f32 %v9220, %v9568
  %v9570 = vpop.f32.mrf.mxu0
  %9571 = vmatprep.mubr.f32.mxu0 0.0
  %9572 = vmatmul.mubr.f32.gmra.mxu0 %v9277
  %v9573 = vpop.f32.mrf.mxu0
  %v9574 = vadd.f32 %v9220, %v9573
  %v9575 = vpop.f32.mrf.mxu0
  %9576 = vmatprep.mubr.f32.mxu0 0.0
  %9577 = vmatmul.mubr.f32.gmra.mxu0 %v9280
  %v9578 = vpop.f32.mrf.mxu0
  %v9579 = vadd.f32 %v9220, %v9578
  %v9580 = vpop.f32.mrf.mxu0
  %9581 = vmatprep.mubr.f32.mxu0 0.0
  %9582 = vmatmul.mubr.f32.gmra.mxu0 %v9283
  %v9583 = vpop.f32.mrf.mxu0
  %v9584 = vadd.f32 %v9220, %v9583
  %v9585 = vpop.f32.mrf.mxu0
  %9586 = vmatprep.mubr.f32.mxu0 0.0
  %9587 = vmatmul.mubr.f32.gmra.mxu0 %v9286
  %v9588 = vpop.f32.mrf.mxu0
  %v9589 = vadd.f32 %v9220, %v9588
  %v9590 = vpop.f32.mrf.mxu0
  %9591 = vmatprep.mubr.f32.mxu0 0.0
  %9592 = vmatmul.mubr.f32.gmra.mxu0 %v9289
  %v9593 = vpop.f32.mrf.mxu0
  %v9594 = vadd.f32 %v9220, %v9593
  %v9595 = vpop.f32.mrf.mxu0
  %9596 = vmatprep.mubr.f32.mxu0 0.0
  %9597 = vmatmul.mubr.f32.gmra.mxu0 %v9292
  %v9598 = vpop.f32.mrf.mxu0
  %v9599 = vadd.f32 %v9220, %v9598
  %v9600 = vpop.f32.mrf.mxu0
  %9601 = vmatprep.mubr.f32.mxu0 0.0
  %9602 = vmatmul.mubr.f32.gmra.mxu0 %v9295
  %v9603 = vpop.f32.mrf.mxu0
  %v9604 = vadd.f32 %v9220, %v9603
  %v9605 = vpop.f32.mrf.mxu0
  %9606 = vmatprep.mubr.f32.mxu0 0.0
  %9607 = vmatmul.mubr.f32.gmra.mxu0 %v9298
  %v9608 = vpop.f32.mrf.mxu0
  %v9609 = vadd.f32 %v9220, %v9608
  %v9610 = vpop.f32.mrf.mxu0
  %9611 = vmatprep.mubr.f32.mxu0 0.0
  %9612 = vmatmul.mubr.f32.gmra.mxu0 %v9301
  %v9613 = vpop.f32.mrf.mxu0
  %v9614 = vadd.f32 %v9220, %v9613
  %v9615 = vpop.f32.mrf.mxu0
  %9616 = vmatprep.mubr.f32.mxu0 0.0
  %9617 = vmatmul.mubr.f32.gmra.mxu0 %v9304
  %v9618 = vpop.f32.mrf.mxu0
  %v9619 = vadd.f32 %v9220, %v9618
  %v9620 = vpop.f32.mrf.mxu0
  %9621 = vmatprep.mubr.f32.mxu0 0.0
  %9622 = vmatmul.mubr.f32.gmra.mxu0 %v9307
  %v9623 = vpop.f32.mrf.mxu0
  %v9624 = vadd.f32 %v9220, %v9623
  %v9625 = vpop.f32.mrf.mxu0
  %9626 = vmatprep.mubr.f32.mxu0 0.0
  %9627 = vmatmul.mubr.f32.gmra.mxu0 %v9310
  %v9628 = vpop.f32.mrf.mxu0
  %v9629 = vadd.f32 %v9220, %v9628
  %v9630 = vpop.f32.mrf.mxu0
  %9631 = vmatprep.mubr.f32.mxu0 0.0
  %9632 = vmatmul.mubr.f32.gmra.mxu0 %v9313
  %v9633 = vpop.f32.mrf.mxu0
  %v9634 = vadd.f32 %v9220, %v9633
  %v9635 = vpop.f32.mrf.mxu0
  %9636 = vmatprep.mubr.f32.mxu0 0.0
  %9637 = vmatmul.mubr.f32.gmra.mxu0 %v9316
  %v9638 = vpop.f32.mrf.mxu0
  %v9639 = vadd.f32 %v9220, %v9638
  %v9640 = vpop.f32.mrf.mxu0
  %9641 = vmatprep.mubr.f32.mxu0 0.0
  %9642 = vmatmul.mubr.f32.gmra.mxu0 %v9319
  %v9643 = vpop.f32.mrf.mxu0
  %v9644 = vadd.f32 %v9220, %v9643
  %v9645 = vpop.f32.mrf.mxu0
  %9646 = vmatprep.mubr.f32.mxu0 0.0
  %9647 = vmatmul.mubr.f32.gmra.mxu0 %v9322
  %v9648 = vpop.f32.mrf.mxu0
  %v9649 = vadd.f32 %v9220, %v9648
  %v9650 = vpop.f32.mrf.mxu0
  %9651 = vmatprep.mubr.f32.mxu0 0.0
  %9652 = vmatmul.mubr.f32.gmra.mxu0 %v9325
  %v9653 = vpop.f32.mrf.mxu0
  %v9654 = vadd.f32 %v9220, %v9653
  %v9655 = vpop.f32.mrf.mxu0
  %9656 = vmatprep.mubr.f32.mxu0 0.0
  %9657 = vmatmul.mubr.f32.gmra.mxu0 %v9328
  %v9658 = vpop.f32.mrf.mxu0
  %v9659 = vadd.f32 %v9220, %v9658
  %v9660 = vpop.f32.mrf.mxu0
  %9661 = vmatprep.mubr.f32.mxu0 0.0
  %9662 = vmatmul.mubr.f32.gmra.mxu0 %v9331
  %v9663 = vpop.f32.mrf.mxu0
  %v9664 = vadd.f32 %v9220, %v9663
  %v9665 = vpop.f32.mrf.mxu0
  %9666 = vmatprep.mubr.f32.mxu0 0.0
  %9667 = vmatmul.mubr.f32.gmra.mxu0 %v9334
  %v9668 = vpop.f32.mrf.mxu0
  %v9669 = vadd.f32 %v9220, %v9668
  %v9670 = vpop.f32.mrf.mxu0
  %9671 = vmatprep.mubr.f32.mxu0 0.0
  %9672 = vmatmul.mubr.f32.gmra.mxu0 %v9337
  %v9673 = vpop.f32.mrf.mxu0
  %v9674 = vadd.f32 %v9220, %v9673
  %v9675 = vpop.f32.mrf.mxu0
  %9676 = vmatprep.mubr.f32.mxu0 0.0
  %9677 = vmatmul.mubr.f32.gmra.mxu0 %v9340
  %v9678 = vpop.f32.mrf.mxu0
  %v9679 = vadd.f32 %v9220, %v9678
  %v9680 = vpop.f32.mrf.mxu0
  %9681 = vmatprep.mubr.f32.mxu0 0.0
  %9682 = vmatmul.mubr.f32.gmra.mxu0 %v9343
  %v9683 = vpop.f32.mrf.mxu0
  %v9684 = vadd.f32 %v9220, %v9683
  %v9685 = vpop.f32.mrf.mxu0
  %9686 = vmatprep.mubr.f32.mxu0 0.0
  %9687 = vmatmul.mubr.f32.gmra.mxu0 %v9346
  %v9688 = vpop.f32.mrf.mxu0
  %v9689 = vadd.f32 %v9220, %v9688
  %v9690 = vpop.f32.mrf.mxu0
  %9691 = vmatprep.mubr.f32.mxu0 0.0
  %9692 = vmatmul.mubr.f32.gmra.mxu0 %v9349
  %v9693 = vpop.f32.mrf.mxu0
  %v9694 = vadd.f32 %v9220, %v9693
  %v9695 = vpop.f32.mrf.mxu0
  %9696 = vmatprep.mubr.f32.mxu0 0.0
  %9697 = vmatmul.mubr.f32.gmra.mxu0 %v9352
  %v9698 = vpop.f32.mrf.mxu0
  %v9699 = vadd.f32 %v9220, %v9698
  %v9700 = vpop.f32.mrf.mxu0
  %9701 = vmatprep.mubr.f32.mxu0 0.0
  %9702 = vmatmul.mubr.f32.gmra.mxu0 %v9355
  %v9703 = vpop.f32.mrf.mxu0
  %v9704 = vadd.f32 %v9220, %v9703
  %v9705 = vpop.f32.mrf.mxu0
  %9706 = vmatprep.mubr.f32.mxu0 0.0
  %9707 = vmatmul.mubr.f32.gmra.mxu0 %v9358
  %v9708 = vpop.f32.mrf.mxu0
  %v9709 = vadd.f32 %v9220, %v9708
  %v9710 = vpop.f32.mrf.mxu0
  %9711 = vmatprep.mubr.f32.mxu0 0.0
  %9712 = vmatmul.mubr.f32.gmra.mxu0 %v9361
  %v9713 = vpop.f32.mrf.mxu0
  %v9714 = vadd.f32 %v9220, %v9713
  %v9715 = vpop.f32.mrf.mxu0
  %9716 = vmatprep.mubr.f32.mxu0 0.0
  %9717 = vmatmul.mubr.f32.gmra.mxu0 %v9364
  %v9718 = vpop.f32.mrf.mxu0
  %v9719 = vadd.f32 %v9220, %v9718
  %v9720 = vpop.f32.mrf.mxu0
  %9721 = vmatprep.mubr.f32.mxu0 0.0
  %9722 = vmatmul.mubr.f32.gmra.mxu0 %v9367
  %v9723 = vpop.f32.mrf.mxu0
  %v9724 = vadd.f32 %v9220, %v9723
  %v9725 = vpop.f32.mrf.mxu0
  %9726 = vmatprep.mubr.f32.mxu0 0.0
  %9727 = vmatmul.mubr.f32.gmra.mxu0 %v9370
  %v9728 = vpop.f32.mrf.mxu0
  %v9729 = vadd.f32 %v9220, %v9728
  %v9730 = vpop.f32.mrf.mxu0
  %9731 = vmatprep.mubr.f32.mxu0 0.0
  %9732 = vmatmul.mubr.f32.gmra.mxu0 %v9373
  %v9733 = vpop.f32.mrf.mxu0
  %v9734 = vadd.f32 %v9220, %v9733
  %v9735 = vpop.f32.mrf.mxu0
  %9736 = vmatprep.mubr.f32.mxu0 0.0
  %9737 = vmatmul.mubr.f32.gmra.mxu0 %v9376
  %v9738 = vpop.f32.mrf.mxu0
  %v9739 = vadd.f32 %v9220, %v9738
  %v9740 = vpop.f32.mrf.mxu0
  %9741 = vmatprep.mubr.f32.mxu0 0.0
  %9742 = vmatmul.mubr.f32.gmra.mxu0 %v9379
  %v9743 = vpop.f32.mrf.mxu0
  %v9744 = vadd.f32 %v9220, %v9743
  %v9745 = vpop.f32.mrf.mxu0
  %9746 = vmatprep.mubr.f32.mxu0 0.0
  %9747 = vmatmul.mubr.f32.gmra.mxu0 %v9382
  %v9748 = vpop.f32.mrf.mxu0
  %v9749 = vadd.f32 %v9220, %v9748
  %v9750 = vpop.f32.mrf.mxu0
  %9751 = vmatprep.mubr.f32.mxu0 0.0
  %9752 = vmatmul.mubr.f32.gmra.mxu0 %v9385
  %v9753 = vpop.f32.mrf.mxu0
  %v9754 = vadd.f32 %v9220, %v9753
  %v9755 = vpop.f32.mrf.mxu0
  %9756 = vmatprep.mubr.f32.mxu0 0.0
  %9757 = vmatmul.mubr.f32.gmra.mxu0 %v9388
  %v9758 = vpop.f32.mrf.mxu0
  %v9759 = vadd.f32 %v9220, %v9758
  %v9760 = vpop.f32.mrf.mxu0
  %9761 = vmatprep.mubr.f32.mxu0 0.0
  %9762 = vmatmul.mubr.f32.gmra.mxu0 %v9391
  %v9763 = vpop.f32.mrf.mxu0
  %v9764 = vadd.f32 %v9220, %v9763
  %v9765 = vpop.f32.mrf.mxu0
  %9766 = vmatprep.mubr.f32.mxu0 0.0
  %9767 = vmatmul.mubr.f32.gmra.mxu0 %v9394
  %v9768 = vpop.f32.mrf.mxu0
  %v9769 = vadd.f32 %v9220, %v9768
  %v9770 = vpop.f32.mrf.mxu0
  %9771 = vmatprep.mubr.f32.mxu0 0.0
  %9772 = vmatmul.mubr.f32.gmra.mxu0 %v9397
  %v9773 = vpop.f32.mrf.mxu0
  %v9774 = vadd.f32 %v9220, %v9773
  %v9775 = vpop.f32.mrf.mxu0
  %9776 = vmatprep.mubr.f32.mxu0 0.0
  %9777 = vmatmul.mubr.f32.gmra.mxu0 %v9400
  %v9778 = vpop.f32.mrf.mxu0
  %v9779 = vadd.f32 %v9220, %v9778
  %v9780 = vpop.f32.mrf.mxu0
  %9781 = vmatprep.mubr.f32.mxu0 0.0
  %9782 = vmatmul.mubr.f32.gmra.mxu0 %v9403
  %v9783 = vpop.f32.mrf.mxu0
  %v9784 = vadd.f32 %v9220, %v9783
  %v9785 = vpop.f32.mrf.mxu0
  %9786 = vmatprep.mubr.f32.mxu0 0.0
  %9787 = vmatmul.mubr.f32.gmra.mxu0 %v9406
  %v9788 = vpop.f32.mrf.mxu0
  %v9789 = vadd.f32 %v9220, %v9788
  %v9790 = vpop.f32.mrf.mxu0
  %9791 = vmatprep.mubr.f32.mxu0 0.0
  %9792 = vmatmul.mubr.f32.gmra.mxu0 %v9409
  %v9793 = vpop.f32.mrf.mxu0
  %v9794 = vadd.f32 %v9220, %v9793
  %v9795 = vpop.f32.mrf.mxu0
  %9796 = vmatprep.mubr.f32.mxu0 0.0
  %9797 = vmatmul.mubr.f32.gmra.mxu0 %v9412
  %v9798 = vpop.f32.mrf.mxu0
  %v9799 = vadd.f32 %v9220, %v9798
  %v9800 = vpop.f32.mrf.mxu0
  %9801 = vdwg.mxu0
  %v9802 = vadd.f32 %v9150, %v9484
  %v9803 = vadd.f32 %v9151, %v9489
  %v9804 = vadd.f32 %v9152, %v9494
  %v9805 = vadd.f32 %v9153, %v9499
  %v9806 = vadd.f32 %v9154, %v9504
  %v9807 = vadd.f32 %v9155, %v9509
  %v9808 = vadd.f32 %v9156, %v9514
  %v9809 = vadd.f32 %v9157, %v9519
  %v9810 = vadd.f32 %v9158, %v9524
  %v9811 = vadd.f32 %v9159, %v9529
  %v9812 = vadd.f32 %v9160, %v9534
  %v9813 = vadd.f32 %v9161, %v9539
  %v9814 = vadd.f32 %v9162, %v9544
  %v9815 = vadd.f32 %v9163, %v9549
  %v9816 = vadd.f32 %v9164, %v9554
  %v9817 = vadd.f32 %v9165, %v9559
  %v9818 = vadd.f32 %v9166, %v9564
  %v9819 = vadd.f32 %v9167, %v9569
  %v9820 = vadd.f32 %v9168, %v9574
  %v9821 = vadd.f32 %v9169, %v9579
  %v9822 = vadd.f32 %v9170, %v9584
  %v9823 = vadd.f32 %v9171, %v9589
  %v9824 = vadd.f32 %v9172, %v9594
  %v9825 = vadd.f32 %v9173, %v9599
  %v9826 = vadd.f32 %v9174, %v9604
  %v9827 = vadd.f32 %v9175, %v9609
  %v9828 = vadd.f32 %v9176, %v9614
  %v9829 = vadd.f32 %v9177, %v9619
  %v9830 = vadd.f32 %v9178, %v9624
  %v9831 = vadd.f32 %v9179, %v9629
  %v9832 = vadd.f32 %v9180, %v9634
  %v9833 = vadd.f32 %v9181, %v9639
  %v9834 = vadd.f32 %v9182, %v9644
  %v9835 = vadd.f32 %v9183, %v9649
  %v9836 = vadd.f32 %v9184, %v9654
  %v9837 = vadd.f32 %v9185, %v9659
  %v9838 = vadd.f32 %v9186, %v9664
  %v9839 = vadd.f32 %v9187, %v9669
  %v9840 = vadd.f32 %v9188, %v9674
  %v9841 = vadd.f32 %v9189, %v9679
  %v9842 = vadd.f32 %v9190, %v9684
  %v9843 = vadd.f32 %v9191, %v9689
  %v9844 = vadd.f32 %v9192, %v9694
  %v9845 = vadd.f32 %v9193, %v9699
  %v9846 = vadd.f32 %v9194, %v9704
  %v9847 = vadd.f32 %v9195, %v9709
  %v9848 = vadd.f32 %v9196, %v9714
  %v9849 = vadd.f32 %v9197, %v9719
  %v9850 = vadd.f32 %v9198, %v9724
  %v9851 = vadd.f32 %v9199, %v9729
  %v9852 = vadd.f32 %v9200, %v9734
  %v9853 = vadd.f32 %v9201, %v9739
  %v9854 = vadd.f32 %v9202, %v9744
  %v9855 = vadd.f32 %v9203, %v9749
  %v9856 = vadd.f32 %v9204, %v9754
  %v9857 = vadd.f32 %v9205, %v9759
  %v9858 = vadd.f32 %v9206, %v9764
  %v9859 = vadd.f32 %v9207, %v9769
  %v9860 = vadd.f32 %v9208, %v9774
  %v9861 = vadd.f32 %v9209, %v9779
  %v9862 = vadd.f32 %v9210, %v9784
  %v9863 = vadd.f32 %v9211, %v9789
  %v9864 = vadd.f32 %v9212, %v9794
  %v9865 = vadd.f32 %v9213, %v9799
  %9866 = vst.msk [vmem:[%s9] sm:$0xff] %vm4111, %v9802
  %9867 = vst.msk [vmem:[%s9 + $0x8] sm:$0xff] %vm4111, %v9803
  %9868 = vst.msk [vmem:[%s9 + $0x10] sm:$0xff] %vm4111, %v9804
  %9869 = vst.msk [vmem:[%s9 + $0x18] sm:$0xff] %vm4111, %v9805
  %9870 = vst.msk [vmem:[%s9 + $0x20] sm:$0xff] %vm4111, %v9806
  %9871 = vst.msk [vmem:[%s9 + $0x28] sm:$0xff] %vm4111, %v9807
  %9872 = vst.msk [vmem:[%s9 + $0x30] sm:$0xff] %vm4111, %v9808
  %9873 = vst.msk [vmem:[%s9 + $0x38] sm:$0xff] %vm4111, %v9809
  %9874 = vst.msk [vmem:[%s9 + $0x40] sm:$0xff] %vm4111, %v9810
  %9875 = vst.msk [vmem:[%s9 + $0x48] sm:$0xff] %vm4111, %v9811
  %9876 = vst.msk [vmem:[%s9 + $0x50] sm:$0xff] %vm4111, %v9812
  %9877 = vst.msk [vmem:[%s9 + $0x58] sm:$0xff] %vm4111, %v9813
  %9878 = vst.msk [vmem:[%s9 + $0x60] sm:$0xff] %vm4111, %v9814
  %9879 = vst.msk [vmem:[%s9 + $0x68] sm:$0xff] %vm4111, %v9815
  %9880 = vst.msk [vmem:[%s9 + $0x70] sm:$0xff] %vm4111, %v9816
  %9881 = vst.msk [vmem:[%s9 + $0x78] sm:$0xff] %vm4111, %v9817
  %9882 = vst.msk [vmem:[%s9 + $0x80] sm:$0xff] %vm4111, %v9818
  %9883 = vst.msk [vmem:[%s9 + $0x88] sm:$0xff] %vm4111, %v9819
  %9884 = vst.msk [vmem:[%s9 + $0x90] sm:$0xff] %vm4111, %v9820
  %9885 = vst.msk [vmem:[%s9 + $0x98] sm:$0xff] %vm4111, %v9821
  %9886 = vst.msk [vmem:[%s9 + $0xa0] sm:$0xff] %vm4111, %v9822
  %9887 = vst.msk [vmem:[%s9 + $0xa8] sm:$0xff] %vm4111, %v9823
  %9888 = vst.msk [vmem:[%s9 + $0xb0] sm:$0xff] %vm4111, %v9824
  %9889 = vst.msk [vmem:[%s9 + $0xb8] sm:$0xff] %vm4111, %v9825
  %9890 = vst.msk [vmem:[%s9 + $0xc0] sm:$0xff] %vm4111, %v9826
  %9891 = vst.msk [vmem:[%s9 + $0xc8] sm:$0xff] %vm4111, %v9827
  %9892 = vst.msk [vmem:[%s9 + $0xd0] sm:$0xff] %vm4111, %v9828
  %9893 = vst.msk [vmem:[%s9 + $0xd8] sm:$0xff] %vm4111, %v9829
  %9894 = vst.msk [vmem:[%s9 + $0xe0] sm:$0xff] %vm4111, %v9830
  %9895 = vst.msk [vmem:[%s9 + $0xe8] sm:$0xff] %vm4111, %v9831
  %9896 = vst.msk [vmem:[%s9 + $0xf0] sm:$0xff] %vm4111, %v9832
  %9897 = vst.msk [vmem:[%s9 + $0xf8] sm:$0xff] %vm4111, %v9833
  %9898 = vst.msk [vmem:[%s9 + $0x100] sm:$0xff] %vm4111, %v9834
  %9899 = vst.msk [vmem:[%s9 + $0x108] sm:$0xff] %vm4111, %v9835
  %9900 = vst.msk [vmem:[%s9 + $0x110] sm:$0xff] %vm4111, %v9836
  %9901 = vst.msk [vmem:[%s9 + $0x118] sm:$0xff] %vm4111, %v9837
  %9902 = vst.msk [vmem:[%s9 + $0x120] sm:$0xff] %vm4111, %v9838
  %9903 = vst.msk [vmem:[%s9 + $0x128] sm:$0xff] %vm4111, %v9839
  %9904 = vst.msk [vmem:[%s9 + $0x130] sm:$0xff] %vm4111, %v9840
  %9905 = vst.msk [vmem:[%s9 + $0x138] sm:$0xff] %vm4111, %v9841
  %9906 = vst.msk [vmem:[%s9 + $0x140] sm:$0xff] %vm4111, %v9842
  %9907 = vst.msk [vmem:[%s9 + $0x148] sm:$0xff] %vm4111, %v9843
  %9908 = vst.msk [vmem:[%s9 + $0x150] sm:$0xff] %vm4111, %v9844
  %9909 = vst.msk [vmem:[%s9 + $0x158] sm:$0xff] %vm4111, %v9845
  %9910 = vst.msk [vmem:[%s9 + $0x160] sm:$0xff] %vm4111, %v9846
  %9911 = vst.msk [vmem:[%s9 + $0x168] sm:$0xff] %vm4111, %v9847
  %9912 = vst.msk [vmem:[%s9 + $0x170] sm:$0xff] %vm4111, %v9848
  %9913 = vst.msk [vmem:[%s9 + $0x178] sm:$0xff] %vm4111, %v9849
  %9914 = vst.msk [vmem:[%s9 + $0x180] sm:$0xff] %vm4111, %v9850
  %9915 = vst.msk [vmem:[%s9 + $0x188] sm:$0xff] %vm4111, %v9851
  %9916 = vst.msk [vmem:[%s9 + $0x190] sm:$0xff] %vm4111, %v9852
  %9917 = vst.msk [vmem:[%s9 + $0x198] sm:$0xff] %vm4111, %v9853
  %9918 = vst.msk [vmem:[%s9 + $0x1a0] sm:$0xff] %vm4111, %v9854
  %9919 = vst.msk [vmem:[%s9 + $0x1a8] sm:$0xff] %vm4111, %v9855
  %9920 = vst.msk [vmem:[%s9 + $0x1b0] sm:$0xff] %vm4111, %v9856
  %9921 = vst.msk [vmem:[%s9 + $0x1b8] sm:$0xff] %vm4111, %v9857
  %9922 = vst.msk [vmem:[%s9 + $0x1c0] sm:$0xff] %vm4111, %v9858
  %9923 = vst.msk [vmem:[%s9 + $0x1c8] sm:$0xff] %vm4111, %v9859
  %9924 = vst.msk [vmem:[%s9 + $0x1d0] sm:$0xff] %vm4111, %v9860
  %9925 = vst.msk [vmem:[%s9 + $0x1d8] sm:$0xff] %vm4111, %v9861
  %9926 = vst.msk [vmem:[%s9 + $0x1e0] sm:$0xff] %vm4111, %v9862
  %9927 = vst.msk [vmem:[%s9 + $0x1e8] sm:$0xff] %vm4111, %v9863
  %9928 = vst.msk [vmem:[%s9 + $0x1f0] sm:$0xff] %vm4111, %v9864
  %9929 = vst.msk [vmem:[%s9 + $0x1f8] sm:$0xff] %vm4111, %v9865
  %v9930 = vld [vmem:[%s9] ss:$2 sm:$0xff]
  %s9931 = scalar_lea.vmem %s9, 32
  %v9932 = vld [vmem:[%s9931] ss:$2 sm:$0xff]
  %s9933 = scalar_lea.vmem %s9, 64
  %v9934 = vld [vmem:[%s9933] ss:$2 sm:$0xff]
  %s9935 = scalar_lea.vmem %s9, 96
  %v9936 = vld [vmem:[%s9935] ss:$2 sm:$0xff]
  %s9937 = scalar_lea.vmem %s9, 128
  %v9938 = vld [vmem:[%s9937] ss:$2 sm:$0xff]
  %s9939 = scalar_lea.vmem %s9, 160
  %v9940 = vld [vmem:[%s9939] ss:$2 sm:$0xff]
  %s9941 = scalar_lea.vmem %s9, 192
  %v9942 = vld [vmem:[%s9941] ss:$2 sm:$0xff]
  %s9943 = scalar_lea.vmem %s9, 224
  %v9944 = vld [vmem:[%s9943] ss:$2 sm:$0xff]
  %s9945 = scalar_lea.vmem %s9, 256
  %v9946 = vld [vmem:[%s9945] ss:$2 sm:$0xff]
  %s9947 = scalar_lea.vmem %s9, 288
  %v9948 = vld [vmem:[%s9947] ss:$2 sm:$0xff]
  %s9949 = scalar_lea.vmem %s9, 320
  %v9950 = vld [vmem:[%s9949] ss:$2 sm:$0xff]
  %s9951 = scalar_lea.vmem %s9, 352
  %v9952 = vld [vmem:[%s9951] ss:$2 sm:$0xff]
  %s9953 = scalar_lea.vmem %s9, 384
  %v9954 = vld [vmem:[%s9953] ss:$2 sm:$0xff]
  %s9955 = scalar_lea.vmem %s9, 416
  %v9956 = vld [vmem:[%s9955] ss:$2 sm:$0xff]
  %s9957 = scalar_lea.vmem %s9, 448
  %v9958 = vld [vmem:[%s9957] ss:$2 sm:$0xff]
  %s9959 = scalar_lea.vmem %s9, 480
  %v9960 = vld [vmem:[%s9959] ss:$2 sm:$0xff]
  %s9961 = scalar_lea.vmem %s9, 1
  %v9962 = vld [vmem:[%s9961] ss:$2 sm:$0xff]
  %s9963 = scalar_lea.vmem %s9, 33
  %v9964 = vld [vmem:[%s9963] ss:$2 sm:$0xff]
  %s9965 = scalar_lea.vmem %s9, 65
  %v9966 = vld [vmem:[%s9965] ss:$2 sm:$0xff]
  %s9967 = scalar_lea.vmem %s9, 97
  %v9968 = vld [vmem:[%s9967] ss:$2 sm:$0xff]
  %s9969 = scalar_lea.vmem %s9, 129
  %v9970 = vld [vmem:[%s9969] ss:$2 sm:$0xff]
  %s9971 = scalar_lea.vmem %s9, 161
  %v9972 = vld [vmem:[%s9971] ss:$2 sm:$0xff]
  %s9973 = scalar_lea.vmem %s9, 193
  %v9974 = vld [vmem:[%s9973] ss:$2 sm:$0xff]
  %s9975 = scalar_lea.vmem %s9, 225
  %v9976 = vld [vmem:[%s9975] ss:$2 sm:$0xff]
  %s9977 = scalar_lea.vmem %s9, 257
  %v9978 = vld [vmem:[%s9977] ss:$2 sm:$0xff]
  %s9979 = scalar_lea.vmem %s9, 289
  %v9980 = vld [vmem:[%s9979] ss:$2 sm:$0xff]
  %s9981 = scalar_lea.vmem %s9, 321
  %v9982 = vld [vmem:[%s9981] ss:$2 sm:$0xff]
  %s9983 = scalar_lea.vmem %s9, 353
  %v9984 = vld [vmem:[%s9983] ss:$2 sm:$0xff]
  %s9985 = scalar_lea.vmem %s9, 385
  %v9986 = vld [vmem:[%s9985] ss:$2 sm:$0xff]
  %s9987 = scalar_lea.vmem %s9, 417
  %v9988 = vld [vmem:[%s9987] ss:$2 sm:$0xff]
  %s9989 = scalar_lea.vmem %s9, 449
  %v9990 = vld [vmem:[%s9989] ss:$2 sm:$0xff]
  %s9991 = scalar_lea.vmem %s9, 481
  %v9992 = vld [vmem:[%s9991] ss:$2 sm:$0xff]
  %v9993 = vmax.f32 %v9930, %v9962
  %v9994 = vmax.f32 %v9932, %v9964
  %v9995 = vmax.f32 %v9934, %v9966
  %v9996 = vmax.f32 %v9936, %v9968
  %v9997 = vmax.f32 %v9938, %v9970
  %v9998 = vmax.f32 %v9940, %v9972
  %v9999 = vmax.f32 %v9942, %v9974
  %v10000 = vmax.f32 %v9944, %v9976
  %v10001 = vmax.f32 %v9946, %v9978
  %v10002 = vmax.f32 %v9948, %v9980
  %v10003 = vmax.f32 %v9950, %v9982
  %v10004 = vmax.f32 %v9952, %v9984
  %v10005 = vmax.f32 %v9954, %v9986
  %v10006 = vmax.f32 %v9956, %v9988
  %v10007 = vmax.f32 %v9958, %v9990
  %v10008 = vmax.f32 %v9960, %v9992
  %s10009 = scalar_lea.vmem %s9, 16
  %v10010 = vld [vmem:[%s10009] ss:$2 sm:$0xff]
  %s10011 = scalar_lea.vmem %s10009, 32
  %v10012 = vld [vmem:[%s10011] ss:$2 sm:$0xff]
  %s10013 = scalar_lea.vmem %s10009, 64
  %v10014 = vld [vmem:[%s10013] ss:$2 sm:$0xff]
  %s10015 = scalar_lea.vmem %s10009, 96
  %v10016 = vld [vmem:[%s10015] ss:$2 sm:$0xff]
  %s10017 = scalar_lea.vmem %s10009, 128
  %v10018 = vld [vmem:[%s10017] ss:$2 sm:$0xff]
  %s10019 = scalar_lea.vmem %s10009, 160
  %v10020 = vld [vmem:[%s10019] ss:$2 sm:$0xff]
  %s10021 = scalar_lea.vmem %s10009, 192
  %v10022 = vld [vmem:[%s10021] ss:$2 sm:$0xff]
  %s10023 = scalar_lea.vmem %s10009, 224
  %v10024 = vld [vmem:[%s10023] ss:$2 sm:$0xff]
  %s10025 = scalar_lea.vmem %s10009, 256
  %v10026 = vld [vmem:[%s10025] ss:$2 sm:$0xff]
  %s10027 = scalar_lea.vmem %s10009, 288
  %v10028 = vld [vmem:[%s10027] ss:$2 sm:$0xff]
  %s10029 = scalar_lea.vmem %s10009, 320
  %v10030 = vld [vmem:[%s10029] ss:$2 sm:$0xff]
  %s10031 = scalar_lea.vmem %s10009, 352
  %v10032 = vld [vmem:[%s10031] ss:$2 sm:$0xff]
  %s10033 = scalar_lea.vmem %s10009, 384
  %v10034 = vld [vmem:[%s10033] ss:$2 sm:$0xff]
  %s10035 = scalar_lea.vmem %s10009, 416
  %v10036 = vld [vmem:[%s10035] ss:$2 sm:$0xff]
  %s10037 = scalar_lea.vmem %s10009, 448
  %v10038 = vld [vmem:[%s10037] ss:$2 sm:$0xff]
  %s10039 = scalar_lea.vmem %s10009, 480
  %v10040 = vld [vmem:[%s10039] ss:$2 sm:$0xff]
  %s10041 = scalar_lea.vmem %s10009, 1
  %v10042 = vld [vmem:[%s10041] ss:$2 sm:$0xff]
  %s10043 = scalar_lea.vmem %s10009, 33
  %v10044 = vld [vmem:[%s10043] ss:$2 sm:$0xff]
  %s10045 = scalar_lea.vmem %s10009, 65
  %v10046 = vld [vmem:[%s10045] ss:$2 sm:$0xff]
  %s10047 = scalar_lea.vmem %s10009, 97
  %v10048 = vld [vmem:[%s10047] ss:$2 sm:$0xff]
  %s10049 = scalar_lea.vmem %s10009, 129
  %v10050 = vld [vmem:[%s10049] ss:$2 sm:$0xff]
  %s10051 = scalar_lea.vmem %s10009, 161
  %v10052 = vld [vmem:[%s10051] ss:$2 sm:$0xff]
  %s10053 = scalar_lea.vmem %s10009, 193
  %v10054 = vld [vmem:[%s10053] ss:$2 sm:$0xff]
  %s10055 = scalar_lea.vmem %s10009, 225
  %v10056 = vld [vmem:[%s10055] ss:$2 sm:$0xff]
  %s10057 = scalar_lea.vmem %s10009, 257
  %v10058 = vld [vmem:[%s10057] ss:$2 sm:$0xff]
  %s10059 = scalar_lea.vmem %s10009, 289
  %v10060 = vld [vmem:[%s10059] ss:$2 sm:$0xff]
  %s10061 = scalar_lea.vmem %s10009, 321
  %v10062 = vld [vmem:[%s10061] ss:$2 sm:$0xff]
  %s10063 = scalar_lea.vmem %s10009, 353
  %v10064 = vld [vmem:[%s10063] ss:$2 sm:$0xff]
  %s10065 = scalar_lea.vmem %s10009, 385
  %v10066 = vld [vmem:[%s10065] ss:$2 sm:$0xff]
  %s10067 = scalar_lea.vmem %s10009, 417
  %v10068 = vld [vmem:[%s10067] ss:$2 sm:$0xff]
  %s10069 = scalar_lea.vmem %s10009, 449
  %v10070 = vld [vmem:[%s10069] ss:$2 sm:$0xff]
  %s10071 = scalar_lea.vmem %s10009, 481
  %v10072 = vld [vmem:[%s10071] ss:$2 sm:$0xff]
  %v10073 = vmax.f32 %v10010, %v10042
  %v10074 = vmax.f32 %v10012, %v10044
  %v10075 = vmax.f32 %v10014, %v10046
  %v10076 = vmax.f32 %v10016, %v10048
  %v10077 = vmax.f32 %v10018, %v10050
  %v10078 = vmax.f32 %v10020, %v10052
  %v10079 = vmax.f32 %v10022, %v10054
  %v10080 = vmax.f32 %v10024, %v10056
  %v10081 = vmax.f32 %v10026, %v10058
  %v10082 = vmax.f32 %v10028, %v10060
  %v10083 = vmax.f32 %v10030, %v10062
  %v10084 = vmax.f32 %v10032, %v10064
  %v10085 = vmax.f32 %v10034, %v10066
  %v10086 = vmax.f32 %v10036, %v10068
  %v10087 = vmax.f32 %v10038, %v10070
  %v10088 = vmax.f32 %v10040, %v10072
  %v10089 = vmax.f32 %v9993, %v10073
  %v10090 = vmax.f32 %v9994, %v10074
  %v10091 = vmax.f32 %v9995, %v10075
  %v10092 = vmax.f32 %v9996, %v10076
  %v10093 = vmax.f32 %v9997, %v10077
  %v10094 = vmax.f32 %v9998, %v10078
  %v10095 = vmax.f32 %v9999, %v10079
  %v10096 = vmax.f32 %v10000, %v10080
  %v10097 = vmax.f32 %v10001, %v10081
  %v10098 = vmax.f32 %v10002, %v10082
  %v10099 = vmax.f32 %v10003, %v10083
  %v10100 = vmax.f32 %v10004, %v10084
  %v10101 = vmax.f32 %v10005, %v10085
  %v10102 = vmax.f32 %v10006, %v10086
  %v10103 = vmax.f32 %v10007, %v10087
  %v10104 = vmax.f32 %v10008, %v10088
  %10105 = vst.msk [vmem:[%s10] sm:$0xff] %vm4111, %v10089
  %10106 = vst.msk [vmem:[%s10 + $0x8] sm:$0xff] %vm4111, %v10090
  %10107 = vst.msk [vmem:[%s10 + $0x10] sm:$0xff] %vm4111, %v10091
  %10108 = vst.msk [vmem:[%s10 + $0x18] sm:$0xff] %vm4111, %v10092
  %10109 = vst.msk [vmem:[%s10 + $0x20] sm:$0xff] %vm4111, %v10093
  %10110 = vst.msk [vmem:[%s10 + $0x28] sm:$0xff] %vm4111, %v10094
  %10111 = vst.msk [vmem:[%s10 + $0x30] sm:$0xff] %vm4111, %v10095
  %10112 = vst.msk [vmem:[%s10 + $0x38] sm:$0xff] %vm4111, %v10096
  %10113 = vst.msk [vmem:[%s10 + $0x40] sm:$0xff] %vm4111, %v10097
  %10114 = vst.msk [vmem:[%s10 + $0x48] sm:$0xff] %vm4111, %v10098
  %10115 = vst.msk [vmem:[%s10 + $0x50] sm:$0xff] %vm4111, %v10099
  %10116 = vst.msk [vmem:[%s10 + $0x58] sm:$0xff] %vm4111, %v10100
  %10117 = vst.msk [vmem:[%s10 + $0x60] sm:$0xff] %vm4111, %v10101
  %10118 = vst.msk [vmem:[%s10 + $0x68] sm:$0xff] %vm4111, %v10102
  %10119 = vst.msk [vmem:[%s10 + $0x70] sm:$0xff] %vm4111, %v10103
  %10120 = vst.msk [vmem:[%s10 + $0x78] sm:$0xff] %vm4111, %v10104
  // Predicated region
  $region38: #{encoder_block_forward.1} parent=0 // pred_check
    _
  $region39: #{encoder_block_forward.1} parent=0 // pred_check_branch
    %10122 = sbr.rel (0) target = $region41
  $region40: #{encoder_block_forward.1} parent=0 // pred_region
    _
  $region41: #{encoder_block_forward.1} parent=0 // pred_fallthru
    _
  // Predicated region
  $region42: #{encoder_block_forward.1} parent=0 // pred_check
    _
  $region43: #{encoder_block_forward.1} parent=0 // pred_check_branch
    %10124 = sbr.rel (0) target = $region45
  $region44: #{encoder_block_forward.1} parent=0 // pred_region
    _
  $region45: #{encoder_block_forward.1} parent=0 // pred_fallthru
    _
  // Predicated region
  $region46: #{encoder_block_forward.1} parent=0 // pred_check
    _
  $region47: #{encoder_block_forward.1} parent=0 // pred_check_branch
    %10126 = sbr.rel (0) target = $region49
  $region48: #{encoder_block_forward.1} parent=0 // pred_region
    _
  $region49: #{encoder_block_forward.1} parent=0 // pred_fallthru
    _
  // Predicated region
  $region50: #{encoder_block_forward.1} parent=0 // pred_check
    _
  $region51: #{encoder_block_forward.1} parent=0 // pred_check_branch
    %10128 = sbr.rel (0) target = $region53
  $region52: #{encoder_block_forward.1} parent=0 // pred_region
    _
  $region53: #{encoder_block_forward.1} parent=0 // pred_fallthru
    _

</llo_original>
